<compile_context>
chip_gen: v6e
topology: v6e:2x2x1
jax: 0.10.0
libtpu: 0.0.40
codegen_flags: <defaults>
</compile_context>

<pallas_src>
import jax
import jax.numpy as jnp
from jax.experimental import pallas as pl
from jax.experimental.pallas import tpu as pltpu

F32 = jnp.float32


# ----------------------------------------------------------------------------
# Pallas kernels
# ----------------------------------------------------------------------------
def _encode_prep_kernel(x_ref, w1_ref, b1_ref, w2_ref, b2_ref, w3_ref, b3_ref,
                        wfc_ref, bfc_ref, w1f_ref, b1f_ref, vert_ref, w1v_ref,
                        d1b_ref, vb_ref):
    """Encoder + decoder-conv1 prep for the WHOLE batch (grid-less).

    x_ref   (3, B*N)   : batch folded into lanes (columns b*N..(b+1)*N-1 = b).
    w*/b*              : BN-folded PointNetfeat conv weights, channel-major.
    wfc/bfc            : BN-folded Linear(1024->bneck), channel-major.
    w1f/b1f (P*C,bneck): stacked feature-part of every decoder conv1.
    vert    (3, V), w1v (P, C, 3): vertex-part of decoder conv1.
    d1b_ref (P, B, C, 1): per-(primitive, batch) conv1 bias column.
    vb_ref  (P, C, V)  : per-primitive batch-invariant vertex base.
    """
    x = x_ref[...]                                               # (3, B*N)
    w1 = w1_ref[...]                                             # (64, 3)
    # K=3 first layer as VPU broadcast-FMAs (MXU-hostile contraction avoided).
    h = (w1[:, 0:1] * x[0:1, :] + w1[:, 1:2] * x[1:2, :]
         + w1[:, 2:3] * x[2:3, :] + b1_ref[...])
    h = jnp.maximum(h, 0.0)                                      # (64,  B*N)
    h = jnp.maximum(
        jnp.dot(w2_ref[...], h, preferred_element_type=F32) + b2_ref[...], 0.0)
    h = jnp.dot(w3_ref[...], h, preferred_element_type=F32) + b3_ref[...]
    # PointNetfeat: bn3(conv3(x)) has NO relu before the global max-pool.
    B = d1b_ref.shape[1]
    N = h.shape[1] // B
    cols = [jnp.max(h[:, b * N:(b + 1) * N], axis=-1, keepdims=True)
            for b in range(B)]                                   # segmented max
    g = jnp.concatenate(cols, axis=-1)                           # (1024, B)

    # Encoder tail: Linear(1024->bneck)+BN+ReLU, channel-major (M=bneck).
    feat = jnp.maximum(
        jnp.dot(wfc_ref[...], g, preferred_element_type=F32) + bfc_ref[...],
        0.0)                                                     # (bneck, B)

    # Feature projection of every primitive's decoder conv1: ONE fused matmul.
    d1b = (jnp.dot(w1f_ref[...], feat, preferred_element_type=F32)
           + b1f_ref[...])                                       # (P*C, B)
    P = d1b_ref.shape[0]
    C = d1b_ref.shape[2]
    for p in range(P):                            # tiny static unroll (P*B)
        blk = d1b[p * C:(p + 1) * C, :]                          # (C, B)
        for b in range(B):
            d1b_ref[p, b, :, :] = blk[:, b:b + 1]                # (C, 1)

    # Batch-invariant vertex base of decoder conv1 (hoisted out of the
    # (P,B) decoder grid); K=3 done as VPU broadcast-FMAs.
    vert = vert_ref[...]                                         # (3, V)
    for p in range(P):
        w = w1v_ref[p]                                           # (C, 3)
        vb_ref[p] = (w[:, 0:1] * vert[0:1, :] + w[:, 1:2] * vert[1:2, :]
                     + w[:, 2:3] * vert[2:3, :])                 # (C, V)


def _decoder_kernel(vb_ref, d1b_ref, w2_ref, b2_ref, w3_ref, b3_ref,
                    w4_ref, b4_ref, out_ref):
    """PointGenCon tail for ONE (primitive, batch) pair, channel-major.

    vb_ref (1, C, V); d1b_ref (1, 1, C, 1); out_ref (1, 1, 3, V) lane-dense.
    """
    h = jnp.maximum(vb_ref[0] + d1b_ref[0, 0], 0.0)              # (C, V)
    h = jnp.maximum(
        jnp.dot(w2_ref[0], h, preferred_element_type=F32) + b2_ref[0], 0.0)
    h = jnp.maximum(
        jnp.dot(w3_ref[0], h, preferred_element_type=F32) + b3_ref[0], 0.0)
    o = jnp.dot(w4_ref[0], h, preferred_element_type=F32) + b4_ref[0]
    out_ref[0, 0] = 2.0 * jnp.tanh(o)                            # (3, V)


# ----------------------------------------------------------------------------
# Wrappers (pallas_call plumbing)
# ----------------------------------------------------------------------------
def encode_prep_forward(x_bcn, enc_params, fc_params, w1f_flat, b1_flat,
                        vert_T, w1v):
    """Returns (d1bias (P,B,C,1), vertbase (P,C,V)) in one grid-less call."""
    B, _, N = x_bcn.shape
    x3 = jnp.transpose(x_bcn, (1, 0, 2)).reshape(3, B * N)       # (3, B*N)
    w1, b1, w2, b2, w3, b3 = enc_params
    wfc, bfc = fc_params
    P, C, _ = w1v.shape
    V = vert_T.shape[1]
    return pl.pallas_call(
        _encode_prep_kernel,
        out_shape=(jax.ShapeDtypeStruct((P, B, C, 1), F32),
                   jax.ShapeDtypeStruct((P, C, V), F32)),
    )(x3, w1, b1, w2, b2, w3, b3, wfc, bfc, w1f_flat, b1_flat, vert_T, w1v)


def decoder_forward(vertbase, d1bias, dec_tail):
    w2, b2, w3, b3, w4, b4 = dec_tail
    P, C, V = vertbase.shape
    B = d1bias.shape[1]
    return pl.pallas_call(
        _decoder_kernel,
        out_shape=jax.ShapeDtypeStruct((B, P, 3, V), F32),
        grid=(P, B),                    # B innermost -> weight blocks reused
        in_specs=[pl.BlockSpec((1, C, V), lambda p, b: (p, 0, 0)),
                  pl.BlockSpec((1, 1, C, 1), lambda p, b: (p, b, 0, 0)),
                  pl.BlockSpec((1,) + w2.shape[1:], lambda p, b: (p, 0, 0)),
                  pl.BlockSpec((1,) + b2.shape[1:], lambda p, b: (p, 0, 0)),
                  pl.BlockSpec((1,) + w3.shape[1:], lambda p, b: (p, 0, 0)),
                  pl.BlockSpec((1,) + b3.shape[1:], lambda p, b: (p, 0, 0)),
                  pl.BlockSpec((1,) + w4.shape[1:], lambda p, b: (p, 0, 0)),
                  pl.BlockSpec((1,) + b4.shape[1:], lambda p, b: (p, 0, 0))],
        out_specs=pl.BlockSpec((1, 1, 3, V), lambda p, b: (b, p, 0, 0)),
        compiler_params=pltpu.CompilerParams(
            dimension_semantics=("parallel", "parallel")),
    )(vertbase, d1bias, w2, b2, w3, b3, w4, b4)


def ae_atlasnet_forward(x_bcn, enc_params, fc_params, dec_params, vertex):
    """x_bcn is PyTorch-style (B, 3, N); returns (B, nb_prim*V, 3)."""
    w1v, w1f_flat, b1_flat, w2, b2, w3, b3, w4, b4 = dec_params
    vert_T = jnp.transpose(vertex)                               # (3, V), once
    d1bias, vertbase = encode_prep_forward(
        x_bcn, enc_params, fc_params, w1f_flat, b1_flat, vert_T, w1v)
    out4 = decoder_forward(vertbase, d1bias,
                           (w2, b2, w3, b3, w4, b4))             # (B, P, 3, V)
    B, P, _, V = out4.shape
    # == torch.cat(outs, 2).transpose(2, 1): primitive-major point ordering.
    return jnp.transpose(out4, (0, 1, 3, 2)).reshape(B, P * V, 3)


# ----------------------------------------------------------------------------
# Deterministic parameter setup (glue)
# ----------------------------------------------------------------------------
def _init_linear(key, out_c, in_c):
    kw, kb = jax.random.split(key)
    bound = 1.0 / jnp.sqrt(jnp.asarray(in_c, F32))
    w = jax.random.uniform(kw, (out_c, in_c), F32, -bound, bound)
    b = jax.random.uniform(kb, (out_c,), F32, -bound, bound)
    return w, b


def _init_bn(key, c):
    k1, k2, k3, k4 = jax.random.split(key, 4)
    gamma = 1.0 + 0.1 * jax.random.normal(k1, (c,), F32)
    beta = 0.1 * jax.random.normal(k2, (c,), F32)
    mean = 0.1 * jax.random.normal(k3, (c,), F32)
    var = 0.8 + 0.4 * jax.random.uniform(k4, (c,), F32)
    return gamma, beta, mean, var


def _fold_bn(w, b, gamma, beta, mean, var, eps=1e-5):
    scale = gamma / jnp.sqrt(var + eps)
    return w * scale[:, None], (b - mean) * scale + beta


def make_params(key, bottleneck, nb_primitives=1):
    keys = iter(jax.random.split(key, 256))

    def conv_bn(in_c, out_c):                     # BN-folded (out,in), (out,)
        w, b = _init_linear(next(keys), out_c, in_c)
        g, be, m, v = _init_bn(next(keys), out_c)
        return _fold_bn(w, b, g, be, m, v)

    def conv_only(in_c, out_c):
        return _init_linear(next(keys), out_c, in_c)

    # Encoder: PointNetfeat conv(3->64->128->1024), channel-major weights.
    w1, b1 = conv_bn(3, 64)
    w2, b2 = conv_bn(64, 128)
    w3, b3 = conv_bn(128, 1024)
    enc = (w1, b1.reshape(-1, 1), w2, b2.reshape(-1, 1), w3, b3.reshape(-1, 1))

    # Encoder tail: Linear(1024->bneck)+BN+ReLU, channel-major (bneck, 1024).
    wfc, bfc = conv_bn(1024, bottleneck)
    fc = (wfc, bfc.reshape(-1, 1))

    # Decoders: PointGenCon with bottleneck_size = 3 + bottleneck.
    # conv1 is split into a vertex part (P, C, 3) and a feature part stacked
    # flat as (P*C, bneck) so the prep kernel does ONE fused matmul.
    C = 3 + bottleneck
    w1v_l, w1f_l, b1_l = [], [], []
    w2_l, b2_l, w3_l, b3_l, w4_l, b4_l = [], [], [], [], [], []
    for _ in range(nb_primitives):
        wd1, bd1 = conv_bn(C, C)
        w1v_l.append(wd1[:, :3])                    # (C, 3)     vertex part
        w1f_l.append(wd1[:, 3:])                    # (C, bneck) feature part
        b1_l.append(bd1.reshape(C, 1))
        wd2, bd2 = conv_bn(C, C // 2)
        w2_l.append(wd2); b2_l.append(bd2.reshape(-1, 1))
        wd3, bd3 = conv_bn(C // 2, C // 4)
        w3_l.append(wd3); b3_l.append(bd3.reshape(-1, 1))
        wd4, bd4 = conv_only(C // 4, 3)
        w4_l.append(wd4); b4_l.append(bd4.reshape(-1, 1))
    dec = (jnp.stack(w1v_l),                        # (P, C, 3)
           jnp.concatenate(w1f_l, axis=0),          # (P*C, bneck)
           jnp.concatenate(b1_l, axis=0),           # (P*C, 1)
           jnp.stack(w2_l), jnp.stack(b2_l),
           jnp.stack(w3_l), jnp.stack(b3_l),
           jnp.stack(w4_l), jnp.stack(b4_l))
    return enc, fc, dec


def make_vertex(key, num_points):
    v = jax.random.uniform(key, (num_points, 3), F32, -1.0, 1.0)
    bbox_max = jnp.max(v, axis=0)
    bbox_min = jnp.min(v, axis=0)
    return v - (bbox_max + bbox_min) / 2.0


# ----------------------------------------------------------------------------
# Pure-JAX reference (same folded parameters, HIGHEST precision matmuls)
# ----------------------------------------------------------------------------
def reference_forward(x_bcn, enc, fc, dec, vertex):
    hp = jax.lax.Precision.HIGHEST
    w1, b1, w2, b2, w3, b3 = enc
    wfc, bfc = fc
    h = jnp.maximum(jnp.einsum('oi,bin->bon', w1, x_bcn, precision=hp)
                    + b1[None], 0.0)
    h = jnp.maximum(jnp.einsum('oi,bin->bon', w2, h, precision=hp)
                    + b2[None], 0.0)
    h = jnp.einsum('oi,bin->bon', w3, h, precision=hp) + b3[None]
    g = jnp.max(h, axis=-1)                                         # (B, 1024)
    feat = jnp.maximum(jnp.einsum('oi,bi->bo', wfc, g, precision=hp)
                       + bfc[:, 0][None, :], 0.0)                   # (B, bneck)
    w1v, w1f_flat, b1_flat, wd2, bd2, wd3, bd3, wd4, bd4 = dec
    P, C, _ = w1v.shape
    vert_T = jnp.transpose(vertex)                                  # (3, V)
    outs = []
    for p in range(P):
        w1f_p = w1f_flat[p * C:(p + 1) * C]                         # (C, bneck)
        b1_p = b1_flat[p * C:(p + 1) * C, 0]                        # (C,)
        bias1 = (jnp.einsum('ck,bk->bc', w1f_p, feat, precision=hp)
                 + b1_p[None, :])                                   # (B, C)
        h = (jnp.einsum('ci,iv->cv', w1v[p], vert_T, precision=hp)[None]
             + bias1[:, :, None])                                   # (B, C, V)
        h = jnp.maximum(h, 0.0)
        h = jnp.maximum(jnp.einsum('oc,bcv->bov', wd2[p], h, precision=hp)
                        + bd2[p][None], 0.0)
        h = jnp.maximum(jnp.einsum('oc,bcv->bov', wd3[p], h, precision=hp)
                        + bd3[p][None], 0.0)
        o = 2.0 * jnp.tanh(jnp.einsum('oc,bcv->bov', wd4[p], h, precision=hp)
                           + bd4[p][None])                          # (B, 3, V)
        outs.append(jnp.transpose(o, (0, 2, 1)))                    # (B, V, 3)
    return jnp.concatenate(outs, axis=1)


# ----------------------------------------------------------------------------
if __name__ == "__main__":
    B = 2            # batch
    N_IN = 64        # input point-cloud size (Conv1d length)
    NUM_POINTS = 128 # template vertex count per primitive (V), 128-lane dense
    BNECK = 128      # bottleneck_size
    NB_PRIM = 2      # nb_primitives (all fused into one decoder pallas_call)

    key = jax.random.PRNGKey(0)
    k_par, k_vert, k_x = jax.random.split(key, 3)

    enc_p, fc_p, dec_p = make_params(k_par, BNECK, NB_PRIM)
    vertex = make_vertex(k_vert, NUM_POINTS)                 # (V, 3)
    x = jax.random.normal(k_x, (B, 3, N_IN), F32)            # PyTorch NCW input

    fwd = jax.jit(ae_atlasnet_forward)
    out = jax.block_until_ready(fwd(x, enc_p, fc_p, dec_p, vertex))

    ref = reference_forward(x, enc_p, fc_p, dec_p, vertex)
    assert out.shape == (B, NB_PRIM * NUM_POINTS, 3), out.shape
    assert bool(jnp.all(jnp.isfinite(out)))
    max_err = float(jnp.max(jnp.abs(out - ref)))
    assert bool(jnp.allclose(out, ref, atol=1e-3, rtol=1e-3)), max_err

    print("KERNEL_OK")
</pallas_src>

<mosaic_0001>
module attributes {stable_mosaic.version = 11 : i64} {
  func.func @_decoder_kernel(%arg0: i32, %arg1: i32, %arg2: memref<1x131x128xf32, #tpu.memory_space<vmem>>, %arg3: memref<1x1x131x1xf32, #tpu.memory_space<vmem>>, %arg4: memref<1x65x131xf32, #tpu.memory_space<vmem>>, %arg5: memref<1x65x1xf32, #tpu.memory_space<vmem>>, %arg6: memref<1x32x65xf32, #tpu.memory_space<vmem>>, %arg7: memref<1x32x1xf32, #tpu.memory_space<vmem>>, %arg8: memref<1x3x32xf32, #tpu.memory_space<vmem>>, %arg9: memref<1x3x1xf32, #tpu.memory_space<vmem>>, %arg10: memref<1x1x3x128xf32, #tpu.memory_space<vmem>>) attributes {dimension_semantics = [#tpu.dimension_semantics<parallel>, #tpu.dimension_semantics<parallel>], iteration_bounds = array<i64: 2, 2>, scalar_prefetch = 0 : i64, scratch_operands = 0 : i64, tpu.core_type = #tpu.core_type<tc>, window_params = [{transform_indices = @transform_0, window_bounds = array<i64: 1, 131, 128>}, {transform_indices = @transform_1, window_bounds = array<i64: 1, 1, 131, 1>}, {transform_indices = @transform_2, window_bounds = array<i64: 1, 65, 131>}, {transform_indices = @transform_3, window_bounds = array<i64: 1, 65, 1>}, {transform_indices = @transform_4, window_bounds = array<i64: 1, 32, 65>}, {transform_indices = @transform_5, window_bounds = array<i64: 1, 32, 1>}, {transform_indices = @transform_6, window_bounds = array<i64: 1, 3, 32>}, {transform_indices = @transform_7, window_bounds = array<i64: 1, 3, 1>}, {transform_indices = @transform_8, window_bounds = array<i64: 1, 1, 3, 128>}]} {
    %c0 = arith.constant 0 : index
    %c0_0 = arith.constant 0 : index
    %c0_1 = arith.constant 0 : index
    %0 = vector.load %arg2[%c0, %c0_0, %c0_1] : memref<1x131x128xf32, #tpu.memory_space<vmem>>, vector<1x131x128xf32>
    %1 = vector.shape_cast %0 : vector<1x131x128xf32> to vector<131x128xf32>
    %c0_2 = arith.constant 0 : index
    %c0_3 = arith.constant 0 : index
    %c0_4 = arith.constant 0 : index
    %c0_5 = arith.constant 0 : index
    %2 = vector.load %arg3[%c0_2, %c0_3, %c0_4, %c0_5] : memref<1x1x131x1xf32, #tpu.memory_space<vmem>>, vector<1x1x131x1xf32>
    %3 = vector.shape_cast %2 : vector<1x1x131x1xf32> to vector<131x1xf32>
    %4 = vector.broadcast %3 : vector<131x1xf32> to vector<131x128xf32>
    %5 = arith.addf %1, %4 : vector<131x128xf32>
    %cst = arith.constant 0.000000e+00 : f32
    %6 = vector.broadcast %cst : f32 to vector<131x128xf32>
    %7 = arith.maximumf %5, %6 : vector<131x128xf32>
    %c0_6 = arith.constant 0 : index
    %c0_7 = arith.constant 0 : index
    %c0_8 = arith.constant 0 : index
    %8 = vector.load %arg4[%c0_6, %c0_7, %c0_8] : memref<1x65x131xf32, #tpu.memory_space<vmem>>, vector<1x65x131xf32>
    %9 = vector.shape_cast %8 : vector<1x65x131xf32> to vector<65x131xf32>
    %cst_9 = arith.constant dense<0.000000e+00> : vector<65x128xf32>
    %10 = tpu.matmul %9, %7, %cst_9 {dimension_numbers = #tpu.dot_dimension_numbers<[1], [0], [0], [1], [0, 0, 1, 1], [], []>} : vector<65x131xf32>, vector<131x128xf32>, vector<65x128xf32> -> vector<65x128xf32>
    %c0_10 = arith.constant 0 : index
    %c0_11 = arith.constant 0 : index
    %c0_12 = arith.constant 0 : index
    %11 = vector.load %arg5[%c0_10, %c0_11, %c0_12] : memref<1x65x1xf32, #tpu.memory_space<vmem>>, vector<1x65x1xf32>
    %12 = vector.shape_cast %11 : vector<1x65x1xf32> to vector<65x1xf32>
    %13 = vector.broadcast %12 : vector<65x1xf32> to vector<65x128xf32>
    %14 = arith.addf %10, %13 : vector<65x128xf32>
    %cst_13 = arith.constant 0.000000e+00 : f32
    %15 = vector.broadcast %cst_13 : f32 to vector<65x128xf32>
    %16 = arith.maximumf %14, %15 : vector<65x128xf32>
    %c0_14 = arith.constant 0 : index
    %c0_15 = arith.constant 0 : index
    %c0_16 = arith.constant 0 : index
    %17 = vector.load %arg6[%c0_14, %c0_15, %c0_16] : memref<1x32x65xf32, #tpu.memory_space<vmem>>, vector<1x32x65xf32>
    %18 = vector.shape_cast %17 : vector<1x32x65xf32> to vector<32x65xf32>
    %cst_17 = arith.constant dense<0.000000e+00> : vector<32x128xf32>
    %19 = tpu.matmul %18, %16, %cst_17 {dimension_numbers = #tpu.dot_dimension_numbers<[1], [0], [0], [1], [0, 0, 1, 1], [], []>} : vector<32x65xf32>, vector<65x128xf32>, vector<32x128xf32> -> vector<32x128xf32>
    %c0_18 = arith.constant 0 : index
    %c0_19 = arith.constant 0 : index
    %c0_20 = arith.constant 0 : index
    %20 = vector.load %arg7[%c0_18, %c0_19, %c0_20] : memref<1x32x1xf32, #tpu.memory_space<vmem>>, vector<1x32x1xf32>
    %21 = vector.shape_cast %20 : vector<1x32x1xf32> to vector<32x1xf32>
    %22 = vector.broadcast %21 : vector<32x1xf32> to vector<32x128xf32>
    %23 = arith.addf %19, %22 : vector<32x128xf32>
    %cst_21 = arith.constant 0.000000e+00 : f32
    %24 = vector.broadcast %cst_21 : f32 to vector<32x128xf32>
    %25 = arith.maximumf %23, %24 : vector<32x128xf32>
    %c0_22 = arith.constant 0 : index
    %c0_23 = arith.constant 0 : index
    %c0_24 = arith.constant 0 : index
    %26 = vector.load %arg8[%c0_22, %c0_23, %c0_24] : memref<1x3x32xf32, #tpu.memory_space<vmem>>, vector<1x3x32xf32>
    %27 = vector.shape_cast %26 : vector<1x3x32xf32> to vector<3x32xf32>
    %cst_25 = arith.constant dense<0.000000e+00> : vector<3x128xf32>
    %28 = tpu.matmul %27, %25, %cst_25 {dimension_numbers = #tpu.dot_dimension_numbers<[1], [0], [0], [1], [0, 0, 1, 1], [], []>} : vector<3x32xf32>, vector<32x128xf32>, vector<3x128xf32> -> vector<3x128xf32>
    %c0_26 = arith.constant 0 : index
    %c0_27 = arith.constant 0 : index
    %c0_28 = arith.constant 0 : index
    %29 = vector.load %arg9[%c0_26, %c0_27, %c0_28] : memref<1x3x1xf32, #tpu.memory_space<vmem>>, vector<1x3x1xf32>
    %30 = vector.shape_cast %29 : vector<1x3x1xf32> to vector<3x1xf32>
    %31 = vector.broadcast %30 : vector<3x1xf32> to vector<3x128xf32>
    %32 = arith.addf %28, %31 : vector<3x128xf32>
    %33 = math.tanh %32 : vector<3x128xf32>
    %cst_29 = arith.constant 2.000000e+00 : f32
    %34 = vector.broadcast %cst_29 : f32 to vector<3x128xf32>
    %35 = arith.mulf %34, %33 : vector<3x128xf32>
    %c0_30 = arith.constant 0 : index
    %c0_31 = arith.constant 0 : index
    %c0_32 = arith.constant 0 : index
    %c0_33 = arith.constant 0 : index
    %36 = vector.load %arg10[%c0_30, %c0_31, %c0_32, %c0_33] : memref<1x1x3x128xf32, #tpu.memory_space<vmem>>, vector<1x1x3x128xf32>
    %37 = vector.shape_cast %36 : vector<1x1x3x128xf32> to vector<3x128xf32>
    %38 = vector.shape_cast %35 : vector<3x128xf32> to vector<1x1x3x128xf32>
    tpu.vector_store %arg10[%c0_30, %c0_31, %c0_32, %c0_33], %38 {strides = array<i32>} : memref<1x1x3x128xf32, #tpu.memory_space<vmem>>, vector<1x1x3x128xf32>,
    return
  }
  func.func @transform_0(%arg0: i32, %arg1: i32) -> (i32, i32, i32) {
    %c0_i32 = arith.constant 0 : i32
    %c0_i32_0 = arith.constant 0 : i32
    %c0_i32_1 = arith.constant 0 : i32
    return %arg0, %c0_i32, %c0_i32_0 : i32, i32, i32
  }
  func.func @transform_1(%arg0: i32, %arg1: i32) -> (i32, i32, i32, i32) {
    %c0_i32 = arith.constant 0 : i32
    %c0_i32_0 = arith.constant 0 : i32
    %c0_i32_1 = arith.constant 0 : i32
    return %arg0, %arg1, %c0_i32, %c0_i32_0 : i32, i32, i32, i32
  }
  func.func @transform_2(%arg0: i32, %arg1: i32) -> (i32, i32, i32) {
    %c0_i32 = arith.constant 0 : i32
    %c0_i32_0 = arith.constant 0 : i32
    %c0_i32_1 = arith.constant 0 : i32
    return %arg0, %c0_i32, %c0_i32_0 : i32, i32, i32
  }
  func.func @transform_3(%arg0: i32, %arg1: i32) -> (i32, i32, i32) {
    %c0_i32 = arith.constant 0 : i32
    %c0_i32_0 = arith.constant 0 : i32
    %c0_i32_1 = arith.constant 0 : i32
    return %arg0, %c0_i32, %c0_i32_0 : i32, i32, i32
  }
  func.func @transform_4(%arg0: i32, %arg1: i32) -> (i32, i32, i32) {
    %c0_i32 = arith.constant 0 : i32
    %c0_i32_0 = arith.constant 0 : i32
    %c0_i32_1 = arith.constant 0 : i32
    return %arg0, %c0_i32, %c0_i32_0 : i32, i32, i32
  }
  func.func @transform_5(%arg0: i32, %arg1: i32) -> (i32, i32, i32) {
    %c0_i32 = arith.constant 0 : i32
    %c0_i32_0 = arith.constant 0 : i32
    %c0_i32_1 = arith.constant 0 : i32
    return %arg0, %c0_i32, %c0_i32_0 : i32, i32, i32
  }
  func.func @transform_6(%arg0: i32, %arg1: i32) -> (i32, i32, i32) {
    %c0_i32 = arith.constant 0 : i32
    %c0_i32_0 = arith.constant 0 : i32
    %c0_i32_1 = arith.constant 0 : i32
    return %arg0, %c0_i32, %c0_i32_0 : i32, i32, i32
  }
  func.func @transform_7(%arg0: i32, %arg1: i32) -> (i32, i32, i32) {
    %c0_i32 = arith.constant 0 : i32
    %c0_i32_0 = arith.constant 0 : i32
    %c0_i32_1 = arith.constant 0 : i32
    return %arg0, %c0_i32, %c0_i32_0 : i32, i32, i32
  }
  func.func @transform_8(%arg0: i32, %arg1: i32) -> (i32, i32, i32, i32) {
    %c0_i32 = arith.constant 0 : i32
    %c0_i32_0 = arith.constant 0 : i32
    %c0_i32_1 = arith.constant 0 : i32
    return %arg1, %arg0, %c0_i32, %c0_i32_0 : i32, i32, i32, i32
  }
}

module attributes {stable_mosaic.version = 11 : i64} {
  func.func @_encode_prep_kernel(%arg0: memref<3x128xf32, #tpu.memory_space<vmem>>, %arg1: memref<64x3xf32, #tpu.memory_space<vmem>>, %arg2: memref<64x1xf32, #tpu.memory_space<vmem>>, %arg3: memref<128x64xf32, #tpu.memory_space<vmem>>, %arg4: memref<128x1xf32, #tpu.memory_space<vmem>>, %arg5: memref<1024x128xf32, #tpu.memory_space<vmem>>, %arg6: memref<1024x1xf32, #tpu.memory_space<vmem>>, %arg7: memref<128x1024xf32, #tpu.memory_space<vmem>>, %arg8: memref<128x1xf32, #tpu.memory_space<vmem>>, %arg9: memref<262x128xf32, #tpu.memory_space<vmem>>, %arg10: memref<262x1xf32, #tpu.memory_space<vmem>>, %arg11: memref<3x128xf32, #tpu.memory_space<vmem>>, %arg12: memref<2x131x3xf32, #tpu.memory_space<vmem>>, %arg13: memref<2x2x131x1xf32, #tpu.memory_space<vmem>>, %arg14: memref<2x131x128xf32, #tpu.memory_space<vmem>>) attributes {dimension_semantics = [], scalar_prefetch = 0 : i64, scratch_operands = 0 : i64, tpu.core_type = #tpu.core_type<tc>} {
    %c0 = arith.constant 0 : index
    %c0_0 = arith.constant 0 : index
    %0 = vector.load %arg0[%c0, %c0_0] : memref<3x128xf32, #tpu.memory_space<vmem>>, vector<3x128xf32>
    %c0_1 = arith.constant 0 : index
    %c0_2 = arith.constant 0 : index
    %1 = vector.load %arg1[%c0_1, %c0_2] : memref<64x3xf32, #tpu.memory_space<vmem>>, vector<64x3xf32>
    %2 = vector.extract_strided_slice %1 {offsets = [0, 0], sizes = [64, 1], strides = [1, 1]} : vector<64x3xf32> to vector<64x1xf32>
    %3 = vector.extract_strided_slice %0 {offsets = [0, 0], sizes = [1, 128], strides = [1, 1]} : vector<3x128xf32> to vector<1x128xf32>
    %4 = vector.broadcast %2 : vector<64x1xf32> to vector<64x128xf32>
    %5 = vector.broadcast %3 : vector<1x128xf32> to vector<64x128xf32>
    %6 = arith.mulf %4, %5 : vector<64x128xf32>
    %7 = vector.extract_strided_slice %1 {offsets = [0, 1], sizes = [64, 1], strides = [1, 1]} : vector<64x3xf32> to vector<64x1xf32>
    %8 = vector.extract_strided_slice %0 {offsets = [1, 0], sizes = [1, 128], strides = [1, 1]} : vector<3x128xf32> to vector<1x128xf32>
    %9 = vector.broadcast %7 : vector<64x1xf32> to vector<64x128xf32>
    %10 = vector.broadcast %8 : vector<1x128xf32> to vector<64x128xf32>
    %11 = arith.mulf %9, %10 : vector<64x128xf32>
    %12 = arith.addf %6, %11 : vector<64x128xf32>
    %13 = vector.extract_strided_slice %1 {offsets = [0, 2], sizes = [64, 1], strides = [1, 1]} : vector<64x3xf32> to vector<64x1xf32>
    %14 = vector.extract_strided_slice %0 {offsets = [2, 0], sizes = [1, 128], strides = [1, 1]} : vector<3x128xf32> to vector<1x128xf32>
    %15 = vector.broadcast %13 : vector<64x1xf32> to vector<64x128xf32>
    %16 = vector.broadcast %14 : vector<1x128xf32> to vector<64x128xf32>
    %17 = arith.mulf %15, %16 : vector<64x128xf32>
    %18 = arith.addf %12, %17 : vector<64x128xf32>
    %c0_3 = arith.constant 0 : index
    %c0_4 = arith.constant 0 : index
    %19 = vector.load %arg2[%c0_3, %c0_4] : memref<64x1xf32, #tpu.memory_space<vmem>>, vector<64x1xf32>
    %20 = vector.broadcast %19 : vector<64x1xf32> to vector<64x128xf32>
    %21 = arith.addf %18, %20 : vector<64x128xf32>
    %cst = arith.constant 0.000000e+00 : f32
    %22 = vector.broadcast %cst : f32 to vector<64x128xf32>
    %23 = arith.maximumf %21, %22 : vector<64x128xf32>
    %c0_5 = arith.constant 0 : index
    %c0_6 = arith.constant 0 : index
    %24 = vector.load %arg3[%c0_5, %c0_6] : memref<128x64xf32, #tpu.memory_space<vmem>>, vector<128x64xf32>
    %cst_7 = arith.constant dense<0.000000e+00> : vector<128x128xf32>
    %25 = tpu.matmul %24, %23, %cst_7 {dimension_numbers = #tpu.dot_dimension_numbers<[1], [0], [0], [1], [0, 0, 1, 1], [], []>} : vector<128x64xf32>, vector<64x128xf32>, vector<128x128xf32> -> vector<128x128xf32>
    %c0_8 = arith.constant 0 : index
    %c0_9 = arith.constant 0 : index
    %26 = vector.load %arg4[%c0_8, %c0_9] : memref<128x1xf32, #tpu.memory_space<vmem>>, vector<128x1xf32>
    %27 = vector.broadcast %26 : vector<128x1xf32> to vector<128x128xf32>
    %28 = arith.addf %25, %27 : vector<128x128xf32>
    %cst_10 = arith.constant 0.000000e+00 : f32
    %29 = vector.broadcast %cst_10 : f32 to vector<128x128xf32>
    %30 = arith.maximumf %28, %29 : vector<128x128xf32>
    %c0_11 = arith.constant 0 : index
    %c0_12 = arith.constant 0 : index
    %31 = vector.load %arg5[%c0_11, %c0_12] : memref<1024x128xf32, #tpu.memory_space<vmem>>, vector<1024x128xf32>
    %cst_13 = arith.constant dense<0.000000e+00> : vector<1024x128xf32>
    %32 = tpu.matmul %31, %30, %cst_13 {dimension_numbers = #tpu.dot_dimension_numbers<[1], [0], [0], [1], [0, 0, 1, 1], [], []>} : vector<1024x128xf32>, vector<128x128xf32>, vector<1024x128xf32> -> vector<1024x128xf32>
    %c0_14 = arith.constant 0 : index
    %c0_15 = arith.constant 0 : index
    %33 = vector.load %arg6[%c0_14, %c0_15] : memref<1024x1xf32, #tpu.memory_space<vmem>>, vector<1024x1xf32>
    %34 = vector.broadcast %33 : vector<1024x1xf32> to vector<1024x128xf32>
    %35 = arith.addf %32, %34 : vector<1024x128xf32>
    %36 = vector.extract_strided_slice %35 {offsets = [0, 0], sizes = [1024, 64], strides = [1, 1]} : vector<1024x128xf32> to vector<1024x64xf32>
    %cst_16 = arith.constant dense<0xFF800000> : vector<1024xf32>
    %37 = vector.multi_reduction <maximumf>, %36, %cst_16 [1] : vector<1024x64xf32> to vector<1024xf32>
    %38 = vector.shape_cast %37 : vector<1024xf32> to vector<1024x1xf32>
    %39 = vector.extract_strided_slice %35 {offsets = [0, 64], sizes = [1024, 64], strides = [1, 1]} : vector<1024x128xf32> to vector<1024x64xf32>
    %cst_17 = arith.constant dense<0xFF800000> : vector<1024xf32>
    %40 = vector.multi_reduction <maximumf>, %39, %cst_17 [1] : vector<1024x64xf32> to vector<1024xf32>
    %41 = vector.shape_cast %40 : vector<1024xf32> to vector<1024x1xf32>
    %42 = tpu.concatenate %38, %41 in 1 : vector<1024x1xf32>, vector<1024x1xf32> -> vector<1024x2xf32>
    %c0_18 = arith.constant 0 : index
    %c0_19 = arith.constant 0 : index
    %43 = vector.load %arg7[%c0_18, %c0_19] : memref<128x1024xf32, #tpu.memory_space<vmem>>, vector<128x1024xf32>
    %cst_20 = arith.constant dense<0.000000e+00> : vector<128x2xf32>
    %44 = tpu.matmul %43, %42, %cst_20 {dimension_numbers = #tpu.dot_dimension_numbers<[1], [0], [0], [1], [0, 0, 1, 1], [], []>} : vector<128x1024xf32>, vector<1024x2xf32>, vector<128x2xf32> -> vector<128x2xf32>
    %c0_21 = arith.constant 0 : index
    %c0_22 = arith.constant 0 : index
    %45 = vector.load %arg8[%c0_21, %c0_22] : memref<128x1xf32, #tpu.memory_space<vmem>>, vector<128x1xf32>
    %46 = vector.broadcast %45 : vector<128x1xf32> to vector<128x2xf32>
    %47 = arith.addf %44, %46 : vector<128x2xf32>
    %cst_23 = arith.constant 0.000000e+00 : f32
    %48 = vector.broadcast %cst_23 : f32 to vector<128x2xf32>
    %49 = arith.maximumf %47, %48 : vector<128x2xf32>
    %c0_24 = arith.constant 0 : index
    %c0_25 = arith.constant 0 : index
    %50 = vector.load %arg9[%c0_24, %c0_25] : memref<262x128xf32, #tpu.memory_space<vmem>>, vector<262x128xf32>
    %cst_26 = arith.constant dense<0.000000e+00> : vector<262x2xf32>
    %51 = tpu.matmul %50, %49, %cst_26 {dimension_numbers = #tpu.dot_dimension_numbers<[1], [0], [0], [1], [0, 0, 1, 1], [], []>} : vector<262x128xf32>, vector<128x2xf32>, vector<262x2xf32> -> vector<262x2xf32>
    %c0_27 = arith.constant 0 : index
    %c0_28 = arith.constant 0 : index
    %52 = vector.load %arg10[%c0_27, %c0_28] : memref<262x1xf32, #tpu.memory_space<vmem>>, vector<262x1xf32>
    %53 = vector.broadcast %52 : vector<262x1xf32> to vector<262x2xf32>
    %54 = arith.addf %51, %53 : vector<262x2xf32>
    %55 = vector.extract_strided_slice %54 {offsets = [0, 0], sizes = [131, 2], strides = [1, 1]} : vector<262x2xf32> to vector<131x2xf32>
    %56 = vector.extract_strided_slice %55 {offsets = [0, 0], sizes = [131, 1], strides = [1, 1]} : vector<131x2xf32> to vector<131x1xf32>
    %c0_29 = arith.constant 0 : index
    %c0_30 = arith.constant 0 : index
    %c0_31 = arith.constant 0 : index
    %c0_32 = arith.constant 0 : index
    %57 = vector.load %arg13[%c0_29, %c0_30, %c0_31, %c0_32] : memref<2x2x131x1xf32, #tpu.memory_space<vmem>>, vector<1x1x131x1xf32>
    %58 = vector.shape_cast %57 : vector<1x1x131x1xf32> to vector<131x1xf32>
    %59 = vector.shape_cast %56 : vector<131x1xf32> to vector<1x1x131x1xf32>
    tpu.vector_store %arg13[%c0_29, %c0_30, %c0_31, %c0_32], %59 {strides = array<i32>} : memref<2x2x131x1xf32, #tpu.memory_space<vmem>>, vector<1x1x131x1xf32>,
    %60 = vector.extract_strided_slice %55 {offsets = [0, 1], sizes = [131, 1], strides = [1, 1]} : vector<131x2xf32> to vector<131x1xf32>
    %c0_33 = arith.constant 0 : index
    %c1 = arith.constant 1 : index
    %c0_34 = arith.constant 0 : index
    %c0_35 = arith.constant 0 : index
    %61 = vector.load %arg13[%c0_33, %c1, %c0_34, %c0_35] : memref<2x2x131x1xf32, #tpu.memory_space<vmem>>, vector<1x1x131x1xf32>
    %62 = vector.shape_cast %61 : vector<1x1x131x1xf32> to vector<131x1xf32>
    %63 = vector.shape_cast %60 : vector<131x1xf32> to vector<1x1x131x1xf32>
    tpu.vector_store %arg13[%c0_33, %c1, %c0_34, %c0_35], %63 {strides = array<i32>} : memref<2x2x131x1xf32, #tpu.memory_space<vmem>>, vector<1x1x131x1xf32>,
    %64 = vector.extract_strided_slice %54 {offsets = [131, 0], sizes = [131, 2], strides = [1, 1]} : vector<262x2xf32> to vector<131x2xf32>
    %65 = vector.extract_strided_slice %64 {offsets = [0, 0], sizes = [131, 1], strides = [1, 1]} : vector<131x2xf32> to vector<131x1xf32>
    %c1_36 = arith.constant 1 : index
    %c0_37 = arith.constant 0 : index
    %c0_38 = arith.constant 0 : index
    %c0_39 = arith.constant 0 : index
    %66 = vector.load %arg13[%c1_36, %c0_37, %c0_38, %c0_39] : memref<2x2x131x1xf32, #tpu.memory_space<vmem>>, vector<1x1x131x1xf32>
    %67 = vector.shape_cast %66 : vector<1x1x131x1xf32> to vector<131x1xf32>
    %68 = vector.shape_cast %65 : vector<131x1xf32> to vector<1x1x131x1xf32>
    tpu.vector_store %arg13[%c1_36, %c0_37, %c0_38, %c0_39], %68 {strides = array<i32>} : memref<2x2x131x1xf32, #tpu.memory_space<vmem>>, vector<1x1x131x1xf32>,
    %69 = vector.extract_strided_slice %64 {offsets = [0, 1], sizes = [131, 1], strides = [1, 1]} : vector<131x2xf32> to vector<131x1xf32>
    %c1_40 = arith.constant 1 : index
    %c1_41 = arith.constant 1 : index
    %c0_42 = arith.constant 0 : index
    %c0_43 = arith.constant 0 : index
    %70 = vector.load %arg13[%c1_40, %c1_41, %c0_42, %c0_43] : memref<2x2x131x1xf32, #tpu.memory_space<vmem>>, vector<1x1x131x1xf32>
    %71 = vector.shape_cast %70 : vector<1x1x131x1xf32> to vector<131x1xf32>
    %72 = vector.shape_cast %69 : vector<131x1xf32> to vector<1x1x131x1xf32>
    tpu.vector_store %arg13[%c1_40, %c1_41, %c0_42, %c0_43], %72 {strides = array<i32>} : memref<2x2x131x1xf32, #tpu.memory_space<vmem>>, vector<1x1x131x1xf32>,
    %c0_44 = arith.constant 0 : index
    %c0_45 = arith.constant 0 : index
    %73 = vector.load %arg11[%c0_44, %c0_45] : memref<3x128xf32, #tpu.memory_space<vmem>>, vector<3x128xf32>
    %c0_46 = arith.constant 0 : index
    %c0_47 = arith.constant 0 : index
    %c0_48 = arith.constant 0 : index
    %74 = vector.load %arg12[%c0_46, %c0_47, %c0_48] : memref<2x131x3xf32, #tpu.memory_space<vmem>>, vector<1x131x3xf32>
    %75 = vector.shape_cast %74 : vector<1x131x3xf32> to vector<131x3xf32>
    %76 = vector.extract_strided_slice %75 {offsets = [0, 0], sizes = [131, 1], strides = [1, 1]} : vector<131x3xf32> to vector<131x1xf32>
    %77 = vector.extract_strided_slice %73 {offsets = [0, 0], sizes = [1, 128], strides = [1, 1]} : vector<3x128xf32> to vector<1x128xf32>
    %78 = vector.broadcast %76 : vector<131x1xf32> to vector<131x128xf32>
    %79 = vector.broadcast %77 : vector<1x128xf32> to vector<131x128xf32>
    %80 = arith.mulf %78, %79 : vector<131x128xf32>
    %81 = vector.extract_strided_slice %75 {offsets = [0, 1], sizes = [131, 1], strides = [1, 1]} : vector<131x3xf32> to vector<131x1xf32>
    %82 = vector.extract_strided_slice %73 {offsets = [1, 0], sizes = [1, 128], strides = [1, 1]} : vector<3x128xf32> to vector<1x128xf32>
    %83 = vector.broadcast %81 : vector<131x1xf32> to vector<131x128xf32>
    %84 = vector.broadcast %82 : vector<1x128xf32> to vector<131x128xf32>
    %85 = arith.mulf %83, %84 : vector<131x128xf32>
    %86 = arith.addf %80, %85 : vector<131x128xf32>
    %87 = vector.extract_strided_slice %75 {offsets = [0, 2], sizes = [131, 1], strides = [1, 1]} : vector<131x3xf32> to vector<131x1xf32>
    %88 = vector.extract_strided_slice %73 {offsets = [2, 0], sizes = [1, 128], strides = [1, 1]} : vector<3x128xf32> to vector<1x128xf32>
    %89 = vector.broadcast %87 : vector<131x1xf32> to vector<131x128xf32>
    %90 = vector.broadcast %88 : vector<1x128xf32> to vector<131x128xf32>
    %91 = arith.mulf %89, %90 : vector<131x128xf32>
    %92 = arith.addf %86, %91 : vector<131x128xf32>
    %c0_49 = arith.constant 0 : index
    %c0_50 = arith.constant 0 : index
    %c0_51 = arith.constant 0 : index
    %93 = vector.load %arg14[%c0_49, %c0_50, %c0_51] : memref<2x131x128xf32, #tpu.memory_space<vmem>>, vector<1x131x128xf32>
    %94 = vector.shape_cast %93 : vector<1x131x128xf32> to vector<131x128xf32>
    %95 = vector.shape_cast %92 : vector<131x128xf32> to vector<1x131x128xf32>
    tpu.vector_store %arg14[%c0_49, %c0_50, %c0_51], %95 {strides = array<i32>} : memref<2x131x128xf32, #tpu.memory_space<vmem>>, vector<1x131x128xf32>,
    %c1_52 = arith.constant 1 : index
    %c0_53 = arith.constant 0 : index
    %c0_54 = arith.constant 0 : index
    %96 = vector.load %arg12[%c1_52, %c0_53, %c0_54] : memref<2x131x3xf32, #tpu.memory_space<vmem>>, vector<1x131x3xf32>
    %97 = vector.shape_cast %96 : vector<1x131x3xf32> to vector<131x3xf32>
    %98 = vector.extract_strided_slice %97 {offsets = [0, 0], sizes = [131, 1], strides = [1, 1]} : vector<131x3xf32> to vector<131x1xf32>
    %99 = vector.extract_strided_slice %73 {offsets = [0, 0], sizes = [1, 128], strides = [1, 1]} : vector<3x128xf32> to vector<1x128xf32>
    %100 = vector.broadcast %98 : vector<131x1xf32> to vector<131x128xf32>
    %101 = vector.broadcast %99 : vector<1x128xf32> to vector<131x128xf32>
    %102 = arith.mulf %100, %101 : vector<131x128xf32>
    %103 = vector.extract_strided_slice %97 {offsets = [0, 1], sizes = [131, 1], strides = [1, 1]} : vector<131x3xf32> to vector<131x1xf32>
    %104 = vector.extract_strided_slice %73 {offsets = [1, 0], sizes = [1, 128], strides = [1, 1]} : vector<3x128xf32> to vector<1x128xf32>
    %105 = vector.broadcast %103 : vector<131x1xf32> to vector<131x128xf32>
    %106 = vector.broadcast %104 : vector<1x128xf32> to vector<131x128xf32>
    %107 = arith.mulf %105, %106 : vector<131x128xf32>
    %108 = arith.addf %102, %107 : vector<131x128xf32>
    %109 = vector.extract_strided_slice %97 {offsets = [0, 2], sizes = [131, 1], strides = [1, 1]} : vector<131x3xf32> to vector<131x1xf32>
    %110 = vector.extract_strided_slice %73 {offsets = [2, 0], sizes = [1, 128], strides = [1, 1]} : vector<3x128xf32> to vector<1x128xf32>
    %111 = vector.broadcast %109 : vector<131x1xf32> to vector<131x128xf32>
    %112 = vector.broadcast %110 : vector<1x128xf32> to vector<131x128xf32>
    %113 = arith.mulf %111, %112 : vector<131x128xf32>
    %114 = arith.addf %108, %113 : vector<131x128xf32>
    %c1_55 = arith.constant 1 : index
    %c0_56 = arith.constant 0 : index
    %c0_57 = arith.constant 0 : index
    %115 = vector.load %arg14[%c1_55, %c0_56, %c0_57] : memref<2x131x128xf32, #tpu.memory_space<vmem>>, vector<1x131x128xf32>
    %116 = vector.shape_cast %115 : vector<1x131x128xf32> to vector<131x128xf32>
    %117 = vector.shape_cast %114 : vector<131x128xf32> to vector<1x131x128xf32>
    tpu.vector_store %arg14[%c1_55, %c0_56, %c0_57], %117 {strides = array<i32>} : memref<2x131x128xf32, #tpu.memory_space<vmem>>, vector<1x131x128xf32>,
    return
  }
}

</mosaic_0001>

<llo_original>
// kernel: ae_atlasnet_forward.3
$region0: #{ae_atlasnet_forward.3}
  #allocation0 [shape = 'u32[]', space=smem, size = 0x4, offset = 0x4, fixed_abs, tag = 'smem constant byte address 0x4 - core index']
  #allocation1 [shape = 'u32[144,128]{1,0:T(1,128)}', space=vmem, size = 0x12000, scoped, tag = 'internal scratch']
  %s0 = inlined_call_operand.vmem [shape: f32[2,131,128], index: 0, kind: input, shape index: {}]
  %s1 = inlined_call_operand.vmem [shape: f32[2,2,131,1], index: 1, kind: input, shape index: {}]
  %s2 = inlined_call_operand.vmem [shape: f32[2,65,131], index: 2, kind: input, shape index: {}]
  %s3 = inlined_call_operand.vmem [shape: f32[2,65,1], index: 3, kind: input, shape index: {}]
  %s4 = inlined_call_operand.vmem [shape: f32[2,32,65], index: 4, kind: input, shape index: {}]
  %s5 = inlined_call_operand.vmem [shape: f32[2,32,1], index: 5, kind: input, shape index: {}]
  %s6 = inlined_call_operand.vmem [shape: f32[2,3,32], index: 6, kind: input, shape index: {}]
  %s7 = inlined_call_operand.vmem [shape: f32[2,3,1], index: 7, kind: input, shape index: {}]
  %s8 = inlined_call_operand.vmem [shape: f32[2,2,3,128], index: 8, kind: output, shape index: {}]
  %s9 = sld [smem:[#allocation0]]
  $region65: #{ae_atlasnet_forward.3} parent=0
    _
  %s11 = ssub.s32 1, %s9
  %s12 = scalar_select 0, %s11, %s9
  loop: start=0, step=1, limit=6
  $region2: #{ae_atlasnet_forward.3} parent=0 // loop_pre_header
    _
  $region3: #{ae_atlasnet_forward.3} parent=0 // loop_header
    %s14 = sphi 0, %s18
    %p15 = scmp.ge.s32.totalorder %s14, 6
    %s21 = sphi 0, %s33
    %s22 = sphi 0, %s29
    %s23 = sphi 0, %s21
    %s24 = sphi 0, %s22
    %s25 = sphi 0, %s23
    %s26 = sphi 0, %s24
    %s36 = sphi 0, %s38
    %s39 = sphi 0, %s36
    %s40 = sphi 0, %s39
    %s56 = sphi 0, %s40
    %s64 = sphi 0, %s66
    %s67 = sphi 0, %s64
    %s68 = sphi 0, %s67
    %s84 = sphi 0, %s68
    %s90 = sphi 0, %s92
    %s93 = sphi 0, %s90
    %s94 = sphi 0, %s93
    %s110 = sphi 0, %s94
    %s116 = sphi 0, %s118
    %s119 = sphi 0, %s116
    %s120 = sphi 0, %s119
    %s136 = sphi 0, %s120
    %s142 = sphi 0, %s144
    %s145 = sphi 0, %s142
    %s146 = sphi 0, %s145
    %s162 = sphi 0, %s146
    %s168 = sphi 0, %s170
    %s171 = sphi 0, %s168
    %s172 = sphi 0, %s171
    %s188 = sphi 0, %s172
    %s194 = sphi 0, %s196
    %s197 = sphi 0, %s194
    %s198 = sphi 0, %s197
    %s214 = sphi 0, %s198
    %s220 = sphi 0, %s222
    %s223 = sphi 0, %s220
    %s224 = sphi 0, %s223
    %s240 = sphi 0, %s224
    %s248 = sphi 0, %s250
    %s251 = sphi 0, %s248
    %s252 = sphi 0, %s251
    %s268 = sphi 0, %s252
  $region4: #{ae_atlasnet_forward.3} parent=0 // loop_header_branch
    %17 = sbr.rel (%p15) target = $region8
  $region5: #{ae_atlasnet_forward.3} parent=0 // loop_body
    %s19 = ssub.s32 %s14, 1
    %s20 = ssub.s32 %s14, 2
    %s27 = sadd.s32 1, %s22
    %p28 = scmp.ge.s32.totalorder %s27, 2
    %s29 = scalar_select %p28, 0, %s27
    %s30 = sadd.s32 1, %s21
    %s31 = scalar_select %p28, %s30, %s21
    %p32 = scmp.ge.s32.totalorder %s31, 2
    %s33 = scalar_select %p32, 0, %s31
    %s34 = ssub.s32 %s21, %s33
    %p35 = scmp.eq.s32.totalorder %s34, 0
    %s37 = sadd.s32 %s36, 1
    %s38 = scalar_select %p35, %s36, %s37
    %p41 = pneg %p35
    %p42 = scmp.eq.s32.totalorder %s14, 3
    %p43 = por %p41, %p42
    %p44 = scmp.ne.s32.totalorder %s36, %s39
    %p45 = scmp.eq.s32.totalorder %s14, 0
    %p46 = por %p44, %p45
    %p47 = scmp.ne.s32.totalorder %s36, %s39
    %p48 = scmp.eq.s32.totalorder %s19, 3
    %p49 = por %p47, %p48
    %p50 = scmp.ne.s32.totalorder %s39, %s40
    %p51 = scmp.eq.s32.totalorder %s19, 0
    %p52 = por %p50, %p51
    %p53 = scmp.ne.s32.totalorder %s39, %s40
    %p54 = scmp.eq.s32.totalorder %s20, 3
    %p55 = por %p53, %p54
    %p57 = scmp.ne.s32.totalorder %s40, %s56
    %p58 = scmp.eq.s32.totalorder %s20, 0
    %p59 = por %p57, %p58
    %s60 = ssub.s32 %s21, %s33
    %s61 = ssub.s32 %s22, %s29
    %s62 = sor.u32 %s60, %s61
    %p63 = scmp.eq.s32.totalorder %s62, 0
    %s65 = sadd.s32 %s64, 1
    %s66 = scalar_select %p63, %s64, %s65
    %p69 = pneg %p63
    %p70 = scmp.eq.s32.totalorder %s14, 3
    %p71 = por %p69, %p70
    %p72 = scmp.ne.s32.totalorder %s64, %s67
    %p73 = scmp.eq.s32.totalorder %s14, 0
    %p74 = por %p72, %p73
    %p75 = scmp.ne.s32.totalorder %s64, %s67
    %p76 = scmp.eq.s32.totalorder %s19, 3
    %p77 = por %p75, %p76
    %p78 = scmp.ne.s32.totalorder %s67, %s68
    %p79 = scmp.eq.s32.totalorder %s19, 0
    %p80 = por %p78, %p79
    %p81 = scmp.ne.s32.totalorder %s67, %s68
    %p82 = scmp.eq.s32.totalorder %s20, 3
    %p83 = por %p81, %p82
    %p85 = scmp.ne.s32.totalorder %s68, %s84
    %p86 = scmp.eq.s32.totalorder %s20, 0
    %p87 = por %p85, %p86
    %s88 = ssub.s32 %s21, %s33
    %p89 = scmp.eq.s32.totalorder %s88, 0
    %s91 = sadd.s32 %s90, 1
    %s92 = scalar_select %p89, %s90, %s91
    %p95 = pneg %p89
    %p96 = scmp.eq.s32.totalorder %s14, 3
    %p97 = por %p95, %p96
    %p98 = scmp.ne.s32.totalorder %s90, %s93
    %p99 = scmp.eq.s32.totalorder %s14, 0
    %p100 = por %p98, %p99
    %p101 = scmp.ne.s32.totalorder %s90, %s93
    %p102 = scmp.eq.s32.totalorder %s19, 3
    %p103 = por %p101, %p102
    %p104 = scmp.ne.s32.totalorder %s93, %s94
    %p105 = scmp.eq.s32.totalorder %s19, 0
    %p106 = por %p104, %p105
    %p107 = scmp.ne.s32.totalorder %s93, %s94
    %p108 = scmp.eq.s32.totalorder %s20, 3
    %p109 = por %p107, %p108
    %p111 = scmp.ne.s32.totalorder %s94, %s110
    %p112 = scmp.eq.s32.totalorder %s20, 0
    %p113 = por %p111, %p112
    %s114 = ssub.s32 %s21, %s33
    %p115 = scmp.eq.s32.totalorder %s114, 0
    %s117 = sadd.s32 %s116, 1
    %s118 = scalar_select %p115, %s116, %s117
    %p121 = pneg %p115
    %p122 = scmp.eq.s32.totalorder %s14, 3
    %p123 = por %p121, %p122
    %p124 = scmp.ne.s32.totalorder %s116, %s119
    %p125 = scmp.eq.s32.totalorder %s14, 0
    %p126 = por %p124, %p125
    %p127 = scmp.ne.s32.totalorder %s116, %s119
    %p128 = scmp.eq.s32.totalorder %s19, 3
    %p129 = por %p127, %p128
    %p130 = scmp.ne.s32.totalorder %s119, %s120
    %p131 = scmp.eq.s32.totalorder %s19, 0
    %p132 = por %p130, %p131
    %p133 = scmp.ne.s32.totalorder %s119, %s120
    %p134 = scmp.eq.s32.totalorder %s20, 3
    %p135 = por %p133, %p134
    %p137 = scmp.ne.s32.totalorder %s120, %s136
    %p138 = scmp.eq.s32.totalorder %s20, 0
    %p139 = por %p137, %p138
    %s140 = ssub.s32 %s21, %s33
    %p141 = scmp.eq.s32.totalorder %s140, 0
    %s143 = sadd.s32 %s142, 1
    %s144 = scalar_select %p141, %s142, %s143
    %p147 = pneg %p141
    %p148 = scmp.eq.s32.totalorder %s14, 3
    %p149 = por %p147, %p148
    %p150 = scmp.ne.s32.totalorder %s142, %s145
    %p151 = scmp.eq.s32.totalorder %s14, 0
    %p152 = por %p150, %p151
    %p153 = scmp.ne.s32.totalorder %s142, %s145
    %p154 = scmp.eq.s32.totalorder %s19, 3
    %p155 = por %p153, %p154
    %p156 = scmp.ne.s32.totalorder %s145, %s146
    %p157 = scmp.eq.s32.totalorder %s19, 0
    %p158 = por %p156, %p157
    %p159 = scmp.ne.s32.totalorder %s145, %s146
    %p160 = scmp.eq.s32.totalorder %s20, 3
    %p161 = por %p159, %p160
    %p163 = scmp.ne.s32.totalorder %s146, %s162
    %p164 = scmp.eq.s32.totalorder %s20, 0
    %p165 = por %p163, %p164
    %s166 = ssub.s32 %s21, %s33
    %p167 = scmp.eq.s32.totalorder %s166, 0
    %s169 = sadd.s32 %s168, 1
    %s170 = scalar_select %p167, %s168, %s169
    %p173 = pneg %p167
    %p174 = scmp.eq.s32.totalorder %s14, 3
    %p175 = por %p173, %p174
    %p176 = scmp.ne.s32.totalorder %s168, %s171
    %p177 = scmp.eq.s32.totalorder %s14, 0
    %p178 = por %p176, %p177
    %p179 = scmp.ne.s32.totalorder %s168, %s171
    %p180 = scmp.eq.s32.totalorder %s19, 3
    %p181 = por %p179, %p180
    %p182 = scmp.ne.s32.totalorder %s171, %s172
    %p183 = scmp.eq.s32.totalorder %s19, 0
    %p184 = por %p182, %p183
    %p185 = scmp.ne.s32.totalorder %s171, %s172
    %p186 = scmp.eq.s32.totalorder %s20, 3
    %p187 = por %p185, %p186
    %p189 = scmp.ne.s32.totalorder %s172, %s188
    %p190 = scmp.eq.s32.totalorder %s20, 0
    %p191 = por %p189, %p190
    %s192 = ssub.s32 %s21, %s33
    %p193 = scmp.eq.s32.totalorder %s192, 0
    %s195 = sadd.s32 %s194, 1
    %s196 = scalar_select %p193, %s194, %s195
    %p199 = pneg %p193
    %p200 = scmp.eq.s32.totalorder %s14, 3
    %p201 = por %p199, %p200
    %p202 = scmp.ne.s32.totalorder %s194, %s197
    %p203 = scmp.eq.s32.totalorder %s14, 0
    %p204 = por %p202, %p203
    %p205 = scmp.ne.s32.totalorder %s194, %s197
    %p206 = scmp.eq.s32.totalorder %s19, 3
    %p207 = por %p205, %p206
    %p208 = scmp.ne.s32.totalorder %s197, %s198
    %p209 = scmp.eq.s32.totalorder %s19, 0
    %p210 = por %p208, %p209
    %p211 = scmp.ne.s32.totalorder %s197, %s198
    %p212 = scmp.eq.s32.totalorder %s20, 3
    %p213 = por %p211, %p212
    %p215 = scmp.ne.s32.totalorder %s198, %s214
    %p216 = scmp.eq.s32.totalorder %s20, 0
    %p217 = por %p215, %p216
    %s218 = ssub.s32 %s21, %s33
    %p219 = scmp.eq.s32.totalorder %s218, 0
    %s221 = sadd.s32 %s220, 1
    %s222 = scalar_select %p219, %s220, %s221
    %p225 = pneg %p219
    %p226 = scmp.eq.s32.totalorder %s14, 3
    %p227 = por %p225, %p226
    %p228 = scmp.ne.s32.totalorder %s220, %s223
    %p229 = scmp.eq.s32.totalorder %s14, 0
    %p230 = por %p228, %p229
    %p231 = scmp.ne.s32.totalorder %s220, %s223
    %p232 = scmp.eq.s32.totalorder %s19, 3
    %p233 = por %p231, %p232
    %p234 = scmp.ne.s32.totalorder %s223, %s224
    %p235 = scmp.eq.s32.totalorder %s19, 0
    %p236 = por %p234, %p235
    %p237 = scmp.ne.s32.totalorder %s223, %s224
    %p238 = scmp.eq.s32.totalorder %s20, 3
    %p239 = por %p237, %p238
    %p241 = scmp.ne.s32.totalorder %s224, %s240
    %p242 = scmp.eq.s32.totalorder %s20, 0
    %p243 = por %p241, %p242
    %s244 = ssub.s32 %s22, %s29
    %s245 = ssub.s32 %s21, %s33
    %s246 = sor.u32 %s244, %s245
    %p247 = scmp.eq.s32.totalorder %s246, 0
    %s249 = sadd.s32 %s248, 1
    %s250 = scalar_select %p247, %s248, %s249
    %p253 = pneg %p247
    %p254 = scmp.eq.s32.totalorder %s14, 3
    %p255 = por %p253, %p254
    %p256 = scmp.ne.s32.totalorder %s248, %s251
    %p257 = scmp.eq.s32.totalorder %s14, 0
    %p258 = por %p256, %p257
    %p259 = scmp.ne.s32.totalorder %s248, %s251
    %p260 = scmp.eq.s32.totalorder %s19, 3
    %p261 = por %p259, %p260
    %p262 = scmp.ne.s32.totalorder %s251, %s252
    %p263 = scmp.eq.s32.totalorder %s19, 0
    %p264 = por %p262, %p263
    %p265 = scmp.ne.s32.totalorder %s251, %s252
    %p266 = scmp.eq.s32.totalorder %s20, 3
    %p267 = por %p265, %p266
    %p269 = scmp.ne.s32.totalorder %s252, %s268
    %p270 = scmp.eq.s32.totalorder %s20, 0
    %p271 = por %p269, %p270
    %p272 = scmp.le.s32.totalorder 1, %s14
    %p273 = scmp.lt.s32.totalorder %s14, 5
    %p274 = pnand %p272, %p273
    %p275 = pneg %p274
    // Predicated region
    $region9: #{ae_atlasnet_forward.3} parent=5 // pred_check
      _
    $region10: #{ae_atlasnet_forward.3} parent=5 // pred_check_branch
      %277 = sbr.rel (%p274) target = $region12
    $region11: #{ae_atlasnet_forward.3} parent=5 // pred_region
      %s278 = ssub.s32 %s14, 1
    $region12: #{ae_atlasnet_forward.3} parent=5 // pred_fallthru
      _
    %p279 = scmp.lt.s32.totalorder %s14, 4
    // Predicated region
    $region13: #{ae_atlasnet_forward.3} parent=5 // pred_check
      %p280 = pneg %p279
    $region14: #{ae_atlasnet_forward.3} parent=5 // pred_check_branch
      %282 = sbr.rel (%p280) target = $region16
    $region15: #{ae_atlasnet_forward.3} parent=5 // pred_region
      // Predicated region
      $region17: #{ae_atlasnet_forward.3} parent=15 // pred_check
        %p283 = pneg %p46
      $region18: #{ae_atlasnet_forward.3} parent=15 // pred_check_branch
        %285 = sbr.rel (%p283) target = $region20
      $region19: #{ae_atlasnet_forward.3} parent=15 // pred_region
        %p286 = scmp.lt.s32.totalorder %s21, 1
        %s287 = scalar_select %p286, %s21, 1
        %s288 = smul.addr %s287, 17
        %s289 = smul.addr %s288, 8
        %s290 = scalar_lea.vmem %s0, %s289
      $region20: #{ae_atlasnet_forward.3} parent=15 // pred_fallthru
        _
      // Predicated region
      $region21: #{ae_atlasnet_forward.3} parent=15 // pred_check
        %p291 = pneg %p74
      $region22: #{ae_atlasnet_forward.3} parent=15 // pred_check_branch
        %293 = sbr.rel (%p291) target = $region24
      $region23: #{ae_atlasnet_forward.3} parent=15 // pred_region
        %p294 = scmp.lt.s32.totalorder %s21, 1
        %s295 = scalar_select %p294, %s21, 1
        %p296 = scmp.lt.s32.totalorder %s22, 1
        %s297 = scalar_select %p296, %s22, 1
        %s298 = smul.addr %s297, 17
        %s299 = smul.addr %s295, 34
        %s300 = sadd.s32 %s298, %s299
        %s301 = smul.addr %s300, 8
        %s302 = scalar_lea.vmem %s1, %s301
      $region24: #{ae_atlasnet_forward.3} parent=15 // pred_fallthru
        _
      // Predicated region
      $region25: #{ae_atlasnet_forward.3} parent=15 // pred_check
        %p303 = pneg %p100
      $region26: #{ae_atlasnet_forward.3} parent=15 // pred_check_branch
        %305 = sbr.rel (%p303) target = $region28
      $region27: #{ae_atlasnet_forward.3} parent=15 // pred_region
        %p306 = scmp.lt.s32.totalorder %s21, 1
        %s307 = scalar_select %p306, %s21, 1
        %s308 = smul.addr %s307, 18
        %s309 = smul.addr %s308, 8
        %s310 = scalar_lea.vmem %s2, %s309
      $region28: #{ae_atlasnet_forward.3} parent=15 // pred_fallthru
        _
      // Predicated region
      $region29: #{ae_atlasnet_forward.3} parent=15 // pred_check
        %p311 = pneg %p126
      $region30: #{ae_atlasnet_forward.3} parent=15 // pred_check_branch
        %313 = sbr.rel (%p311) target = $region32
      $region31: #{ae_atlasnet_forward.3} parent=15 // pred_region
        %p314 = scmp.lt.s32.totalorder %s21, 1
        %s315 = scalar_select %p314, %s21, 1
        %s316 = smul.addr %s315, 9
        %s317 = smul.addr %s316, 8
        %s318 = scalar_lea.vmem %s3, %s317
      $region32: #{ae_atlasnet_forward.3} parent=15 // pred_fallthru
        _
      // Predicated region
      $region33: #{ae_atlasnet_forward.3} parent=15 // pred_check
        %p319 = pneg %p152
      $region34: #{ae_atlasnet_forward.3} parent=15 // pred_check_branch
        %321 = sbr.rel (%p319) target = $region36
      $region35: #{ae_atlasnet_forward.3} parent=15 // pred_region
        %p322 = scmp.lt.s32.totalorder %s21, 1
        %s323 = scalar_select %p322, %s21, 1
        %s324 = smul.addr %s323, 4
        %s325 = smul.addr %s324, 8
        %s326 = scalar_lea.vmem %s4, %s325
      $region36: #{ae_atlasnet_forward.3} parent=15 // pred_fallthru
        _
      // Predicated region
      $region37: #{ae_atlasnet_forward.3} parent=15 // pred_check
        %p327 = pneg %p178
      $region38: #{ae_atlasnet_forward.3} parent=15 // pred_check_branch
        %329 = sbr.rel (%p327) target = $region40
      $region39: #{ae_atlasnet_forward.3} parent=15 // pred_region
        %p330 = scmp.lt.s32.totalorder %s21, 1
        %s331 = scalar_select %p330, %s21, 1
        %s332 = smul.addr %s331, 4
        %s333 = smul.addr %s332, 8
        %s334 = scalar_lea.vmem %s5, %s333
      $region40: #{ae_atlasnet_forward.3} parent=15 // pred_fallthru
        _
      // Predicated region
      $region41: #{ae_atlasnet_forward.3} parent=15 // pred_check
        %p335 = pneg %p204
      $region42: #{ae_atlasnet_forward.3} parent=15 // pred_check_branch
        %337 = sbr.rel (%p335) target = $region44
      $region43: #{ae_atlasnet_forward.3} parent=15 // pred_region
        %p338 = scmp.lt.s32.totalorder %s21, 1
        %s339 = scalar_select %p338, %s21, 1
        %s340 = smul.addr %s339, 4
        %s341 = scalar_lea.vmem %s6, %s340
      $region44: #{ae_atlasnet_forward.3} parent=15 // pred_fallthru
        _
      // Predicated region
      $region45: #{ae_atlasnet_forward.3} parent=15 // pred_check
        %p342 = pneg %p230
      $region46: #{ae_atlasnet_forward.3} parent=15 // pred_check_branch
        %344 = sbr.rel (%p342) target = $region48
      $region47: #{ae_atlasnet_forward.3} parent=15 // pred_region
        %p345 = scmp.lt.s32.totalorder %s21, 1
        %s346 = scalar_select %p345, %s21, 1
        %s347 = smul.addr %s346, 4
        %s348 = scalar_lea.vmem %s7, %s347
      $region48: #{ae_atlasnet_forward.3} parent=15 // pred_fallthru
        _
    $region16: #{ae_atlasnet_forward.3} parent=5 // pred_fallthru
      _
    %p349 = scmp.le.s32.totalorder 1, %s14
    %p350 = scmp.lt.s32.totalorder %s14, 5
    %p351 = pnand %p349, %p350
    %p352 = pneg %p351
    // Predicated region
    $region49: #{ae_atlasnet_forward.3} parent=5 // pred_check
      _
    $region50: #{ae_atlasnet_forward.3} parent=5 // pred_check_branch
      %354 = sbr.rel (%p351) target = $region52
    $region51: #{ae_atlasnet_forward.3} parent=5 // pred_region
      %s355 = ssub.s32 %s14, 1
      %p356 = scmp.lt.s32.totalorder %s23, 1
      %s357 = scalar_select %p356, %s23, 1
      %s358 = smul.addr %s357, 17
      %s359 = smul.addr %s358, 8
      %s360 = scalar_lea.vmem %s0, %s359
      %p361 = pneg %p52
      %p362 = pneg %p49
      %p363 = scmp.lt.s32.totalorder %s23, 1
      %s364 = scalar_select %p363, %s23, 1
      %p365 = scmp.lt.s32.totalorder %s24, 1
      %s366 = scalar_select %p365, %s24, 1
      %s367 = smul.addr %s366, 17
      %s368 = smul.addr %s364, 34
      %s369 = sadd.s32 %s367, %s368
      %s370 = smul.addr %s369, 8
      %s371 = scalar_lea.vmem %s1, %s370
      %p372 = pneg %p80
      %p373 = pneg %p77
      %p374 = scmp.lt.s32.totalorder %s23, 1
      %s375 = scalar_select %p374, %s23, 1
      %s376 = smul.addr %s375, 18
      %s377 = smul.addr %s376, 8
      %s378 = scalar_lea.vmem %s2, %s377
      %p379 = pneg %p106
      %p380 = pneg %p103
      %p381 = scmp.lt.s32.totalorder %s23, 1
      %s382 = scalar_select %p381, %s23, 1
      %s383 = smul.addr %s382, 9
      %s384 = smul.addr %s383, 8
      %s385 = scalar_lea.vmem %s3, %s384
      %p386 = pneg %p132
      %p387 = pneg %p129
      %p388 = scmp.lt.s32.totalorder %s23, 1
      %s389 = scalar_select %p388, %s23, 1
      %s390 = smul.addr %s389, 4
      %s391 = smul.addr %s390, 8
      %s392 = scalar_lea.vmem %s4, %s391
      %p393 = pneg %p158
      %p394 = pneg %p155
      %p395 = scmp.lt.s32.totalorder %s23, 1
      %s396 = scalar_select %p395, %s23, 1
      %s397 = smul.addr %s396, 4
      %s398 = smul.addr %s397, 8
      %s399 = scalar_lea.vmem %s5, %s398
      %p400 = pneg %p184
      %p401 = pneg %p181
      %p402 = scmp.lt.s32.totalorder %s23, 1
      %s403 = scalar_select %p402, %s23, 1
      %s404 = smul.addr %s403, 4
      %s405 = scalar_lea.vmem %s6, %s404
      %p406 = pneg %p210
      %p407 = pneg %p207
      %p408 = scmp.lt.s32.totalorder %s23, 1
      %s409 = scalar_select %p408, %s23, 1
      %s410 = smul.addr %s409, 4
      %s411 = scalar_lea.vmem %s7, %s410
      %p412 = pneg %p236
      %p413 = pneg %p233
      %p414 = pneg %p264
      %p415 = pneg %p261
      %p416 = scmp.lt.s32.totalorder %s24, 1
      %s417 = scalar_select %p416, %s24, 1
      %p418 = scmp.lt.s32.totalorder %s23, 1
      %s419 = scalar_select %p418, %s23, 1
      %s420 = smul.addr %s417, 2
      %s421 = sadd.s32 %s419, %s420
      %s422 = smul.addr %s421, 4
      %s423 = scalar_lea.vmem %s8, %s422
      %p424 = scmp.lt.s32.totalorder %s23, 1
      %s425 = scalar_select %p424, %s23, 1
      %s426 = smul.addr %s425, 17
      %s427 = smul.addr %s426, 8
      %s428 = scalar_lea.vmem %s0, %s427
      %p429 = scmp.lt.s32.totalorder %s23, 1
      %s430 = scalar_select %p429, %s23, 1
      %p431 = scmp.lt.s32.totalorder %s24, 1
      %s432 = scalar_select %p431, %s24, 1
      %s433 = smul.addr %s432, 17
      %s434 = smul.addr %s430, 34
      %s435 = sadd.s32 %s433, %s434
      %s436 = smul.addr %s435, 8
      %s437 = scalar_lea.vmem %s1, %s436
      %p438 = scmp.lt.s32.totalorder %s23, 1
      %s439 = scalar_select %p438, %s23, 1
      %s440 = smul.addr %s439, 18
      %s441 = smul.addr %s440, 8
      %s442 = scalar_lea.vmem %s2, %s441
      %p443 = scmp.lt.s32.totalorder %s23, 1
      %s444 = scalar_select %p443, %s23, 1
      %s445 = smul.addr %s444, 9
      %s446 = smul.addr %s445, 8
      %s447 = scalar_lea.vmem %s3, %s446
      %p448 = scmp.lt.s32.totalorder %s23, 1
      %s449 = scalar_select %p448, %s23, 1
      %s450 = smul.addr %s449, 4
      %s451 = smul.addr %s450, 8
      %s452 = scalar_lea.vmem %s4, %s451
      %p453 = scmp.lt.s32.totalorder %s23, 1
      %s454 = scalar_select %p453, %s23, 1
      %s455 = smul.addr %s454, 4
      %s456 = smul.addr %s455, 8
      %s457 = scalar_lea.vmem %s5, %s456
      %p458 = scmp.lt.s32.totalorder %s23, 1
      %s459 = scalar_select %p458, %s23, 1
      %s460 = smul.addr %s459, 4
      %s461 = scalar_lea.vmem %s6, %s460
      %p462 = scmp.lt.s32.totalorder %s23, 1
      %s463 = scalar_select %p462, %s23, 1
      %s464 = smul.addr %s463, 4
      %s465 = scalar_lea.vmem %s7, %s464
      %p466 = scmp.lt.s32.totalorder %s24, 1
      %s467 = scalar_select %p466, %s24, 1
      %p468 = scmp.lt.s32.totalorder %s23, 1
      %s469 = scalar_select %p468, %s23, 1
      %s470 = smul.addr %s467, 2
      %s471 = sadd.s32 %s469, %s470
      %s472 = smul.addr %s471, 4
      %s473 = scalar_lea.vmem %s8, %s472
      %v474 = vld [vmem:[%s428] sm:$0xff]
      %v475 = vld [vmem:[%s428 + $0x8] sm:$0xff]
      %v476 = vld [vmem:[%s428 + $0x10] sm:$0xff]
      %v477 = vld [vmem:[%s428 + $0x18] sm:$0xff]
      %v478 = vld [vmem:[%s428 + $0x20] sm:$0xff]
      %v479 = vld [vmem:[%s428 + $0x28] sm:$0xff]
      %v480 = vld [vmem:[%s428 + $0x30] sm:$0xff]
      %v481 = vld [vmem:[%s428 + $0x38] sm:$0xff]
      %v482 = vld [vmem:[%s428 + $0x40] sm:$0xff]
      %v483 = vld [vmem:[%s428 + $0x48] sm:$0xff]
      %v484 = vld [vmem:[%s428 + $0x50] sm:$0xff]
      %v485 = vld [vmem:[%s428 + $0x58] sm:$0xff]
      %v486 = vld [vmem:[%s428 + $0x60] sm:$0xff]
      %v487 = vld [vmem:[%s428 + $0x68] sm:$0xff]
      %v488 = vld [vmem:[%s428 + $0x70] sm:$0xff]
      %v489 = vld [vmem:[%s428 + $0x78] sm:$0xff]
      %v490 = vld [vmem:[%s428 + $0x80] sm:$0x7]
      %v491 = vld [vmem:[%s437] sm:$0xff]
      %v492 = vld [vmem:[%s437 + $0x8] sm:$0xff]
      %v493 = vld [vmem:[%s437 + $0x10] sm:$0xff]
      %v494 = vld [vmem:[%s437 + $0x18] sm:$0xff]
      %v495 = vld [vmem:[%s437 + $0x20] sm:$0xff]
      %v496 = vld [vmem:[%s437 + $0x28] sm:$0xff]
      %v497 = vld [vmem:[%s437 + $0x30] sm:$0xff]
      %v498 = vld [vmem:[%s437 + $0x38] sm:$0xff]
      %v499 = vld [vmem:[%s437 + $0x40] sm:$0xff]
      %v500 = vld [vmem:[%s437 + $0x48] sm:$0xff]
      %v501 = vld [vmem:[%s437 + $0x50] sm:$0xff]
      %v502 = vld [vmem:[%s437 + $0x58] sm:$0xff]
      %v503 = vld [vmem:[%s437 + $0x60] sm:$0xff]
      %v504 = vld [vmem:[%s437 + $0x68] sm:$0xff]
      %v505 = vld [vmem:[%s437 + $0x70] sm:$0xff]
      %v506 = vld [vmem:[%s437 + $0x78] sm:$0xff]
      %v507 = vld [vmem:[%s437 + $0x80] sm:$0x7]
      %509 = vset.pattern.permute.xlu0 0
      %510 = vperm.xlu0 %509, %v491
      %v511 = vpop.permute.xlu0 %510
      %514 = vset.pattern.permute.xlu0 0
      %515 = vperm.xlu0 %514, %v492
      %v516 = vpop.permute.xlu0 %515
      %519 = vset.pattern.permute.xlu0 0
      %520 = vperm.xlu0 %519, %v493
      %v521 = vpop.permute.xlu0 %520
      %524 = vset.pattern.permute.xlu0 0
      %525 = vperm.xlu0 %524, %v494
      %v526 = vpop.permute.xlu0 %525
      %529 = vset.pattern.permute.xlu0 0
      %530 = vperm.xlu0 %529, %v495
      %v531 = vpop.permute.xlu0 %530
      %534 = vset.pattern.permute.xlu0 0
      %535 = vperm.xlu0 %534, %v496
      %v536 = vpop.permute.xlu0 %535
      %539 = vset.pattern.permute.xlu0 0
      %540 = vperm.xlu0 %539, %v497
      %v541 = vpop.permute.xlu0 %540
      %544 = vset.pattern.permute.xlu0 0
      %545 = vperm.xlu0 %544, %v498
      %v546 = vpop.permute.xlu0 %545
      %549 = vset.pattern.permute.xlu0 0
      %550 = vperm.xlu0 %549, %v499
      %v551 = vpop.permute.xlu0 %550
      %554 = vset.pattern.permute.xlu0 0
      %555 = vperm.xlu0 %554, %v500
      %v556 = vpop.permute.xlu0 %555
      %559 = vset.pattern.permute.xlu0 0
      %560 = vperm.xlu0 %559, %v501
      %v561 = vpop.permute.xlu0 %560
      %564 = vset.pattern.permute.xlu0 0
      %565 = vperm.xlu0 %564, %v502
      %v566 = vpop.permute.xlu0 %565
      %569 = vset.pattern.permute.xlu0 0
      %570 = vperm.xlu0 %569, %v503
      %v571 = vpop.permute.xlu0 %570
      %574 = vset.pattern.permute.xlu0 0
      %575 = vperm.xlu0 %574, %v504
      %v576 = vpop.permute.xlu0 %575
      %579 = vset.pattern.permute.xlu0 0
      %580 = vperm.xlu0 %579, %v505
      %v581 = vpop.permute.xlu0 %580
      %584 = vset.pattern.permute.xlu0 0
      %585 = vperm.xlu0 %584, %v506
      %v586 = vpop.permute.xlu0 %585
      %589 = vset.pattern.permute.xlu0 0
      %590 = vperm.xlu0 %589, %v507
      %v591 = vpop.permute.xlu0 %590
      %v593 = vadd.f32 %v474, %v511
      %v594 = vadd.f32 %v475, %v516
      %v595 = vadd.f32 %v476, %v521
      %v596 = vadd.f32 %v477, %v526
      %v597 = vadd.f32 %v478, %v531
      %v598 = vadd.f32 %v479, %v536
      %v599 = vadd.f32 %v480, %v541
      %v600 = vadd.f32 %v481, %v546
      %v601 = vadd.f32 %v482, %v551
      %v602 = vadd.f32 %v483, %v556
      %v603 = vadd.f32 %v484, %v561
      %v604 = vadd.f32 %v485, %v566
      %v605 = vadd.f32 %v486, %v571
      %v606 = vadd.f32 %v487, %v576
      %v607 = vadd.f32 %v488, %v581
      %v608 = vadd.f32 %v489, %v586
      %v609 = vadd.f32 %v490, %v591
      %v610 = vmax.f32 %v593, 0.0
      %v611 = vmax.f32 %v594, 0.0
      %v612 = vmax.f32 %v595, 0.0
      %v613 = vmax.f32 %v596, 0.0
      %v614 = vmax.f32 %v597, 0.0
      %v615 = vmax.f32 %v598, 0.0
      %v616 = vmax.f32 %v599, 0.0
      %v617 = vmax.f32 %v600, 0.0
      %v618 = vmax.f32 %v601, 0.0
      %v619 = vmax.f32 %v602, 0.0
      %v620 = vmax.f32 %v603, 0.0
      %v621 = vmax.f32 %v604, 0.0
      %v622 = vmax.f32 %v605, 0.0
      %v623 = vmax.f32 %v606, 0.0
      %v624 = vmax.f32 %v607, 0.0
      %v625 = vmax.f32 %v608, 0.0
      %v626 = vmax.f32 %v609, 0.0
      %v627 = vld [vmem:[%s442] sm:$0xff]
      %v628 = vld [vmem:[%s442 + $0x8] sm:$0xff]
      %v629 = vld [vmem:[%s442 + $0x10] sm:$0xff]
      %v630 = vld [vmem:[%s442 + $0x18] sm:$0xff]
      %v631 = vld [vmem:[%s442 + $0x20] sm:$0xff]
      %v632 = vld [vmem:[%s442 + $0x28] sm:$0xff]
      %v633 = vld [vmem:[%s442 + $0x30] sm:$0xff]
      %v634 = vld [vmem:[%s442 + $0x38] sm:$0xff]
      %v635 = vld [vmem:[%s442 + $0x40] sm:$0xff]
      %v636 = vld [vmem:[%s442 + $0x48] sm:$0xff]
      %v637 = vld [vmem:[%s442 + $0x50] sm:$0xff]
      %v638 = vld [vmem:[%s442 + $0x58] sm:$0xff]
      %v639 = vld [vmem:[%s442 + $0x60] sm:$0xff]
      %v640 = vld [vmem:[%s442 + $0x68] sm:$0xff]
      %v641 = vld [vmem:[%s442 + $0x70] sm:$0xff]
      %v642 = vld [vmem:[%s442 + $0x78] sm:$0xff]
      %v643 = vld [vmem:[%s442 + $0x80] sm:$0x1]
      %v644 = vld [vmem:[%s442 + $0x88] sm:$0x1]
      %v645 = vld [vmem:[%s447] sm:$0xff]
      %v646 = vld [vmem:[%s447 + $0x8] sm:$0xff]
      %v647 = vld [vmem:[%s447 + $0x10] sm:$0xff]
      %v648 = vld [vmem:[%s447 + $0x18] sm:$0xff]
      %v649 = vld [vmem:[%s447 + $0x20] sm:$0xff]
      %v650 = vld [vmem:[%s447 + $0x28] sm:$0xff]
      %v651 = vld [vmem:[%s447 + $0x30] sm:$0xff]
      %v652 = vld [vmem:[%s447 + $0x38] sm:$0xff]
      %v653 = vld [vmem:[%s447 + $0x40] sm:$0x1]
      %655 = vset.pattern.permute.xlu0 0
      %656 = vperm.xlu0 %655, %v645
      %v657 = vpop.permute.xlu0 %656
      %660 = vset.pattern.permute.xlu0 0
      %661 = vperm.xlu0 %660, %v646
      %v662 = vpop.permute.xlu0 %661
      %665 = vset.pattern.permute.xlu0 0
      %666 = vperm.xlu0 %665, %v647
      %v667 = vpop.permute.xlu0 %666
      %670 = vset.pattern.permute.xlu0 0
      %671 = vperm.xlu0 %670, %v648
      %v672 = vpop.permute.xlu0 %671
      %675 = vset.pattern.permute.xlu0 0
      %676 = vperm.xlu0 %675, %v649
      %v677 = vpop.permute.xlu0 %676
      %680 = vset.pattern.permute.xlu0 0
      %681 = vperm.xlu0 %680, %v650
      %v682 = vpop.permute.xlu0 %681
      %685 = vset.pattern.permute.xlu0 0
      %686 = vperm.xlu0 %685, %v651
      %v687 = vpop.permute.xlu0 %686
      %690 = vset.pattern.permute.xlu0 0
      %691 = vperm.xlu0 %690, %v652
      %v692 = vpop.permute.xlu0 %691
      %695 = vset.pattern.permute.xlu0 0
      %696 = vperm.xlu0 %695, %v653
      %v697 = vpop.permute.xlu0 %696
      %vm699 = vcmask 23552
      %v701 = vsel %vm699, %v628, 0
      %v704 = vsel %vm699, %v630, 0
      %v707 = vsel %vm699, %v632, 0
      %v710 = vsel %vm699, %v634, 0
      %v713 = vsel %vm699, %v636, 0
      %v716 = vsel %vm699, %v638, 0
      %v719 = vsel %vm699, %v640, 0
      %v722 = vsel %vm699, %v642, 0
      %v725 = vsel %vm699, %v644, 0
      %vm727 = vcmask 1042432
      %v729 = vsel %vm727, %v626, 0
      %731 = vmatprep.subr.mxu0 0.0
      %732 = vmatpush1.msra.mxu0 %v625
      %733 = vmatprep.subr.mxu0 0.0
      %734 = vmatpush1.msra.mxu0 %v624
      %735 = vmatprep.subr.mxu0 0.0
      %736 = vmatpush1.msra.mxu0 %v623
      %737 = vmatprep.subr.mxu0 0.0
      %738 = vmatpush1.msra.mxu0 %v622
      %739 = vmatprep.subr.mxu0 0.0
      %740 = vmatpush1.msra.mxu0 %v621
      %741 = vmatprep.subr.mxu0 0.0
      %742 = vmatpush1.msra.mxu0 %v620
      %743 = vmatprep.subr.mxu0 0.0
      %744 = vmatpush1.msra.mxu0 %v619
      %745 = vmatprep.subr.mxu0 0.0
      %746 = vmatpush1.msra.mxu0 %v618
      %747 = vmatprep.subr.mxu0 0.0
      %748 = vmatpush1.msra.mxu0 %v617
      %749 = vmatprep.subr.mxu0 0.0
      %750 = vmatpush1.msra.mxu0 %v616
      %751 = vmatprep.subr.mxu0 0.0
      %752 = vmatpush1.msra.mxu0 %v615
      %753 = vmatprep.subr.mxu0 0.0
      %754 = vmatpush1.msra.mxu0 %v614
      %755 = vmatprep.subr.mxu0 0.0
      %756 = vmatpush1.msra.mxu0 %v613
      %757 = vmatprep.subr.mxu0 0.0
      %758 = vmatpush1.msra.mxu0 %v612
      %759 = vmatprep.subr.mxu0 0.0
      %760 = vmatpush1.msra.mxu0 %v611
      %761 = vmatprep.subr.mxu0 0.0
      %762 = vmatpush1.msra.mxu0 %v610
      %763 = vmatprep.subr.mxu0 0.0
      %764 = vmatpush2.msra.mxu0 0.0
      %765 = vmatprep.subr.mxu0 0.0
      %766 = vmatpush2.msra.mxu0 0.0
      %767 = vmatprep.subr.mxu0 0.0
      %768 = vmatpush2.msra.mxu0 0.0
      %769 = vmatprep.subr.mxu0 0.0
      %770 = vmatpush2.msra.mxu0 0.0
      %771 = vmatprep.subr.mxu0 0.0
      %772 = vmatpush2.msra.mxu0 0.0
      %773 = vmatprep.subr.mxu0 0.0
      %774 = vmatpush2.msra.mxu0 0.0
      %775 = vmatprep.subr.mxu0 0.0
      %776 = vmatpush2.msra.mxu0 0.0
      %777 = vmatprep.subr.mxu0 0.0
      %778 = vmatpush2.msra.mxu0 0.0
      %779 = vmatprep.subr.mxu0 0.0
      %780 = vmatpush2.msra.mxu0 0.0
      %781 = vmatprep.subr.mxu0 0.0
      %782 = vmatpush2.msra.mxu0 0.0
      %783 = vmatprep.subr.mxu0 0.0
      %784 = vmatpush2.msra.mxu0 0.0
      %785 = vmatprep.subr.mxu0 0.0
      %786 = vmatpush2.msra.mxu0 0.0
      %787 = vmatprep.subr.mxu0 0.0
      %788 = vmatpush2.msra.mxu0 0.0
      %789 = vmatprep.subr.mxu0 0.0
      %790 = vmatpush2.msra.mxu0 0.0
      %791 = vmatprep.subr.mxu0 0.0
      %792 = vmatpush2.msra.mxu0 0.0
      %793 = vmatprep.subr.mxu0 0.0
      %794 = vmatpush2.msra.mxu0 %v729
      %795 = vmatprep.mubr.f32.mxu0 %v701
      %796 = vmatmul.mubr.f32.gmra.mxu0 %v627
      %v797 = vpop.f32.mrf.mxu0
      %v798 = vadd.f32 %v657, %v797
      %v799 = vpop.f32.mrf.mxu0
      %800 = vmatprep.mubr.f32.mxu0 %v704
      %801 = vmatmul.mubr.f32.gmra.mxu0 %v629
      %v802 = vpop.f32.mrf.mxu0
      %v803 = vadd.f32 %v662, %v802
      %v804 = vpop.f32.mrf.mxu0
      %805 = vmatprep.mubr.f32.mxu0 %v707
      %806 = vmatmul.mubr.f32.gmra.mxu0 %v631
      %v807 = vpop.f32.mrf.mxu0
      %v808 = vadd.f32 %v667, %v807
      %v809 = vpop.f32.mrf.mxu0
      %810 = vmatprep.mubr.f32.mxu0 %v710
      %811 = vmatmul.mubr.f32.gmra.mxu0 %v633
      %v812 = vpop.f32.mrf.mxu0
      %v813 = vadd.f32 %v672, %v812
      %v814 = vpop.f32.mrf.mxu0
      %815 = vmatprep.mubr.f32.mxu0 %v713
      %816 = vmatmul.mubr.f32.gmra.mxu0 %v635
      %v817 = vpop.f32.mrf.mxu0
      %v818 = vadd.f32 %v677, %v817
      %v819 = vpop.f32.mrf.mxu0
      %820 = vmatprep.mubr.f32.mxu0 %v716
      %821 = vmatmul.mubr.f32.gmra.mxu0 %v637
      %v822 = vpop.f32.mrf.mxu0
      %v823 = vadd.f32 %v682, %v822
      %v824 = vpop.f32.mrf.mxu0
      %825 = vmatprep.mubr.f32.mxu0 %v719
      %826 = vmatmul.mubr.f32.gmra.mxu0 %v639
      %v827 = vpop.f32.mrf.mxu0
      %v828 = vadd.f32 %v687, %v827
      %v829 = vpop.f32.mrf.mxu0
      %830 = vmatprep.mubr.f32.mxu0 %v722
      %831 = vmatmul.mubr.f32.gmra.mxu0 %v641
      %v832 = vpop.f32.mrf.mxu0
      %v833 = vadd.f32 %v692, %v832
      %v834 = vpop.f32.mrf.mxu0
      %835 = vmatprep.mubr.f32.mxu0 %v725
      %836 = vmatmul.mubr.f32.gmra.mxu0 %v643
      %v837 = vpop.f32.mrf.mxu0
      %v838 = vadd.f32 %v697, %v837
      %v839 = vpop.f32.mrf.mxu0
      %840 = vdwg.mxu0
      %v841 = vmax.f32 %v798, 0.0
      %v842 = vmax.f32 %v803, 0.0
      %v843 = vmax.f32 %v808, 0.0
      %v844 = vmax.f32 %v813, 0.0
      %v845 = vmax.f32 %v818, 0.0
      %v846 = vmax.f32 %v823, 0.0
      %v847 = vmax.f32 %v828, 0.0
      %v848 = vmax.f32 %v833, 0.0
      %v849 = vmax.f32 %v838, 0.0
      %v850 = vld [vmem:[%s452] sm:$0xff]
      %v851 = vld [vmem:[%s452 + $0x8] sm:$0xff]
      %v852 = vld [vmem:[%s452 + $0x10] sm:$0xff]
      %v853 = vld [vmem:[%s452 + $0x18] sm:$0xff]
      %v854 = vld [vmem:[%s457] sm:$0xff]
      %v855 = vld [vmem:[%s457 + $0x8] sm:$0xff]
      %v856 = vld [vmem:[%s457 + $0x10] sm:$0xff]
      %v857 = vld [vmem:[%s457 + $0x18] sm:$0xff]
      %859 = vset.pattern.permute.xlu0 0
      %860 = vperm.xlu0 %859, %v854
      %v861 = vpop.permute.xlu0 %860
      %864 = vset.pattern.permute.xlu0 0
      %865 = vperm.xlu0 %864, %v855
      %v866 = vpop.permute.xlu0 %865
      %869 = vset.pattern.permute.xlu0 0
      %870 = vperm.xlu0 %869, %v856
      %v871 = vpop.permute.xlu0 %870
      %874 = vset.pattern.permute.xlu0 0
      %875 = vperm.xlu0 %874, %v857
      %v876 = vpop.permute.xlu0 %875
      %vm878 = vcmask 531456
      %v880 = vsel %vm878, %v850, 0
      %v883 = vsel %vm878, %v851, 0
      %v886 = vsel %vm878, %v852, 0
      %v889 = vsel %vm878, %v853, 0
      %vm891 = vcmask 1040384
      %v893 = vsel %vm891, %v849, 0
      %895 = vmatprep.subr.mxu0 0.0
      %896 = vmatpush1.msra.mxu0 0.0
      %897 = vmatprep.subr.mxu0 0.0
      %898 = vmatpush1.msra.mxu0 0.0
      %899 = vmatprep.subr.mxu0 0.0
      %900 = vmatpush1.msra.mxu0 0.0
      %901 = vmatprep.subr.mxu0 0.0
      %902 = vmatpush1.msra.mxu0 0.0
      %903 = vmatprep.subr.mxu0 0.0
      %904 = vmatpush1.msra.mxu0 0.0
      %905 = vmatprep.subr.mxu0 0.0
      %906 = vmatpush1.msra.mxu0 0.0
      %907 = vmatprep.subr.mxu0 0.0
      %908 = vmatpush1.msra.mxu0 0.0
      %909 = vmatprep.subr.mxu0 0.0
      %910 = vmatpush1.msra.mxu0 %v893
      %911 = vmatprep.subr.mxu0 0.0
      %912 = vmatpush1.msra.mxu0 %v848
      %913 = vmatprep.subr.mxu0 0.0
      %914 = vmatpush1.msra.mxu0 %v847
      %915 = vmatprep.subr.mxu0 0.0
      %916 = vmatpush1.msra.mxu0 %v846
      %917 = vmatprep.subr.mxu0 0.0
      %918 = vmatpush1.msra.mxu0 %v845
      %919 = vmatprep.subr.mxu0 0.0
      %920 = vmatpush1.msra.mxu0 %v844
      %921 = vmatprep.subr.mxu0 0.0
      %922 = vmatpush1.msra.mxu0 %v843
      %923 = vmatprep.subr.mxu0 0.0
      %924 = vmatpush1.msra.mxu0 %v842
      %925 = vmatprep.subr.mxu0 0.0
      %926 = vmatpush1.msra.mxu0 %v841
      %927 = vmatprep.subr.mxu0 0.0
      %928 = vmatpush2.msra.mxu0 0.0
      %929 = vmatprep.subr.mxu0 0.0
      %930 = vmatpush2.msra.mxu0 0.0
      %931 = vmatprep.subr.mxu0 0.0
      %932 = vmatpush2.msra.mxu0 0.0
      %933 = vmatprep.subr.mxu0 0.0
      %934 = vmatpush2.msra.mxu0 0.0
      %935 = vmatprep.subr.mxu0 0.0
      %936 = vmatpush2.msra.mxu0 0.0
      %937 = vmatprep.subr.mxu0 0.0
      %938 = vmatpush2.msra.mxu0 0.0
      %939 = vmatprep.subr.mxu0 0.0
      %940 = vmatpush2.msra.mxu0 0.0
      %941 = vmatprep.subr.mxu0 0.0
      %942 = vmatpush2.msra.mxu0 0.0
      %943 = vmatprep.subr.mxu0 0.0
      %944 = vmatpush2.msra.mxu0 0.0
      %945 = vmatprep.subr.mxu0 0.0
      %946 = vmatpush2.msra.mxu0 0.0
      %947 = vmatprep.subr.mxu0 0.0
      %948 = vmatpush2.msra.mxu0 0.0
      %949 = vmatprep.subr.mxu0 0.0
      %950 = vmatpush2.msra.mxu0 0.0
      %951 = vmatprep.subr.mxu0 0.0
      %952 = vmatpush2.msra.mxu0 0.0
      %953 = vmatprep.subr.mxu0 0.0
      %954 = vmatpush2.msra.mxu0 0.0
      %955 = vmatprep.subr.mxu0 0.0
      %956 = vmatpush2.msra.mxu0 0.0
      %957 = vmatprep.subr.mxu0 0.0
      %958 = vmatpush2.msra.mxu0 0.0
      %959 = vmatprep.mubr.f32.mxu0 0.0
      %960 = vmatmul.mubr.f32.gmra.mxu0 %v880
      %v961 = vpop.f32.mrf.mxu0
      %v962 = vadd.f32 %v861, %v961
      %v963 = vpop.f32.mrf.mxu0
      %964 = vmatprep.mubr.f32.mxu0 0.0
      %965 = vmatmul.mubr.f32.gmra.mxu0 %v883
      %v966 = vpop.f32.mrf.mxu0
      %v967 = vadd.f32 %v866, %v966
      %v968 = vpop.f32.mrf.mxu0
      %969 = vmatprep.mubr.f32.mxu0 0.0
      %970 = vmatmul.mubr.f32.gmra.mxu0 %v886
      %v971 = vpop.f32.mrf.mxu0
      %v972 = vadd.f32 %v871, %v971
      %v973 = vpop.f32.mrf.mxu0
      %974 = vmatprep.mubr.f32.mxu0 0.0
      %975 = vmatmul.mubr.f32.gmra.mxu0 %v889
      %v976 = vpop.f32.mrf.mxu0
      %v977 = vadd.f32 %v876, %v976
      %v978 = vpop.f32.mrf.mxu0
      %979 = vdwg.mxu0
      %v980 = vmax.f32 %v962, 0.0
      %v981 = vmax.f32 %v967, 0.0
      %v982 = vmax.f32 %v972, 0.0
      %v983 = vmax.f32 %v977, 0.0
      %v984 = vld [vmem:[%s461] sm:$0x7]
      %v985 = vld [vmem:[%s465] sm:$0x7]
      %987 = vset.pattern.permute.xlu0 0
      %988 = vperm.xlu0 %987, %v985
      %v989 = vpop.permute.xlu0 %988
      %vm991 = vcmask 261120
      %v993 = vsel %vm991, %v984, 0
      %995 = vmatprep.subr.mxu0 0.0
      %996 = vmatpush1.msra.mxu0 0.0
      %997 = vmatprep.subr.mxu0 0.0
      %998 = vmatpush1.msra.mxu0 0.0
      %999 = vmatprep.subr.mxu0 0.0
      %1000 = vmatpush1.msra.mxu0 0.0
      %1001 = vmatprep.subr.mxu0 0.0
      %1002 = vmatpush1.msra.mxu0 0.0
      %1003 = vmatprep.subr.mxu0 0.0
      %1004 = vmatpush1.msra.mxu0 0.0
      %1005 = vmatprep.subr.mxu0 0.0
      %1006 = vmatpush1.msra.mxu0 0.0
      %1007 = vmatprep.subr.mxu0 0.0
      %1008 = vmatpush1.msra.mxu0 0.0
      %1009 = vmatprep.subr.mxu0 0.0
      %1010 = vmatpush1.msra.mxu0 0.0
      %1011 = vmatprep.subr.mxu0 0.0
      %1012 = vmatpush1.msra.mxu0 0.0
      %1013 = vmatprep.subr.mxu0 0.0
      %1014 = vmatpush1.msra.mxu0 0.0
      %1015 = vmatprep.subr.mxu0 0.0
      %1016 = vmatpush1.msra.mxu0 0.0
      %1017 = vmatprep.subr.mxu0 0.0
      %1018 = vmatpush1.msra.mxu0 0.0
      %1019 = vmatprep.subr.mxu0 0.0
      %1020 = vmatpush1.msra.mxu0 %v983
      %1021 = vmatprep.subr.mxu0 0.0
      %1022 = vmatpush1.msra.mxu0 %v982
      %1023 = vmatprep.subr.mxu0 0.0
      %1024 = vmatpush1.msra.mxu0 %v981
      %1025 = vmatprep.subr.mxu0 0.0
      %1026 = vmatpush1.msra.mxu0 %v980
      %1027 = vmatprep.subr.mxu0 0.0
      %1028 = vmatpush2.msra.mxu0 0.0
      %1029 = vmatprep.subr.mxu0 0.0
      %1030 = vmatpush2.msra.mxu0 0.0
      %1031 = vmatprep.subr.mxu0 0.0
      %1032 = vmatpush2.msra.mxu0 0.0
      %1033 = vmatprep.subr.mxu0 0.0
      %1034 = vmatpush2.msra.mxu0 0.0
      %1035 = vmatprep.subr.mxu0 0.0
      %1036 = vmatpush2.msra.mxu0 0.0
      %1037 = vmatprep.subr.mxu0 0.0
      %1038 = vmatpush2.msra.mxu0 0.0
      %1039 = vmatprep.subr.mxu0 0.0
      %1040 = vmatpush2.msra.mxu0 0.0
      %1041 = vmatprep.subr.mxu0 0.0
      %1042 = vmatpush2.msra.mxu0 0.0
      %1043 = vmatprep.subr.mxu0 0.0
      %1044 = vmatpush2.msra.mxu0 0.0
      %1045 = vmatprep.subr.mxu0 0.0
      %1046 = vmatpush2.msra.mxu0 0.0
      %1047 = vmatprep.subr.mxu0 0.0
      %1048 = vmatpush2.msra.mxu0 0.0
      %1049 = vmatprep.subr.mxu0 0.0
      %1050 = vmatpush2.msra.mxu0 0.0
      %1051 = vmatprep.subr.mxu0 0.0
      %1052 = vmatpush2.msra.mxu0 0.0
      %1053 = vmatprep.subr.mxu0 0.0
      %1054 = vmatpush2.msra.mxu0 0.0
      %1055 = vmatprep.subr.mxu0 0.0
      %1056 = vmatpush2.msra.mxu0 0.0
      %1057 = vmatprep.subr.mxu0 0.0
      %1058 = vmatpush2.msra.mxu0 0.0
      %1059 = vmatprep.mubr.f32.mxu0 0.0
      %1060 = vmatmul.mubr.f32.gmra.mxu0 %v993
      %v1061 = vpop.f32.mrf.mxu0
      %v1062 = vadd.f32 %v989, %v1061
      %v1063 = vpop.f32.mrf.mxu0
      %1064 = vdwg.mxu0
      %v1065 = vtanh.pop %v1062
      %v1066 = vmul.f32 %v1065, 2.0
      %1067 = vst [vmem:[%s473] sm:$0x7] %v1066
      %p1068 = scmp.lt.s32.totalorder %s24, 1
      %s1069 = scalar_select %p1068, %s24, 1
      %p1070 = scmp.lt.s32.totalorder %s23, 1
      %s1071 = scalar_select %p1070, %s23, 1
      %s1072 = smul.addr %s1069, 2
      %s1073 = sadd.s32 %s1071, %s1072
      %s1074 = smul.addr %s1073, 4
      %s1075 = scalar_lea.vmem %s8, %s1074
      // Predicated region
      $region53: #{ae_atlasnet_forward.3} parent=51 // pred_check
        %p1076 = pneg %p261
      $region54: #{ae_atlasnet_forward.3} parent=51 // pred_check_branch
        %1078 = sbr.rel (%p1076) target = $region56
      $region55: #{ae_atlasnet_forward.3} parent=51 // pred_region
        _
      $region56: #{ae_atlasnet_forward.3} parent=51 // pred_fallthru
        _
    $region52: #{ae_atlasnet_forward.3} parent=5 // pred_fallthru
      _
    %p1079 = scmp.le.s32.totalorder 2, %s14
    // Predicated region
    $region57: #{ae_atlasnet_forward.3} parent=5 // pred_check
      %p1080 = pneg %p1079
    $region58: #{ae_atlasnet_forward.3} parent=5 // pred_check_branch
      %1082 = sbr.rel (%p1080) target = $region60
    $region59: #{ae_atlasnet_forward.3} parent=5 // pred_region
      %s1083 = ssub.s32 %s14, 2
      // Predicated region
      $region61: #{ae_atlasnet_forward.3} parent=59 // pred_check
        %p1084 = pneg %p267
      $region62: #{ae_atlasnet_forward.3} parent=59 // pred_check_branch
        %1086 = sbr.rel (%p1084) target = $region64
      $region63: #{ae_atlasnet_forward.3} parent=59 // pred_region
        %p1087 = scmp.lt.s32.totalorder %s26, 1
        %s1088 = scalar_select %p1087, %s26, 1
        %p1089 = scmp.lt.s32.totalorder %s25, 1
        %s1090 = scalar_select %p1089, %s25, 1
        %s1091 = smul.addr %s1088, 2
        %s1092 = sadd.s32 %s1090, %s1091
        %s1093 = smul.addr %s1092, 4
        %s1094 = scalar_lea.vmem %s8, %s1093
      $region64: #{ae_atlasnet_forward.3} parent=59 // pred_fallthru
        _
    $region60: #{ae_atlasnet_forward.3} parent=5 // pred_fallthru
      _
  $region6: #{ae_atlasnet_forward.3} parent=0 // loop_footer
    %s18 = sadd.s32 1, %s14
  $region7: #{ae_atlasnet_forward.3} parent=0 // loop_footer_branch
    %13 = sbr.rel target = $region3
  $region8: #{ae_atlasnet_forward.3} parent=0 // loop_exit
    _

// kernel: ae_atlasnet_forward.2
$region0: #{ae_atlasnet_forward.2}
  #allocation0 [shape = 'u32[]', space=smem, size = 0x4, offset = 0x4, fixed_abs, tag = 'smem constant byte address 0x4 - core index']
  #allocation1 [shape = 'u32[144,128]{1,0:T(1,128)}', space=vmem, size = 0x12000, scoped, tag = 'internal scratch']
  %s0 = inlined_call_operand.vmem [shape: f32[3,128], index: 0, kind: input, shape index: {}]
  %s1 = inlined_call_operand.vmem [shape: f32[64,3], index: 1, kind: input, shape index: {}]
  %s2 = inlined_call_operand.vmem [shape: f32[64,1], index: 2, kind: input, shape index: {}]
  %s3 = inlined_call_operand.vmem [shape: f32[128,64], index: 3, kind: input, shape index: {}]
  %s4 = inlined_call_operand.vmem [shape: f32[128,1], index: 4, kind: input, shape index: {}]
  %s5 = inlined_call_operand.vmem [shape: f32[1024,128], index: 5, kind: input, shape index: {}]
  %s6 = inlined_call_operand.vmem [shape: f32[1024,1], index: 6, kind: input, shape index: {}]
  %s7 = inlined_call_operand.vmem [shape: f32[128,1024], index: 7, kind: input, shape index: {}]
  %s8 = inlined_call_operand.vmem [shape: f32[128,1], index: 8, kind: input, shape index: {}]
  %s9 = inlined_call_operand.hbm [shape: f32[262,128], index: 9, kind: input, shape index: {}]
  %s10 = inlined_call_operand.vmem [shape: f32[262,1], index: 10, kind: input, shape index: {}]
  %s11 = inlined_call_operand.vmem [shape: f32[3,128], index: 11, kind: input, shape index: {}]
  %s12 = inlined_call_operand.vmem [shape: f32[2,131,3], index: 12, kind: input, shape index: {}]
  %s13 = inlined_call_operand.vmem [shape: f32[2,2,131,1], index: 13, kind: output, shape index: {0}]
  %s14 = inlined_call_operand.vmem [shape: f32[2,131,128], index: 14, kind: output, shape index: {1}]
  %15 = xla_tuple %s13, %s14
  %s16 = sld [smem:[#allocation0]]
  $region74: #{ae_atlasnet_forward.2} parent=0
    _
  %s18 = ssub.s32 1, %s16
  %s19 = scalar_select 0, %s18, %s16
  $region1: #{ae_atlasnet_forward.2} parent=0
    #allocation2 [shape = 'u8[135168]{0}', space=vmem, size = 0x21000, scoped, tag = 'input window, operand 9, single buffered']
    #allocation3 [shape = 's32[1]{0}', space=sflag, size = 0x4, scoped, tag = 'scoped memory for ae_atlasnet_forward.2']
    %20 = vsyncpa [#allocation3], 0
    // Predicated region
    $region2: #{ae_atlasnet_forward.2} parent=1 // pred_check
      _
    $region3: #{ae_atlasnet_forward.2} parent=1 // pred_check_branch
      %22 = sbr.rel (0) target = $region5
    $region4: #{ae_atlasnet_forward.2} parent=1 // pred_region
      _
    $region5: #{ae_atlasnet_forward.2} parent=1 // pred_fallthru
      _
    // Predicated region
    $region6: #{ae_atlasnet_forward.2} parent=1 // pred_check
      _
    $region7: #{ae_atlasnet_forward.2} parent=1 // pred_check_branch
      %24 = sbr.rel (0) target = $region9
    $region8: #{ae_atlasnet_forward.2} parent=1 // pred_region
      _
    $region9: #{ae_atlasnet_forward.2} parent=1 // pred_fallthru
      _
    // Predicated region
    $region10: #{ae_atlasnet_forward.2} parent=1 // pred_check
      _
    $region11: #{ae_atlasnet_forward.2} parent=1 // pred_check_branch
      %26 = sbr.rel (0) target = $region13
    $region12: #{ae_atlasnet_forward.2} parent=1 // pred_region
      _
    $region13: #{ae_atlasnet_forward.2} parent=1 // pred_fallthru
      _
    // Predicated region
    $region14: #{ae_atlasnet_forward.2} parent=1 // pred_check
      _
    $region15: #{ae_atlasnet_forward.2} parent=1 // pred_check_branch
      %28 = sbr.rel (0) target = $region17
    $region16: #{ae_atlasnet_forward.2} parent=1 // pred_region
      _
    $region17: #{ae_atlasnet_forward.2} parent=1 // pred_fallthru
      _
    // Predicated region
    $region18: #{ae_atlasnet_forward.2} parent=1 // pred_check
      _
    $region19: #{ae_atlasnet_forward.2} parent=1 // pred_check_branch
      %30 = sbr.rel (0) target = $region21
    $region20: #{ae_atlasnet_forward.2} parent=1 // pred_region
      _
    $region21: #{ae_atlasnet_forward.2} parent=1 // pred_fallthru
      _
    // Predicated region
    $region22: #{ae_atlasnet_forward.2} parent=1 // pred_check
      _
    $region23: #{ae_atlasnet_forward.2} parent=1 // pred_check_branch
      %32 = sbr.rel (0) target = $region25
    $region24: #{ae_atlasnet_forward.2} parent=1 // pred_region
      _
    $region25: #{ae_atlasnet_forward.2} parent=1 // pred_fallthru
      _
    // Predicated region
    $region26: #{ae_atlasnet_forward.2} parent=1 // pred_check
      _
    $region27: #{ae_atlasnet_forward.2} parent=1 // pred_check_branch
      %34 = sbr.rel (0) target = $region29
    $region28: #{ae_atlasnet_forward.2} parent=1 // pred_region
      _
    $region29: #{ae_atlasnet_forward.2} parent=1 // pred_fallthru
      _
    // Predicated region
    $region30: #{ae_atlasnet_forward.2} parent=1 // pred_check
      _
    $region31: #{ae_atlasnet_forward.2} parent=1 // pred_check_branch
      %36 = sbr.rel (0) target = $region33
    $region32: #{ae_atlasnet_forward.2} parent=1 // pred_region
      _
    $region33: #{ae_atlasnet_forward.2} parent=1 // pred_fallthru
      _
    // Predicated region
    $region34: #{ae_atlasnet_forward.2} parent=1 // pred_check
      _
    $region35: #{ae_atlasnet_forward.2} parent=1 // pred_check_branch
      %38 = sbr.rel (0) target = $region37
    $region36: #{ae_atlasnet_forward.2} parent=1 // pred_region
      _
    $region37: #{ae_atlasnet_forward.2} parent=1 // pred_fallthru
      _
    // Predicated region
    $region38: #{ae_atlasnet_forward.2} parent=1 // pred_check
      _
    $region39: #{ae_atlasnet_forward.2} parent=1 // pred_check_branch
      %40 = sbr.rel (0) target = $region41
    $region40: #{ae_atlasnet_forward.2} parent=1 // pred_region
      %s42 = ssub.s32 4224, 4224
      %43 = vsyncadd [#allocation3], %s42
      %s44 = sshll.u32 [#allocation2], 4
      %s45 = int_to_ptr.vmem [resolvable:$true] %s44
      %50 = dma.hbm_to_vmem [thread:$0]  %s9, 4224, %s45, [#allocation3], 128, 128, 8
    $region41: #{ae_atlasnet_forward.2} parent=1 // pred_fallthru
      _
    // Predicated region
    $region42: #{ae_atlasnet_forward.2} parent=1 // pred_check
      _
    $region43: #{ae_atlasnet_forward.2} parent=1 // pred_check_branch
      %52 = sbr.rel (0) target = $region45
    $region44: #{ae_atlasnet_forward.2} parent=1 // pred_region
      _
    $region45: #{ae_atlasnet_forward.2} parent=1 // pred_fallthru
      _
    // Predicated region
    $region46: #{ae_atlasnet_forward.2} parent=1 // pred_check
      _
    $region47: #{ae_atlasnet_forward.2} parent=1 // pred_check_branch
      %54 = sbr.rel (0) target = $region49
    $region48: #{ae_atlasnet_forward.2} parent=1 // pred_region
      _
    $region49: #{ae_atlasnet_forward.2} parent=1 // pred_fallthru
      _
    // Predicated region
    $region50: #{ae_atlasnet_forward.2} parent=1 // pred_check
      _
    $region51: #{ae_atlasnet_forward.2} parent=1 // pred_check_branch
      %56 = sbr.rel (0) target = $region53
    $region52: #{ae_atlasnet_forward.2} parent=1 // pred_region
      _
    $region53: #{ae_atlasnet_forward.2} parent=1 // pred_fallthru
      _
    // Predicated region
    $region54: #{ae_atlasnet_forward.2} parent=1 // pred_check
      _
    $region55: #{ae_atlasnet_forward.2} parent=1 // pred_check_branch
      %58 = sbr.rel (0) target = $region57
    $region56: #{ae_atlasnet_forward.2} parent=1 // pred_region
      %59 = dma.done [#allocation3], 4224
    $region57: #{ae_atlasnet_forward.2} parent=1 // pred_fallthru
      _
    %v60 = vld [vmem:[%s0] sm:$0x7]
    %v61 = vld [vmem:[%s1] sm:$0xff]
    %v62 = vld [vmem:[%s1 + $0x8] sm:$0xff]
    %v63 = vld [vmem:[%s1 + $0x10] sm:$0xff]
    %v64 = vld [vmem:[%s1 + $0x18] sm:$0xff]
    %v65 = vld [vmem:[%s1 + $0x20] sm:$0xff]
    %v66 = vld [vmem:[%s1 + $0x28] sm:$0xff]
    %v67 = vld [vmem:[%s1 + $0x30] sm:$0xff]
    %v68 = vld [vmem:[%s1 + $0x38] sm:$0xff]
    %70 = vset.pattern.permute.xlu0 0
    %71 = vperm.xlu0 %70, %v61
    %v72 = vpop.permute.xlu0 %71
    %75 = vset.pattern.permute.xlu0 0
    %76 = vperm.xlu0 %75, %v62
    %v77 = vpop.permute.xlu0 %76
    %80 = vset.pattern.permute.xlu0 0
    %81 = vperm.xlu0 %80, %v63
    %v82 = vpop.permute.xlu0 %81
    %85 = vset.pattern.permute.xlu0 0
    %86 = vperm.xlu0 %85, %v64
    %v87 = vpop.permute.xlu0 %86
    %90 = vset.pattern.permute.xlu0 0
    %91 = vperm.xlu0 %90, %v65
    %v92 = vpop.permute.xlu0 %91
    %95 = vset.pattern.permute.xlu0 0
    %96 = vperm.xlu0 %95, %v66
    %v97 = vpop.permute.xlu0 %96
    %100 = vset.pattern.permute.xlu0 0
    %101 = vperm.xlu0 %100, %v67
    %v102 = vpop.permute.xlu0 %101
    %105 = vset.pattern.permute.xlu0 0
    %106 = vperm.xlu0 %105, %v68
    %v107 = vpop.permute.xlu0 %106
    %v109 = vlaneseq
    %v110 = vshrl.u32 %v109, 7
    %v111 = vsub.s32 0, %v110
    %v112 = vrot.slane %v60, %v111
    %v113 = vmul.f32 %v72, %v112
    %v114 = vmul.f32 %v77, %v112
    %v115 = vmul.f32 %v82, %v112
    %v116 = vmul.f32 %v87, %v112
    %v117 = vmul.f32 %v92, %v112
    %v118 = vmul.f32 %v97, %v112
    %v119 = vmul.f32 %v102, %v112
    %v120 = vmul.f32 %v107, %v112
    %121 = vset.pattern.permute.xlu0 1
    %122 = vperm.xlu0 %121, %v61
    %v123 = vpop.permute.xlu0 %122
    %125 = vset.pattern.permute.xlu0 1
    %126 = vperm.xlu0 %125, %v62
    %v127 = vpop.permute.xlu0 %126
    %129 = vset.pattern.permute.xlu0 1
    %130 = vperm.xlu0 %129, %v63
    %v131 = vpop.permute.xlu0 %130
    %133 = vset.pattern.permute.xlu0 1
    %134 = vperm.xlu0 %133, %v64
    %v135 = vpop.permute.xlu0 %134
    %137 = vset.pattern.permute.xlu0 1
    %138 = vperm.xlu0 %137, %v65
    %v139 = vpop.permute.xlu0 %138
    %141 = vset.pattern.permute.xlu0 1
    %142 = vperm.xlu0 %141, %v66
    %v143 = vpop.permute.xlu0 %142
    %145 = vset.pattern.permute.xlu0 1
    %146 = vperm.xlu0 %145, %v67
    %v147 = vpop.permute.xlu0 %146
    %149 = vset.pattern.permute.xlu0 1
    %150 = vperm.xlu0 %149, %v68
    %v151 = vpop.permute.xlu0 %150
    %v153 = vlaneseq
    %v154 = vshrl.u32 %v153, 7
    %v155 = vsub.s32 1, %v154
    %v156 = vrot.slane %v60, %v155
    %v157 = vmul.f32 %v123, %v156
    %v158 = vmul.f32 %v127, %v156
    %v159 = vmul.f32 %v131, %v156
    %v160 = vmul.f32 %v135, %v156
    %v161 = vmul.f32 %v139, %v156
    %v162 = vmul.f32 %v143, %v156
    %v163 = vmul.f32 %v147, %v156
    %v164 = vmul.f32 %v151, %v156
    %v165 = vadd.f32 %v113, %v157
    %v166 = vadd.f32 %v114, %v158
    %v167 = vadd.f32 %v115, %v159
    %v168 = vadd.f32 %v116, %v160
    %v169 = vadd.f32 %v117, %v161
    %v170 = vadd.f32 %v118, %v162
    %v171 = vadd.f32 %v119, %v163
    %v172 = vadd.f32 %v120, %v164
    %173 = vset.pattern.permute.xlu0 2
    %174 = vperm.xlu0 %173, %v61
    %v175 = vpop.permute.xlu0 %174
    %177 = vset.pattern.permute.xlu0 2
    %178 = vperm.xlu0 %177, %v62
    %v179 = vpop.permute.xlu0 %178
    %181 = vset.pattern.permute.xlu0 2
    %182 = vperm.xlu0 %181, %v63
    %v183 = vpop.permute.xlu0 %182
    %185 = vset.pattern.permute.xlu0 2
    %186 = vperm.xlu0 %185, %v64
    %v187 = vpop.permute.xlu0 %186
    %189 = vset.pattern.permute.xlu0 2
    %190 = vperm.xlu0 %189, %v65
    %v191 = vpop.permute.xlu0 %190
    %193 = vset.pattern.permute.xlu0 2
    %194 = vperm.xlu0 %193, %v66
    %v195 = vpop.permute.xlu0 %194
    %197 = vset.pattern.permute.xlu0 2
    %198 = vperm.xlu0 %197, %v67
    %v199 = vpop.permute.xlu0 %198
    %201 = vset.pattern.permute.xlu0 2
    %202 = vperm.xlu0 %201, %v68
    %v203 = vpop.permute.xlu0 %202
    %v205 = vlaneseq
    %v206 = vshrl.u32 %v205, 7
    %v207 = vsub.s32 2, %v206
    %v208 = vrot.slane %v60, %v207
    %v209 = vmul.f32 %v175, %v208
    %v210 = vmul.f32 %v179, %v208
    %v211 = vmul.f32 %v183, %v208
    %v212 = vmul.f32 %v187, %v208
    %v213 = vmul.f32 %v191, %v208
    %v214 = vmul.f32 %v195, %v208
    %v215 = vmul.f32 %v199, %v208
    %v216 = vmul.f32 %v203, %v208
    %v217 = vadd.f32 %v165, %v209
    %v218 = vadd.f32 %v166, %v210
    %v219 = vadd.f32 %v167, %v211
    %v220 = vadd.f32 %v168, %v212
    %v221 = vadd.f32 %v169, %v213
    %v222 = vadd.f32 %v170, %v214
    %v223 = vadd.f32 %v171, %v215
    %v224 = vadd.f32 %v172, %v216
    %v225 = vld [vmem:[%s2] sm:$0xff]
    %v226 = vld [vmem:[%s2 + $0x8] sm:$0xff]
    %v227 = vld [vmem:[%s2 + $0x10] sm:$0xff]
    %v228 = vld [vmem:[%s2 + $0x18] sm:$0xff]
    %v229 = vld [vmem:[%s2 + $0x20] sm:$0xff]
    %v230 = vld [vmem:[%s2 + $0x28] sm:$0xff]
    %v231 = vld [vmem:[%s2 + $0x30] sm:$0xff]
    %v232 = vld [vmem:[%s2 + $0x38] sm:$0xff]
    %234 = vset.pattern.permute.xlu0 0
    %235 = vperm.xlu0 %234, %v225
    %v236 = vpop.permute.xlu0 %235
    %239 = vset.pattern.permute.xlu0 0
    %240 = vperm.xlu0 %239, %v226
    %v241 = vpop.permute.xlu0 %240
    %244 = vset.pattern.permute.xlu0 0
    %245 = vperm.xlu0 %244, %v227
    %v246 = vpop.permute.xlu0 %245
    %249 = vset.pattern.permute.xlu0 0
    %250 = vperm.xlu0 %249, %v228
    %v251 = vpop.permute.xlu0 %250
    %254 = vset.pattern.permute.xlu0 0
    %255 = vperm.xlu0 %254, %v229
    %v256 = vpop.permute.xlu0 %255
    %259 = vset.pattern.permute.xlu0 0
    %260 = vperm.xlu0 %259, %v230
    %v261 = vpop.permute.xlu0 %260
    %264 = vset.pattern.permute.xlu0 0
    %265 = vperm.xlu0 %264, %v231
    %v266 = vpop.permute.xlu0 %265
    %269 = vset.pattern.permute.xlu0 0
    %270 = vperm.xlu0 %269, %v232
    %v271 = vpop.permute.xlu0 %270
    %v273 = vadd.f32 %v217, %v236
    %v274 = vadd.f32 %v218, %v241
    %v275 = vadd.f32 %v219, %v246
    %v276 = vadd.f32 %v220, %v251
    %v277 = vadd.f32 %v221, %v256
    %v278 = vadd.f32 %v222, %v261
    %v279 = vadd.f32 %v223, %v266
    %v280 = vadd.f32 %v224, %v271
    %v281 = vmax.f32 %v273, 0.0
    %v282 = vmax.f32 %v274, 0.0
    %v283 = vmax.f32 %v275, 0.0
    %v284 = vmax.f32 %v276, 0.0
    %v285 = vmax.f32 %v277, 0.0
    %v286 = vmax.f32 %v278, 0.0
    %v287 = vmax.f32 %v279, 0.0
    %v288 = vmax.f32 %v280, 0.0
    %v289 = vld [vmem:[%s3] sm:$0xff]
    %v290 = vld [vmem:[%s3 + $0x8] sm:$0xff]
    %v291 = vld [vmem:[%s3 + $0x10] sm:$0xff]
    %v292 = vld [vmem:[%s3 + $0x18] sm:$0xff]
    %v293 = vld [vmem:[%s3 + $0x20] sm:$0xff]
    %v294 = vld [vmem:[%s3 + $0x28] sm:$0xff]
    %v295 = vld [vmem:[%s3 + $0x30] sm:$0xff]
    %v296 = vld [vmem:[%s3 + $0x38] sm:$0xff]
    %v297 = vld [vmem:[%s3 + $0x40] sm:$0xff]
    %v298 = vld [vmem:[%s3 + $0x48] sm:$0xff]
    %v299 = vld [vmem:[%s3 + $0x50] sm:$0xff]
    %v300 = vld [vmem:[%s3 + $0x58] sm:$0xff]
    %v301 = vld [vmem:[%s3 + $0x60] sm:$0xff]
    %v302 = vld [vmem:[%s3 + $0x68] sm:$0xff]
    %v303 = vld [vmem:[%s3 + $0x70] sm:$0xff]
    %v304 = vld [vmem:[%s3 + $0x78] sm:$0xff]
    %v305 = vld [vmem:[%s4] sm:$0xff]
    %v306 = vld [vmem:[%s4 + $0x8] sm:$0xff]
    %v307 = vld [vmem:[%s4 + $0x10] sm:$0xff]
    %v308 = vld [vmem:[%s4 + $0x18] sm:$0xff]
    %v309 = vld [vmem:[%s4 + $0x20] sm:$0xff]
    %v310 = vld [vmem:[%s4 + $0x28] sm:$0xff]
    %v311 = vld [vmem:[%s4 + $0x30] sm:$0xff]
    %v312 = vld [vmem:[%s4 + $0x38] sm:$0xff]
    %v313 = vld [vmem:[%s4 + $0x40] sm:$0xff]
    %v314 = vld [vmem:[%s4 + $0x48] sm:$0xff]
    %v315 = vld [vmem:[%s4 + $0x50] sm:$0xff]
    %v316 = vld [vmem:[%s4 + $0x58] sm:$0xff]
    %v317 = vld [vmem:[%s4 + $0x60] sm:$0xff]
    %v318 = vld [vmem:[%s4 + $0x68] sm:$0xff]
    %v319 = vld [vmem:[%s4 + $0x70] sm:$0xff]
    %v320 = vld [vmem:[%s4 + $0x78] sm:$0xff]
    %322 = vset.pattern.permute.xlu0 0
    %323 = vperm.xlu0 %322, %v305
    %v324 = vpop.permute.xlu0 %323
    %327 = vset.pattern.permute.xlu0 0
    %328 = vperm.xlu0 %327, %v306
    %v329 = vpop.permute.xlu0 %328
    %332 = vset.pattern.permute.xlu0 0
    %333 = vperm.xlu0 %332, %v307
    %v334 = vpop.permute.xlu0 %333
    %337 = vset.pattern.permute.xlu0 0
    %338 = vperm.xlu0 %337, %v308
    %v339 = vpop.permute.xlu0 %338
    %342 = vset.pattern.permute.xlu0 0
    %343 = vperm.xlu0 %342, %v309
    %v344 = vpop.permute.xlu0 %343
    %347 = vset.pattern.permute.xlu0 0
    %348 = vperm.xlu0 %347, %v310
    %v349 = vpop.permute.xlu0 %348
    %352 = vset.pattern.permute.xlu0 0
    %353 = vperm.xlu0 %352, %v311
    %v354 = vpop.permute.xlu0 %353
    %357 = vset.pattern.permute.xlu0 0
    %358 = vperm.xlu0 %357, %v312
    %v359 = vpop.permute.xlu0 %358
    %362 = vset.pattern.permute.xlu0 0
    %363 = vperm.xlu0 %362, %v313
    %v364 = vpop.permute.xlu0 %363
    %367 = vset.pattern.permute.xlu0 0
    %368 = vperm.xlu0 %367, %v314
    %v369 = vpop.permute.xlu0 %368
    %372 = vset.pattern.permute.xlu0 0
    %373 = vperm.xlu0 %372, %v315
    %v374 = vpop.permute.xlu0 %373
    %377 = vset.pattern.permute.xlu0 0
    %378 = vperm.xlu0 %377, %v316
    %v379 = vpop.permute.xlu0 %378
    %382 = vset.pattern.permute.xlu0 0
    %383 = vperm.xlu0 %382, %v317
    %v384 = vpop.permute.xlu0 %383
    %387 = vset.pattern.permute.xlu0 0
    %388 = vperm.xlu0 %387, %v318
    %v389 = vpop.permute.xlu0 %388
    %392 = vset.pattern.permute.xlu0 0
    %393 = vperm.xlu0 %392, %v319
    %v394 = vpop.permute.xlu0 %393
    %397 = vset.pattern.permute.xlu0 0
    %398 = vperm.xlu0 %397, %v320
    %v399 = vpop.permute.xlu0 %398
    %vm401 = vcmask 523264
    %v403 = vsel %vm401, %v289, 0
    %v406 = vsel %vm401, %v290, 0
    %v409 = vsel %vm401, %v291, 0
    %v412 = vsel %vm401, %v292, 0
    %v415 = vsel %vm401, %v293, 0
    %v418 = vsel %vm401, %v294, 0
    %v421 = vsel %vm401, %v295, 0
    %v424 = vsel %vm401, %v296, 0
    %v427 = vsel %vm401, %v297, 0
    %v430 = vsel %vm401, %v298, 0
    %v433 = vsel %vm401, %v299, 0
    %v436 = vsel %vm401, %v300, 0
    %v439 = vsel %vm401, %v301, 0
    %v442 = vsel %vm401, %v302, 0
    %v445 = vsel %vm401, %v303, 0
    %v448 = vsel %vm401, %v304, 0
    %450 = vmatprep.subr.mxu0 0.0
    %451 = vmatpush1.msra.mxu0 0.0
    %452 = vmatprep.subr.mxu0 0.0
    %453 = vmatpush1.msra.mxu0 0.0
    %454 = vmatprep.subr.mxu0 0.0
    %455 = vmatpush1.msra.mxu0 0.0
    %456 = vmatprep.subr.mxu0 0.0
    %457 = vmatpush1.msra.mxu0 0.0
    %458 = vmatprep.subr.mxu0 0.0
    %459 = vmatpush1.msra.mxu0 0.0
    %460 = vmatprep.subr.mxu0 0.0
    %461 = vmatpush1.msra.mxu0 0.0
    %462 = vmatprep.subr.mxu0 0.0
    %463 = vmatpush1.msra.mxu0 0.0
    %464 = vmatprep.subr.mxu0 0.0
    %465 = vmatpush1.msra.mxu0 0.0
    %466 = vmatprep.subr.mxu0 0.0
    %467 = vmatpush1.msra.mxu0 %v288
    %468 = vmatprep.subr.mxu0 0.0
    %469 = vmatpush1.msra.mxu0 %v287
    %470 = vmatprep.subr.mxu0 0.0
    %471 = vmatpush1.msra.mxu0 %v286
    %472 = vmatprep.subr.mxu0 0.0
    %473 = vmatpush1.msra.mxu0 %v285
    %474 = vmatprep.subr.mxu0 0.0
    %475 = vmatpush1.msra.mxu0 %v284
    %476 = vmatprep.subr.mxu0 0.0
    %477 = vmatpush1.msra.mxu0 %v283
    %478 = vmatprep.subr.mxu0 0.0
    %479 = vmatpush1.msra.mxu0 %v282
    %480 = vmatprep.subr.mxu0 0.0
    %481 = vmatpush1.msra.mxu0 %v281
    %482 = vmatprep.subr.mxu0 0.0
    %483 = vmatpush2.msra.mxu0 0.0
    %484 = vmatprep.subr.mxu0 0.0
    %485 = vmatpush2.msra.mxu0 0.0
    %486 = vmatprep.subr.mxu0 0.0
    %487 = vmatpush2.msra.mxu0 0.0
    %488 = vmatprep.subr.mxu0 0.0
    %489 = vmatpush2.msra.mxu0 0.0
    %490 = vmatprep.subr.mxu0 0.0
    %491 = vmatpush2.msra.mxu0 0.0
    %492 = vmatprep.subr.mxu0 0.0
    %493 = vmatpush2.msra.mxu0 0.0
    %494 = vmatprep.subr.mxu0 0.0
    %495 = vmatpush2.msra.mxu0 0.0
    %496 = vmatprep.subr.mxu0 0.0
    %497 = vmatpush2.msra.mxu0 0.0
    %498 = vmatprep.subr.mxu0 0.0
    %499 = vmatpush2.msra.mxu0 0.0
    %500 = vmatprep.subr.mxu0 0.0
    %501 = vmatpush2.msra.mxu0 0.0
    %502 = vmatprep.subr.mxu0 0.0
    %503 = vmatpush2.msra.mxu0 0.0
    %504 = vmatprep.subr.mxu0 0.0
    %505 = vmatpush2.msra.mxu0 0.0
    %506 = vmatprep.subr.mxu0 0.0
    %507 = vmatpush2.msra.mxu0 0.0
    %508 = vmatprep.subr.mxu0 0.0
    %509 = vmatpush2.msra.mxu0 0.0
    %510 = vmatprep.subr.mxu0 0.0
    %511 = vmatpush2.msra.mxu0 0.0
    %512 = vmatprep.subr.mxu0 0.0
    %513 = vmatpush2.msra.mxu0 0.0
    %514 = vmatprep.mubr.f32.mxu0 0.0
    %515 = vmatmul.mubr.f32.gmra.mxu0 %v403
    %v516 = vpop.f32.mrf.mxu0
    %v517 = vadd.f32 %v324, %v516
    %v518 = vpop.f32.mrf.mxu0
    %519 = vmatprep.mubr.f32.mxu0 0.0
    %520 = vmatmul.mubr.f32.gmra.mxu0 %v406
    %v521 = vpop.f32.mrf.mxu0
    %v522 = vadd.f32 %v329, %v521
    %v523 = vpop.f32.mrf.mxu0
    %524 = vmatprep.mubr.f32.mxu0 0.0
    %525 = vmatmul.mubr.f32.gmra.mxu0 %v409
    %v526 = vpop.f32.mrf.mxu0
    %v527 = vadd.f32 %v334, %v526
    %v528 = vpop.f32.mrf.mxu0
    %529 = vmatprep.mubr.f32.mxu0 0.0
    %530 = vmatmul.mubr.f32.gmra.mxu0 %v412
    %v531 = vpop.f32.mrf.mxu0
    %v532 = vadd.f32 %v339, %v531
    %v533 = vpop.f32.mrf.mxu0
    %534 = vmatprep.mubr.f32.mxu0 0.0
    %535 = vmatmul.mubr.f32.gmra.mxu0 %v415
    %v536 = vpop.f32.mrf.mxu0
    %v537 = vadd.f32 %v344, %v536
    %v538 = vpop.f32.mrf.mxu0
    %539 = vmatprep.mubr.f32.mxu0 0.0
    %540 = vmatmul.mubr.f32.gmra.mxu0 %v418
    %v541 = vpop.f32.mrf.mxu0
    %v542 = vadd.f32 %v349, %v541
    %v543 = vpop.f32.mrf.mxu0
    %544 = vmatprep.mubr.f32.mxu0 0.0
    %545 = vmatmul.mubr.f32.gmra.mxu0 %v421
    %v546 = vpop.f32.mrf.mxu0
    %v547 = vadd.f32 %v354, %v546
    %v548 = vpop.f32.mrf.mxu0
    %549 = vmatprep.mubr.f32.mxu0 0.0
    %550 = vmatmul.mubr.f32.gmra.mxu0 %v424
    %v551 = vpop.f32.mrf.mxu0
    %v552 = vadd.f32 %v359, %v551
    %v553 = vpop.f32.mrf.mxu0
    %554 = vmatprep.mubr.f32.mxu0 0.0
    %555 = vmatmul.mubr.f32.gmra.mxu0 %v427
    %v556 = vpop.f32.mrf.mxu0
    %v557 = vadd.f32 %v364, %v556
    %v558 = vpop.f32.mrf.mxu0
    %559 = vmatprep.mubr.f32.mxu0 0.0
    %560 = vmatmul.mubr.f32.gmra.mxu0 %v430
    %v561 = vpop.f32.mrf.mxu0
    %v562 = vadd.f32 %v369, %v561
    %v563 = vpop.f32.mrf.mxu0
    %564 = vmatprep.mubr.f32.mxu0 0.0
    %565 = vmatmul.mubr.f32.gmra.mxu0 %v433
    %v566 = vpop.f32.mrf.mxu0
    %v567 = vadd.f32 %v374, %v566
    %v568 = vpop.f32.mrf.mxu0
    %569 = vmatprep.mubr.f32.mxu0 0.0
    %570 = vmatmul.mubr.f32.gmra.mxu0 %v436
    %v571 = vpop.f32.mrf.mxu0
    %v572 = vadd.f32 %v379, %v571
    %v573 = vpop.f32.mrf.mxu0
    %574 = vmatprep.mubr.f32.mxu0 0.0
    %575 = vmatmul.mubr.f32.gmra.mxu0 %v439
    %v576 = vpop.f32.mrf.mxu0
    %v577 = vadd.f32 %v384, %v576
    %v578 = vpop.f32.mrf.mxu0
    %579 = vmatprep.mubr.f32.mxu0 0.0
    %580 = vmatmul.mubr.f32.gmra.mxu0 %v442
    %v581 = vpop.f32.mrf.mxu0
    %v582 = vadd.f32 %v389, %v581
    %v583 = vpop.f32.mrf.mxu0
    %584 = vmatprep.mubr.f32.mxu0 0.0
    %585 = vmatmul.mubr.f32.gmra.mxu0 %v445
    %v586 = vpop.f32.mrf.mxu0
    %v587 = vadd.f32 %v394, %v586
    %v588 = vpop.f32.mrf.mxu0
    %589 = vmatprep.mubr.f32.mxu0 0.0
    %590 = vmatmul.mubr.f32.gmra.mxu0 %v448
    %v591 = vpop.f32.mrf.mxu0
    %v592 = vadd.f32 %v399, %v591
    %v593 = vpop.f32.mrf.mxu0
    %594 = vdwg.mxu0
    %v595 = vmax.f32 %v517, 0.0
    %v596 = vmax.f32 %v522, 0.0
    %v597 = vmax.f32 %v527, 0.0
    %v598 = vmax.f32 %v532, 0.0
    %v599 = vmax.f32 %v537, 0.0
    %v600 = vmax.f32 %v542, 0.0
    %v601 = vmax.f32 %v547, 0.0
    %v602 = vmax.f32 %v552, 0.0
    %v603 = vmax.f32 %v557, 0.0
    %v604 = vmax.f32 %v562, 0.0
    %v605 = vmax.f32 %v567, 0.0
    %v606 = vmax.f32 %v572, 0.0
    %v607 = vmax.f32 %v577, 0.0
    %v608 = vmax.f32 %v582, 0.0
    %v609 = vmax.f32 %v587, 0.0
    %v610 = vmax.f32 %v592, 0.0
    %v611 = vld [vmem:[%s5] sm:$0xff]
    %v612 = vld [vmem:[%s5 + $0x8] sm:$0xff]
    %v613 = vld [vmem:[%s5 + $0x10] sm:$0xff]
    %v614 = vld [vmem:[%s5 + $0x18] sm:$0xff]
    %v615 = vld [vmem:[%s5 + $0x20] sm:$0xff]
    %v616 = vld [vmem:[%s5 + $0x28] sm:$0xff]
    %v617 = vld [vmem:[%s5 + $0x30] sm:$0xff]
    %v618 = vld [vmem:[%s5 + $0x38] sm:$0xff]
    %v619 = vld [vmem:[%s5 + $0x40] sm:$0xff]
    %v620 = vld [vmem:[%s5 + $0x48] sm:$0xff]
    %v621 = vld [vmem:[%s5 + $0x50] sm:$0xff]
    %v622 = vld [vmem:[%s5 + $0x58] sm:$0xff]
    %v623 = vld [vmem:[%s5 + $0x60] sm:$0xff]
    %v624 = vld [vmem:[%s5 + $0x68] sm:$0xff]
    %v625 = vld [vmem:[%s5 + $0x70] sm:$0xff]
    %v626 = vld [vmem:[%s5 + $0x78] sm:$0xff]
    %v627 = vld [vmem:[%s5 + $0x80] sm:$0xff]
    %v628 = vld [vmem:[%s5 + $0x88] sm:$0xff]
    %v629 = vld [vmem:[%s5 + $0x90] sm:$0xff]
    %v630 = vld [vmem:[%s5 + $0x98] sm:$0xff]
    %v631 = vld [vmem:[%s5 + $0xa0] sm:$0xff]
    %v632 = vld [vmem:[%s5 + $0xa8] sm:$0xff]
    %v633 = vld [vmem:[%s5 + $0xb0] sm:$0xff]
    %v634 = vld [vmem:[%s5 + $0xb8] sm:$0xff]
    %v635 = vld [vmem:[%s5 + $0xc0] sm:$0xff]
    %v636 = vld [vmem:[%s5 + $0xc8] sm:$0xff]
    %v637 = vld [vmem:[%s5 + $0xd0] sm:$0xff]
    %v638 = vld [vmem:[%s5 + $0xd8] sm:$0xff]
    %v639 = vld [vmem:[%s5 + $0xe0] sm:$0xff]
    %v640 = vld [vmem:[%s5 + $0xe8] sm:$0xff]
    %v641 = vld [vmem:[%s5 + $0xf0] sm:$0xff]
    %v642 = vld [vmem:[%s5 + $0xf8] sm:$0xff]
    %v643 = vld [vmem:[%s5 + $0x100] sm:$0xff]
    %v644 = vld [vmem:[%s5 + $0x108] sm:$0xff]
    %v645 = vld [vmem:[%s5 + $0x110] sm:$0xff]
    %v646 = vld [vmem:[%s5 + $0x118] sm:$0xff]
    %v647 = vld [vmem:[%s5 + $0x120] sm:$0xff]
    %v648 = vld [vmem:[%s5 + $0x128] sm:$0xff]
    %v649 = vld [vmem:[%s5 + $0x130] sm:$0xff]
    %v650 = vld [vmem:[%s5 + $0x138] sm:$0xff]
    %v651 = vld [vmem:[%s5 + $0x140] sm:$0xff]
    %v652 = vld [vmem:[%s5 + $0x148] sm:$0xff]
    %v653 = vld [vmem:[%s5 + $0x150] sm:$0xff]
    %v654 = vld [vmem:[%s5 + $0x158] sm:$0xff]
    %v655 = vld [vmem:[%s5 + $0x160] sm:$0xff]
    %v656 = vld [vmem:[%s5 + $0x168] sm:$0xff]
    %v657 = vld [vmem:[%s5 + $0x170] sm:$0xff]
    %v658 = vld [vmem:[%s5 + $0x178] sm:$0xff]
    %v659 = vld [vmem:[%s5 + $0x180] sm:$0xff]
    %v660 = vld [vmem:[%s5 + $0x188] sm:$0xff]
    %v661 = vld [vmem:[%s5 + $0x190] sm:$0xff]
    %v662 = vld [vmem:[%s5 + $0x198] sm:$0xff]
    %v663 = vld [vmem:[%s5 + $0x1a0] sm:$0xff]
    %v664 = vld [vmem:[%s5 + $0x1a8] sm:$0xff]
    %v665 = vld [vmem:[%s5 + $0x1b0] sm:$0xff]
    %v666 = vld [vmem:[%s5 + $0x1b8] sm:$0xff]
    %v667 = vld [vmem:[%s5 + $0x1c0] sm:$0xff]
    %v668 = vld [vmem:[%s5 + $0x1c8] sm:$0xff]
    %v669 = vld [vmem:[%s5 + $0x1d0] sm:$0xff]
    %v670 = vld [vmem:[%s5 + $0x1d8] sm:$0xff]
    %v671 = vld [vmem:[%s5 + $0x1e0] sm:$0xff]
    %v672 = vld [vmem:[%s5 + $0x1e8] sm:$0xff]
    %v673 = vld [vmem:[%s5 + $0x1f0] sm:$0xff]
    %v674 = vld [vmem:[%s5 + $0x1f8] sm:$0xff]
    %v675 = vld [vmem:[%s5 + $0x200] sm:$0xff]
    %v676 = vld [vmem:[%s5 + $0x208] sm:$0xff]
    %v677 = vld [vmem:[%s5 + $0x210] sm:$0xff]
    %v678 = vld [vmem:[%s5 + $0x218] sm:$0xff]
    %v679 = vld [vmem:[%s5 + $0x220] sm:$0xff]
    %v680 = vld [vmem:[%s5 + $0x228] sm:$0xff]
    %v681 = vld [vmem:[%s5 + $0x230] sm:$0xff]
    %v682 = vld [vmem:[%s5 + $0x238] sm:$0xff]
    %v683 = vld [vmem:[%s5 + $0x240] sm:$0xff]
    %v684 = vld [vmem:[%s5 + $0x248] sm:$0xff]
    %v685 = vld [vmem:[%s5 + $0x250] sm:$0xff]
    %v686 = vld [vmem:[%s5 + $0x258] sm:$0xff]
    %v687 = vld [vmem:[%s5 + $0x260] sm:$0xff]
    %v688 = vld [vmem:[%s5 + $0x268] sm:$0xff]
    %v689 = vld [vmem:[%s5 + $0x270] sm:$0xff]
    %v690 = vld [vmem:[%s5 + $0x278] sm:$0xff]
    %v691 = vld [vmem:[%s5 + $0x280] sm:$0xff]
    %v692 = vld [vmem:[%s5 + $0x288] sm:$0xff]
    %v693 = vld [vmem:[%s5 + $0x290] sm:$0xff]
    %v694 = vld [vmem:[%s5 + $0x298] sm:$0xff]
    %v695 = vld [vmem:[%s5 + $0x2a0] sm:$0xff]
    %v696 = vld [vmem:[%s5 + $0x2a8] sm:$0xff]
    %v697 = vld [vmem:[%s5 + $0x2b0] sm:$0xff]
    %v698 = vld [vmem:[%s5 + $0x2b8] sm:$0xff]
    %v699 = vld [vmem:[%s5 + $0x2c0] sm:$0xff]
    %v700 = vld [vmem:[%s5 + $0x2c8] sm:$0xff]
    %v701 = vld [vmem:[%s5 + $0x2d0] sm:$0xff]
    %v702 = vld [vmem:[%s5 + $0x2d8] sm:$0xff]
    %v703 = vld [vmem:[%s5 + $0x2e0] sm:$0xff]
    %v704 = vld [vmem:[%s5 + $0x2e8] sm:$0xff]
    %v705 = vld [vmem:[%s5 + $0x2f0] sm:$0xff]
    %v706 = vld [vmem:[%s5 + $0x2f8] sm:$0xff]
    %v707 = vld [vmem:[%s5 + $0x300] sm:$0xff]
    %v708 = vld [vmem:[%s5 + $0x308] sm:$0xff]
    %v709 = vld [vmem:[%s5 + $0x310] sm:$0xff]
    %v710 = vld [vmem:[%s5 + $0x318] sm:$0xff]
    %v711 = vld [vmem:[%s5 + $0x320] sm:$0xff]
    %v712 = vld [vmem:[%s5 + $0x328] sm:$0xff]
    %v713 = vld [vmem:[%s5 + $0x330] sm:$0xff]
    %v714 = vld [vmem:[%s5 + $0x338] sm:$0xff]
    %v715 = vld [vmem:[%s5 + $0x340] sm:$0xff]
    %v716 = vld [vmem:[%s5 + $0x348] sm:$0xff]
    %v717 = vld [vmem:[%s5 + $0x350] sm:$0xff]
    %v718 = vld [vmem:[%s5 + $0x358] sm:$0xff]
    %v719 = vld [vmem:[%s5 + $0x360] sm:$0xff]
    %v720 = vld [vmem:[%s5 + $0x368] sm:$0xff]
    %v721 = vld [vmem:[%s5 + $0x370] sm:$0xff]
    %v722 = vld [vmem:[%s5 + $0x378] sm:$0xff]
    %v723 = vld [vmem:[%s5 + $0x380] sm:$0xff]
    %v724 = vld [vmem:[%s5 + $0x388] sm:$0xff]
    %v725 = vld [vmem:[%s5 + $0x390] sm:$0xff]
    %v726 = vld [vmem:[%s5 + $0x398] sm:$0xff]
    %v727 = vld [vmem:[%s5 + $0x3a0] sm:$0xff]
    %v728 = vld [vmem:[%s5 + $0x3a8] sm:$0xff]
    %v729 = vld [vmem:[%s5 + $0x3b0] sm:$0xff]
    %v730 = vld [vmem:[%s5 + $0x3b8] sm:$0xff]
    %v731 = vld [vmem:[%s5 + $0x3c0] sm:$0xff]
    %v732 = vld [vmem:[%s5 + $0x3c8] sm:$0xff]
    %v733 = vld [vmem:[%s5 + $0x3d0] sm:$0xff]
    %v734 = vld [vmem:[%s5 + $0x3d8] sm:$0xff]
    %v735 = vld [vmem:[%s5 + $0x3e0] sm:$0xff]
    %v736 = vld [vmem:[%s5 + $0x3e8] sm:$0xff]
    %v737 = vld [vmem:[%s5 + $0x3f0] sm:$0xff]
    %v738 = vld [vmem:[%s5 + $0x3f8] sm:$0xff]
    %v739 = vld [vmem:[%s6] sm:$0xff]
    %v740 = vld [vmem:[%s6 + $0x8] sm:$0xff]
    %v741 = vld [vmem:[%s6 + $0x10] sm:$0xff]
    %v742 = vld [vmem:[%s6 + $0x18] sm:$0xff]
    %v743 = vld [vmem:[%s6 + $0x20] sm:$0xff]
    %v744 = vld [vmem:[%s6 + $0x28] sm:$0xff]
    %v745 = vld [vmem:[%s6 + $0x30] sm:$0xff]
    %v746 = vld [vmem:[%s6 + $0x38] sm:$0xff]
    %v747 = vld [vmem:[%s6 + $0x40] sm:$0xff]
    %v748 = vld [vmem:[%s6 + $0x48] sm:$0xff]
    %v749 = vld [vmem:[%s6 + $0x50] sm:$0xff]
    %v750 = vld [vmem:[%s6 + $0x58] sm:$0xff]
    %v751 = vld [vmem:[%s6 + $0x60] sm:$0xff]
    %v752 = vld [vmem:[%s6 + $0x68] sm:$0xff]
    %v753 = vld [vmem:[%s6 + $0x70] sm:$0xff]
    %v754 = vld [vmem:[%s6 + $0x78] sm:$0xff]
    %v755 = vld [vmem:[%s6 + $0x80] sm:$0xff]
    %v756 = vld [vmem:[%s6 + $0x88] sm:$0xff]
    %v757 = vld [vmem:[%s6 + $0x90] sm:$0xff]
    %v758 = vld [vmem:[%s6 + $0x98] sm:$0xff]
    %v759 = vld [vmem:[%s6 + $0xa0] sm:$0xff]
    %v760 = vld [vmem:[%s6 + $0xa8] sm:$0xff]
    %v761 = vld [vmem:[%s6 + $0xb0] sm:$0xff]
    %v762 = vld [vmem:[%s6 + $0xb8] sm:$0xff]
    %v763 = vld [vmem:[%s6 + $0xc0] sm:$0xff]
    %v764 = vld [vmem:[%s6 + $0xc8] sm:$0xff]
    %v765 = vld [vmem:[%s6 + $0xd0] sm:$0xff]
    %v766 = vld [vmem:[%s6 + $0xd8] sm:$0xff]
    %v767 = vld [vmem:[%s6 + $0xe0] sm:$0xff]
    %v768 = vld [vmem:[%s6 + $0xe8] sm:$0xff]
    %v769 = vld [vmem:[%s6 + $0xf0] sm:$0xff]
    %v770 = vld [vmem:[%s6 + $0xf8] sm:$0xff]
    %v771 = vld [vmem:[%s6 + $0x100] sm:$0xff]
    %v772 = vld [vmem:[%s6 + $0x108] sm:$0xff]
    %v773 = vld [vmem:[%s6 + $0x110] sm:$0xff]
    %v774 = vld [vmem:[%s6 + $0x118] sm:$0xff]
    %v775 = vld [vmem:[%s6 + $0x120] sm:$0xff]
    %v776 = vld [vmem:[%s6 + $0x128] sm:$0xff]
    %v777 = vld [vmem:[%s6 + $0x130] sm:$0xff]
    %v778 = vld [vmem:[%s6 + $0x138] sm:$0xff]
    %v779 = vld [vmem:[%s6 + $0x140] sm:$0xff]
    %v780 = vld [vmem:[%s6 + $0x148] sm:$0xff]
    %v781 = vld [vmem:[%s6 + $0x150] sm:$0xff]
    %v782 = vld [vmem:[%s6 + $0x158] sm:$0xff]
    %v783 = vld [vmem:[%s6 + $0x160] sm:$0xff]
    %v784 = vld [vmem:[%s6 + $0x168] sm:$0xff]
    %v785 = vld [vmem:[%s6 + $0x170] sm:$0xff]
    %v786 = vld [vmem:[%s6 + $0x178] sm:$0xff]
    %v787 = vld [vmem:[%s6 + $0x180] sm:$0xff]
    %v788 = vld [vmem:[%s6 + $0x188] sm:$0xff]
    %v789 = vld [vmem:[%s6 + $0x190] sm:$0xff]
    %v790 = vld [vmem:[%s6 + $0x198] sm:$0xff]
    %v791 = vld [vmem:[%s6 + $0x1a0] sm:$0xff]
    %v792 = vld [vmem:[%s6 + $0x1a8] sm:$0xff]
    %v793 = vld [vmem:[%s6 + $0x1b0] sm:$0xff]
    %v794 = vld [vmem:[%s6 + $0x1b8] sm:$0xff]
    %v795 = vld [vmem:[%s6 + $0x1c0] sm:$0xff]
    %v796 = vld [vmem:[%s6 + $0x1c8] sm:$0xff]
    %v797 = vld [vmem:[%s6 + $0x1d0] sm:$0xff]
    %v798 = vld [vmem:[%s6 + $0x1d8] sm:$0xff]
    %v799 = vld [vmem:[%s6 + $0x1e0] sm:$0xff]
    %v800 = vld [vmem:[%s6 + $0x1e8] sm:$0xff]
    %v801 = vld [vmem:[%s6 + $0x1f0] sm:$0xff]
    %v802 = vld [vmem:[%s6 + $0x1f8] sm:$0xff]
    %v803 = vld [vmem:[%s6 + $0x200] sm:$0xff]
    %v804 = vld [vmem:[%s6 + $0x208] sm:$0xff]
    %v805 = vld [vmem:[%s6 + $0x210] sm:$0xff]
    %v806 = vld [vmem:[%s6 + $0x218] sm:$0xff]
    %v807 = vld [vmem:[%s6 + $0x220] sm:$0xff]
    %v808 = vld [vmem:[%s6 + $0x228] sm:$0xff]
    %v809 = vld [vmem:[%s6 + $0x230] sm:$0xff]
    %v810 = vld [vmem:[%s6 + $0x238] sm:$0xff]
    %v811 = vld [vmem:[%s6 + $0x240] sm:$0xff]
    %v812 = vld [vmem:[%s6 + $0x248] sm:$0xff]
    %v813 = vld [vmem:[%s6 + $0x250] sm:$0xff]
    %v814 = vld [vmem:[%s6 + $0x258] sm:$0xff]
    %v815 = vld [vmem:[%s6 + $0x260] sm:$0xff]
    %v816 = vld [vmem:[%s6 + $0x268] sm:$0xff]
    %v817 = vld [vmem:[%s6 + $0x270] sm:$0xff]
    %v818 = vld [vmem:[%s6 + $0x278] sm:$0xff]
    %v819 = vld [vmem:[%s6 + $0x280] sm:$0xff]
    %v820 = vld [vmem:[%s6 + $0x288] sm:$0xff]
    %v821 = vld [vmem:[%s6 + $0x290] sm:$0xff]
    %v822 = vld [vmem:[%s6 + $0x298] sm:$0xff]
    %v823 = vld [vmem:[%s6 + $0x2a0] sm:$0xff]
    %v824 = vld [vmem:[%s6 + $0x2a8] sm:$0xff]
    %v825 = vld [vmem:[%s6 + $0x2b0] sm:$0xff]
    %v826 = vld [vmem:[%s6 + $0x2b8] sm:$0xff]
    %v827 = vld [vmem:[%s6 + $0x2c0] sm:$0xff]
    %v828 = vld [vmem:[%s6 + $0x2c8] sm:$0xff]
    %v829 = vld [vmem:[%s6 + $0x2d0] sm:$0xff]
    %v830 = vld [vmem:[%s6 + $0x2d8] sm:$0xff]
    %v831 = vld [vmem:[%s6 + $0x2e0] sm:$0xff]
    %v832 = vld [vmem:[%s6 + $0x2e8] sm:$0xff]
    %v833 = vld [vmem:[%s6 + $0x2f0] sm:$0xff]
    %v834 = vld [vmem:[%s6 + $0x2f8] sm:$0xff]
    %v835 = vld [vmem:[%s6 + $0x300] sm:$0xff]
    %v836 = vld [vmem:[%s6 + $0x308] sm:$0xff]
    %v837 = vld [vmem:[%s6 + $0x310] sm:$0xff]
    %v838 = vld [vmem:[%s6 + $0x318] sm:$0xff]
    %v839 = vld [vmem:[%s6 + $0x320] sm:$0xff]
    %v840 = vld [vmem:[%s6 + $0x328] sm:$0xff]
    %v841 = vld [vmem:[%s6 + $0x330] sm:$0xff]
    %v842 = vld [vmem:[%s6 + $0x338] sm:$0xff]
    %v843 = vld [vmem:[%s6 + $0x340] sm:$0xff]
    %v844 = vld [vmem:[%s6 + $0x348] sm:$0xff]
    %v845 = vld [vmem:[%s6 + $0x350] sm:$0xff]
    %v846 = vld [vmem:[%s6 + $0x358] sm:$0xff]
    %v847 = vld [vmem:[%s6 + $0x360] sm:$0xff]
    %v848 = vld [vmem:[%s6 + $0x368] sm:$0xff]
    %v849 = vld [vmem:[%s6 + $0x370] sm:$0xff]
    %v850 = vld [vmem:[%s6 + $0x378] sm:$0xff]
    %v851 = vld [vmem:[%s6 + $0x380] sm:$0xff]
    %v852 = vld [vmem:[%s6 + $0x388] sm:$0xff]
    %v853 = vld [vmem:[%s6 + $0x390] sm:$0xff]
    %v854 = vld [vmem:[%s6 + $0x398] sm:$0xff]
    %v855 = vld [vmem:[%s6 + $0x3a0] sm:$0xff]
    %v856 = vld [vmem:[%s6 + $0x3a8] sm:$0xff]
    %v857 = vld [vmem:[%s6 + $0x3b0] sm:$0xff]
    %v858 = vld [vmem:[%s6 + $0x3b8] sm:$0xff]
    %v859 = vld [vmem:[%s6 + $0x3c0] sm:$0xff]
    %v860 = vld [vmem:[%s6 + $0x3c8] sm:$0xff]
    %v861 = vld [vmem:[%s6 + $0x3d0] sm:$0xff]
    %v862 = vld [vmem:[%s6 + $0x3d8] sm:$0xff]
    %v863 = vld [vmem:[%s6 + $0x3e0] sm:$0xff]
    %v864 = vld [vmem:[%s6 + $0x3e8] sm:$0xff]
    %v865 = vld [vmem:[%s6 + $0x3f0] sm:$0xff]
    %v866 = vld [vmem:[%s6 + $0x3f8] sm:$0xff]
    %868 = vset.pattern.permute.xlu0 0
    %869 = vperm.xlu0 %868, %v739
    %v870 = vpop.permute.xlu0 %869
    %873 = vset.pattern.permute.xlu0 0
    %874 = vperm.xlu0 %873, %v740
    %v875 = vpop.permute.xlu0 %874
    %878 = vset.pattern.permute.xlu0 0
    %879 = vperm.xlu0 %878, %v741
    %v880 = vpop.permute.xlu0 %879
    %883 = vset.pattern.permute.xlu0 0
    %884 = vperm.xlu0 %883, %v742
    %v885 = vpop.permute.xlu0 %884
    %888 = vset.pattern.permute.xlu0 0
    %889 = vperm.xlu0 %888, %v743
    %v890 = vpop.permute.xlu0 %889
    %893 = vset.pattern.permute.xlu0 0
    %894 = vperm.xlu0 %893, %v744
    %v895 = vpop.permute.xlu0 %894
    %898 = vset.pattern.permute.xlu0 0
    %899 = vperm.xlu0 %898, %v745
    %v900 = vpop.permute.xlu0 %899
    %903 = vset.pattern.permute.xlu0 0
    %904 = vperm.xlu0 %903, %v746
    %v905 = vpop.permute.xlu0 %904
    %908 = vset.pattern.permute.xlu0 0
    %909 = vperm.xlu0 %908, %v747
    %v910 = vpop.permute.xlu0 %909
    %913 = vset.pattern.permute.xlu0 0
    %914 = vperm.xlu0 %913, %v748
    %v915 = vpop.permute.xlu0 %914
    %918 = vset.pattern.permute.xlu0 0
    %919 = vperm.xlu0 %918, %v749
    %v920 = vpop.permute.xlu0 %919
    %923 = vset.pattern.permute.xlu0 0
    %924 = vperm.xlu0 %923, %v750
    %v925 = vpop.permute.xlu0 %924
    %928 = vset.pattern.permute.xlu0 0
    %929 = vperm.xlu0 %928, %v751
    %v930 = vpop.permute.xlu0 %929
    %933 = vset.pattern.permute.xlu0 0
    %934 = vperm.xlu0 %933, %v752
    %v935 = vpop.permute.xlu0 %934
    %938 = vset.pattern.permute.xlu0 0
    %939 = vperm.xlu0 %938, %v753
    %v940 = vpop.permute.xlu0 %939
    %943 = vset.pattern.permute.xlu0 0
    %944 = vperm.xlu0 %943, %v754
    %v945 = vpop.permute.xlu0 %944
    %948 = vset.pattern.permute.xlu0 0
    %949 = vperm.xlu0 %948, %v755
    %v950 = vpop.permute.xlu0 %949
    %953 = vset.pattern.permute.xlu0 0
    %954 = vperm.xlu0 %953, %v756
    %v955 = vpop.permute.xlu0 %954
    %958 = vset.pattern.permute.xlu0 0
    %959 = vperm.xlu0 %958, %v757
    %v960 = vpop.permute.xlu0 %959
    %963 = vset.pattern.permute.xlu0 0
    %964 = vperm.xlu0 %963, %v758
    %v965 = vpop.permute.xlu0 %964
    %968 = vset.pattern.permute.xlu0 0
    %969 = vperm.xlu0 %968, %v759
    %v970 = vpop.permute.xlu0 %969
    %973 = vset.pattern.permute.xlu0 0
    %974 = vperm.xlu0 %973, %v760
    %v975 = vpop.permute.xlu0 %974
    %978 = vset.pattern.permute.xlu0 0
    %979 = vperm.xlu0 %978, %v761
    %v980 = vpop.permute.xlu0 %979
    %983 = vset.pattern.permute.xlu0 0
    %984 = vperm.xlu0 %983, %v762
    %v985 = vpop.permute.xlu0 %984
    %988 = vset.pattern.permute.xlu0 0
    %989 = vperm.xlu0 %988, %v763
    %v990 = vpop.permute.xlu0 %989
    %993 = vset.pattern.permute.xlu0 0
    %994 = vperm.xlu0 %993, %v764
    %v995 = vpop.permute.xlu0 %994
    %998 = vset.pattern.permute.xlu0 0
    %999 = vperm.xlu0 %998, %v765
    %v1000 = vpop.permute.xlu0 %999
    %1003 = vset.pattern.permute.xlu0 0
    %1004 = vperm.xlu0 %1003, %v766
    %v1005 = vpop.permute.xlu0 %1004
    %1008 = vset.pattern.permute.xlu0 0
    %1009 = vperm.xlu0 %1008, %v767
    %v1010 = vpop.permute.xlu0 %1009
    %1013 = vset.pattern.permute.xlu0 0
    %1014 = vperm.xlu0 %1013, %v768
    %v1015 = vpop.permute.xlu0 %1014
    %1018 = vset.pattern.permute.xlu0 0
    %1019 = vperm.xlu0 %1018, %v769
    %v1020 = vpop.permute.xlu0 %1019
    %1023 = vset.pattern.permute.xlu0 0
    %1024 = vperm.xlu0 %1023, %v770
    %v1025 = vpop.permute.xlu0 %1024
    %1028 = vset.pattern.permute.xlu0 0
    %1029 = vperm.xlu0 %1028, %v771
    %v1030 = vpop.permute.xlu0 %1029
    %1033 = vset.pattern.permute.xlu0 0
    %1034 = vperm.xlu0 %1033, %v772
    %v1035 = vpop.permute.xlu0 %1034
    %1038 = vset.pattern.permute.xlu0 0
    %1039 = vperm.xlu0 %1038, %v773
    %v1040 = vpop.permute.xlu0 %1039
    %1043 = vset.pattern.permute.xlu0 0
    %1044 = vperm.xlu0 %1043, %v774
    %v1045 = vpop.permute.xlu0 %1044
    %1048 = vset.pattern.permute.xlu0 0
    %1049 = vperm.xlu0 %1048, %v775
    %v1050 = vpop.permute.xlu0 %1049
    %1053 = vset.pattern.permute.xlu0 0
    %1054 = vperm.xlu0 %1053, %v776
    %v1055 = vpop.permute.xlu0 %1054
    %1058 = vset.pattern.permute.xlu0 0
    %1059 = vperm.xlu0 %1058, %v777
    %v1060 = vpop.permute.xlu0 %1059
    %1063 = vset.pattern.permute.xlu0 0
    %1064 = vperm.xlu0 %1063, %v778
    %v1065 = vpop.permute.xlu0 %1064
    %1068 = vset.pattern.permute.xlu0 0
    %1069 = vperm.xlu0 %1068, %v779
    %v1070 = vpop.permute.xlu0 %1069
    %1073 = vset.pattern.permute.xlu0 0
    %1074 = vperm.xlu0 %1073, %v780
    %v1075 = vpop.permute.xlu0 %1074
    %1078 = vset.pattern.permute.xlu0 0
    %1079 = vperm.xlu0 %1078, %v781
    %v1080 = vpop.permute.xlu0 %1079
    %1083 = vset.pattern.permute.xlu0 0
    %1084 = vperm.xlu0 %1083, %v782
    %v1085 = vpop.permute.xlu0 %1084
    %1088 = vset.pattern.permute.xlu0 0
    %1089 = vperm.xlu0 %1088, %v783
    %v1090 = vpop.permute.xlu0 %1089
    %1093 = vset.pattern.permute.xlu0 0
    %1094 = vperm.xlu0 %1093, %v784
    %v1095 = vpop.permute.xlu0 %1094
    %1098 = vset.pattern.permute.xlu0 0
    %1099 = vperm.xlu0 %1098, %v785
    %v1100 = vpop.permute.xlu0 %1099
    %1103 = vset.pattern.permute.xlu0 0
    %1104 = vperm.xlu0 %1103, %v786
    %v1105 = vpop.permute.xlu0 %1104
    %1108 = vset.pattern.permute.xlu0 0
    %1109 = vperm.xlu0 %1108, %v787
    %v1110 = vpop.permute.xlu0 %1109
    %1113 = vset.pattern.permute.xlu0 0
    %1114 = vperm.xlu0 %1113, %v788
    %v1115 = vpop.permute.xlu0 %1114
    %1118 = vset.pattern.permute.xlu0 0
    %1119 = vperm.xlu0 %1118, %v789
    %v1120 = vpop.permute.xlu0 %1119
    %1123 = vset.pattern.permute.xlu0 0
    %1124 = vperm.xlu0 %1123, %v790
    %v1125 = vpop.permute.xlu0 %1124
    %1128 = vset.pattern.permute.xlu0 0
    %1129 = vperm.xlu0 %1128, %v791
    %v1130 = vpop.permute.xlu0 %1129
    %1133 = vset.pattern.permute.xlu0 0
    %1134 = vperm.xlu0 %1133, %v792
    %v1135 = vpop.permute.xlu0 %1134
    %1138 = vset.pattern.permute.xlu0 0
    %1139 = vperm.xlu0 %1138, %v793
    %v1140 = vpop.permute.xlu0 %1139
    %1143 = vset.pattern.permute.xlu0 0
    %1144 = vperm.xlu0 %1143, %v794
    %v1145 = vpop.permute.xlu0 %1144
    %1148 = vset.pattern.permute.xlu0 0
    %1149 = vperm.xlu0 %1148, %v795
    %v1150 = vpop.permute.xlu0 %1149
    %1153 = vset.pattern.permute.xlu0 0
    %1154 = vperm.xlu0 %1153, %v796
    %v1155 = vpop.permute.xlu0 %1154
    %1158 = vset.pattern.permute.xlu0 0
    %1159 = vperm.xlu0 %1158, %v797
    %v1160 = vpop.permute.xlu0 %1159
    %1163 = vset.pattern.permute.xlu0 0
    %1164 = vperm.xlu0 %1163, %v798
    %v1165 = vpop.permute.xlu0 %1164
    %1168 = vset.pattern.permute.xlu0 0
    %1169 = vperm.xlu0 %1168, %v799
    %v1170 = vpop.permute.xlu0 %1169
    %1173 = vset.pattern.permute.xlu0 0
    %1174 = vperm.xlu0 %1173, %v800
    %v1175 = vpop.permute.xlu0 %1174
    %1178 = vset.pattern.permute.xlu0 0
    %1179 = vperm.xlu0 %1178, %v801
    %v1180 = vpop.permute.xlu0 %1179
    %1183 = vset.pattern.permute.xlu0 0
    %1184 = vperm.xlu0 %1183, %v802
    %v1185 = vpop.permute.xlu0 %1184
    %1188 = vset.pattern.permute.xlu0 0
    %1189 = vperm.xlu0 %1188, %v803
    %v1190 = vpop.permute.xlu0 %1189
    %1193 = vset.pattern.permute.xlu0 0
    %1194 = vperm.xlu0 %1193, %v804
    %v1195 = vpop.permute.xlu0 %1194
    %1198 = vset.pattern.permute.xlu0 0
    %1199 = vperm.xlu0 %1198, %v805
    %v1200 = vpop.permute.xlu0 %1199
    %1203 = vset.pattern.permute.xlu0 0
    %1204 = vperm.xlu0 %1203, %v806
    %v1205 = vpop.permute.xlu0 %1204
    %1208 = vset.pattern.permute.xlu0 0
    %1209 = vperm.xlu0 %1208, %v807
    %v1210 = vpop.permute.xlu0 %1209
    %1213 = vset.pattern.permute.xlu0 0
    %1214 = vperm.xlu0 %1213, %v808
    %v1215 = vpop.permute.xlu0 %1214
    %1218 = vset.pattern.permute.xlu0 0
    %1219 = vperm.xlu0 %1218, %v809
    %v1220 = vpop.permute.xlu0 %1219
    %1223 = vset.pattern.permute.xlu0 0
    %1224 = vperm.xlu0 %1223, %v810
    %v1225 = vpop.permute.xlu0 %1224
    %1228 = vset.pattern.permute.xlu0 0
    %1229 = vperm.xlu0 %1228, %v811
    %v1230 = vpop.permute.xlu0 %1229
    %1233 = vset.pattern.permute.xlu0 0
    %1234 = vperm.xlu0 %1233, %v812
    %v1235 = vpop.permute.xlu0 %1234
    %1238 = vset.pattern.permute.xlu0 0
    %1239 = vperm.xlu0 %1238, %v813
    %v1240 = vpop.permute.xlu0 %1239
    %1243 = vset.pattern.permute.xlu0 0
    %1244 = vperm.xlu0 %1243, %v814
    %v1245 = vpop.permute.xlu0 %1244
    %1248 = vset.pattern.permute.xlu0 0
    %1249 = vperm.xlu0 %1248, %v815
    %v1250 = vpop.permute.xlu0 %1249
    %1253 = vset.pattern.permute.xlu0 0
    %1254 = vperm.xlu0 %1253, %v816
    %v1255 = vpop.permute.xlu0 %1254
    %1258 = vset.pattern.permute.xlu0 0
    %1259 = vperm.xlu0 %1258, %v817
    %v1260 = vpop.permute.xlu0 %1259
    %1263 = vset.pattern.permute.xlu0 0
    %1264 = vperm.xlu0 %1263, %v818
    %v1265 = vpop.permute.xlu0 %1264
    %1268 = vset.pattern.permute.xlu0 0
    %1269 = vperm.xlu0 %1268, %v819
    %v1270 = vpop.permute.xlu0 %1269
    %1273 = vset.pattern.permute.xlu0 0
    %1274 = vperm.xlu0 %1273, %v820
    %v1275 = vpop.permute.xlu0 %1274
    %1278 = vset.pattern.permute.xlu0 0
    %1279 = vperm.xlu0 %1278, %v821
    %v1280 = vpop.permute.xlu0 %1279
    %1283 = vset.pattern.permute.xlu0 0
    %1284 = vperm.xlu0 %1283, %v822
    %v1285 = vpop.permute.xlu0 %1284
    %1288 = vset.pattern.permute.xlu0 0
    %1289 = vperm.xlu0 %1288, %v823
    %v1290 = vpop.permute.xlu0 %1289
    %1293 = vset.pattern.permute.xlu0 0
    %1294 = vperm.xlu0 %1293, %v824
    %v1295 = vpop.permute.xlu0 %1294
    %1298 = vset.pattern.permute.xlu0 0
    %1299 = vperm.xlu0 %1298, %v825
    %v1300 = vpop.permute.xlu0 %1299
    %1303 = vset.pattern.permute.xlu0 0
    %1304 = vperm.xlu0 %1303, %v826
    %v1305 = vpop.permute.xlu0 %1304
    %1308 = vset.pattern.permute.xlu0 0
    %1309 = vperm.xlu0 %1308, %v827
    %v1310 = vpop.permute.xlu0 %1309
    %1313 = vset.pattern.permute.xlu0 0
    %1314 = vperm.xlu0 %1313, %v828
    %v1315 = vpop.permute.xlu0 %1314
    %1318 = vset.pattern.permute.xlu0 0
    %1319 = vperm.xlu0 %1318, %v829
    %v1320 = vpop.permute.xlu0 %1319
    %1323 = vset.pattern.permute.xlu0 0
    %1324 = vperm.xlu0 %1323, %v830
    %v1325 = vpop.permute.xlu0 %1324
    %1328 = vset.pattern.permute.xlu0 0
    %1329 = vperm.xlu0 %1328, %v831
    %v1330 = vpop.permute.xlu0 %1329
    %1333 = vset.pattern.permute.xlu0 0
    %1334 = vperm.xlu0 %1333, %v832
    %v1335 = vpop.permute.xlu0 %1334
    %1338 = vset.pattern.permute.xlu0 0
    %1339 = vperm.xlu0 %1338, %v833
    %v1340 = vpop.permute.xlu0 %1339
    %1343 = vset.pattern.permute.xlu0 0
    %1344 = vperm.xlu0 %1343, %v834
    %v1345 = vpop.permute.xlu0 %1344
    %1348 = vset.pattern.permute.xlu0 0
    %1349 = vperm.xlu0 %1348, %v835
    %v1350 = vpop.permute.xlu0 %1349
    %1353 = vset.pattern.permute.xlu0 0
    %1354 = vperm.xlu0 %1353, %v836
    %v1355 = vpop.permute.xlu0 %1354
    %1358 = vset.pattern.permute.xlu0 0
    %1359 = vperm.xlu0 %1358, %v837
    %v1360 = vpop.permute.xlu0 %1359
    %1363 = vset.pattern.permute.xlu0 0
    %1364 = vperm.xlu0 %1363, %v838
    %v1365 = vpop.permute.xlu0 %1364
    %1368 = vset.pattern.permute.xlu0 0
    %1369 = vperm.xlu0 %1368, %v839
    %v1370 = vpop.permute.xlu0 %1369
    %1373 = vset.pattern.permute.xlu0 0
    %1374 = vperm.xlu0 %1373, %v840
    %v1375 = vpop.permute.xlu0 %1374
    %1378 = vset.pattern.permute.xlu0 0
    %1379 = vperm.xlu0 %1378, %v841
    %v1380 = vpop.permute.xlu0 %1379
    %1383 = vset.pattern.permute.xlu0 0
    %1384 = vperm.xlu0 %1383, %v842
    %v1385 = vpop.permute.xlu0 %1384
    %1388 = vset.pattern.permute.xlu0 0
    %1389 = vperm.xlu0 %1388, %v843
    %v1390 = vpop.permute.xlu0 %1389
    %1393 = vset.pattern.permute.xlu0 0
    %1394 = vperm.xlu0 %1393, %v844
    %v1395 = vpop.permute.xlu0 %1394
    %1398 = vset.pattern.permute.xlu0 0
    %1399 = vperm.xlu0 %1398, %v845
    %v1400 = vpop.permute.xlu0 %1399
    %1403 = vset.pattern.permute.xlu0 0
    %1404 = vperm.xlu0 %1403, %v846
    %v1405 = vpop.permute.xlu0 %1404
    %1408 = vset.pattern.permute.xlu0 0
    %1409 = vperm.xlu0 %1408, %v847
    %v1410 = vpop.permute.xlu0 %1409
    %1413 = vset.pattern.permute.xlu0 0
    %1414 = vperm.xlu0 %1413, %v848
    %v1415 = vpop.permute.xlu0 %1414
    %1418 = vset.pattern.permute.xlu0 0
    %1419 = vperm.xlu0 %1418, %v849
    %v1420 = vpop.permute.xlu0 %1419
    %1423 = vset.pattern.permute.xlu0 0
    %1424 = vperm.xlu0 %1423, %v850
    %v1425 = vpop.permute.xlu0 %1424
    %1428 = vset.pattern.permute.xlu0 0
    %1429 = vperm.xlu0 %1428, %v851
    %v1430 = vpop.permute.xlu0 %1429
    %1433 = vset.pattern.permute.xlu0 0
    %1434 = vperm.xlu0 %1433, %v852
    %v1435 = vpop.permute.xlu0 %1434
    %1438 = vset.pattern.permute.xlu0 0
    %1439 = vperm.xlu0 %1438, %v853
    %v1440 = vpop.permute.xlu0 %1439
    %1443 = vset.pattern.permute.xlu0 0
    %1444 = vperm.xlu0 %1443, %v854
    %v1445 = vpop.permute.xlu0 %1444
    %1448 = vset.pattern.permute.xlu0 0
    %1449 = vperm.xlu0 %1448, %v855
    %v1450 = vpop.permute.xlu0 %1449
    %1453 = vset.pattern.permute.xlu0 0
    %1454 = vperm.xlu0 %1453, %v856
    %v1455 = vpop.permute.xlu0 %1454
    %1458 = vset.pattern.permute.xlu0 0
    %1459 = vperm.xlu0 %1458, %v857
    %v1460 = vpop.permute.xlu0 %1459
    %1463 = vset.pattern.permute.xlu0 0
    %1464 = vperm.xlu0 %1463, %v858
    %v1465 = vpop.permute.xlu0 %1464
    %1468 = vset.pattern.permute.xlu0 0
    %1469 = vperm.xlu0 %1468, %v859
    %v1470 = vpop.permute.xlu0 %1469
    %1473 = vset.pattern.permute.xlu0 0
    %1474 = vperm.xlu0 %1473, %v860
    %v1475 = vpop.permute.xlu0 %1474
    %1478 = vset.pattern.permute.xlu0 0
    %1479 = vperm.xlu0 %1478, %v861
    %v1480 = vpop.permute.xlu0 %1479
    %1483 = vset.pattern.permute.xlu0 0
    %1484 = vperm.xlu0 %1483, %v862
    %v1485 = vpop.permute.xlu0 %1484
    %1488 = vset.pattern.permute.xlu0 0
    %1489 = vperm.xlu0 %1488, %v863
    %v1490 = vpop.permute.xlu0 %1489
    %1493 = vset.pattern.permute.xlu0 0
    %1494 = vperm.xlu0 %1493, %v864
    %v1495 = vpop.permute.xlu0 %1494
    %1498 = vset.pattern.permute.xlu0 0
    %1499 = vperm.xlu0 %1498, %v865
    %v1500 = vpop.permute.xlu0 %1499
    %1503 = vset.pattern.permute.xlu0 0
    %1504 = vperm.xlu0 %1503, %v866
    %v1505 = vpop.permute.xlu0 %1504
    %1507 = vmatprep.subr.mxu0 0.0
    %1508 = vmatpush1.msra.mxu0 %v610
    %1509 = vmatprep.subr.mxu0 0.0
    %1510 = vmatpush1.msra.mxu0 %v609
    %1511 = vmatprep.subr.mxu0 0.0
    %1512 = vmatpush1.msra.mxu0 %v608
    %1513 = vmatprep.subr.mxu0 0.0
    %1514 = vmatpush1.msra.mxu0 %v607
    %1515 = vmatprep.subr.mxu0 0.0
    %1516 = vmatpush1.msra.mxu0 %v606
    %1517 = vmatprep.subr.mxu0 0.0
    %1518 = vmatpush1.msra.mxu0 %v605
    %1519 = vmatprep.subr.mxu0 0.0
    %1520 = vmatpush1.msra.mxu0 %v604
    %1521 = vmatprep.subr.mxu0 0.0
    %1522 = vmatpush1.msra.mxu0 %v603
    %1523 = vmatprep.subr.mxu0 0.0
    %1524 = vmatpush1.msra.mxu0 %v602
    %1525 = vmatprep.subr.mxu0 0.0
    %1526 = vmatpush1.msra.mxu0 %v601
    %1527 = vmatprep.subr.mxu0 0.0
    %1528 = vmatpush1.msra.mxu0 %v600
    %1529 = vmatprep.subr.mxu0 0.0
    %1530 = vmatpush1.msra.mxu0 %v599
    %1531 = vmatprep.subr.mxu0 0.0
    %1532 = vmatpush1.msra.mxu0 %v598
    %1533 = vmatprep.subr.mxu0 0.0
    %1534 = vmatpush1.msra.mxu0 %v597
    %1535 = vmatprep.subr.mxu0 0.0
    %1536 = vmatpush1.msra.mxu0 %v596
    %1537 = vmatprep.subr.mxu0 0.0
    %1538 = vmatpush1.msra.mxu0 %v595
    %1539 = vmatprep.subr.mxu0 0.0
    %1540 = vmatpush2.msra.mxu0 0.0
    %1541 = vmatprep.subr.mxu0 0.0
    %1542 = vmatpush2.msra.mxu0 0.0
    %1543 = vmatprep.subr.mxu0 0.0
    %1544 = vmatpush2.msra.mxu0 0.0
    %1545 = vmatprep.subr.mxu0 0.0
    %1546 = vmatpush2.msra.mxu0 0.0
    %1547 = vmatprep.subr.mxu0 0.0
    %1548 = vmatpush2.msra.mxu0 0.0
    %1549 = vmatprep.subr.mxu0 0.0
    %1550 = vmatpush2.msra.mxu0 0.0
    %1551 = vmatprep.subr.mxu0 0.0
    %1552 = vmatpush2.msra.mxu0 0.0
    %1553 = vmatprep.subr.mxu0 0.0
    %1554 = vmatpush2.msra.mxu0 0.0
    %1555 = vmatprep.subr.mxu0 0.0
    %1556 = vmatpush2.msra.mxu0 0.0
    %1557 = vmatprep.subr.mxu0 0.0
    %1558 = vmatpush2.msra.mxu0 0.0
    %1559 = vmatprep.subr.mxu0 0.0
    %1560 = vmatpush2.msra.mxu0 0.0
    %1561 = vmatprep.subr.mxu0 0.0
    %1562 = vmatpush2.msra.mxu0 0.0
    %1563 = vmatprep.subr.mxu0 0.0
    %1564 = vmatpush2.msra.mxu0 0.0
    %1565 = vmatprep.subr.mxu0 0.0
    %1566 = vmatpush2.msra.mxu0 0.0
    %1567 = vmatprep.subr.mxu0 0.0
    %1568 = vmatpush2.msra.mxu0 0.0
    %1569 = vmatprep.subr.mxu0 0.0
    %1570 = vmatpush2.msra.mxu0 0.0
    %1571 = vmatprep.mubr.f32.mxu0 0.0
    %1572 = vmatmul.mubr.f32.gmra.mxu0 %v611
    %v1573 = vpop.f32.mrf.mxu0
    %v1574 = vadd.f32 %v870, %v1573
    %v1575 = vpop.f32.mrf.mxu0
    %1576 = vmatprep.mubr.f32.mxu0 0.0
    %1577 = vmatmul.mubr.f32.gmra.mxu0 %v612
    %v1578 = vpop.f32.mrf.mxu0
    %v1579 = vadd.f32 %v875, %v1578
    %v1580 = vpop.f32.mrf.mxu0
    %1581 = vmatprep.mubr.f32.mxu0 0.0
    %1582 = vmatmul.mubr.f32.gmra.mxu0 %v613
    %v1583 = vpop.f32.mrf.mxu0
    %v1584 = vadd.f32 %v880, %v1583
    %v1585 = vpop.f32.mrf.mxu0
    %1586 = vmatprep.mubr.f32.mxu0 0.0
    %1587 = vmatmul.mubr.f32.gmra.mxu0 %v614
    %v1588 = vpop.f32.mrf.mxu0
    %v1589 = vadd.f32 %v885, %v1588
    %v1590 = vpop.f32.mrf.mxu0
    %1591 = vmatprep.mubr.f32.mxu0 0.0
    %1592 = vmatmul.mubr.f32.gmra.mxu0 %v615
    %v1593 = vpop.f32.mrf.mxu0
    %v1594 = vadd.f32 %v890, %v1593
    %v1595 = vpop.f32.mrf.mxu0
    %1596 = vmatprep.mubr.f32.mxu0 0.0
    %1597 = vmatmul.mubr.f32.gmra.mxu0 %v616
    %v1598 = vpop.f32.mrf.mxu0
    %v1599 = vadd.f32 %v895, %v1598
    %v1600 = vpop.f32.mrf.mxu0
    %1601 = vmatprep.mubr.f32.mxu0 0.0
    %1602 = vmatmul.mubr.f32.gmra.mxu0 %v617
    %v1603 = vpop.f32.mrf.mxu0
    %v1604 = vadd.f32 %v900, %v1603
    %v1605 = vpop.f32.mrf.mxu0
    %1606 = vmatprep.mubr.f32.mxu0 0.0
    %1607 = vmatmul.mubr.f32.gmra.mxu0 %v618
    %v1608 = vpop.f32.mrf.mxu0
    %v1609 = vadd.f32 %v905, %v1608
    %v1610 = vpop.f32.mrf.mxu0
    %1611 = vmatprep.mubr.f32.mxu0 0.0
    %1612 = vmatmul.mubr.f32.gmra.mxu0 %v619
    %v1613 = vpop.f32.mrf.mxu0
    %v1614 = vadd.f32 %v910, %v1613
    %v1615 = vpop.f32.mrf.mxu0
    %1616 = vmatprep.mubr.f32.mxu0 0.0
    %1617 = vmatmul.mubr.f32.gmra.mxu0 %v620
    %v1618 = vpop.f32.mrf.mxu0
    %v1619 = vadd.f32 %v915, %v1618
    %v1620 = vpop.f32.mrf.mxu0
    %1621 = vmatprep.mubr.f32.mxu0 0.0
    %1622 = vmatmul.mubr.f32.gmra.mxu0 %v621
    %v1623 = vpop.f32.mrf.mxu0
    %v1624 = vadd.f32 %v920, %v1623
    %v1625 = vpop.f32.mrf.mxu0
    %1626 = vmatprep.mubr.f32.mxu0 0.0
    %1627 = vmatmul.mubr.f32.gmra.mxu0 %v622
    %v1628 = vpop.f32.mrf.mxu0
    %v1629 = vadd.f32 %v925, %v1628
    %v1630 = vpop.f32.mrf.mxu0
    %1631 = vmatprep.mubr.f32.mxu0 0.0
    %1632 = vmatmul.mubr.f32.gmra.mxu0 %v623
    %v1633 = vpop.f32.mrf.mxu0
    %v1634 = vadd.f32 %v930, %v1633
    %v1635 = vpop.f32.mrf.mxu0
    %1636 = vmatprep.mubr.f32.mxu0 0.0
    %1637 = vmatmul.mubr.f32.gmra.mxu0 %v624
    %v1638 = vpop.f32.mrf.mxu0
    %v1639 = vadd.f32 %v935, %v1638
    %v1640 = vpop.f32.mrf.mxu0
    %1641 = vmatprep.mubr.f32.mxu0 0.0
    %1642 = vmatmul.mubr.f32.gmra.mxu0 %v625
    %v1643 = vpop.f32.mrf.mxu0
    %v1644 = vadd.f32 %v940, %v1643
    %v1645 = vpop.f32.mrf.mxu0
    %1646 = vmatprep.mubr.f32.mxu0 0.0
    %1647 = vmatmul.mubr.f32.gmra.mxu0 %v626
    %v1648 = vpop.f32.mrf.mxu0
    %v1649 = vadd.f32 %v945, %v1648
    %v1650 = vpop.f32.mrf.mxu0
    %1651 = vmatprep.mubr.f32.mxu0 0.0
    %1652 = vmatmul.mubr.f32.gmra.mxu0 %v627
    %v1653 = vpop.f32.mrf.mxu0
    %v1654 = vadd.f32 %v950, %v1653
    %v1655 = vpop.f32.mrf.mxu0
    %1656 = vmatprep.mubr.f32.mxu0 0.0
    %1657 = vmatmul.mubr.f32.gmra.mxu0 %v628
    %v1658 = vpop.f32.mrf.mxu0
    %v1659 = vadd.f32 %v955, %v1658
    %v1660 = vpop.f32.mrf.mxu0
    %1661 = vmatprep.mubr.f32.mxu0 0.0
    %1662 = vmatmul.mubr.f32.gmra.mxu0 %v629
    %v1663 = vpop.f32.mrf.mxu0
    %v1664 = vadd.f32 %v960, %v1663
    %v1665 = vpop.f32.mrf.mxu0
    %1666 = vmatprep.mubr.f32.mxu0 0.0
    %1667 = vmatmul.mubr.f32.gmra.mxu0 %v630
    %v1668 = vpop.f32.mrf.mxu0
    %v1669 = vadd.f32 %v965, %v1668
    %v1670 = vpop.f32.mrf.mxu0
    %1671 = vmatprep.mubr.f32.mxu0 0.0
    %1672 = vmatmul.mubr.f32.gmra.mxu0 %v631
    %v1673 = vpop.f32.mrf.mxu0
    %v1674 = vadd.f32 %v970, %v1673
    %v1675 = vpop.f32.mrf.mxu0
    %1676 = vmatprep.mubr.f32.mxu0 0.0
    %1677 = vmatmul.mubr.f32.gmra.mxu0 %v632
    %v1678 = vpop.f32.mrf.mxu0
    %v1679 = vadd.f32 %v975, %v1678
    %v1680 = vpop.f32.mrf.mxu0
    %1681 = vmatprep.mubr.f32.mxu0 0.0
    %1682 = vmatmul.mubr.f32.gmra.mxu0 %v633
    %v1683 = vpop.f32.mrf.mxu0
    %v1684 = vadd.f32 %v980, %v1683
    %v1685 = vpop.f32.mrf.mxu0
    %1686 = vmatprep.mubr.f32.mxu0 0.0
    %1687 = vmatmul.mubr.f32.gmra.mxu0 %v634
    %v1688 = vpop.f32.mrf.mxu0
    %v1689 = vadd.f32 %v985, %v1688
    %v1690 = vpop.f32.mrf.mxu0
    %1691 = vmatprep.mubr.f32.mxu0 0.0
    %1692 = vmatmul.mubr.f32.gmra.mxu0 %v635
    %v1693 = vpop.f32.mrf.mxu0
    %v1694 = vadd.f32 %v990, %v1693
    %v1695 = vpop.f32.mrf.mxu0
    %1696 = vmatprep.mubr.f32.mxu0 0.0
    %1697 = vmatmul.mubr.f32.gmra.mxu0 %v636
    %v1698 = vpop.f32.mrf.mxu0
    %v1699 = vadd.f32 %v995, %v1698
    %v1700 = vpop.f32.mrf.mxu0
    %1701 = vmatprep.mubr.f32.mxu0 0.0
    %1702 = vmatmul.mubr.f32.gmra.mxu0 %v637
    %v1703 = vpop.f32.mrf.mxu0
    %v1704 = vadd.f32 %v1000, %v1703
    %v1705 = vpop.f32.mrf.mxu0
    %1706 = vmatprep.mubr.f32.mxu0 0.0
    %1707 = vmatmul.mubr.f32.gmra.mxu0 %v638
    %v1708 = vpop.f32.mrf.mxu0
    %v1709 = vadd.f32 %v1005, %v1708
    %v1710 = vpop.f32.mrf.mxu0
    %1711 = vmatprep.mubr.f32.mxu0 0.0
    %1712 = vmatmul.mubr.f32.gmra.mxu0 %v639
    %v1713 = vpop.f32.mrf.mxu0
    %v1714 = vadd.f32 %v1010, %v1713
    %v1715 = vpop.f32.mrf.mxu0
    %1716 = vmatprep.mubr.f32.mxu0 0.0
    %1717 = vmatmul.mubr.f32.gmra.mxu0 %v640
    %v1718 = vpop.f32.mrf.mxu0
    %v1719 = vadd.f32 %v1015, %v1718
    %v1720 = vpop.f32.mrf.mxu0
    %1721 = vmatprep.mubr.f32.mxu0 0.0
    %1722 = vmatmul.mubr.f32.gmra.mxu0 %v641
    %v1723 = vpop.f32.mrf.mxu0
    %v1724 = vadd.f32 %v1020, %v1723
    %v1725 = vpop.f32.mrf.mxu0
    %1726 = vmatprep.mubr.f32.mxu0 0.0
    %1727 = vmatmul.mubr.f32.gmra.mxu0 %v642
    %v1728 = vpop.f32.mrf.mxu0
    %v1729 = vadd.f32 %v1025, %v1728
    %v1730 = vpop.f32.mrf.mxu0
    %1731 = vmatprep.mubr.f32.mxu0 0.0
    %1732 = vmatmul.mubr.f32.gmra.mxu0 %v643
    %v1733 = vpop.f32.mrf.mxu0
    %v1734 = vadd.f32 %v1030, %v1733
    %v1735 = vpop.f32.mrf.mxu0
    %1736 = vmatprep.mubr.f32.mxu0 0.0
    %1737 = vmatmul.mubr.f32.gmra.mxu0 %v644
    %v1738 = vpop.f32.mrf.mxu0
    %v1739 = vadd.f32 %v1035, %v1738
    %v1740 = vpop.f32.mrf.mxu0
    %1741 = vmatprep.mubr.f32.mxu0 0.0
    %1742 = vmatmul.mubr.f32.gmra.mxu0 %v645
    %v1743 = vpop.f32.mrf.mxu0
    %v1744 = vadd.f32 %v1040, %v1743
    %v1745 = vpop.f32.mrf.mxu0
    %1746 = vmatprep.mubr.f32.mxu0 0.0
    %1747 = vmatmul.mubr.f32.gmra.mxu0 %v646
    %v1748 = vpop.f32.mrf.mxu0
    %v1749 = vadd.f32 %v1045, %v1748
    %v1750 = vpop.f32.mrf.mxu0
    %1751 = vmatprep.mubr.f32.mxu0 0.0
    %1752 = vmatmul.mubr.f32.gmra.mxu0 %v647
    %v1753 = vpop.f32.mrf.mxu0
    %v1754 = vadd.f32 %v1050, %v1753
    %v1755 = vpop.f32.mrf.mxu0
    %1756 = vmatprep.mubr.f32.mxu0 0.0
    %1757 = vmatmul.mubr.f32.gmra.mxu0 %v648
    %v1758 = vpop.f32.mrf.mxu0
    %v1759 = vadd.f32 %v1055, %v1758
    %v1760 = vpop.f32.mrf.mxu0
    %1761 = vmatprep.mubr.f32.mxu0 0.0
    %1762 = vmatmul.mubr.f32.gmra.mxu0 %v649
    %v1763 = vpop.f32.mrf.mxu0
    %v1764 = vadd.f32 %v1060, %v1763
    %v1765 = vpop.f32.mrf.mxu0
    %1766 = vmatprep.mubr.f32.mxu0 0.0
    %1767 = vmatmul.mubr.f32.gmra.mxu0 %v650
    %v1768 = vpop.f32.mrf.mxu0
    %v1769 = vadd.f32 %v1065, %v1768
    %v1770 = vpop.f32.mrf.mxu0
    %1771 = vmatprep.mubr.f32.mxu0 0.0
    %1772 = vmatmul.mubr.f32.gmra.mxu0 %v651
    %v1773 = vpop.f32.mrf.mxu0
    %v1774 = vadd.f32 %v1070, %v1773
    %v1775 = vpop.f32.mrf.mxu0
    %1776 = vmatprep.mubr.f32.mxu0 0.0
    %1777 = vmatmul.mubr.f32.gmra.mxu0 %v652
    %v1778 = vpop.f32.mrf.mxu0
    %v1779 = vadd.f32 %v1075, %v1778
    %v1780 = vpop.f32.mrf.mxu0
    %1781 = vmatprep.mubr.f32.mxu0 0.0
    %1782 = vmatmul.mubr.f32.gmra.mxu0 %v653
    %v1783 = vpop.f32.mrf.mxu0
    %v1784 = vadd.f32 %v1080, %v1783
    %v1785 = vpop.f32.mrf.mxu0
    %1786 = vmatprep.mubr.f32.mxu0 0.0
    %1787 = vmatmul.mubr.f32.gmra.mxu0 %v654
    %v1788 = vpop.f32.mrf.mxu0
    %v1789 = vadd.f32 %v1085, %v1788
    %v1790 = vpop.f32.mrf.mxu0
    %1791 = vmatprep.mubr.f32.mxu0 0.0
    %1792 = vmatmul.mubr.f32.gmra.mxu0 %v655
    %v1793 = vpop.f32.mrf.mxu0
    %v1794 = vadd.f32 %v1090, %v1793
    %v1795 = vpop.f32.mrf.mxu0
    %1796 = vmatprep.mubr.f32.mxu0 0.0
    %1797 = vmatmul.mubr.f32.gmra.mxu0 %v656
    %v1798 = vpop.f32.mrf.mxu0
    %v1799 = vadd.f32 %v1095, %v1798
    %v1800 = vpop.f32.mrf.mxu0
    %1801 = vmatprep.mubr.f32.mxu0 0.0
    %1802 = vmatmul.mubr.f32.gmra.mxu0 %v657
    %v1803 = vpop.f32.mrf.mxu0
    %v1804 = vadd.f32 %v1100, %v1803
    %v1805 = vpop.f32.mrf.mxu0
    %1806 = vmatprep.mubr.f32.mxu0 0.0
    %1807 = vmatmul.mubr.f32.gmra.mxu0 %v658
    %v1808 = vpop.f32.mrf.mxu0
    %v1809 = vadd.f32 %v1105, %v1808
    %v1810 = vpop.f32.mrf.mxu0
    %1811 = vmatprep.mubr.f32.mxu0 0.0
    %1812 = vmatmul.mubr.f32.gmra.mxu0 %v659
    %v1813 = vpop.f32.mrf.mxu0
    %v1814 = vadd.f32 %v1110, %v1813
    %v1815 = vpop.f32.mrf.mxu0
    %1816 = vmatprep.mubr.f32.mxu0 0.0
    %1817 = vmatmul.mubr.f32.gmra.mxu0 %v660
    %v1818 = vpop.f32.mrf.mxu0
    %v1819 = vadd.f32 %v1115, %v1818
    %v1820 = vpop.f32.mrf.mxu0
    %1821 = vmatprep.mubr.f32.mxu0 0.0
    %1822 = vmatmul.mubr.f32.gmra.mxu0 %v661
    %v1823 = vpop.f32.mrf.mxu0
    %v1824 = vadd.f32 %v1120, %v1823
    %v1825 = vpop.f32.mrf.mxu0
    %1826 = vmatprep.mubr.f32.mxu0 0.0
    %1827 = vmatmul.mubr.f32.gmra.mxu0 %v662
    %v1828 = vpop.f32.mrf.mxu0
    %v1829 = vadd.f32 %v1125, %v1828
    %v1830 = vpop.f32.mrf.mxu0
    %1831 = vmatprep.mubr.f32.mxu0 0.0
    %1832 = vmatmul.mubr.f32.gmra.mxu0 %v663
    %v1833 = vpop.f32.mrf.mxu0
    %v1834 = vadd.f32 %v1130, %v1833
    %v1835 = vpop.f32.mrf.mxu0
    %1836 = vmatprep.mubr.f32.mxu0 0.0
    %1837 = vmatmul.mubr.f32.gmra.mxu0 %v664
    %v1838 = vpop.f32.mrf.mxu0
    %v1839 = vadd.f32 %v1135, %v1838
    %v1840 = vpop.f32.mrf.mxu0
    %1841 = vmatprep.mubr.f32.mxu0 0.0
    %1842 = vmatmul.mubr.f32.gmra.mxu0 %v665
    %v1843 = vpop.f32.mrf.mxu0
    %v1844 = vadd.f32 %v1140, %v1843
    %v1845 = vpop.f32.mrf.mxu0
    %1846 = vmatprep.mubr.f32.mxu0 0.0
    %1847 = vmatmul.mubr.f32.gmra.mxu0 %v666
    %v1848 = vpop.f32.mrf.mxu0
    %v1849 = vadd.f32 %v1145, %v1848
    %v1850 = vpop.f32.mrf.mxu0
    %1851 = vmatprep.mubr.f32.mxu0 0.0
    %1852 = vmatmul.mubr.f32.gmra.mxu0 %v667
    %v1853 = vpop.f32.mrf.mxu0
    %v1854 = vadd.f32 %v1150, %v1853
    %v1855 = vpop.f32.mrf.mxu0
    %1856 = vmatprep.mubr.f32.mxu0 0.0
    %1857 = vmatmul.mubr.f32.gmra.mxu0 %v668
    %v1858 = vpop.f32.mrf.mxu0
    %v1859 = vadd.f32 %v1155, %v1858
    %v1860 = vpop.f32.mrf.mxu0
    %1861 = vmatprep.mubr.f32.mxu0 0.0
    %1862 = vmatmul.mubr.f32.gmra.mxu0 %v669
    %v1863 = vpop.f32.mrf.mxu0
    %v1864 = vadd.f32 %v1160, %v1863
    %v1865 = vpop.f32.mrf.mxu0
    %1866 = vmatprep.mubr.f32.mxu0 0.0
    %1867 = vmatmul.mubr.f32.gmra.mxu0 %v670
    %v1868 = vpop.f32.mrf.mxu0
    %v1869 = vadd.f32 %v1165, %v1868
    %v1870 = vpop.f32.mrf.mxu0
    %1871 = vmatprep.mubr.f32.mxu0 0.0
    %1872 = vmatmul.mubr.f32.gmra.mxu0 %v671
    %v1873 = vpop.f32.mrf.mxu0
    %v1874 = vadd.f32 %v1170, %v1873
    %v1875 = vpop.f32.mrf.mxu0
    %1876 = vmatprep.mubr.f32.mxu0 0.0
    %1877 = vmatmul.mubr.f32.gmra.mxu0 %v672
    %v1878 = vpop.f32.mrf.mxu0
    %v1879 = vadd.f32 %v1175, %v1878
    %v1880 = vpop.f32.mrf.mxu0
    %1881 = vmatprep.mubr.f32.mxu0 0.0
    %1882 = vmatmul.mubr.f32.gmra.mxu0 %v673
    %v1883 = vpop.f32.mrf.mxu0
    %v1884 = vadd.f32 %v1180, %v1883
    %v1885 = vpop.f32.mrf.mxu0
    %1886 = vmatprep.mubr.f32.mxu0 0.0
    %1887 = vmatmul.mubr.f32.gmra.mxu0 %v674
    %v1888 = vpop.f32.mrf.mxu0
    %v1889 = vadd.f32 %v1185, %v1888
    %v1890 = vpop.f32.mrf.mxu0
    %1891 = vmatprep.mubr.f32.mxu0 0.0
    %1892 = vmatmul.mubr.f32.gmra.mxu0 %v675
    %v1893 = vpop.f32.mrf.mxu0
    %v1894 = vadd.f32 %v1190, %v1893
    %v1895 = vpop.f32.mrf.mxu0
    %1896 = vmatprep.mubr.f32.mxu0 0.0
    %1897 = vmatmul.mubr.f32.gmra.mxu0 %v676
    %v1898 = vpop.f32.mrf.mxu0
    %v1899 = vadd.f32 %v1195, %v1898
    %v1900 = vpop.f32.mrf.mxu0
    %1901 = vmatprep.mubr.f32.mxu0 0.0
    %1902 = vmatmul.mubr.f32.gmra.mxu0 %v677
    %v1903 = vpop.f32.mrf.mxu0
    %v1904 = vadd.f32 %v1200, %v1903
    %v1905 = vpop.f32.mrf.mxu0
    %1906 = vmatprep.mubr.f32.mxu0 0.0
    %1907 = vmatmul.mubr.f32.gmra.mxu0 %v678
    %v1908 = vpop.f32.mrf.mxu0
    %v1909 = vadd.f32 %v1205, %v1908
    %v1910 = vpop.f32.mrf.mxu0
    %1911 = vmatprep.mubr.f32.mxu0 0.0
    %1912 = vmatmul.mubr.f32.gmra.mxu0 %v679
    %v1913 = vpop.f32.mrf.mxu0
    %v1914 = vadd.f32 %v1210, %v1913
    %v1915 = vpop.f32.mrf.mxu0
    %1916 = vmatprep.mubr.f32.mxu0 0.0
    %1917 = vmatmul.mubr.f32.gmra.mxu0 %v680
    %v1918 = vpop.f32.mrf.mxu0
    %v1919 = vadd.f32 %v1215, %v1918
    %v1920 = vpop.f32.mrf.mxu0
    %1921 = vmatprep.mubr.f32.mxu0 0.0
    %1922 = vmatmul.mubr.f32.gmra.mxu0 %v681
    %v1923 = vpop.f32.mrf.mxu0
    %v1924 = vadd.f32 %v1220, %v1923
    %v1925 = vpop.f32.mrf.mxu0
    %1926 = vmatprep.mubr.f32.mxu0 0.0
    %1927 = vmatmul.mubr.f32.gmra.mxu0 %v682
    %v1928 = vpop.f32.mrf.mxu0
    %v1929 = vadd.f32 %v1225, %v1928
    %v1930 = vpop.f32.mrf.mxu0
    %1931 = vmatprep.mubr.f32.mxu0 0.0
    %1932 = vmatmul.mubr.f32.gmra.mxu0 %v683
    %v1933 = vpop.f32.mrf.mxu0
    %v1934 = vadd.f32 %v1230, %v1933
    %v1935 = vpop.f32.mrf.mxu0
    %1936 = vmatprep.mubr.f32.mxu0 0.0
    %1937 = vmatmul.mubr.f32.gmra.mxu0 %v684
    %v1938 = vpop.f32.mrf.mxu0
    %v1939 = vadd.f32 %v1235, %v1938
    %v1940 = vpop.f32.mrf.mxu0
    %1941 = vmatprep.mubr.f32.mxu0 0.0
    %1942 = vmatmul.mubr.f32.gmra.mxu0 %v685
    %v1943 = vpop.f32.mrf.mxu0
    %v1944 = vadd.f32 %v1240, %v1943
    %v1945 = vpop.f32.mrf.mxu0
    %1946 = vmatprep.mubr.f32.mxu0 0.0
    %1947 = vmatmul.mubr.f32.gmra.mxu0 %v686
    %v1948 = vpop.f32.mrf.mxu0
    %v1949 = vadd.f32 %v1245, %v1948
    %v1950 = vpop.f32.mrf.mxu0
    %1951 = vmatprep.mubr.f32.mxu0 0.0
    %1952 = vmatmul.mubr.f32.gmra.mxu0 %v687
    %v1953 = vpop.f32.mrf.mxu0
    %v1954 = vadd.f32 %v1250, %v1953
    %v1955 = vpop.f32.mrf.mxu0
    %1956 = vmatprep.mubr.f32.mxu0 0.0
    %1957 = vmatmul.mubr.f32.gmra.mxu0 %v688
    %v1958 = vpop.f32.mrf.mxu0
    %v1959 = vadd.f32 %v1255, %v1958
    %v1960 = vpop.f32.mrf.mxu0
    %1961 = vmatprep.mubr.f32.mxu0 0.0
    %1962 = vmatmul.mubr.f32.gmra.mxu0 %v689
    %v1963 = vpop.f32.mrf.mxu0
    %v1964 = vadd.f32 %v1260, %v1963
    %v1965 = vpop.f32.mrf.mxu0
    %1966 = vmatprep.mubr.f32.mxu0 0.0
    %1967 = vmatmul.mubr.f32.gmra.mxu0 %v690
    %v1968 = vpop.f32.mrf.mxu0
    %v1969 = vadd.f32 %v1265, %v1968
    %v1970 = vpop.f32.mrf.mxu0
    %1971 = vmatprep.mubr.f32.mxu0 0.0
    %1972 = vmatmul.mubr.f32.gmra.mxu0 %v691
    %v1973 = vpop.f32.mrf.mxu0
    %v1974 = vadd.f32 %v1270, %v1973
    %v1975 = vpop.f32.mrf.mxu0
    %1976 = vmatprep.mubr.f32.mxu0 0.0
    %1977 = vmatmul.mubr.f32.gmra.mxu0 %v692
    %v1978 = vpop.f32.mrf.mxu0
    %v1979 = vadd.f32 %v1275, %v1978
    %v1980 = vpop.f32.mrf.mxu0
    %1981 = vmatprep.mubr.f32.mxu0 0.0
    %1982 = vmatmul.mubr.f32.gmra.mxu0 %v693
    %v1983 = vpop.f32.mrf.mxu0
    %v1984 = vadd.f32 %v1280, %v1983
    %v1985 = vpop.f32.mrf.mxu0
    %1986 = vmatprep.mubr.f32.mxu0 0.0
    %1987 = vmatmul.mubr.f32.gmra.mxu0 %v694
    %v1988 = vpop.f32.mrf.mxu0
    %v1989 = vadd.f32 %v1285, %v1988
    %v1990 = vpop.f32.mrf.mxu0
    %1991 = vmatprep.mubr.f32.mxu0 0.0
    %1992 = vmatmul.mubr.f32.gmra.mxu0 %v695
    %v1993 = vpop.f32.mrf.mxu0
    %v1994 = vadd.f32 %v1290, %v1993
    %v1995 = vpop.f32.mrf.mxu0
    %1996 = vmatprep.mubr.f32.mxu0 0.0
    %1997 = vmatmul.mubr.f32.gmra.mxu0 %v696
    %v1998 = vpop.f32.mrf.mxu0
    %v1999 = vadd.f32 %v1295, %v1998
    %v2000 = vpop.f32.mrf.mxu0
    %2001 = vmatprep.mubr.f32.mxu0 0.0
    %2002 = vmatmul.mubr.f32.gmra.mxu0 %v697
    %v2003 = vpop.f32.mrf.mxu0
    %v2004 = vadd.f32 %v1300, %v2003
    %v2005 = vpop.f32.mrf.mxu0
    %2006 = vmatprep.mubr.f32.mxu0 0.0
    %2007 = vmatmul.mubr.f32.gmra.mxu0 %v698
    %v2008 = vpop.f32.mrf.mxu0
    %v2009 = vadd.f32 %v1305, %v2008
    %v2010 = vpop.f32.mrf.mxu0
    %2011 = vmatprep.mubr.f32.mxu0 0.0
    %2012 = vmatmul.mubr.f32.gmra.mxu0 %v699
    %v2013 = vpop.f32.mrf.mxu0
    %v2014 = vadd.f32 %v1310, %v2013
    %v2015 = vpop.f32.mrf.mxu0
    %2016 = vmatprep.mubr.f32.mxu0 0.0
    %2017 = vmatmul.mubr.f32.gmra.mxu0 %v700
    %v2018 = vpop.f32.mrf.mxu0
    %v2019 = vadd.f32 %v1315, %v2018
    %v2020 = vpop.f32.mrf.mxu0
    %2021 = vmatprep.mubr.f32.mxu0 0.0
    %2022 = vmatmul.mubr.f32.gmra.mxu0 %v701
    %v2023 = vpop.f32.mrf.mxu0
    %v2024 = vadd.f32 %v1320, %v2023
    %v2025 = vpop.f32.mrf.mxu0
    %2026 = vmatprep.mubr.f32.mxu0 0.0
    %2027 = vmatmul.mubr.f32.gmra.mxu0 %v702
    %v2028 = vpop.f32.mrf.mxu0
    %v2029 = vadd.f32 %v1325, %v2028
    %v2030 = vpop.f32.mrf.mxu0
    %2031 = vmatprep.mubr.f32.mxu0 0.0
    %2032 = vmatmul.mubr.f32.gmra.mxu0 %v703
    %v2033 = vpop.f32.mrf.mxu0
    %v2034 = vadd.f32 %v1330, %v2033
    %v2035 = vpop.f32.mrf.mxu0
    %2036 = vmatprep.mubr.f32.mxu0 0.0
    %2037 = vmatmul.mubr.f32.gmra.mxu0 %v704
    %v2038 = vpop.f32.mrf.mxu0
    %v2039 = vadd.f32 %v1335, %v2038
    %v2040 = vpop.f32.mrf.mxu0
    %2041 = vmatprep.mubr.f32.mxu0 0.0
    %2042 = vmatmul.mubr.f32.gmra.mxu0 %v705
    %v2043 = vpop.f32.mrf.mxu0
    %v2044 = vadd.f32 %v1340, %v2043
    %v2045 = vpop.f32.mrf.mxu0
    %2046 = vmatprep.mubr.f32.mxu0 0.0
    %2047 = vmatmul.mubr.f32.gmra.mxu0 %v706
    %v2048 = vpop.f32.mrf.mxu0
    %v2049 = vadd.f32 %v1345, %v2048
    %v2050 = vpop.f32.mrf.mxu0
    %2051 = vmatprep.mubr.f32.mxu0 0.0
    %2052 = vmatmul.mubr.f32.gmra.mxu0 %v707
    %v2053 = vpop.f32.mrf.mxu0
    %v2054 = vadd.f32 %v1350, %v2053
    %v2055 = vpop.f32.mrf.mxu0
    %2056 = vmatprep.mubr.f32.mxu0 0.0
    %2057 = vmatmul.mubr.f32.gmra.mxu0 %v708
    %v2058 = vpop.f32.mrf.mxu0
    %v2059 = vadd.f32 %v1355, %v2058
    %v2060 = vpop.f32.mrf.mxu0
    %2061 = vmatprep.mubr.f32.mxu0 0.0
    %2062 = vmatmul.mubr.f32.gmra.mxu0 %v709
    %v2063 = vpop.f32.mrf.mxu0
    %v2064 = vadd.f32 %v1360, %v2063
    %v2065 = vpop.f32.mrf.mxu0
    %2066 = vmatprep.mubr.f32.mxu0 0.0
    %2067 = vmatmul.mubr.f32.gmra.mxu0 %v710
    %v2068 = vpop.f32.mrf.mxu0
    %v2069 = vadd.f32 %v1365, %v2068
    %v2070 = vpop.f32.mrf.mxu0
    %2071 = vmatprep.mubr.f32.mxu0 0.0
    %2072 = vmatmul.mubr.f32.gmra.mxu0 %v711
    %v2073 = vpop.f32.mrf.mxu0
    %v2074 = vadd.f32 %v1370, %v2073
    %v2075 = vpop.f32.mrf.mxu0
    %2076 = vmatprep.mubr.f32.mxu0 0.0
    %2077 = vmatmul.mubr.f32.gmra.mxu0 %v712
    %v2078 = vpop.f32.mrf.mxu0
    %v2079 = vadd.f32 %v1375, %v2078
    %v2080 = vpop.f32.mrf.mxu0
    %2081 = vmatprep.mubr.f32.mxu0 0.0
    %2082 = vmatmul.mubr.f32.gmra.mxu0 %v713
    %v2083 = vpop.f32.mrf.mxu0
    %v2084 = vadd.f32 %v1380, %v2083
    %v2085 = vpop.f32.mrf.mxu0
    %2086 = vmatprep.mubr.f32.mxu0 0.0
    %2087 = vmatmul.mubr.f32.gmra.mxu0 %v714
    %v2088 = vpop.f32.mrf.mxu0
    %v2089 = vadd.f32 %v1385, %v2088
    %v2090 = vpop.f32.mrf.mxu0
    %2091 = vmatprep.mubr.f32.mxu0 0.0
    %2092 = vmatmul.mubr.f32.gmra.mxu0 %v715
    %v2093 = vpop.f32.mrf.mxu0
    %v2094 = vadd.f32 %v1390, %v2093
    %v2095 = vpop.f32.mrf.mxu0
    %2096 = vmatprep.mubr.f32.mxu0 0.0
    %2097 = vmatmul.mubr.f32.gmra.mxu0 %v716
    %v2098 = vpop.f32.mrf.mxu0
    %v2099 = vadd.f32 %v1395, %v2098
    %v2100 = vpop.f32.mrf.mxu0
    %2101 = vmatprep.mubr.f32.mxu0 0.0
    %2102 = vmatmul.mubr.f32.gmra.mxu0 %v717
    %v2103 = vpop.f32.mrf.mxu0
    %v2104 = vadd.f32 %v1400, %v2103
    %v2105 = vpop.f32.mrf.mxu0
    %2106 = vmatprep.mubr.f32.mxu0 0.0
    %2107 = vmatmul.mubr.f32.gmra.mxu0 %v718
    %v2108 = vpop.f32.mrf.mxu0
    %v2109 = vadd.f32 %v1405, %v2108
    %v2110 = vpop.f32.mrf.mxu0
    %2111 = vmatprep.mubr.f32.mxu0 0.0
    %2112 = vmatmul.mubr.f32.gmra.mxu0 %v719
    %v2113 = vpop.f32.mrf.mxu0
    %v2114 = vadd.f32 %v1410, %v2113
    %v2115 = vpop.f32.mrf.mxu0
    %2116 = vmatprep.mubr.f32.mxu0 0.0
    %2117 = vmatmul.mubr.f32.gmra.mxu0 %v720
    %v2118 = vpop.f32.mrf.mxu0
    %v2119 = vadd.f32 %v1415, %v2118
    %v2120 = vpop.f32.mrf.mxu0
    %2121 = vmatprep.mubr.f32.mxu0 0.0
    %2122 = vmatmul.mubr.f32.gmra.mxu0 %v721
    %v2123 = vpop.f32.mrf.mxu0
    %v2124 = vadd.f32 %v1420, %v2123
    %v2125 = vpop.f32.mrf.mxu0
    %2126 = vmatprep.mubr.f32.mxu0 0.0
    %2127 = vmatmul.mubr.f32.gmra.mxu0 %v722
    %v2128 = vpop.f32.mrf.mxu0
    %v2129 = vadd.f32 %v1425, %v2128
    %v2130 = vpop.f32.mrf.mxu0
    %2131 = vmatprep.mubr.f32.mxu0 0.0
    %2132 = vmatmul.mubr.f32.gmra.mxu0 %v723
    %v2133 = vpop.f32.mrf.mxu0
    %v2134 = vadd.f32 %v1430, %v2133
    %v2135 = vpop.f32.mrf.mxu0
    %2136 = vmatprep.mubr.f32.mxu0 0.0
    %2137 = vmatmul.mubr.f32.gmra.mxu0 %v724
    %v2138 = vpop.f32.mrf.mxu0
    %v2139 = vadd.f32 %v1435, %v2138
    %v2140 = vpop.f32.mrf.mxu0
    %2141 = vmatprep.mubr.f32.mxu0 0.0
    %2142 = vmatmul.mubr.f32.gmra.mxu0 %v725
    %v2143 = vpop.f32.mrf.mxu0
    %v2144 = vadd.f32 %v1440, %v2143
    %v2145 = vpop.f32.mrf.mxu0
    %2146 = vmatprep.mubr.f32.mxu0 0.0
    %2147 = vmatmul.mubr.f32.gmra.mxu0 %v726
    %v2148 = vpop.f32.mrf.mxu0
    %v2149 = vadd.f32 %v1445, %v2148
    %v2150 = vpop.f32.mrf.mxu0
    %2151 = vmatprep.mubr.f32.mxu0 0.0
    %2152 = vmatmul.mubr.f32.gmra.mxu0 %v727
    %v2153 = vpop.f32.mrf.mxu0
    %v2154 = vadd.f32 %v1450, %v2153
    %v2155 = vpop.f32.mrf.mxu0
    %2156 = vmatprep.mubr.f32.mxu0 0.0
    %2157 = vmatmul.mubr.f32.gmra.mxu0 %v728
    %v2158 = vpop.f32.mrf.mxu0
    %v2159 = vadd.f32 %v1455, %v2158
    %v2160 = vpop.f32.mrf.mxu0
    %2161 = vmatprep.mubr.f32.mxu0 0.0
    %2162 = vmatmul.mubr.f32.gmra.mxu0 %v729
    %v2163 = vpop.f32.mrf.mxu0
    %v2164 = vadd.f32 %v1460, %v2163
    %v2165 = vpop.f32.mrf.mxu0
    %2166 = vmatprep.mubr.f32.mxu0 0.0
    %2167 = vmatmul.mubr.f32.gmra.mxu0 %v730
    %v2168 = vpop.f32.mrf.mxu0
    %v2169 = vadd.f32 %v1465, %v2168
    %v2170 = vpop.f32.mrf.mxu0
    %2171 = vmatprep.mubr.f32.mxu0 0.0
    %2172 = vmatmul.mubr.f32.gmra.mxu0 %v731
    %v2173 = vpop.f32.mrf.mxu0
    %v2174 = vadd.f32 %v1470, %v2173
    %v2175 = vpop.f32.mrf.mxu0
    %2176 = vmatprep.mubr.f32.mxu0 0.0
    %2177 = vmatmul.mubr.f32.gmra.mxu0 %v732
    %v2178 = vpop.f32.mrf.mxu0
    %v2179 = vadd.f32 %v1475, %v2178
    %v2180 = vpop.f32.mrf.mxu0
    %2181 = vmatprep.mubr.f32.mxu0 0.0
    %2182 = vmatmul.mubr.f32.gmra.mxu0 %v733
    %v2183 = vpop.f32.mrf.mxu0
    %v2184 = vadd.f32 %v1480, %v2183
    %v2185 = vpop.f32.mrf.mxu0
    %2186 = vmatprep.mubr.f32.mxu0 0.0
    %2187 = vmatmul.mubr.f32.gmra.mxu0 %v734
    %v2188 = vpop.f32.mrf.mxu0
    %v2189 = vadd.f32 %v1485, %v2188
    %v2190 = vpop.f32.mrf.mxu0
    %2191 = vmatprep.mubr.f32.mxu0 0.0
    %2192 = vmatmul.mubr.f32.gmra.mxu0 %v735
    %v2193 = vpop.f32.mrf.mxu0
    %v2194 = vadd.f32 %v1490, %v2193
    %v2195 = vpop.f32.mrf.mxu0
    %2196 = vmatprep.mubr.f32.mxu0 0.0
    %2197 = vmatmul.mubr.f32.gmra.mxu0 %v736
    %v2198 = vpop.f32.mrf.mxu0
    %v2199 = vadd.f32 %v1495, %v2198
    %v2200 = vpop.f32.mrf.mxu0
    %2201 = vmatprep.mubr.f32.mxu0 0.0
    %2202 = vmatmul.mubr.f32.gmra.mxu0 %v737
    %v2203 = vpop.f32.mrf.mxu0
    %v2204 = vadd.f32 %v1500, %v2203
    %v2205 = vpop.f32.mrf.mxu0
    %2206 = vmatprep.mubr.f32.mxu0 0.0
    %2207 = vmatmul.mubr.f32.gmra.mxu0 %v738
    %v2208 = vpop.f32.mrf.mxu0
    %v2209 = vadd.f32 %v1505, %v2208
    %v2210 = vpop.f32.mrf.mxu0
    %2211 = vdwg.mxu0
    %v2212 = vsel %vm401, %v1574, -inf
    %2213 = vmax.xlane.f32.xlu0 %v2212
    %v2214 = vpop.xlane.xlu0 %2213
    %v2215 = vsel %vm401, %v1579, -inf
    %2216 = vmax.xlane.f32.xlu0 %v2215
    %v2217 = vpop.xlane.xlu0 %2216
    %v2218 = vsel %vm401, %v1584, -inf
    %2219 = vmax.xlane.f32.xlu0 %v2218
    %v2220 = vpop.xlane.xlu0 %2219
    %v2221 = vsel %vm401, %v1589, -inf
    %2222 = vmax.xlane.f32.xlu0 %v2221
    %v2223 = vpop.xlane.xlu0 %2222
    %v2224 = vsel %vm401, %v1594, -inf
    %2225 = vmax.xlane.f32.xlu0 %v2224
    %v2226 = vpop.xlane.xlu0 %2225
    %v2227 = vsel %vm401, %v1599, -inf
    %2228 = vmax.xlane.f32.xlu0 %v2227
    %v2229 = vpop.xlane.xlu0 %2228
    %v2230 = vsel %vm401, %v1604, -inf
    %2231 = vmax.xlane.f32.xlu0 %v2230
    %v2232 = vpop.xlane.xlu0 %2231
    %v2233 = vsel %vm401, %v1609, -inf
    %2234 = vmax.xlane.f32.xlu0 %v2233
    %v2235 = vpop.xlane.xlu0 %2234
    %v2236 = vsel %vm401, %v1614, -inf
    %2237 = vmax.xlane.f32.xlu0 %v2236
    %v2238 = vpop.xlane.xlu0 %2237
    %v2239 = vsel %vm401, %v1619, -inf
    %2240 = vmax.xlane.f32.xlu0 %v2239
    %v2241 = vpop.xlane.xlu0 %2240
    %v2242 = vsel %vm401, %v1624, -inf
    %2243 = vmax.xlane.f32.xlu0 %v2242
    %v2244 = vpop.xlane.xlu0 %2243
    %v2245 = vsel %vm401, %v1629, -inf
    %2246 = vmax.xlane.f32.xlu0 %v2245
    %v2247 = vpop.xlane.xlu0 %2246
    %v2248 = vsel %vm401, %v1634, -inf
    %2249 = vmax.xlane.f32.xlu0 %v2248
    %v2250 = vpop.xlane.xlu0 %2249
    %v2251 = vsel %vm401, %v1639, -inf
    %2252 = vmax.xlane.f32.xlu0 %v2251
    %v2253 = vpop.xlane.xlu0 %2252
    %v2254 = vsel %vm401, %v1644, -inf
    %2255 = vmax.xlane.f32.xlu0 %v2254
    %v2256 = vpop.xlane.xlu0 %2255
    %v2257 = vsel %vm401, %v1649, -inf
    %2258 = vmax.xlane.f32.xlu0 %v2257
    %v2259 = vpop.xlane.xlu0 %2258
    %v2260 = vsel %vm401, %v1654, -inf
    %2261 = vmax.xlane.f32.xlu0 %v2260
    %v2262 = vpop.xlane.xlu0 %2261
    %v2263 = vsel %vm401, %v1659, -inf
    %2264 = vmax.xlane.f32.xlu0 %v2263
    %v2265 = vpop.xlane.xlu0 %2264
    %v2266 = vsel %vm401, %v1664, -inf
    %2267 = vmax.xlane.f32.xlu0 %v2266
    %v2268 = vpop.xlane.xlu0 %2267
    %v2269 = vsel %vm401, %v1669, -inf
    %2270 = vmax.xlane.f32.xlu0 %v2269
    %v2271 = vpop.xlane.xlu0 %2270
    %v2272 = vsel %vm401, %v1674, -inf
    %2273 = vmax.xlane.f32.xlu0 %v2272
    %v2274 = vpop.xlane.xlu0 %2273
    %v2275 = vsel %vm401, %v1679, -inf
    %2276 = vmax.xlane.f32.xlu0 %v2275
    %v2277 = vpop.xlane.xlu0 %2276
    %v2278 = vsel %vm401, %v1684, -inf
    %2279 = vmax.xlane.f32.xlu0 %v2278
    %v2280 = vpop.xlane.xlu0 %2279
    %v2281 = vsel %vm401, %v1689, -inf
    %2282 = vmax.xlane.f32.xlu0 %v2281
    %v2283 = vpop.xlane.xlu0 %2282
    %v2284 = vsel %vm401, %v1694, -inf
    %2285 = vmax.xlane.f32.xlu0 %v2284
    %v2286 = vpop.xlane.xlu0 %2285
    %v2287 = vsel %vm401, %v1699, -inf
    %2288 = vmax.xlane.f32.xlu0 %v2287
    %v2289 = vpop.xlane.xlu0 %2288
    %v2290 = vsel %vm401, %v1704, -inf
    %2291 = vmax.xlane.f32.xlu0 %v2290
    %v2292 = vpop.xlane.xlu0 %2291
    %v2293 = vsel %vm401, %v1709, -inf
    %2294 = vmax.xlane.f32.xlu0 %v2293
    %v2295 = vpop.xlane.xlu0 %2294
    %v2296 = vsel %vm401, %v1714, -inf
    %2297 = vmax.xlane.f32.xlu0 %v2296
    %v2298 = vpop.xlane.xlu0 %2297
    %v2299 = vsel %vm401, %v1719, -inf
    %2300 = vmax.xlane.f32.xlu0 %v2299
    %v2301 = vpop.xlane.xlu0 %2300
    %v2302 = vsel %vm401, %v1724, -inf
    %2303 = vmax.xlane.f32.xlu0 %v2302
    %v2304 = vpop.xlane.xlu0 %2303
    %v2305 = vsel %vm401, %v1729, -inf
    %2306 = vmax.xlane.f32.xlu0 %v2305
    %v2307 = vpop.xlane.xlu0 %2306
    %v2308 = vsel %vm401, %v1734, -inf
    %2309 = vmax.xlane.f32.xlu0 %v2308
    %v2310 = vpop.xlane.xlu0 %2309
    %v2311 = vsel %vm401, %v1739, -inf
    %2312 = vmax.xlane.f32.xlu0 %v2311
    %v2313 = vpop.xlane.xlu0 %2312
    %v2314 = vsel %vm401, %v1744, -inf
    %2315 = vmax.xlane.f32.xlu0 %v2314
    %v2316 = vpop.xlane.xlu0 %2315
    %v2317 = vsel %vm401, %v1749, -inf
    %2318 = vmax.xlane.f32.xlu0 %v2317
    %v2319 = vpop.xlane.xlu0 %2318
    %v2320 = vsel %vm401, %v1754, -inf
    %2321 = vmax.xlane.f32.xlu0 %v2320
    %v2322 = vpop.xlane.xlu0 %2321
    %v2323 = vsel %vm401, %v1759, -inf
    %2324 = vmax.xlane.f32.xlu0 %v2323
    %v2325 = vpop.xlane.xlu0 %2324
    %v2326 = vsel %vm401, %v1764, -inf
    %2327 = vmax.xlane.f32.xlu0 %v2326
    %v2328 = vpop.xlane.xlu0 %2327
    %v2329 = vsel %vm401, %v1769, -inf
    %2330 = vmax.xlane.f32.xlu0 %v2329
    %v2331 = vpop.xlane.xlu0 %2330
    %v2332 = vsel %vm401, %v1774, -inf
    %2333 = vmax.xlane.f32.xlu0 %v2332
    %v2334 = vpop.xlane.xlu0 %2333
    %v2335 = vsel %vm401, %v1779, -inf
    %2336 = vmax.xlane.f32.xlu0 %v2335
    %v2337 = vpop.xlane.xlu0 %2336
    %v2338 = vsel %vm401, %v1784, -inf
    %2339 = vmax.xlane.f32.xlu0 %v2338
    %v2340 = vpop.xlane.xlu0 %2339
    %v2341 = vsel %vm401, %v1789, -inf
    %2342 = vmax.xlane.f32.xlu0 %v2341
    %v2343 = vpop.xlane.xlu0 %2342
    %v2344 = vsel %vm401, %v1794, -inf
    %2345 = vmax.xlane.f32.xlu0 %v2344
    %v2346 = vpop.xlane.xlu0 %2345
    %v2347 = vsel %vm401, %v1799, -inf
    %2348 = vmax.xlane.f32.xlu0 %v2347
    %v2349 = vpop.xlane.xlu0 %2348
    %v2350 = vsel %vm401, %v1804, -inf
    %2351 = vmax.xlane.f32.xlu0 %v2350
    %v2352 = vpop.xlane.xlu0 %2351
    %v2353 = vsel %vm401, %v1809, -inf
    %2354 = vmax.xlane.f32.xlu0 %v2353
    %v2355 = vpop.xlane.xlu0 %2354
    %v2356 = vsel %vm401, %v1814, -inf
    %2357 = vmax.xlane.f32.xlu0 %v2356
    %v2358 = vpop.xlane.xlu0 %2357
    %v2359 = vsel %vm401, %v1819, -inf
    %2360 = vmax.xlane.f32.xlu0 %v2359
    %v2361 = vpop.xlane.xlu0 %2360
    %v2362 = vsel %vm401, %v1824, -inf
    %2363 = vmax.xlane.f32.xlu0 %v2362
    %v2364 = vpop.xlane.xlu0 %2363
    %v2365 = vsel %vm401, %v1829, -inf
    %2366 = vmax.xlane.f32.xlu0 %v2365
    %v2367 = vpop.xlane.xlu0 %2366
    %v2368 = vsel %vm401, %v1834, -inf
    %2369 = vmax.xlane.f32.xlu0 %v2368
    %v2370 = vpop.xlane.xlu0 %2369
    %v2371 = vsel %vm401, %v1839, -inf
    %2372 = vmax.xlane.f32.xlu0 %v2371
    %v2373 = vpop.xlane.xlu0 %2372
    %v2374 = vsel %vm401, %v1844, -inf
    %2375 = vmax.xlane.f32.xlu0 %v2374
    %v2376 = vpop.xlane.xlu0 %2375
    %v2377 = vsel %vm401, %v1849, -inf
    %2378 = vmax.xlane.f32.xlu0 %v2377
    %v2379 = vpop.xlane.xlu0 %2378
    %v2380 = vsel %vm401, %v1854, -inf
    %2381 = vmax.xlane.f32.xlu0 %v2380
    %v2382 = vpop.xlane.xlu0 %2381
    %v2383 = vsel %vm401, %v1859, -inf
    %2384 = vmax.xlane.f32.xlu0 %v2383
    %v2385 = vpop.xlane.xlu0 %2384
    %v2386 = vsel %vm401, %v1864, -inf
    %2387 = vmax.xlane.f32.xlu0 %v2386
    %v2388 = vpop.xlane.xlu0 %2387
    %v2389 = vsel %vm401, %v1869, -inf
    %2390 = vmax.xlane.f32.xlu0 %v2389
    %v2391 = vpop.xlane.xlu0 %2390
    %v2392 = vsel %vm401, %v1874, -inf
    %2393 = vmax.xlane.f32.xlu0 %v2392
    %v2394 = vpop.xlane.xlu0 %2393
    %v2395 = vsel %vm401, %v1879, -inf
    %2396 = vmax.xlane.f32.xlu0 %v2395
    %v2397 = vpop.xlane.xlu0 %2396
    %v2398 = vsel %vm401, %v1884, -inf
    %2399 = vmax.xlane.f32.xlu0 %v2398
    %v2400 = vpop.xlane.xlu0 %2399
    %v2401 = vsel %vm401, %v1889, -inf
    %2402 = vmax.xlane.f32.xlu0 %v2401
    %v2403 = vpop.xlane.xlu0 %2402
    %v2404 = vsel %vm401, %v1894, -inf
    %2405 = vmax.xlane.f32.xlu0 %v2404
    %v2406 = vpop.xlane.xlu0 %2405
    %v2407 = vsel %vm401, %v1899, -inf
    %2408 = vmax.xlane.f32.xlu0 %v2407
    %v2409 = vpop.xlane.xlu0 %2408
    %v2410 = vsel %vm401, %v1904, -inf
    %2411 = vmax.xlane.f32.xlu0 %v2410
    %v2412 = vpop.xlane.xlu0 %2411
    %v2413 = vsel %vm401, %v1909, -inf
    %2414 = vmax.xlane.f32.xlu0 %v2413
    %v2415 = vpop.xlane.xlu0 %2414
    %v2416 = vsel %vm401, %v1914, -inf
    %2417 = vmax.xlane.f32.xlu0 %v2416
    %v2418 = vpop.xlane.xlu0 %2417
    %v2419 = vsel %vm401, %v1919, -inf
    %2420 = vmax.xlane.f32.xlu0 %v2419
    %v2421 = vpop.xlane.xlu0 %2420
    %v2422 = vsel %vm401, %v1924, -inf
    %2423 = vmax.xlane.f32.xlu0 %v2422
    %v2424 = vpop.xlane.xlu0 %2423
    %v2425 = vsel %vm401, %v1929, -inf
    %2426 = vmax.xlane.f32.xlu0 %v2425
    %v2427 = vpop.xlane.xlu0 %2426
    %v2428 = vsel %vm401, %v1934, -inf
    %2429 = vmax.xlane.f32.xlu0 %v2428
    %v2430 = vpop.xlane.xlu0 %2429
    %v2431 = vsel %vm401, %v1939, -inf
    %2432 = vmax.xlane.f32.xlu0 %v2431
    %v2433 = vpop.xlane.xlu0 %2432
    %v2434 = vsel %vm401, %v1944, -inf
    %2435 = vmax.xlane.f32.xlu0 %v2434
    %v2436 = vpop.xlane.xlu0 %2435
    %v2437 = vsel %vm401, %v1949, -inf
    %2438 = vmax.xlane.f32.xlu0 %v2437
    %v2439 = vpop.xlane.xlu0 %2438
    %v2440 = vsel %vm401, %v1954, -inf
    %2441 = vmax.xlane.f32.xlu0 %v2440
    %v2442 = vpop.xlane.xlu0 %2441
    %v2443 = vsel %vm401, %v1959, -inf
    %2444 = vmax.xlane.f32.xlu0 %v2443
    %v2445 = vpop.xlane.xlu0 %2444
    %v2446 = vsel %vm401, %v1964, -inf
    %2447 = vmax.xlane.f32.xlu0 %v2446
    %v2448 = vpop.xlane.xlu0 %2447
    %v2449 = vsel %vm401, %v1969, -inf
    %2450 = vmax.xlane.f32.xlu0 %v2449
    %v2451 = vpop.xlane.xlu0 %2450
    %v2452 = vsel %vm401, %v1974, -inf
    %2453 = vmax.xlane.f32.xlu0 %v2452
    %v2454 = vpop.xlane.xlu0 %2453
    %v2455 = vsel %vm401, %v1979, -inf
    %2456 = vmax.xlane.f32.xlu0 %v2455
    %v2457 = vpop.xlane.xlu0 %2456
    %v2458 = vsel %vm401, %v1984, -inf
    %2459 = vmax.xlane.f32.xlu0 %v2458
    %v2460 = vpop.xlane.xlu0 %2459
    %v2461 = vsel %vm401, %v1989, -inf
    %2462 = vmax.xlane.f32.xlu0 %v2461
    %v2463 = vpop.xlane.xlu0 %2462
    %v2464 = vsel %vm401, %v1994, -inf
    %2465 = vmax.xlane.f32.xlu0 %v2464
    %v2466 = vpop.xlane.xlu0 %2465
    %v2467 = vsel %vm401, %v1999, -inf
    %2468 = vmax.xlane.f32.xlu0 %v2467
    %v2469 = vpop.xlane.xlu0 %2468
    %v2470 = vsel %vm401, %v2004, -inf
    %2471 = vmax.xlane.f32.xlu0 %v2470
    %v2472 = vpop.xlane.xlu0 %2471
    %v2473 = vsel %vm401, %v2009, -inf
    %2474 = vmax.xlane.f32.xlu0 %v2473
    %v2475 = vpop.xlane.xlu0 %2474
    %v2476 = vsel %vm401, %v2014, -inf
    %2477 = vmax.xlane.f32.xlu0 %v2476
    %v2478 = vpop.xlane.xlu0 %2477
    %v2479 = vsel %vm401, %v2019, -inf
    %2480 = vmax.xlane.f32.xlu0 %v2479
    %v2481 = vpop.xlane.xlu0 %2480
    %v2482 = vsel %vm401, %v2024, -inf
    %2483 = vmax.xlane.f32.xlu0 %v2482
    %v2484 = vpop.xlane.xlu0 %2483
    %v2485 = vsel %vm401, %v2029, -inf
    %2486 = vmax.xlane.f32.xlu0 %v2485
    %v2487 = vpop.xlane.xlu0 %2486
    %v2488 = vsel %vm401, %v2034, -inf
    %2489 = vmax.xlane.f32.xlu0 %v2488
    %v2490 = vpop.xlane.xlu0 %2489
    %v2491 = vsel %vm401, %v2039, -inf
    %2492 = vmax.xlane.f32.xlu0 %v2491
    %v2493 = vpop.xlane.xlu0 %2492
    %v2494 = vsel %vm401, %v2044, -inf
    %2495 = vmax.xlane.f32.xlu0 %v2494
    %v2496 = vpop.xlane.xlu0 %2495
    %v2497 = vsel %vm401, %v2049, -inf
    %2498 = vmax.xlane.f32.xlu0 %v2497
    %v2499 = vpop.xlane.xlu0 %2498
    %v2500 = vsel %vm401, %v2054, -inf
    %2501 = vmax.xlane.f32.xlu0 %v2500
    %v2502 = vpop.xlane.xlu0 %2501
    %v2503 = vsel %vm401, %v2059, -inf
    %2504 = vmax.xlane.f32.xlu0 %v2503
    %v2505 = vpop.xlane.xlu0 %2504
    %v2506 = vsel %vm401, %v2064, -inf
    %2507 = vmax.xlane.f32.xlu0 %v2506
    %v2508 = vpop.xlane.xlu0 %2507
    %v2509 = vsel %vm401, %v2069, -inf
    %2510 = vmax.xlane.f32.xlu0 %v2509
    %v2511 = vpop.xlane.xlu0 %2510
    %v2512 = vsel %vm401, %v2074, -inf
    %2513 = vmax.xlane.f32.xlu0 %v2512
    %v2514 = vpop.xlane.xlu0 %2513
    %v2515 = vsel %vm401, %v2079, -inf
    %2516 = vmax.xlane.f32.xlu0 %v2515
    %v2517 = vpop.xlane.xlu0 %2516
    %v2518 = vsel %vm401, %v2084, -inf
    %2519 = vmax.xlane.f32.xlu0 %v2518
    %v2520 = vpop.xlane.xlu0 %2519
    %v2521 = vsel %vm401, %v2089, -inf
    %2522 = vmax.xlane.f32.xlu0 %v2521
    %v2523 = vpop.xlane.xlu0 %2522
    %v2524 = vsel %vm401, %v2094, -inf
    %2525 = vmax.xlane.f32.xlu0 %v2524
    %v2526 = vpop.xlane.xlu0 %2525
    %v2527 = vsel %vm401, %v2099, -inf
    %2528 = vmax.xlane.f32.xlu0 %v2527
    %v2529 = vpop.xlane.xlu0 %2528
    %v2530 = vsel %vm401, %v2104, -inf
    %2531 = vmax.xlane.f32.xlu0 %v2530
    %v2532 = vpop.xlane.xlu0 %2531
    %v2533 = vsel %vm401, %v2109, -inf
    %2534 = vmax.xlane.f32.xlu0 %v2533
    %v2535 = vpop.xlane.xlu0 %2534
    %v2536 = vsel %vm401, %v2114, -inf
    %2537 = vmax.xlane.f32.xlu0 %v2536
    %v2538 = vpop.xlane.xlu0 %2537
    %v2539 = vsel %vm401, %v2119, -inf
    %2540 = vmax.xlane.f32.xlu0 %v2539
    %v2541 = vpop.xlane.xlu0 %2540
    %v2542 = vsel %vm401, %v2124, -inf
    %2543 = vmax.xlane.f32.xlu0 %v2542
    %v2544 = vpop.xlane.xlu0 %2543
    %v2545 = vsel %vm401, %v2129, -inf
    %2546 = vmax.xlane.f32.xlu0 %v2545
    %v2547 = vpop.xlane.xlu0 %2546
    %v2548 = vsel %vm401, %v2134, -inf
    %2549 = vmax.xlane.f32.xlu0 %v2548
    %v2550 = vpop.xlane.xlu0 %2549
    %v2551 = vsel %vm401, %v2139, -inf
    %2552 = vmax.xlane.f32.xlu0 %v2551
    %v2553 = vpop.xlane.xlu0 %2552
    %v2554 = vsel %vm401, %v2144, -inf
    %2555 = vmax.xlane.f32.xlu0 %v2554
    %v2556 = vpop.xlane.xlu0 %2555
    %v2557 = vsel %vm401, %v2149, -inf
    %2558 = vmax.xlane.f32.xlu0 %v2557
    %v2559 = vpop.xlane.xlu0 %2558
    %v2560 = vsel %vm401, %v2154, -inf
    %2561 = vmax.xlane.f32.xlu0 %v2560
    %v2562 = vpop.xlane.xlu0 %2561
    %v2563 = vsel %vm401, %v2159, -inf
    %2564 = vmax.xlane.f32.xlu0 %v2563
    %v2565 = vpop.xlane.xlu0 %2564
    %v2566 = vsel %vm401, %v2164, -inf
    %2567 = vmax.xlane.f32.xlu0 %v2566
    %v2568 = vpop.xlane.xlu0 %2567
    %v2569 = vsel %vm401, %v2169, -inf
    %2570 = vmax.xlane.f32.xlu0 %v2569
    %v2571 = vpop.xlane.xlu0 %2570
    %v2572 = vsel %vm401, %v2174, -inf
    %2573 = vmax.xlane.f32.xlu0 %v2572
    %v2574 = vpop.xlane.xlu0 %2573
    %v2575 = vsel %vm401, %v2179, -inf
    %2576 = vmax.xlane.f32.xlu0 %v2575
    %v2577 = vpop.xlane.xlu0 %2576
    %v2578 = vsel %vm401, %v2184, -inf
    %2579 = vmax.xlane.f32.xlu0 %v2578
    %v2580 = vpop.xlane.xlu0 %2579
    %v2581 = vsel %vm401, %v2189, -inf
    %2582 = vmax.xlane.f32.xlu0 %v2581
    %v2583 = vpop.xlane.xlu0 %2582
    %v2584 = vsel %vm401, %v2194, -inf
    %2585 = vmax.xlane.f32.xlu0 %v2584
    %v2586 = vpop.xlane.xlu0 %2585
    %v2587 = vsel %vm401, %v2199, -inf
    %2588 = vmax.xlane.f32.xlu0 %v2587
    %v2589 = vpop.xlane.xlu0 %2588
    %v2590 = vsel %vm401, %v2204, -inf
    %2591 = vmax.xlane.f32.xlu0 %v2590
    %v2592 = vpop.xlane.xlu0 %2591
    %v2593 = vsel %vm401, %v2209, -inf
    %2594 = vmax.xlane.f32.xlu0 %v2593
    %v2595 = vpop.xlane.xlu0 %2594
    %vm2596 = vcmask 1048064
    %v2597 = vsel %vm2596, %v1574, -inf
    %2598 = vmax.xlane.f32.xlu0 %v2597
    %v2599 = vpop.xlane.xlu0 %2598
    %v2600 = vsel %vm2596, %v1579, -inf
    %2601 = vmax.xlane.f32.xlu0 %v2600
    %v2602 = vpop.xlane.xlu0 %2601
    %v2603 = vsel %vm2596, %v1584, -inf
    %2604 = vmax.xlane.f32.xlu0 %v2603
    %v2605 = vpop.xlane.xlu0 %2604
    %v2606 = vsel %vm2596, %v1589, -inf
    %2607 = vmax.xlane.f32.xlu0 %v2606
    %v2608 = vpop.xlane.xlu0 %2607
    %v2609 = vsel %vm2596, %v1594, -inf
    %2610 = vmax.xlane.f32.xlu0 %v2609
    %v2611 = vpop.xlane.xlu0 %2610
    %v2612 = vsel %vm2596, %v1599, -inf
    %2613 = vmax.xlane.f32.xlu0 %v2612
    %v2614 = vpop.xlane.xlu0 %2613
    %v2615 = vsel %vm2596, %v1604, -inf
    %2616 = vmax.xlane.f32.xlu0 %v2615
    %v2617 = vpop.xlane.xlu0 %2616
    %v2618 = vsel %vm2596, %v1609, -inf
    %2619 = vmax.xlane.f32.xlu0 %v2618
    %v2620 = vpop.xlane.xlu0 %2619
    %v2621 = vsel %vm2596, %v1614, -inf
    %2622 = vmax.xlane.f32.xlu0 %v2621
    %v2623 = vpop.xlane.xlu0 %2622
    %v2624 = vsel %vm2596, %v1619, -inf
    %2625 = vmax.xlane.f32.xlu0 %v2624
    %v2626 = vpop.xlane.xlu0 %2625
    %v2627 = vsel %vm2596, %v1624, -inf
    %2628 = vmax.xlane.f32.xlu0 %v2627
    %v2629 = vpop.xlane.xlu0 %2628
    %v2630 = vsel %vm2596, %v1629, -inf
    %2631 = vmax.xlane.f32.xlu0 %v2630
    %v2632 = vpop.xlane.xlu0 %2631
    %v2633 = vsel %vm2596, %v1634, -inf
    %2634 = vmax.xlane.f32.xlu0 %v2633
    %v2635 = vpop.xlane.xlu0 %2634
    %v2636 = vsel %vm2596, %v1639, -inf
    %2637 = vmax.xlane.f32.xlu0 %v2636
    %v2638 = vpop.xlane.xlu0 %2637
    %v2639 = vsel %vm2596, %v1644, -inf
    %2640 = vmax.xlane.f32.xlu0 %v2639
    %v2641 = vpop.xlane.xlu0 %2640
    %v2642 = vsel %vm2596, %v1649, -inf
    %2643 = vmax.xlane.f32.xlu0 %v2642
    %v2644 = vpop.xlane.xlu0 %2643
    %v2645 = vsel %vm2596, %v1654, -inf
    %2646 = vmax.xlane.f32.xlu0 %v2645
    %v2647 = vpop.xlane.xlu0 %2646
    %v2648 = vsel %vm2596, %v1659, -inf
    %2649 = vmax.xlane.f32.xlu0 %v2648
    %v2650 = vpop.xlane.xlu0 %2649
    %v2651 = vsel %vm2596, %v1664, -inf
    %2652 = vmax.xlane.f32.xlu0 %v2651
    %v2653 = vpop.xlane.xlu0 %2652
    %v2654 = vsel %vm2596, %v1669, -inf
    %2655 = vmax.xlane.f32.xlu0 %v2654
    %v2656 = vpop.xlane.xlu0 %2655
    %v2657 = vsel %vm2596, %v1674, -inf
    %2658 = vmax.xlane.f32.xlu0 %v2657
    %v2659 = vpop.xlane.xlu0 %2658
    %v2660 = vsel %vm2596, %v1679, -inf
    %2661 = vmax.xlane.f32.xlu0 %v2660
    %v2662 = vpop.xlane.xlu0 %2661
    %v2663 = vsel %vm2596, %v1684, -inf
    %2664 = vmax.xlane.f32.xlu0 %v2663
    %v2665 = vpop.xlane.xlu0 %2664
    %v2666 = vsel %vm2596, %v1689, -inf
    %2667 = vmax.xlane.f32.xlu0 %v2666
    %v2668 = vpop.xlane.xlu0 %2667
    %v2669 = vsel %vm2596, %v1694, -inf
    %2670 = vmax.xlane.f32.xlu0 %v2669
    %v2671 = vpop.xlane.xlu0 %2670
    %v2672 = vsel %vm2596, %v1699, -inf
    %2673 = vmax.xlane.f32.xlu0 %v2672
    %v2674 = vpop.xlane.xlu0 %2673
    %v2675 = vsel %vm2596, %v1704, -inf
    %2676 = vmax.xlane.f32.xlu0 %v2675
    %v2677 = vpop.xlane.xlu0 %2676
    %v2678 = vsel %vm2596, %v1709, -inf
    %2679 = vmax.xlane.f32.xlu0 %v2678
    %v2680 = vpop.xlane.xlu0 %2679
    %v2681 = vsel %vm2596, %v1714, -inf
    %2682 = vmax.xlane.f32.xlu0 %v2681
    %v2683 = vpop.xlane.xlu0 %2682
    %v2684 = vsel %vm2596, %v1719, -inf
    %2685 = vmax.xlane.f32.xlu0 %v2684
    %v2686 = vpop.xlane.xlu0 %2685
    %v2687 = vsel %vm2596, %v1724, -inf
    %2688 = vmax.xlane.f32.xlu0 %v2687
    %v2689 = vpop.xlane.xlu0 %2688
    %v2690 = vsel %vm2596, %v1729, -inf
    %2691 = vmax.xlane.f32.xlu0 %v2690
    %v2692 = vpop.xlane.xlu0 %2691
    %v2693 = vsel %vm2596, %v1734, -inf
    %2694 = vmax.xlane.f32.xlu0 %v2693
    %v2695 = vpop.xlane.xlu0 %2694
    %v2696 = vsel %vm2596, %v1739, -inf
    %2697 = vmax.xlane.f32.xlu0 %v2696
    %v2698 = vpop.xlane.xlu0 %2697
    %v2699 = vsel %vm2596, %v1744, -inf
    %2700 = vmax.xlane.f32.xlu0 %v2699
    %v2701 = vpop.xlane.xlu0 %2700
    %v2702 = vsel %vm2596, %v1749, -inf
    %2703 = vmax.xlane.f32.xlu0 %v2702
    %v2704 = vpop.xlane.xlu0 %2703
    %v2705 = vsel %vm2596, %v1754, -inf
    %2706 = vmax.xlane.f32.xlu0 %v2705
    %v2707 = vpop.xlane.xlu0 %2706
    %v2708 = vsel %vm2596, %v1759, -inf
    %2709 = vmax.xlane.f32.xlu0 %v2708
    %v2710 = vpop.xlane.xlu0 %2709
    %v2711 = vsel %vm2596, %v1764, -inf
    %2712 = vmax.xlane.f32.xlu0 %v2711
    %v2713 = vpop.xlane.xlu0 %2712
    %v2714 = vsel %vm2596, %v1769, -inf
    %2715 = vmax.xlane.f32.xlu0 %v2714
    %v2716 = vpop.xlane.xlu0 %2715
    %v2717 = vsel %vm2596, %v1774, -inf
    %2718 = vmax.xlane.f32.xlu0 %v2717
    %v2719 = vpop.xlane.xlu0 %2718
    %v2720 = vsel %vm2596, %v1779, -inf
    %2721 = vmax.xlane.f32.xlu0 %v2720
    %v2722 = vpop.xlane.xlu0 %2721
    %v2723 = vsel %vm2596, %v1784, -inf
    %2724 = vmax.xlane.f32.xlu0 %v2723
    %v2725 = vpop.xlane.xlu0 %2724
    %v2726 = vsel %vm2596, %v1789, -inf
    %2727 = vmax.xlane.f32.xlu0 %v2726
    %v2728 = vpop.xlane.xlu0 %2727
    %v2729 = vsel %vm2596, %v1794, -inf
    %2730 = vmax.xlane.f32.xlu0 %v2729
    %v2731 = vpop.xlane.xlu0 %2730
    %v2732 = vsel %vm2596, %v1799, -inf
    %2733 = vmax.xlane.f32.xlu0 %v2732
    %v2734 = vpop.xlane.xlu0 %2733
    %v2735 = vsel %vm2596, %v1804, -inf
    %2736 = vmax.xlane.f32.xlu0 %v2735
    %v2737 = vpop.xlane.xlu0 %2736
    %v2738 = vsel %vm2596, %v1809, -inf
    %2739 = vmax.xlane.f32.xlu0 %v2738
    %v2740 = vpop.xlane.xlu0 %2739
    %v2741 = vsel %vm2596, %v1814, -inf
    %2742 = vmax.xlane.f32.xlu0 %v2741
    %v2743 = vpop.xlane.xlu0 %2742
    %v2744 = vsel %vm2596, %v1819, -inf
    %2745 = vmax.xlane.f32.xlu0 %v2744
    %v2746 = vpop.xlane.xlu0 %2745
    %v2747 = vsel %vm2596, %v1824, -inf
    %2748 = vmax.xlane.f32.xlu0 %v2747
    %v2749 = vpop.xlane.xlu0 %2748
    %v2750 = vsel %vm2596, %v1829, -inf
    %2751 = vmax.xlane.f32.xlu0 %v2750
    %v2752 = vpop.xlane.xlu0 %2751
    %v2753 = vsel %vm2596, %v1834, -inf
    %2754 = vmax.xlane.f32.xlu0 %v2753
    %v2755 = vpop.xlane.xlu0 %2754
    %v2756 = vsel %vm2596, %v1839, -inf
    %2757 = vmax.xlane.f32.xlu0 %v2756
    %v2758 = vpop.xlane.xlu0 %2757
    %v2759 = vsel %vm2596, %v1844, -inf
    %2760 = vmax.xlane.f32.xlu0 %v2759
    %v2761 = vpop.xlane.xlu0 %2760
    %v2762 = vsel %vm2596, %v1849, -inf
    %2763 = vmax.xlane.f32.xlu0 %v2762
    %v2764 = vpop.xlane.xlu0 %2763
    %v2765 = vsel %vm2596, %v1854, -inf
    %2766 = vmax.xlane.f32.xlu0 %v2765
    %v2767 = vpop.xlane.xlu0 %2766
    %v2768 = vsel %vm2596, %v1859, -inf
    %2769 = vmax.xlane.f32.xlu0 %v2768
    %v2770 = vpop.xlane.xlu0 %2769
    %v2771 = vsel %vm2596, %v1864, -inf
    %2772 = vmax.xlane.f32.xlu0 %v2771
    %v2773 = vpop.xlane.xlu0 %2772
    %v2774 = vsel %vm2596, %v1869, -inf
    %2775 = vmax.xlane.f32.xlu0 %v2774
    %v2776 = vpop.xlane.xlu0 %2775
    %v2777 = vsel %vm2596, %v1874, -inf
    %2778 = vmax.xlane.f32.xlu0 %v2777
    %v2779 = vpop.xlane.xlu0 %2778
    %v2780 = vsel %vm2596, %v1879, -inf
    %2781 = vmax.xlane.f32.xlu0 %v2780
    %v2782 = vpop.xlane.xlu0 %2781
    %v2783 = vsel %vm2596, %v1884, -inf
    %2784 = vmax.xlane.f32.xlu0 %v2783
    %v2785 = vpop.xlane.xlu0 %2784
    %v2786 = vsel %vm2596, %v1889, -inf
    %2787 = vmax.xlane.f32.xlu0 %v2786
    %v2788 = vpop.xlane.xlu0 %2787
    %v2789 = vsel %vm2596, %v1894, -inf
    %2790 = vmax.xlane.f32.xlu0 %v2789
    %v2791 = vpop.xlane.xlu0 %2790
    %v2792 = vsel %vm2596, %v1899, -inf
    %2793 = vmax.xlane.f32.xlu0 %v2792
    %v2794 = vpop.xlane.xlu0 %2793
    %v2795 = vsel %vm2596, %v1904, -inf
    %2796 = vmax.xlane.f32.xlu0 %v2795
    %v2797 = vpop.xlane.xlu0 %2796
    %v2798 = vsel %vm2596, %v1909, -inf
    %2799 = vmax.xlane.f32.xlu0 %v2798
    %v2800 = vpop.xlane.xlu0 %2799
    %v2801 = vsel %vm2596, %v1914, -inf
    %2802 = vmax.xlane.f32.xlu0 %v2801
    %v2803 = vpop.xlane.xlu0 %2802
    %v2804 = vsel %vm2596, %v1919, -inf
    %2805 = vmax.xlane.f32.xlu0 %v2804
    %v2806 = vpop.xlane.xlu0 %2805
    %v2807 = vsel %vm2596, %v1924, -inf
    %2808 = vmax.xlane.f32.xlu0 %v2807
    %v2809 = vpop.xlane.xlu0 %2808
    %v2810 = vsel %vm2596, %v1929, -inf
    %2811 = vmax.xlane.f32.xlu0 %v2810
    %v2812 = vpop.xlane.xlu0 %2811
    %v2813 = vsel %vm2596, %v1934, -inf
    %2814 = vmax.xlane.f32.xlu0 %v2813
    %v2815 = vpop.xlane.xlu0 %2814
    %v2816 = vsel %vm2596, %v1939, -inf
    %2817 = vmax.xlane.f32.xlu0 %v2816
    %v2818 = vpop.xlane.xlu0 %2817
    %v2819 = vsel %vm2596, %v1944, -inf
    %2820 = vmax.xlane.f32.xlu0 %v2819
    %v2821 = vpop.xlane.xlu0 %2820
    %v2822 = vsel %vm2596, %v1949, -inf
    %2823 = vmax.xlane.f32.xlu0 %v2822
    %v2824 = vpop.xlane.xlu0 %2823
    %v2825 = vsel %vm2596, %v1954, -inf
    %2826 = vmax.xlane.f32.xlu0 %v2825
    %v2827 = vpop.xlane.xlu0 %2826
    %v2828 = vsel %vm2596, %v1959, -inf
    %2829 = vmax.xlane.f32.xlu0 %v2828
    %v2830 = vpop.xlane.xlu0 %2829
    %v2831 = vsel %vm2596, %v1964, -inf
    %2832 = vmax.xlane.f32.xlu0 %v2831
    %v2833 = vpop.xlane.xlu0 %2832
    %v2834 = vsel %vm2596, %v1969, -inf
    %2835 = vmax.xlane.f32.xlu0 %v2834
    %v2836 = vpop.xlane.xlu0 %2835
    %v2837 = vsel %vm2596, %v1974, -inf
    %2838 = vmax.xlane.f32.xlu0 %v2837
    %v2839 = vpop.xlane.xlu0 %2838
    %v2840 = vsel %vm2596, %v1979, -inf
    %2841 = vmax.xlane.f32.xlu0 %v2840
    %v2842 = vpop.xlane.xlu0 %2841
    %v2843 = vsel %vm2596, %v1984, -inf
    %2844 = vmax.xlane.f32.xlu0 %v2843
    %v2845 = vpop.xlane.xlu0 %2844
    %v2846 = vsel %vm2596, %v1989, -inf
    %2847 = vmax.xlane.f32.xlu0 %v2846
    %v2848 = vpop.xlane.xlu0 %2847
    %v2849 = vsel %vm2596, %v1994, -inf
    %2850 = vmax.xlane.f32.xlu0 %v2849
    %v2851 = vpop.xlane.xlu0 %2850
    %v2852 = vsel %vm2596, %v1999, -inf
    %2853 = vmax.xlane.f32.xlu0 %v2852
    %v2854 = vpop.xlane.xlu0 %2853
    %v2855 = vsel %vm2596, %v2004, -inf
    %2856 = vmax.xlane.f32.xlu0 %v2855
    %v2857 = vpop.xlane.xlu0 %2856
    %v2858 = vsel %vm2596, %v2009, -inf
    %2859 = vmax.xlane.f32.xlu0 %v2858
    %v2860 = vpop.xlane.xlu0 %2859
    %v2861 = vsel %vm2596, %v2014, -inf
    %2862 = vmax.xlane.f32.xlu0 %v2861
    %v2863 = vpop.xlane.xlu0 %2862
    %v2864 = vsel %vm2596, %v2019, -inf
    %2865 = vmax.xlane.f32.xlu0 %v2864
    %v2866 = vpop.xlane.xlu0 %2865
    %v2867 = vsel %vm2596, %v2024, -inf
    %2868 = vmax.xlane.f32.xlu0 %v2867
    %v2869 = vpop.xlane.xlu0 %2868
    %v2870 = vsel %vm2596, %v2029, -inf
    %2871 = vmax.xlane.f32.xlu0 %v2870
    %v2872 = vpop.xlane.xlu0 %2871
    %v2873 = vsel %vm2596, %v2034, -inf
    %2874 = vmax.xlane.f32.xlu0 %v2873
    %v2875 = vpop.xlane.xlu0 %2874
    %v2876 = vsel %vm2596, %v2039, -inf
    %2877 = vmax.xlane.f32.xlu0 %v2876
    %v2878 = vpop.xlane.xlu0 %2877
    %v2879 = vsel %vm2596, %v2044, -inf
    %2880 = vmax.xlane.f32.xlu0 %v2879
    %v2881 = vpop.xlane.xlu0 %2880
    %v2882 = vsel %vm2596, %v2049, -inf
    %2883 = vmax.xlane.f32.xlu0 %v2882
    %v2884 = vpop.xlane.xlu0 %2883
    %v2885 = vsel %vm2596, %v2054, -inf
    %2886 = vmax.xlane.f32.xlu0 %v2885
    %v2887 = vpop.xlane.xlu0 %2886
    %v2888 = vsel %vm2596, %v2059, -inf
    %2889 = vmax.xlane.f32.xlu0 %v2888
    %v2890 = vpop.xlane.xlu0 %2889
    %v2891 = vsel %vm2596, %v2064, -inf
    %2892 = vmax.xlane.f32.xlu0 %v2891
    %v2893 = vpop.xlane.xlu0 %2892
    %v2894 = vsel %vm2596, %v2069, -inf
    %2895 = vmax.xlane.f32.xlu0 %v2894
    %v2896 = vpop.xlane.xlu0 %2895
    %v2897 = vsel %vm2596, %v2074, -inf
    %2898 = vmax.xlane.f32.xlu0 %v2897
    %v2899 = vpop.xlane.xlu0 %2898
    %v2900 = vsel %vm2596, %v2079, -inf
    %2901 = vmax.xlane.f32.xlu0 %v2900
    %v2902 = vpop.xlane.xlu0 %2901
    %v2903 = vsel %vm2596, %v2084, -inf
    %2904 = vmax.xlane.f32.xlu0 %v2903
    %v2905 = vpop.xlane.xlu0 %2904
    %v2906 = vsel %vm2596, %v2089, -inf
    %2907 = vmax.xlane.f32.xlu0 %v2906
    %v2908 = vpop.xlane.xlu0 %2907
    %v2909 = vsel %vm2596, %v2094, -inf
    %2910 = vmax.xlane.f32.xlu0 %v2909
    %v2911 = vpop.xlane.xlu0 %2910
    %v2912 = vsel %vm2596, %v2099, -inf
    %2913 = vmax.xlane.f32.xlu0 %v2912
    %v2914 = vpop.xlane.xlu0 %2913
    %v2915 = vsel %vm2596, %v2104, -inf
    %2916 = vmax.xlane.f32.xlu0 %v2915
    %v2917 = vpop.xlane.xlu0 %2916
    %v2918 = vsel %vm2596, %v2109, -inf
    %2919 = vmax.xlane.f32.xlu0 %v2918
    %v2920 = vpop.xlane.xlu0 %2919
    %v2921 = vsel %vm2596, %v2114, -inf
    %2922 = vmax.xlane.f32.xlu0 %v2921
    %v2923 = vpop.xlane.xlu0 %2922
    %v2924 = vsel %vm2596, %v2119, -inf
    %2925 = vmax.xlane.f32.xlu0 %v2924
    %v2926 = vpop.xlane.xlu0 %2925
    %v2927 = vsel %vm2596, %v2124, -inf
    %2928 = vmax.xlane.f32.xlu0 %v2927
    %v2929 = vpop.xlane.xlu0 %2928
    %v2930 = vsel %vm2596, %v2129, -inf
    %2931 = vmax.xlane.f32.xlu0 %v2930
    %v2932 = vpop.xlane.xlu0 %2931
    %v2933 = vsel %vm2596, %v2134, -inf
    %2934 = vmax.xlane.f32.xlu0 %v2933
    %v2935 = vpop.xlane.xlu0 %2934
    %v2936 = vsel %vm2596, %v2139, -inf
    %2937 = vmax.xlane.f32.xlu0 %v2936
    %v2938 = vpop.xlane.xlu0 %2937
    %v2939 = vsel %vm2596, %v2144, -inf
    %2940 = vmax.xlane.f32.xlu0 %v2939
    %v2941 = vpop.xlane.xlu0 %2940
    %v2942 = vsel %vm2596, %v2149, -inf
    %2943 = vmax.xlane.f32.xlu0 %v2942
    %v2944 = vpop.xlane.xlu0 %2943
    %v2945 = vsel %vm2596, %v2154, -inf
    %2946 = vmax.xlane.f32.xlu0 %v2945
    %v2947 = vpop.xlane.xlu0 %2946
    %v2948 = vsel %vm2596, %v2159, -inf
    %2949 = vmax.xlane.f32.xlu0 %v2948
    %v2950 = vpop.xlane.xlu0 %2949
    %v2951 = vsel %vm2596, %v2164, -inf
    %2952 = vmax.xlane.f32.xlu0 %v2951
    %v2953 = vpop.xlane.xlu0 %2952
    %v2954 = vsel %vm2596, %v2169, -inf
    %2955 = vmax.xlane.f32.xlu0 %v2954
    %v2956 = vpop.xlane.xlu0 %2955
    %v2957 = vsel %vm2596, %v2174, -inf
    %2958 = vmax.xlane.f32.xlu0 %v2957
    %v2959 = vpop.xlane.xlu0 %2958
    %v2960 = vsel %vm2596, %v2179, -inf
    %2961 = vmax.xlane.f32.xlu0 %v2960
    %v2962 = vpop.xlane.xlu0 %2961
    %v2963 = vsel %vm2596, %v2184, -inf
    %2964 = vmax.xlane.f32.xlu0 %v2963
    %v2965 = vpop.xlane.xlu0 %2964
    %v2966 = vsel %vm2596, %v2189, -inf
    %2967 = vmax.xlane.f32.xlu0 %v2966
    %v2968 = vpop.xlane.xlu0 %2967
    %v2969 = vsel %vm2596, %v2194, -inf
    %2970 = vmax.xlane.f32.xlu0 %v2969
    %v2971 = vpop.xlane.xlu0 %2970
    %v2972 = vsel %vm2596, %v2199, -inf
    %2973 = vmax.xlane.f32.xlu0 %v2972
    %v2974 = vpop.xlane.xlu0 %2973
    %v2975 = vsel %vm2596, %v2204, -inf
    %2976 = vmax.xlane.f32.xlu0 %v2975
    %v2977 = vpop.xlane.xlu0 %2976
    %v2978 = vsel %vm2596, %v2209, -inf
    %2979 = vmax.xlane.f32.xlu0 %v2978
    %v2980 = vpop.xlane.xlu0 %2979
    %vm2981 = vcmask 7168
    %v2982 = vsel %vm2981, %v2214, %v2599
    %v2983 = vsel %vm2981, %v2217, %v2602
    %v2984 = vsel %vm2981, %v2220, %v2605
    %v2985 = vsel %vm2981, %v2223, %v2608
    %v2986 = vsel %vm2981, %v2226, %v2611
    %v2987 = vsel %vm2981, %v2229, %v2614
    %v2988 = vsel %vm2981, %v2232, %v2617
    %v2989 = vsel %vm2981, %v2235, %v2620
    %v2990 = vsel %vm2981, %v2238, %v2623
    %v2991 = vsel %vm2981, %v2241, %v2626
    %v2992 = vsel %vm2981, %v2244, %v2629
    %v2993 = vsel %vm2981, %v2247, %v2632
    %v2994 = vsel %vm2981, %v2250, %v2635
    %v2995 = vsel %vm2981, %v2253, %v2638
    %v2996 = vsel %vm2981, %v2256, %v2641
    %v2997 = vsel %vm2981, %v2259, %v2644
    %v2998 = vsel %vm2981, %v2262, %v2647
    %v2999 = vsel %vm2981, %v2265, %v2650
    %v3000 = vsel %vm2981, %v2268, %v2653
    %v3001 = vsel %vm2981, %v2271, %v2656
    %v3002 = vsel %vm2981, %v2274, %v2659
    %v3003 = vsel %vm2981, %v2277, %v2662
    %v3004 = vsel %vm2981, %v2280, %v2665
    %v3005 = vsel %vm2981, %v2283, %v2668
    %v3006 = vsel %vm2981, %v2286, %v2671
    %v3007 = vsel %vm2981, %v2289, %v2674
    %v3008 = vsel %vm2981, %v2292, %v2677
    %v3009 = vsel %vm2981, %v2295, %v2680
    %v3010 = vsel %vm2981, %v2298, %v2683
    %v3011 = vsel %vm2981, %v2301, %v2686
    %v3012 = vsel %vm2981, %v2304, %v2689
    %v3013 = vsel %vm2981, %v2307, %v2692
    %v3014 = vsel %vm2981, %v2310, %v2695
    %v3015 = vsel %vm2981, %v2313, %v2698
    %v3016 = vsel %vm2981, %v2316, %v2701
    %v3017 = vsel %vm2981, %v2319, %v2704
    %v3018 = vsel %vm2981, %v2322, %v2707
    %v3019 = vsel %vm2981, %v2325, %v2710
    %v3020 = vsel %vm2981, %v2328, %v2713
    %v3021 = vsel %vm2981, %v2331, %v2716
    %v3022 = vsel %vm2981, %v2334, %v2719
    %v3023 = vsel %vm2981, %v2337, %v2722
    %v3024 = vsel %vm2981, %v2340, %v2725
    %v3025 = vsel %vm2981, %v2343, %v2728
    %v3026 = vsel %vm2981, %v2346, %v2731
    %v3027 = vsel %vm2981, %v2349, %v2734
    %v3028 = vsel %vm2981, %v2352, %v2737
    %v3029 = vsel %vm2981, %v2355, %v2740
    %v3030 = vsel %vm2981, %v2358, %v2743
    %v3031 = vsel %vm2981, %v2361, %v2746
    %v3032 = vsel %vm2981, %v2364, %v2749
    %v3033 = vsel %vm2981, %v2367, %v2752
    %v3034 = vsel %vm2981, %v2370, %v2755
    %v3035 = vsel %vm2981, %v2373, %v2758
    %v3036 = vsel %vm2981, %v2376, %v2761
    %v3037 = vsel %vm2981, %v2379, %v2764
    %v3038 = vsel %vm2981, %v2382, %v2767
    %v3039 = vsel %vm2981, %v2385, %v2770
    %v3040 = vsel %vm2981, %v2388, %v2773
    %v3041 = vsel %vm2981, %v2391, %v2776
    %v3042 = vsel %vm2981, %v2394, %v2779
    %v3043 = vsel %vm2981, %v2397, %v2782
    %v3044 = vsel %vm2981, %v2400, %v2785
    %v3045 = vsel %vm2981, %v2403, %v2788
    %v3046 = vsel %vm2981, %v2406, %v2791
    %v3047 = vsel %vm2981, %v2409, %v2794
    %v3048 = vsel %vm2981, %v2412, %v2797
    %v3049 = vsel %vm2981, %v2415, %v2800
    %v3050 = vsel %vm2981, %v2418, %v2803
    %v3051 = vsel %vm2981, %v2421, %v2806
    %v3052 = vsel %vm2981, %v2424, %v2809
    %v3053 = vsel %vm2981, %v2427, %v2812
    %v3054 = vsel %vm2981, %v2430, %v2815
    %v3055 = vsel %vm2981, %v2433, %v2818
    %v3056 = vsel %vm2981, %v2436, %v2821
    %v3057 = vsel %vm2981, %v2439, %v2824
    %v3058 = vsel %vm2981, %v2442, %v2827
    %v3059 = vsel %vm2981, %v2445, %v2830
    %v3060 = vsel %vm2981, %v2448, %v2833
    %v3061 = vsel %vm2981, %v2451, %v2836
    %v3062 = vsel %vm2981, %v2454, %v2839
    %v3063 = vsel %vm2981, %v2457, %v2842
    %v3064 = vsel %vm2981, %v2460, %v2845
    %v3065 = vsel %vm2981, %v2463, %v2848
    %v3066 = vsel %vm2981, %v2466, %v2851
    %v3067 = vsel %vm2981, %v2469, %v2854
    %v3068 = vsel %vm2981, %v2472, %v2857
    %v3069 = vsel %vm2981, %v2475, %v2860
    %v3070 = vsel %vm2981, %v2478, %v2863
    %v3071 = vsel %vm2981, %v2481, %v2866
    %v3072 = vsel %vm2981, %v2484, %v2869
    %v3073 = vsel %vm2981, %v2487, %v2872
    %v3074 = vsel %vm2981, %v2490, %v2875
    %v3075 = vsel %vm2981, %v2493, %v2878
    %v3076 = vsel %vm2981, %v2496, %v2881
    %v3077 = vsel %vm2981, %v2499, %v2884
    %v3078 = vsel %vm2981, %v2502, %v2887
    %v3079 = vsel %vm2981, %v2505, %v2890
    %v3080 = vsel %vm2981, %v2508, %v2893
    %v3081 = vsel %vm2981, %v2511, %v2896
    %v3082 = vsel %vm2981, %v2514, %v2899
    %v3083 = vsel %vm2981, %v2517, %v2902
    %v3084 = vsel %vm2981, %v2520, %v2905
    %v3085 = vsel %vm2981, %v2523, %v2908
    %v3086 = vsel %vm2981, %v2526, %v2911
    %v3087 = vsel %vm2981, %v2529, %v2914
    %v3088 = vsel %vm2981, %v2532, %v2917
    %v3089 = vsel %vm2981, %v2535, %v2920
    %v3090 = vsel %vm2981, %v2538, %v2923
    %v3091 = vsel %vm2981, %v2541, %v2926
    %v3092 = vsel %vm2981, %v2544, %v2929
    %v3093 = vsel %vm2981, %v2547, %v2932
    %v3094 = vsel %vm2981, %v2550, %v2935
    %v3095 = vsel %vm2981, %v2553, %v2938
    %v3096 = vsel %vm2981, %v2556, %v2941
    %v3097 = vsel %vm2981, %v2559, %v2944
    %v3098 = vsel %vm2981, %v2562, %v2947
    %v3099 = vsel %vm2981, %v2565, %v2950
    %v3100 = vsel %vm2981, %v2568, %v2953
    %v3101 = vsel %vm2981, %v2571, %v2956
    %v3102 = vsel %vm2981, %v2574, %v2959
    %v3103 = vsel %vm2981, %v2577, %v2962
    %v3104 = vsel %vm2981, %v2580, %v2965
    %v3105 = vsel %vm2981, %v2583, %v2968
    %v3106 = vsel %vm2981, %v2586, %v2971
    %v3107 = vsel %vm2981, %v2589, %v2974
    %v3108 = vsel %vm2981, %v2592, %v2977
    %v3109 = vsel %vm2981, %v2595, %v2980
    %v3110 = vld [vmem:[%s7] sm:$0xff]
    %v3111 = vld [vmem:[%s7 + $0x8] sm:$0xff]
    %v3112 = vld [vmem:[%s7 + $0x10] sm:$0xff]
    %v3113 = vld [vmem:[%s7 + $0x18] sm:$0xff]
    %v3114 = vld [vmem:[%s7 + $0x20] sm:$0xff]
    %v3115 = vld [vmem:[%s7 + $0x28] sm:$0xff]
    %v3116 = vld [vmem:[%s7 + $0x30] sm:$0xff]
    %v3117 = vld [vmem:[%s7 + $0x38] sm:$0xff]
    %v3118 = vld [vmem:[%s7 + $0x40] sm:$0xff]
    %v3119 = vld [vmem:[%s7 + $0x48] sm:$0xff]
    %v3120 = vld [vmem:[%s7 + $0x50] sm:$0xff]
    %v3121 = vld [vmem:[%s7 + $0x58] sm:$0xff]
    %v3122 = vld [vmem:[%s7 + $0x60] sm:$0xff]
    %v3123 = vld [vmem:[%s7 + $0x68] sm:$0xff]
    %v3124 = vld [vmem:[%s7 + $0x70] sm:$0xff]
    %v3125 = vld [vmem:[%s7 + $0x78] sm:$0xff]
    %v3126 = vld [vmem:[%s7 + $0x80] sm:$0xff]
    %v3127 = vld [vmem:[%s7 + $0x88] sm:$0xff]
    %v3128 = vld [vmem:[%s7 + $0x90] sm:$0xff]
    %v3129 = vld [vmem:[%s7 + $0x98] sm:$0xff]
    %v3130 = vld [vmem:[%s7 + $0xa0] sm:$0xff]
    %v3131 = vld [vmem:[%s7 + $0xa8] sm:$0xff]
    %v3132 = vld [vmem:[%s7 + $0xb0] sm:$0xff]
    %v3133 = vld [vmem:[%s7 + $0xb8] sm:$0xff]
    %v3134 = vld [vmem:[%s7 + $0xc0] sm:$0xff]
    %v3135 = vld [vmem:[%s7 + $0xc8] sm:$0xff]
    %v3136 = vld [vmem:[%s7 + $0xd0] sm:$0xff]
    %v3137 = vld [vmem:[%s7 + $0xd8] sm:$0xff]
    %v3138 = vld [vmem:[%s7 + $0xe0] sm:$0xff]
    %v3139 = vld [vmem:[%s7 + $0xe8] sm:$0xff]
    %v3140 = vld [vmem:[%s7 + $0xf0] sm:$0xff]
    %v3141 = vld [vmem:[%s7 + $0xf8] sm:$0xff]
    %v3142 = vld [vmem:[%s7 + $0x100] sm:$0xff]
    %v3143 = vld [vmem:[%s7 + $0x108] sm:$0xff]
    %v3144 = vld [vmem:[%s7 + $0x110] sm:$0xff]
    %v3145 = vld [vmem:[%s7 + $0x118] sm:$0xff]
    %v3146 = vld [vmem:[%s7 + $0x120] sm:$0xff]
    %v3147 = vld [vmem:[%s7 + $0x128] sm:$0xff]
    %v3148 = vld [vmem:[%s7 + $0x130] sm:$0xff]
    %v3149 = vld [vmem:[%s7 + $0x138] sm:$0xff]
    %v3150 = vld [vmem:[%s7 + $0x140] sm:$0xff]
    %v3151 = vld [vmem:[%s7 + $0x148] sm:$0xff]
    %v3152 = vld [vmem:[%s7 + $0x150] sm:$0xff]
    %v3153 = vld [vmem:[%s7 + $0x158] sm:$0xff]
    %v3154 = vld [vmem:[%s7 + $0x160] sm:$0xff]
    %v3155 = vld [vmem:[%s7 + $0x168] sm:$0xff]
    %v3156 = vld [vmem:[%s7 + $0x170] sm:$0xff]
    %v3157 = vld [vmem:[%s7 + $0x178] sm:$0xff]
    %v3158 = vld [vmem:[%s7 + $0x180] sm:$0xff]
    %v3159 = vld [vmem:[%s7 + $0x188] sm:$0xff]
    %v3160 = vld [vmem:[%s7 + $0x190] sm:$0xff]
    %v3161 = vld [vmem:[%s7 + $0x198] sm:$0xff]
    %v3162 = vld [vmem:[%s7 + $0x1a0] sm:$0xff]
    %v3163 = vld [vmem:[%s7 + $0x1a8] sm:$0xff]
    %v3164 = vld [vmem:[%s7 + $0x1b0] sm:$0xff]
    %v3165 = vld [vmem:[%s7 + $0x1b8] sm:$0xff]
    %v3166 = vld [vmem:[%s7 + $0x1c0] sm:$0xff]
    %v3167 = vld [vmem:[%s7 + $0x1c8] sm:$0xff]
    %v3168 = vld [vmem:[%s7 + $0x1d0] sm:$0xff]
    %v3169 = vld [vmem:[%s7 + $0x1d8] sm:$0xff]
    %v3170 = vld [vmem:[%s7 + $0x1e0] sm:$0xff]
    %v3171 = vld [vmem:[%s7 + $0x1e8] sm:$0xff]
    %v3172 = vld [vmem:[%s7 + $0x1f0] sm:$0xff]
    %v3173 = vld [vmem:[%s7 + $0x1f8] sm:$0xff]
    %v3174 = vld [vmem:[%s7 + $0x200] sm:$0xff]
    %v3175 = vld [vmem:[%s7 + $0x208] sm:$0xff]
    %v3176 = vld [vmem:[%s7 + $0x210] sm:$0xff]
    %v3177 = vld [vmem:[%s7 + $0x218] sm:$0xff]
    %v3178 = vld [vmem:[%s7 + $0x220] sm:$0xff]
    %v3179 = vld [vmem:[%s7 + $0x228] sm:$0xff]
    %v3180 = vld [vmem:[%s7 + $0x230] sm:$0xff]
    %v3181 = vld [vmem:[%s7 + $0x238] sm:$0xff]
    %v3182 = vld [vmem:[%s7 + $0x240] sm:$0xff]
    %v3183 = vld [vmem:[%s7 + $0x248] sm:$0xff]
    %v3184 = vld [vmem:[%s7 + $0x250] sm:$0xff]
    %v3185 = vld [vmem:[%s7 + $0x258] sm:$0xff]
    %v3186 = vld [vmem:[%s7 + $0x260] sm:$0xff]
    %v3187 = vld [vmem:[%s7 + $0x268] sm:$0xff]
    %v3188 = vld [vmem:[%s7 + $0x270] sm:$0xff]
    %v3189 = vld [vmem:[%s7 + $0x278] sm:$0xff]
    %v3190 = vld [vmem:[%s7 + $0x280] sm:$0xff]
    %v3191 = vld [vmem:[%s7 + $0x288] sm:$0xff]
    %v3192 = vld [vmem:[%s7 + $0x290] sm:$0xff]
    %v3193 = vld [vmem:[%s7 + $0x298] sm:$0xff]
    %v3194 = vld [vmem:[%s7 + $0x2a0] sm:$0xff]
    %v3195 = vld [vmem:[%s7 + $0x2a8] sm:$0xff]
    %v3196 = vld [vmem:[%s7 + $0x2b0] sm:$0xff]
    %v3197 = vld [vmem:[%s7 + $0x2b8] sm:$0xff]
    %v3198 = vld [vmem:[%s7 + $0x2c0] sm:$0xff]
    %v3199 = vld [vmem:[%s7 + $0x2c8] sm:$0xff]
    %v3200 = vld [vmem:[%s7 + $0x2d0] sm:$0xff]
    %v3201 = vld [vmem:[%s7 + $0x2d8] sm:$0xff]
    %v3202 = vld [vmem:[%s7 + $0x2e0] sm:$0xff]
    %v3203 = vld [vmem:[%s7 + $0x2e8] sm:$0xff]
    %v3204 = vld [vmem:[%s7 + $0x2f0] sm:$0xff]
    %v3205 = vld [vmem:[%s7 + $0x2f8] sm:$0xff]
    %v3206 = vld [vmem:[%s7 + $0x300] sm:$0xff]
    %v3207 = vld [vmem:[%s7 + $0x308] sm:$0xff]
    %v3208 = vld [vmem:[%s7 + $0x310] sm:$0xff]
    %v3209 = vld [vmem:[%s7 + $0x318] sm:$0xff]
    %v3210 = vld [vmem:[%s7 + $0x320] sm:$0xff]
    %v3211 = vld [vmem:[%s7 + $0x328] sm:$0xff]
    %v3212 = vld [vmem:[%s7 + $0x330] sm:$0xff]
    %v3213 = vld [vmem:[%s7 + $0x338] sm:$0xff]
    %v3214 = vld [vmem:[%s7 + $0x340] sm:$0xff]
    %v3215 = vld [vmem:[%s7 + $0x348] sm:$0xff]
    %v3216 = vld [vmem:[%s7 + $0x350] sm:$0xff]
    %v3217 = vld [vmem:[%s7 + $0x358] sm:$0xff]
    %v3218 = vld [vmem:[%s7 + $0x360] sm:$0xff]
    %v3219 = vld [vmem:[%s7 + $0x368] sm:$0xff]
    %v3220 = vld [vmem:[%s7 + $0x370] sm:$0xff]
    %v3221 = vld [vmem:[%s7 + $0x378] sm:$0xff]
    %v3222 = vld [vmem:[%s7 + $0x380] sm:$0xff]
    %v3223 = vld [vmem:[%s7 + $0x388] sm:$0xff]
    %v3224 = vld [vmem:[%s7 + $0x390] sm:$0xff]
    %v3225 = vld [vmem:[%s7 + $0x398] sm:$0xff]
    %v3226 = vld [vmem:[%s7 + $0x3a0] sm:$0xff]
    %v3227 = vld [vmem:[%s7 + $0x3a8] sm:$0xff]
    %v3228 = vld [vmem:[%s7 + $0x3b0] sm:$0xff]
    %v3229 = vld [vmem:[%s7 + $0x3b8] sm:$0xff]
    %v3230 = vld [vmem:[%s7 + $0x3c0] sm:$0xff]
    %v3231 = vld [vmem:[%s7 + $0x3c8] sm:$0xff]
    %v3232 = vld [vmem:[%s7 + $0x3d0] sm:$0xff]
    %v3233 = vld [vmem:[%s7 + $0x3d8] sm:$0xff]
    %v3234 = vld [vmem:[%s7 + $0x3e0] sm:$0xff]
    %v3235 = vld [vmem:[%s7 + $0x3e8] sm:$0xff]
    %v3236 = vld [vmem:[%s7 + $0x3f0] sm:$0xff]
    %v3237 = vld [vmem:[%s7 + $0x3f8] sm:$0xff]
    %v3238 = vld [vmem:[%s8] sm:$0xff]
    %v3239 = vld [vmem:[%s8 + $0x8] sm:$0xff]
    %v3240 = vld [vmem:[%s8 + $0x10] sm:$0xff]
    %v3241 = vld [vmem:[%s8 + $0x18] sm:$0xff]
    %v3242 = vld [vmem:[%s8 + $0x20] sm:$0xff]
    %v3243 = vld [vmem:[%s8 + $0x28] sm:$0xff]
    %v3244 = vld [vmem:[%s8 + $0x30] sm:$0xff]
    %v3245 = vld [vmem:[%s8 + $0x38] sm:$0xff]
    %v3246 = vld [vmem:[%s8 + $0x40] sm:$0xff]
    %v3247 = vld [vmem:[%s8 + $0x48] sm:$0xff]
    %v3248 = vld [vmem:[%s8 + $0x50] sm:$0xff]
    %v3249 = vld [vmem:[%s8 + $0x58] sm:$0xff]
    %v3250 = vld [vmem:[%s8 + $0x60] sm:$0xff]
    %v3251 = vld [vmem:[%s8 + $0x68] sm:$0xff]
    %v3252 = vld [vmem:[%s8 + $0x70] sm:$0xff]
    %v3253 = vld [vmem:[%s8 + $0x78] sm:$0xff]
    %3255 = vset.pattern.permute.xlu0 0
    %3256 = vperm.xlu0 %3255, %v3238
    %v3257 = vpop.permute.xlu0 %3256
    %3260 = vset.pattern.permute.xlu0 0
    %3261 = vperm.xlu0 %3260, %v3239
    %v3262 = vpop.permute.xlu0 %3261
    %3265 = vset.pattern.permute.xlu0 0
    %3266 = vperm.xlu0 %3265, %v3240
    %v3267 = vpop.permute.xlu0 %3266
    %3270 = vset.pattern.permute.xlu0 0
    %3271 = vperm.xlu0 %3270, %v3241
    %v3272 = vpop.permute.xlu0 %3271
    %3275 = vset.pattern.permute.xlu0 0
    %3276 = vperm.xlu0 %3275, %v3242
    %v3277 = vpop.permute.xlu0 %3276
    %3280 = vset.pattern.permute.xlu0 0
    %3281 = vperm.xlu0 %3280, %v3243
    %v3282 = vpop.permute.xlu0 %3281
    %3285 = vset.pattern.permute.xlu0 0
    %3286 = vperm.xlu0 %3285, %v3244
    %v3287 = vpop.permute.xlu0 %3286
    %3290 = vset.pattern.permute.xlu0 0
    %3291 = vperm.xlu0 %3290, %v3245
    %v3292 = vpop.permute.xlu0 %3291
    %3295 = vset.pattern.permute.xlu0 0
    %3296 = vperm.xlu0 %3295, %v3246
    %v3297 = vpop.permute.xlu0 %3296
    %3300 = vset.pattern.permute.xlu0 0
    %3301 = vperm.xlu0 %3300, %v3247
    %v3302 = vpop.permute.xlu0 %3301
    %3305 = vset.pattern.permute.xlu0 0
    %3306 = vperm.xlu0 %3305, %v3248
    %v3307 = vpop.permute.xlu0 %3306
    %3310 = vset.pattern.permute.xlu0 0
    %3311 = vperm.xlu0 %3310, %v3249
    %v3312 = vpop.permute.xlu0 %3311
    %3315 = vset.pattern.permute.xlu0 0
    %3316 = vperm.xlu0 %3315, %v3250
    %v3317 = vpop.permute.xlu0 %3316
    %3320 = vset.pattern.permute.xlu0 0
    %3321 = vperm.xlu0 %3320, %v3251
    %v3322 = vpop.permute.xlu0 %3321
    %3325 = vset.pattern.permute.xlu0 0
    %3326 = vperm.xlu0 %3325, %v3252
    %v3327 = vpop.permute.xlu0 %3326
    %3330 = vset.pattern.permute.xlu0 0
    %3331 = vperm.xlu0 %3330, %v3253
    %v3332 = vpop.permute.xlu0 %3331
    %3334 = vmatprep.subr.mxu0 0.0
    %3335 = vmatpush1.msra.mxu0 %v2997
    %3336 = vmatprep.subr.mxu0 0.0
    %3337 = vmatpush1.msra.mxu0 %v2996
    %3338 = vmatprep.subr.mxu0 0.0
    %3339 = vmatpush1.msra.mxu0 %v2995
    %3340 = vmatprep.subr.mxu0 0.0
    %3341 = vmatpush1.msra.mxu0 %v2994
    %3342 = vmatprep.subr.mxu0 0.0
    %3343 = vmatpush1.msra.mxu0 %v2993
    %3344 = vmatprep.subr.mxu0 0.0
    %3345 = vmatpush1.msra.mxu0 %v2992
    %3346 = vmatprep.subr.mxu0 0.0
    %3347 = vmatpush1.msra.mxu0 %v2991
    %3348 = vmatprep.subr.mxu0 0.0
    %3349 = vmatpush1.msra.mxu0 %v2990
    %3350 = vmatprep.subr.mxu0 0.0
    %3351 = vmatpush1.msra.mxu0 %v2989
    %3352 = vmatprep.subr.mxu0 0.0
    %3353 = vmatpush1.msra.mxu0 %v2988
    %3354 = vmatprep.subr.mxu0 0.0
    %3355 = vmatpush1.msra.mxu0 %v2987
    %3356 = vmatprep.subr.mxu0 0.0
    %3357 = vmatpush1.msra.mxu0 %v2986
    %3358 = vmatprep.subr.mxu0 0.0
    %3359 = vmatpush1.msra.mxu0 %v2985
    %3360 = vmatprep.subr.mxu0 0.0
    %3361 = vmatpush1.msra.mxu0 %v2984
    %3362 = vmatprep.subr.mxu0 0.0
    %3363 = vmatpush1.msra.mxu0 %v2983
    %3364 = vmatprep.subr.mxu0 0.0
    %3365 = vmatpush1.msra.mxu0 %v2982
    %3366 = vmatprep.subr.mxu0 0.0
    %3367 = vmatpush2.msra.mxu0 %v3013
    %3368 = vmatprep.subr.mxu0 0.0
    %3369 = vmatpush2.msra.mxu0 %v3012
    %3370 = vmatprep.subr.mxu0 0.0
    %3371 = vmatpush2.msra.mxu0 %v3011
    %3372 = vmatprep.subr.mxu0 0.0
    %3373 = vmatpush2.msra.mxu0 %v3010
    %3374 = vmatprep.subr.mxu0 0.0
    %3375 = vmatpush2.msra.mxu0 %v3009
    %3376 = vmatprep.subr.mxu0 0.0
    %3377 = vmatpush2.msra.mxu0 %v3008
    %3378 = vmatprep.subr.mxu0 0.0
    %3379 = vmatpush2.msra.mxu0 %v3007
    %3380 = vmatprep.subr.mxu0 0.0
    %3381 = vmatpush2.msra.mxu0 %v3006
    %3382 = vmatprep.subr.mxu0 0.0
    %3383 = vmatpush2.msra.mxu0 %v3005
    %3384 = vmatprep.subr.mxu0 0.0
    %3385 = vmatpush2.msra.mxu0 %v3004
    %3386 = vmatprep.subr.mxu0 0.0
    %3387 = vmatpush2.msra.mxu0 %v3003
    %3388 = vmatprep.subr.mxu0 0.0
    %3389 = vmatpush2.msra.mxu0 %v3002
    %3390 = vmatprep.subr.mxu0 0.0
    %3391 = vmatpush2.msra.mxu0 %v3001
    %3392 = vmatprep.subr.mxu0 0.0
    %3393 = vmatpush2.msra.mxu0 %v3000
    %3394 = vmatprep.subr.mxu0 0.0
    %3395 = vmatpush2.msra.mxu0 %v2999
    %3396 = vmatprep.subr.mxu0 0.0
    %3397 = vmatpush2.msra.mxu0 %v2998
    %3398 = vmatprep.mubr.f32.mxu0 %v3111
    %3399 = vmatmul.mubr.f32.gmra.mxu0 %v3110
    %v3400 = vpop.f32.mrf.mxu0
    %v3401 = vadd.f32 %v3257, %v3400
    %v3402 = vpop.f32.mrf.mxu0
    %3403 = vmatprep.mubr.f32.mxu0 %v3119
    %3404 = vmatmul.mubr.f32.gmra.mxu0 %v3118
    %v3405 = vpop.f32.mrf.mxu0
    %v3406 = vadd.f32 %v3262, %v3405
    %v3407 = vpop.f32.mrf.mxu0
    %3408 = vmatprep.mubr.f32.mxu0 %v3127
    %3409 = vmatmul.mubr.f32.gmra.mxu0 %v3126
    %v3410 = vpop.f32.mrf.mxu0
    %v3411 = vadd.f32 %v3267, %v3410
    %v3412 = vpop.f32.mrf.mxu0
    %3413 = vmatprep.mubr.f32.mxu0 %v3135
    %3414 = vmatmul.mubr.f32.gmra.mxu0 %v3134
    %v3415 = vpop.f32.mrf.mxu0
    %v3416 = vadd.f32 %v3272, %v3415
    %v3417 = vpop.f32.mrf.mxu0
    %3418 = vmatprep.mubr.f32.mxu0 %v3143
    %3419 = vmatmul.mubr.f32.gmra.mxu0 %v3142
    %v3420 = vpop.f32.mrf.mxu0
    %v3421 = vadd.f32 %v3277, %v3420
    %v3422 = vpop.f32.mrf.mxu0
    %3423 = vmatprep.mubr.f32.mxu0 %v3151
    %3424 = vmatmul.mubr.f32.gmra.mxu0 %v3150
    %v3425 = vpop.f32.mrf.mxu0
    %v3426 = vadd.f32 %v3282, %v3425
    %v3427 = vpop.f32.mrf.mxu0
    %3428 = vmatprep.mubr.f32.mxu0 %v3159
    %3429 = vmatmul.mubr.f32.gmra.mxu0 %v3158
    %v3430 = vpop.f32.mrf.mxu0
    %v3431 = vadd.f32 %v3287, %v3430
    %v3432 = vpop.f32.mrf.mxu0
    %3433 = vmatprep.mubr.f32.mxu0 %v3167
    %3434 = vmatmul.mubr.f32.gmra.mxu0 %v3166
    %v3435 = vpop.f32.mrf.mxu0
    %v3436 = vadd.f32 %v3292, %v3435
    %v3437 = vpop.f32.mrf.mxu0
    %3438 = vmatprep.mubr.f32.mxu0 %v3175
    %3439 = vmatmul.mubr.f32.gmra.mxu0 %v3174
    %v3440 = vpop.f32.mrf.mxu0
    %v3441 = vadd.f32 %v3297, %v3440
    %v3442 = vpop.f32.mrf.mxu0
    %3443 = vmatprep.mubr.f32.mxu0 %v3183
    %3444 = vmatmul.mubr.f32.gmra.mxu0 %v3182
    %v3445 = vpop.f32.mrf.mxu0
    %v3446 = vadd.f32 %v3302, %v3445
    %v3447 = vpop.f32.mrf.mxu0
    %3448 = vmatprep.mubr.f32.mxu0 %v3191
    %3449 = vmatmul.mubr.f32.gmra.mxu0 %v3190
    %v3450 = vpop.f32.mrf.mxu0
    %v3451 = vadd.f32 %v3307, %v3450
    %v3452 = vpop.f32.mrf.mxu0
    %3453 = vmatprep.mubr.f32.mxu0 %v3199
    %3454 = vmatmul.mubr.f32.gmra.mxu0 %v3198
    %v3455 = vpop.f32.mrf.mxu0
    %v3456 = vadd.f32 %v3312, %v3455
    %v3457 = vpop.f32.mrf.mxu0
    %3458 = vmatprep.mubr.f32.mxu0 %v3207
    %3459 = vmatmul.mubr.f32.gmra.mxu0 %v3206
    %v3460 = vpop.f32.mrf.mxu0
    %v3461 = vadd.f32 %v3317, %v3460
    %v3462 = vpop.f32.mrf.mxu0
    %3463 = vmatprep.mubr.f32.mxu0 %v3215
    %3464 = vmatmul.mubr.f32.gmra.mxu0 %v3214
    %v3465 = vpop.f32.mrf.mxu0
    %v3466 = vadd.f32 %v3322, %v3465
    %v3467 = vpop.f32.mrf.mxu0
    %3468 = vmatprep.mubr.f32.mxu0 %v3223
    %3469 = vmatmul.mubr.f32.gmra.mxu0 %v3222
    %v3470 = vpop.f32.mrf.mxu0
    %v3471 = vadd.f32 %v3327, %v3470
    %v3472 = vpop.f32.mrf.mxu0
    %3473 = vmatprep.mubr.f32.mxu0 %v3231
    %3474 = vmatmul.mubr.f32.gmra.mxu0 %v3230
    %v3475 = vpop.f32.mrf.mxu0
    %v3476 = vadd.f32 %v3332, %v3475
    %v3477 = vpop.f32.mrf.mxu0
    %3478 = vdwg.mxu0
    %3479 = vmatprep.subr.mxu0 0.0
    %3480 = vmatpush1.msra.mxu0 %v3029
    %3481 = vmatprep.subr.mxu0 0.0
    %3482 = vmatpush1.msra.mxu0 %v3028
    %3483 = vmatprep.subr.mxu0 0.0
    %3484 = vmatpush1.msra.mxu0 %v3027
    %3485 = vmatprep.subr.mxu0 0.0
    %3486 = vmatpush1.msra.mxu0 %v3026
    %3487 = vmatprep.subr.mxu0 0.0
    %3488 = vmatpush1.msra.mxu0 %v3025
    %3489 = vmatprep.subr.mxu0 0.0
    %3490 = vmatpush1.msra.mxu0 %v3024
    %3491 = vmatprep.subr.mxu0 0.0
    %3492 = vmatpush1.msra.mxu0 %v3023
    %3493 = vmatprep.subr.mxu0 0.0
    %3494 = vmatpush1.msra.mxu0 %v3022
    %3495 = vmatprep.subr.mxu0 0.0
    %3496 = vmatpush1.msra.mxu0 %v3021
    %3497 = vmatprep.subr.mxu0 0.0
    %3498 = vmatpush1.msra.mxu0 %v3020
    %3499 = vmatprep.subr.mxu0 0.0
    %3500 = vmatpush1.msra.mxu0 %v3019
    %3501 = vmatprep.subr.mxu0 0.0
    %3502 = vmatpush1.msra.mxu0 %v3018
    %3503 = vmatprep.subr.mxu0 0.0
    %3504 = vmatpush1.msra.mxu0 %v3017
    %3505 = vmatprep.subr.mxu0 0.0
    %3506 = vmatpush1.msra.mxu0 %v3016
    %3507 = vmatprep.subr.mxu0 0.0
    %3508 = vmatpush1.msra.mxu0 %v3015
    %3509 = vmatprep.subr.mxu0 0.0
    %3510 = vmatpush1.msra.mxu0 %v3014
    %3511 = vmatprep.subr.mxu0 0.0
    %3512 = vmatpush2.msra.mxu0 %v3045
    %3513 = vmatprep.subr.mxu0 0.0
    %3514 = vmatpush2.msra.mxu0 %v3044
    %3515 = vmatprep.subr.mxu0 0.0
    %3516 = vmatpush2.msra.mxu0 %v3043
    %3517 = vmatprep.subr.mxu0 0.0
    %3518 = vmatpush2.msra.mxu0 %v3042
    %3519 = vmatprep.subr.mxu0 0.0
    %3520 = vmatpush2.msra.mxu0 %v3041
    %3521 = vmatprep.subr.mxu0 0.0
    %3522 = vmatpush2.msra.mxu0 %v3040
    %3523 = vmatprep.subr.mxu0 0.0
    %3524 = vmatpush2.msra.mxu0 %v3039
    %3525 = vmatprep.subr.mxu0 0.0
    %3526 = vmatpush2.msra.mxu0 %v3038
    %3527 = vmatprep.subr.mxu0 0.0
    %3528 = vmatpush2.msra.mxu0 %v3037
    %3529 = vmatprep.subr.mxu0 0.0
    %3530 = vmatpush2.msra.mxu0 %v3036
    %3531 = vmatprep.subr.mxu0 0.0
    %3532 = vmatpush2.msra.mxu0 %v3035
    %3533 = vmatprep.subr.mxu0 0.0
    %3534 = vmatpush2.msra.mxu0 %v3034
    %3535 = vmatprep.subr.mxu0 0.0
    %3536 = vmatpush2.msra.mxu0 %v3033
    %3537 = vmatprep.subr.mxu0 0.0
    %3538 = vmatpush2.msra.mxu0 %v3032
    %3539 = vmatprep.subr.mxu0 0.0
    %3540 = vmatpush2.msra.mxu0 %v3031
    %3541 = vmatprep.subr.mxu0 0.0
    %3542 = vmatpush2.msra.mxu0 %v3030
    %3543 = vmatprep.mubr.f32.mxu0 %v3113
    %3544 = vmatmul.mubr.f32.gmra.mxu0 %v3112
    %v3545 = vpop.f32.mrf.mxu0
    %v3546 = vadd.f32 %v3401, %v3545
    %v3547 = vpop.f32.mrf.mxu0
    %3548 = vmatprep.mubr.f32.mxu0 %v3121
    %3549 = vmatmul.mubr.f32.gmra.mxu0 %v3120
    %v3550 = vpop.f32.mrf.mxu0
    %v3551 = vadd.f32 %v3406, %v3550
    %v3552 = vpop.f32.mrf.mxu0
    %3553 = vmatprep.mubr.f32.mxu0 %v3129
    %3554 = vmatmul.mubr.f32.gmra.mxu0 %v3128
    %v3555 = vpop.f32.mrf.mxu0
    %v3556 = vadd.f32 %v3411, %v3555
    %v3557 = vpop.f32.mrf.mxu0
    %3558 = vmatprep.mubr.f32.mxu0 %v3137
    %3559 = vmatmul.mubr.f32.gmra.mxu0 %v3136
    %v3560 = vpop.f32.mrf.mxu0
    %v3561 = vadd.f32 %v3416, %v3560
    %v3562 = vpop.f32.mrf.mxu0
    %3563 = vmatprep.mubr.f32.mxu0 %v3145
    %3564 = vmatmul.mubr.f32.gmra.mxu0 %v3144
    %v3565 = vpop.f32.mrf.mxu0
    %v3566 = vadd.f32 %v3421, %v3565
    %v3567 = vpop.f32.mrf.mxu0
    %3568 = vmatprep.mubr.f32.mxu0 %v3153
    %3569 = vmatmul.mubr.f32.gmra.mxu0 %v3152
    %v3570 = vpop.f32.mrf.mxu0
    %v3571 = vadd.f32 %v3426, %v3570
    %v3572 = vpop.f32.mrf.mxu0
    %3573 = vmatprep.mubr.f32.mxu0 %v3161
    %3574 = vmatmul.mubr.f32.gmra.mxu0 %v3160
    %v3575 = vpop.f32.mrf.mxu0
    %v3576 = vadd.f32 %v3431, %v3575
    %v3577 = vpop.f32.mrf.mxu0
    %3578 = vmatprep.mubr.f32.mxu0 %v3169
    %3579 = vmatmul.mubr.f32.gmra.mxu0 %v3168
    %v3580 = vpop.f32.mrf.mxu0
    %v3581 = vadd.f32 %v3436, %v3580
    %v3582 = vpop.f32.mrf.mxu0
    %3583 = vmatprep.mubr.f32.mxu0 %v3177
    %3584 = vmatmul.mubr.f32.gmra.mxu0 %v3176
    %v3585 = vpop.f32.mrf.mxu0
    %v3586 = vadd.f32 %v3441, %v3585
    %v3587 = vpop.f32.mrf.mxu0
    %3588 = vmatprep.mubr.f32.mxu0 %v3185
    %3589 = vmatmul.mubr.f32.gmra.mxu0 %v3184
    %v3590 = vpop.f32.mrf.mxu0
    %v3591 = vadd.f32 %v3446, %v3590
    %v3592 = vpop.f32.mrf.mxu0
    %3593 = vmatprep.mubr.f32.mxu0 %v3193
    %3594 = vmatmul.mubr.f32.gmra.mxu0 %v3192
    %v3595 = vpop.f32.mrf.mxu0
    %v3596 = vadd.f32 %v3451, %v3595
    %v3597 = vpop.f32.mrf.mxu0
    %3598 = vmatprep.mubr.f32.mxu0 %v3201
    %3599 = vmatmul.mubr.f32.gmra.mxu0 %v3200
    %v3600 = vpop.f32.mrf.mxu0
    %v3601 = vadd.f32 %v3456, %v3600
    %v3602 = vpop.f32.mrf.mxu0
    %3603 = vmatprep.mubr.f32.mxu0 %v3209
    %3604 = vmatmul.mubr.f32.gmra.mxu0 %v3208
    %v3605 = vpop.f32.mrf.mxu0
    %v3606 = vadd.f32 %v3461, %v3605
    %v3607 = vpop.f32.mrf.mxu0
    %3608 = vmatprep.mubr.f32.mxu0 %v3217
    %3609 = vmatmul.mubr.f32.gmra.mxu0 %v3216
    %v3610 = vpop.f32.mrf.mxu0
    %v3611 = vadd.f32 %v3466, %v3610
    %v3612 = vpop.f32.mrf.mxu0
    %3613 = vmatprep.mubr.f32.mxu0 %v3225
    %3614 = vmatmul.mubr.f32.gmra.mxu0 %v3224
    %v3615 = vpop.f32.mrf.mxu0
    %v3616 = vadd.f32 %v3471, %v3615
    %v3617 = vpop.f32.mrf.mxu0
    %3618 = vmatprep.mubr.f32.mxu0 %v3233
    %3619 = vmatmul.mubr.f32.gmra.mxu0 %v3232
    %v3620 = vpop.f32.mrf.mxu0
    %v3621 = vadd.f32 %v3476, %v3620
    %v3622 = vpop.f32.mrf.mxu0
    %3623 = vdwg.mxu0
    %3624 = vmatprep.subr.mxu0 0.0
    %3625 = vmatpush1.msra.mxu0 %v3061
    %3626 = vmatprep.subr.mxu0 0.0
    %3627 = vmatpush1.msra.mxu0 %v3060
    %3628 = vmatprep.subr.mxu0 0.0
    %3629 = vmatpush1.msra.mxu0 %v3059
    %3630 = vmatprep.subr.mxu0 0.0
    %3631 = vmatpush1.msra.mxu0 %v3058
    %3632 = vmatprep.subr.mxu0 0.0
    %3633 = vmatpush1.msra.mxu0 %v3057
    %3634 = vmatprep.subr.mxu0 0.0
    %3635 = vmatpush1.msra.mxu0 %v3056
    %3636 = vmatprep.subr.mxu0 0.0
    %3637 = vmatpush1.msra.mxu0 %v3055
    %3638 = vmatprep.subr.mxu0 0.0
    %3639 = vmatpush1.msra.mxu0 %v3054
    %3640 = vmatprep.subr.mxu0 0.0
    %3641 = vmatpush1.msra.mxu0 %v3053
    %3642 = vmatprep.subr.mxu0 0.0
    %3643 = vmatpush1.msra.mxu0 %v3052
    %3644 = vmatprep.subr.mxu0 0.0
    %3645 = vmatpush1.msra.mxu0 %v3051
    %3646 = vmatprep.subr.mxu0 0.0
    %3647 = vmatpush1.msra.mxu0 %v3050
    %3648 = vmatprep.subr.mxu0 0.0
    %3649 = vmatpush1.msra.mxu0 %v3049
    %3650 = vmatprep.subr.mxu0 0.0
    %3651 = vmatpush1.msra.mxu0 %v3048
    %3652 = vmatprep.subr.mxu0 0.0
    %3653 = vmatpush1.msra.mxu0 %v3047
    %3654 = vmatprep.subr.mxu0 0.0
    %3655 = vmatpush1.msra.mxu0 %v3046
    %3656 = vmatprep.subr.mxu0 0.0
    %3657 = vmatpush2.msra.mxu0 %v3077
    %3658 = vmatprep.subr.mxu0 0.0
    %3659 = vmatpush2.msra.mxu0 %v3076
    %3660 = vmatprep.subr.mxu0 0.0
    %3661 = vmatpush2.msra.mxu0 %v3075
    %3662 = vmatprep.subr.mxu0 0.0
    %3663 = vmatpush2.msra.mxu0 %v3074
    %3664 = vmatprep.subr.mxu0 0.0
    %3665 = vmatpush2.msra.mxu0 %v3073
    %3666 = vmatprep.subr.mxu0 0.0
    %3667 = vmatpush2.msra.mxu0 %v3072
    %3668 = vmatprep.subr.mxu0 0.0
    %3669 = vmatpush2.msra.mxu0 %v3071
    %3670 = vmatprep.subr.mxu0 0.0
    %3671 = vmatpush2.msra.mxu0 %v3070
    %3672 = vmatprep.subr.mxu0 0.0
    %3673 = vmatpush2.msra.mxu0 %v3069
    %3674 = vmatprep.subr.mxu0 0.0
    %3675 = vmatpush2.msra.mxu0 %v3068
    %3676 = vmatprep.subr.mxu0 0.0
    %3677 = vmatpush2.msra.mxu0 %v3067
    %3678 = vmatprep.subr.mxu0 0.0
    %3679 = vmatpush2.msra.mxu0 %v3066
    %3680 = vmatprep.subr.mxu0 0.0
    %3681 = vmatpush2.msra.mxu0 %v3065
    %3682 = vmatprep.subr.mxu0 0.0
    %3683 = vmatpush2.msra.mxu0 %v3064
    %3684 = vmatprep.subr.mxu0 0.0
    %3685 = vmatpush2.msra.mxu0 %v3063
    %3686 = vmatprep.subr.mxu0 0.0
    %3687 = vmatpush2.msra.mxu0 %v3062
    %3688 = vmatprep.mubr.f32.mxu0 %v3115
    %3689 = vmatmul.mubr.f32.gmra.mxu0 %v3114
    %v3690 = vpop.f32.mrf.mxu0
    %v3691 = vadd.f32 %v3546, %v3690
    %v3692 = vpop.f32.mrf.mxu0
    %3693 = vmatprep.mubr.f32.mxu0 %v3123
    %3694 = vmatmul.mubr.f32.gmra.mxu0 %v3122
    %v3695 = vpop.f32.mrf.mxu0
    %v3696 = vadd.f32 %v3551, %v3695
    %v3697 = vpop.f32.mrf.mxu0
    %3698 = vmatprep.mubr.f32.mxu0 %v3131
    %3699 = vmatmul.mubr.f32.gmra.mxu0 %v3130
    %v3700 = vpop.f32.mrf.mxu0
    %v3701 = vadd.f32 %v3556, %v3700
    %v3702 = vpop.f32.mrf.mxu0
    %3703 = vmatprep.mubr.f32.mxu0 %v3139
    %3704 = vmatmul.mubr.f32.gmra.mxu0 %v3138
    %v3705 = vpop.f32.mrf.mxu0
    %v3706 = vadd.f32 %v3561, %v3705
    %v3707 = vpop.f32.mrf.mxu0
    %3708 = vmatprep.mubr.f32.mxu0 %v3147
    %3709 = vmatmul.mubr.f32.gmra.mxu0 %v3146
    %v3710 = vpop.f32.mrf.mxu0
    %v3711 = vadd.f32 %v3566, %v3710
    %v3712 = vpop.f32.mrf.mxu0
    %3713 = vmatprep.mubr.f32.mxu0 %v3155
    %3714 = vmatmul.mubr.f32.gmra.mxu0 %v3154
    %v3715 = vpop.f32.mrf.mxu0
    %v3716 = vadd.f32 %v3571, %v3715
    %v3717 = vpop.f32.mrf.mxu0
    %3718 = vmatprep.mubr.f32.mxu0 %v3163
    %3719 = vmatmul.mubr.f32.gmra.mxu0 %v3162
    %v3720 = vpop.f32.mrf.mxu0
    %v3721 = vadd.f32 %v3576, %v3720
    %v3722 = vpop.f32.mrf.mxu0
    %3723 = vmatprep.mubr.f32.mxu0 %v3171
    %3724 = vmatmul.mubr.f32.gmra.mxu0 %v3170
    %v3725 = vpop.f32.mrf.mxu0
    %v3726 = vadd.f32 %v3581, %v3725
    %v3727 = vpop.f32.mrf.mxu0
    %3728 = vmatprep.mubr.f32.mxu0 %v3179
    %3729 = vmatmul.mubr.f32.gmra.mxu0 %v3178
    %v3730 = vpop.f32.mrf.mxu0
    %v3731 = vadd.f32 %v3586, %v3730
    %v3732 = vpop.f32.mrf.mxu0
    %3733 = vmatprep.mubr.f32.mxu0 %v3187
    %3734 = vmatmul.mubr.f32.gmra.mxu0 %v3186
    %v3735 = vpop.f32.mrf.mxu0
    %v3736 = vadd.f32 %v3591, %v3735
    %v3737 = vpop.f32.mrf.mxu0
    %3738 = vmatprep.mubr.f32.mxu0 %v3195
    %3739 = vmatmul.mubr.f32.gmra.mxu0 %v3194
    %v3740 = vpop.f32.mrf.mxu0
    %v3741 = vadd.f32 %v3596, %v3740
    %v3742 = vpop.f32.mrf.mxu0
    %3743 = vmatprep.mubr.f32.mxu0 %v3203
    %3744 = vmatmul.mubr.f32.gmra.mxu0 %v3202
    %v3745 = vpop.f32.mrf.mxu0
    %v3746 = vadd.f32 %v3601, %v3745
    %v3747 = vpop.f32.mrf.mxu0
    %3748 = vmatprep.mubr.f32.mxu0 %v3211
    %3749 = vmatmul.mubr.f32.gmra.mxu0 %v3210
    %v3750 = vpop.f32.mrf.mxu0
    %v3751 = vadd.f32 %v3606, %v3750
    %v3752 = vpop.f32.mrf.mxu0
    %3753 = vmatprep.mubr.f32.mxu0 %v3219
    %3754 = vmatmul.mubr.f32.gmra.mxu0 %v3218
    %v3755 = vpop.f32.mrf.mxu0
    %v3756 = vadd.f32 %v3611, %v3755
    %v3757 = vpop.f32.mrf.mxu0
    %3758 = vmatprep.mubr.f32.mxu0 %v3227
    %3759 = vmatmul.mubr.f32.gmra.mxu0 %v3226
    %v3760 = vpop.f32.mrf.mxu0
    %v3761 = vadd.f32 %v3616, %v3760
    %v3762 = vpop.f32.mrf.mxu0
    %3763 = vmatprep.mubr.f32.mxu0 %v3235
    %3764 = vmatmul.mubr.f32.gmra.mxu0 %v3234
    %v3765 = vpop.f32.mrf.mxu0
    %v3766 = vadd.f32 %v3621, %v3765
    %v3767 = vpop.f32.mrf.mxu0
    %3768 = vdwg.mxu0
    %3769 = vmatprep.subr.mxu0 0.0
    %3770 = vmatpush1.msra.mxu0 %v3093
    %3771 = vmatprep.subr.mxu0 0.0
    %3772 = vmatpush1.msra.mxu0 %v3092
    %3773 = vmatprep.subr.mxu0 0.0
    %3774 = vmatpush1.msra.mxu0 %v3091
    %3775 = vmatprep.subr.mxu0 0.0
    %3776 = vmatpush1.msra.mxu0 %v3090
    %3777 = vmatprep.subr.mxu0 0.0
    %3778 = vmatpush1.msra.mxu0 %v3089
    %3779 = vmatprep.subr.mxu0 0.0
    %3780 = vmatpush1.msra.mxu0 %v3088
    %3781 = vmatprep.subr.mxu0 0.0
    %3782 = vmatpush1.msra.mxu0 %v3087
    %3783 = vmatprep.subr.mxu0 0.0
    %3784 = vmatpush1.msra.mxu0 %v3086
    %3785 = vmatprep.subr.mxu0 0.0
    %3786 = vmatpush1.msra.mxu0 %v3085
    %3787 = vmatprep.subr.mxu0 0.0
    %3788 = vmatpush1.msra.mxu0 %v3084
    %3789 = vmatprep.subr.mxu0 0.0
    %3790 = vmatpush1.msra.mxu0 %v3083
    %3791 = vmatprep.subr.mxu0 0.0
    %3792 = vmatpush1.msra.mxu0 %v3082
    %3793 = vmatprep.subr.mxu0 0.0
    %3794 = vmatpush1.msra.mxu0 %v3081
    %3795 = vmatprep.subr.mxu0 0.0
    %3796 = vmatpush1.msra.mxu0 %v3080
    %3797 = vmatprep.subr.mxu0 0.0
    %3798 = vmatpush1.msra.mxu0 %v3079
    %3799 = vmatprep.subr.mxu0 0.0
    %3800 = vmatpush1.msra.mxu0 %v3078
    %3801 = vmatprep.subr.mxu0 0.0
    %3802 = vmatpush2.msra.mxu0 %v3109
    %3803 = vmatprep.subr.mxu0 0.0
    %3804 = vmatpush2.msra.mxu0 %v3108
    %3805 = vmatprep.subr.mxu0 0.0
    %3806 = vmatpush2.msra.mxu0 %v3107
    %3807 = vmatprep.subr.mxu0 0.0
    %3808 = vmatpush2.msra.mxu0 %v3106
    %3809 = vmatprep.subr.mxu0 0.0
    %3810 = vmatpush2.msra.mxu0 %v3105
    %3811 = vmatprep.subr.mxu0 0.0
    %3812 = vmatpush2.msra.mxu0 %v3104
    %3813 = vmatprep.subr.mxu0 0.0
    %3814 = vmatpush2.msra.mxu0 %v3103
    %3815 = vmatprep.subr.mxu0 0.0
    %3816 = vmatpush2.msra.mxu0 %v3102
    %3817 = vmatprep.subr.mxu0 0.0
    %3818 = vmatpush2.msra.mxu0 %v3101
    %3819 = vmatprep.subr.mxu0 0.0
    %3820 = vmatpush2.msra.mxu0 %v3100
    %3821 = vmatprep.subr.mxu0 0.0
    %3822 = vmatpush2.msra.mxu0 %v3099
    %3823 = vmatprep.subr.mxu0 0.0
    %3824 = vmatpush2.msra.mxu0 %v3098
    %3825 = vmatprep.subr.mxu0 0.0
    %3826 = vmatpush2.msra.mxu0 %v3097
    %3827 = vmatprep.subr.mxu0 0.0
    %3828 = vmatpush2.msra.mxu0 %v3096
    %3829 = vmatprep.subr.mxu0 0.0
    %3830 = vmatpush2.msra.mxu0 %v3095
    %3831 = vmatprep.subr.mxu0 0.0
    %3832 = vmatpush2.msra.mxu0 %v3094
    %3833 = vmatprep.mubr.f32.mxu0 %v3117
    %3834 = vmatmul.mubr.f32.gmra.mxu0 %v3116
    %v3835 = vpop.f32.mrf.mxu0
    %v3836 = vadd.f32 %v3691, %v3835
    %v3837 = vpop.f32.mrf.mxu0
    %3838 = vmatprep.mubr.f32.mxu0 %v3125
    %3839 = vmatmul.mubr.f32.gmra.mxu0 %v3124
    %v3840 = vpop.f32.mrf.mxu0
    %v3841 = vadd.f32 %v3696, %v3840
    %v3842 = vpop.f32.mrf.mxu0
    %3843 = vmatprep.mubr.f32.mxu0 %v3133
    %3844 = vmatmul.mubr.f32.gmra.mxu0 %v3132
    %v3845 = vpop.f32.mrf.mxu0
    %v3846 = vadd.f32 %v3701, %v3845
    %v3847 = vpop.f32.mrf.mxu0
    %3848 = vmatprep.mubr.f32.mxu0 %v3141
    %3849 = vmatmul.mubr.f32.gmra.mxu0 %v3140
    %v3850 = vpop.f32.mrf.mxu0
    %v3851 = vadd.f32 %v3706, %v3850
    %v3852 = vpop.f32.mrf.mxu0
    %3853 = vmatprep.mubr.f32.mxu0 %v3149
    %3854 = vmatmul.mubr.f32.gmra.mxu0 %v3148
    %v3855 = vpop.f32.mrf.mxu0
    %v3856 = vadd.f32 %v3711, %v3855
    %v3857 = vpop.f32.mrf.mxu0
    %3858 = vmatprep.mubr.f32.mxu0 %v3157
    %3859 = vmatmul.mubr.f32.gmra.mxu0 %v3156
    %v3860 = vpop.f32.mrf.mxu0
    %v3861 = vadd.f32 %v3716, %v3860
    %v3862 = vpop.f32.mrf.mxu0
    %3863 = vmatprep.mubr.f32.mxu0 %v3165
    %3864 = vmatmul.mubr.f32.gmra.mxu0 %v3164
    %v3865 = vpop.f32.mrf.mxu0
    %v3866 = vadd.f32 %v3721, %v3865
    %v3867 = vpop.f32.mrf.mxu0
    %3868 = vmatprep.mubr.f32.mxu0 %v3173
    %3869 = vmatmul.mubr.f32.gmra.mxu0 %v3172
    %v3870 = vpop.f32.mrf.mxu0
    %v3871 = vadd.f32 %v3726, %v3870
    %v3872 = vpop.f32.mrf.mxu0
    %3873 = vmatprep.mubr.f32.mxu0 %v3181
    %3874 = vmatmul.mubr.f32.gmra.mxu0 %v3180
    %v3875 = vpop.f32.mrf.mxu0
    %v3876 = vadd.f32 %v3731, %v3875
    %v3877 = vpop.f32.mrf.mxu0
    %3878 = vmatprep.mubr.f32.mxu0 %v3189
    %3879 = vmatmul.mubr.f32.gmra.mxu0 %v3188
    %v3880 = vpop.f32.mrf.mxu0
    %v3881 = vadd.f32 %v3736, %v3880
    %v3882 = vpop.f32.mrf.mxu0
    %3883 = vmatprep.mubr.f32.mxu0 %v3197
    %3884 = vmatmul.mubr.f32.gmra.mxu0 %v3196
    %v3885 = vpop.f32.mrf.mxu0
    %v3886 = vadd.f32 %v3741, %v3885
    %v3887 = vpop.f32.mrf.mxu0
    %3888 = vmatprep.mubr.f32.mxu0 %v3205
    %3889 = vmatmul.mubr.f32.gmra.mxu0 %v3204
    %v3890 = vpop.f32.mrf.mxu0
    %v3891 = vadd.f32 %v3746, %v3890
    %v3892 = vpop.f32.mrf.mxu0
    %3893 = vmatprep.mubr.f32.mxu0 %v3213
    %3894 = vmatmul.mubr.f32.gmra.mxu0 %v3212
    %v3895 = vpop.f32.mrf.mxu0
    %v3896 = vadd.f32 %v3751, %v3895
    %v3897 = vpop.f32.mrf.mxu0
    %3898 = vmatprep.mubr.f32.mxu0 %v3221
    %3899 = vmatmul.mubr.f32.gmra.mxu0 %v3220
    %v3900 = vpop.f32.mrf.mxu0
    %v3901 = vadd.f32 %v3756, %v3900
    %v3902 = vpop.f32.mrf.mxu0
    %3903 = vmatprep.mubr.f32.mxu0 %v3229
    %3904 = vmatmul.mubr.f32.gmra.mxu0 %v3228
    %v3905 = vpop.f32.mrf.mxu0
    %v3906 = vadd.f32 %v3761, %v3905
    %v3907 = vpop.f32.mrf.mxu0
    %3908 = vmatprep.mubr.f32.mxu0 %v3237
    %3909 = vmatmul.mubr.f32.gmra.mxu0 %v3236
    %v3910 = vpop.f32.mrf.mxu0
    %v3911 = vadd.f32 %v3766, %v3910
    %v3912 = vpop.f32.mrf.mxu0
    %3913 = vdwg.mxu0
    %v3914 = vmax.f32 %v3836, 0.0
    %v3915 = vmax.f32 %v3841, 0.0
    %v3916 = vmax.f32 %v3846, 0.0
    %v3917 = vmax.f32 %v3851, 0.0
    %v3918 = vmax.f32 %v3856, 0.0
    %v3919 = vmax.f32 %v3861, 0.0
    %v3920 = vmax.f32 %v3866, 0.0
    %v3921 = vmax.f32 %v3871, 0.0
    %v3922 = vmax.f32 %v3876, 0.0
    %v3923 = vmax.f32 %v3881, 0.0
    %v3924 = vmax.f32 %v3886, 0.0
    %v3925 = vmax.f32 %v3891, 0.0
    %v3926 = vmax.f32 %v3896, 0.0
    %v3927 = vmax.f32 %v3901, 0.0
    %v3928 = vmax.f32 %v3906, 0.0
    %v3929 = vmax.f32 %v3911, 0.0
    %v3930 = vld [vmem:[#allocation2] sm:$0xff]
    %v3931 = vld [vmem:[#allocation2 + $0x8] sm:$0xff]
    %v3932 = vld [vmem:[#allocation2 + $0x10] sm:$0xff]
    %v3933 = vld [vmem:[#allocation2 + $0x18] sm:$0xff]
    %v3934 = vld [vmem:[#allocation2 + $0x20] sm:$0xff]
    %v3935 = vld [vmem:[#allocation2 + $0x28] sm:$0xff]
    %v3936 = vld [vmem:[#allocation2 + $0x30] sm:$0xff]
    %v3937 = vld [vmem:[#allocation2 + $0x38] sm:$0xff]
    %v3938 = vld [vmem:[#allocation2 + $0x40] sm:$0xff]
    %v3939 = vld [vmem:[#allocation2 + $0x48] sm:$0xff]
    %v3940 = vld [vmem:[#allocation2 + $0x50] sm:$0xff]
    %v3941 = vld [vmem:[#allocation2 + $0x58] sm:$0xff]
    %v3942 = vld [vmem:[#allocation2 + $0x60] sm:$0xff]
    %v3943 = vld [vmem:[#allocation2 + $0x68] sm:$0xff]
    %v3944 = vld [vmem:[#allocation2 + $0x70] sm:$0xff]
    %v3945 = vld [vmem:[#allocation2 + $0x78] sm:$0xff]
    %v3946 = vld [vmem:[#allocation2 + $0x80] sm:$0xff]
    %v3947 = vld [vmem:[#allocation2 + $0x88] sm:$0xff]
    %v3948 = vld [vmem:[#allocation2 + $0x90] sm:$0xff]
    %v3949 = vld [vmem:[#allocation2 + $0x98] sm:$0xff]
    %v3950 = vld [vmem:[#allocation2 + $0xa0] sm:$0xff]
    %v3951 = vld [vmem:[#allocation2 + $0xa8] sm:$0xff]
    %v3952 = vld [vmem:[#allocation2 + $0xb0] sm:$0xff]
    %v3953 = vld [vmem:[#allocation2 + $0xb8] sm:$0xff]
    %v3954 = vld [vmem:[#allocation2 + $0xc0] sm:$0xff]
    %v3955 = vld [vmem:[#allocation2 + $0xc8] sm:$0xff]
    %v3956 = vld [vmem:[#allocation2 + $0xd0] sm:$0xff]
    %v3957 = vld [vmem:[#allocation2 + $0xd8] sm:$0xff]
    %v3958 = vld [vmem:[#allocation2 + $0xe0] sm:$0xff]
    %v3959 = vld [vmem:[#allocation2 + $0xe8] sm:$0xff]
    %v3960 = vld [vmem:[#allocation2 + $0xf0] sm:$0xff]
    %v3961 = vld [vmem:[#allocation2 + $0xf8] sm:$0xff]
    %v3962 = vld [vmem:[#allocation2 + $0x100] sm:$0x3f]
    %v3963 = vld [vmem:[%s10] sm:$0xff]
    %v3964 = vld [vmem:[%s10 + $0x8] sm:$0xff]
    %v3965 = vld [vmem:[%s10 + $0x10] sm:$0xff]
    %v3966 = vld [vmem:[%s10 + $0x18] sm:$0xff]
    %v3967 = vld [vmem:[%s10 + $0x20] sm:$0xff]
    %v3968 = vld [vmem:[%s10 + $0x28] sm:$0xff]
    %v3969 = vld [vmem:[%s10 + $0x30] sm:$0xff]
    %v3970 = vld [vmem:[%s10 + $0x38] sm:$0xff]
    %v3971 = vld [vmem:[%s10 + $0x40] sm:$0xff]
    %v3972 = vld [vmem:[%s10 + $0x48] sm:$0xff]
    %v3973 = vld [vmem:[%s10 + $0x50] sm:$0xff]
    %v3974 = vld [vmem:[%s10 + $0x58] sm:$0xff]
    %v3975 = vld [vmem:[%s10 + $0x60] sm:$0xff]
    %v3976 = vld [vmem:[%s10 + $0x68] sm:$0xff]
    %v3977 = vld [vmem:[%s10 + $0x70] sm:$0xff]
    %v3978 = vld [vmem:[%s10 + $0x78] sm:$0xff]
    %v3979 = vld [vmem:[%s10 + $0x80] sm:$0xff]
    %v3980 = vld [vmem:[%s10 + $0x88] sm:$0xff]
    %v3981 = vld [vmem:[%s10 + $0x90] sm:$0xff]
    %v3982 = vld [vmem:[%s10 + $0x98] sm:$0xff]
    %v3983 = vld [vmem:[%s10 + $0xa0] sm:$0xff]
    %v3984 = vld [vmem:[%s10 + $0xa8] sm:$0xff]
    %v3985 = vld [vmem:[%s10 + $0xb0] sm:$0xff]
    %v3986 = vld [vmem:[%s10 + $0xb8] sm:$0xff]
    %v3987 = vld [vmem:[%s10 + $0xc0] sm:$0xff]
    %v3988 = vld [vmem:[%s10 + $0xc8] sm:$0xff]
    %v3989 = vld [vmem:[%s10 + $0xd0] sm:$0xff]
    %v3990 = vld [vmem:[%s10 + $0xd8] sm:$0xff]
    %v3991 = vld [vmem:[%s10 + $0xe0] sm:$0xff]
    %v3992 = vld [vmem:[%s10 + $0xe8] sm:$0xff]
    %v3993 = vld [vmem:[%s10 + $0xf0] sm:$0xff]
    %v3994 = vld [vmem:[%s10 + $0xf8] sm:$0xff]
    %v3995 = vld [vmem:[%s10 + $0x100] sm:$0x3f]
    %3997 = vset.pattern.permute.xlu0 0
    %3998 = vperm.xlu0 %3997, %v3963
    %v3999 = vpop.permute.xlu0 %3998
    %4002 = vset.pattern.permute.xlu0 0
    %4003 = vperm.xlu0 %4002, %v3964
    %v4004 = vpop.permute.xlu0 %4003
    %4007 = vset.pattern.permute.xlu0 0
    %4008 = vperm.xlu0 %4007, %v3965
    %v4009 = vpop.permute.xlu0 %4008
    %4012 = vset.pattern.permute.xlu0 0
    %4013 = vperm.xlu0 %4012, %v3966
    %v4014 = vpop.permute.xlu0 %4013
    %4017 = vset.pattern.permute.xlu0 0
    %4018 = vperm.xlu0 %4017, %v3967
    %v4019 = vpop.permute.xlu0 %4018
    %4022 = vset.pattern.permute.xlu0 0
    %4023 = vperm.xlu0 %4022, %v3968
    %v4024 = vpop.permute.xlu0 %4023
    %4027 = vset.pattern.permute.xlu0 0
    %4028 = vperm.xlu0 %4027, %v3969
    %v4029 = vpop.permute.xlu0 %4028
    %4032 = vset.pattern.permute.xlu0 0
    %4033 = vperm.xlu0 %4032, %v3970
    %v4034 = vpop.permute.xlu0 %4033
    %4037 = vset.pattern.permute.xlu0 0
    %4038 = vperm.xlu0 %4037, %v3971
    %v4039 = vpop.permute.xlu0 %4038
    %4042 = vset.pattern.permute.xlu0 0
    %4043 = vperm.xlu0 %4042, %v3972
    %v4044 = vpop.permute.xlu0 %4043
    %4047 = vset.pattern.permute.xlu0 0
    %4048 = vperm.xlu0 %4047, %v3973
    %v4049 = vpop.permute.xlu0 %4048
    %4052 = vset.pattern.permute.xlu0 0
    %4053 = vperm.xlu0 %4052, %v3974
    %v4054 = vpop.permute.xlu0 %4053
    %4057 = vset.pattern.permute.xlu0 0
    %4058 = vperm.xlu0 %4057, %v3975
    %v4059 = vpop.permute.xlu0 %4058
    %4062 = vset.pattern.permute.xlu0 0
    %4063 = vperm.xlu0 %4062, %v3976
    %v4064 = vpop.permute.xlu0 %4063
    %4067 = vset.pattern.permute.xlu0 0
    %4068 = vperm.xlu0 %4067, %v3977
    %v4069 = vpop.permute.xlu0 %4068
    %4072 = vset.pattern.permute.xlu0 0
    %4073 = vperm.xlu0 %4072, %v3978
    %v4074 = vpop.permute.xlu0 %4073
    %4077 = vset.pattern.permute.xlu0 0
    %4078 = vperm.xlu0 %4077, %v3979
    %v4079 = vpop.permute.xlu0 %4078
    %4082 = vset.pattern.permute.xlu0 0
    %4083 = vperm.xlu0 %4082, %v3980
    %v4084 = vpop.permute.xlu0 %4083
    %4087 = vset.pattern.permute.xlu0 0
    %4088 = vperm.xlu0 %4087, %v3981
    %v4089 = vpop.permute.xlu0 %4088
    %4092 = vset.pattern.permute.xlu0 0
    %4093 = vperm.xlu0 %4092, %v3982
    %v4094 = vpop.permute.xlu0 %4093
    %4097 = vset.pattern.permute.xlu0 0
    %4098 = vperm.xlu0 %4097, %v3983
    %v4099 = vpop.permute.xlu0 %4098
    %4102 = vset.pattern.permute.xlu0 0
    %4103 = vperm.xlu0 %4102, %v3984
    %v4104 = vpop.permute.xlu0 %4103
    %4107 = vset.pattern.permute.xlu0 0
    %4108 = vperm.xlu0 %4107, %v3985
    %v4109 = vpop.permute.xlu0 %4108
    %4112 = vset.pattern.permute.xlu0 0
    %4113 = vperm.xlu0 %4112, %v3986
    %v4114 = vpop.permute.xlu0 %4113
    %4117 = vset.pattern.permute.xlu0 0
    %4118 = vperm.xlu0 %4117, %v3987
    %v4119 = vpop.permute.xlu0 %4118
    %4122 = vset.pattern.permute.xlu0 0
    %4123 = vperm.xlu0 %4122, %v3988
    %v4124 = vpop.permute.xlu0 %4123
    %4127 = vset.pattern.permute.xlu0 0
    %4128 = vperm.xlu0 %4127, %v3989
    %v4129 = vpop.permute.xlu0 %4128
    %4132 = vset.pattern.permute.xlu0 0
    %4133 = vperm.xlu0 %4132, %v3990
    %v4134 = vpop.permute.xlu0 %4133
    %4137 = vset.pattern.permute.xlu0 0
    %4138 = vperm.xlu0 %4137, %v3991
    %v4139 = vpop.permute.xlu0 %4138
    %4142 = vset.pattern.permute.xlu0 0
    %4143 = vperm.xlu0 %4142, %v3992
    %v4144 = vpop.permute.xlu0 %4143
    %4147 = vset.pattern.permute.xlu0 0
    %4148 = vperm.xlu0 %4147, %v3993
    %v4149 = vpop.permute.xlu0 %4148
    %4152 = vset.pattern.permute.xlu0 0
    %4153 = vperm.xlu0 %4152, %v3994
    %v4154 = vpop.permute.xlu0 %4153
    %4157 = vset.pattern.permute.xlu0 0
    %4158 = vperm.xlu0 %4157, %v3995
    %v4159 = vpop.permute.xlu0 %4158
    %4161 = vmatprep.subr.mxu0 0.0
    %4162 = vmatpush1.msra.mxu0 %v3929
    %4163 = vmatprep.subr.mxu0 0.0
    %4164 = vmatpush1.msra.mxu0 %v3928
    %4165 = vmatprep.subr.mxu0 0.0
    %4166 = vmatpush1.msra.mxu0 %v3927
    %4167 = vmatprep.subr.mxu0 0.0
    %4168 = vmatpush1.msra.mxu0 %v3926
    %4169 = vmatprep.subr.mxu0 0.0
    %4170 = vmatpush1.msra.mxu0 %v3925
    %4171 = vmatprep.subr.mxu0 0.0
    %4172 = vmatpush1.msra.mxu0 %v3924
    %4173 = vmatprep.subr.mxu0 0.0
    %4174 = vmatpush1.msra.mxu0 %v3923
    %4175 = vmatprep.subr.mxu0 0.0
    %4176 = vmatpush1.msra.mxu0 %v3922
    %4177 = vmatprep.subr.mxu0 0.0
    %4178 = vmatpush1.msra.mxu0 %v3921
    %4179 = vmatprep.subr.mxu0 0.0
    %4180 = vmatpush1.msra.mxu0 %v3920
    %4181 = vmatprep.subr.mxu0 0.0
    %4182 = vmatpush1.msra.mxu0 %v3919
    %4183 = vmatprep.subr.mxu0 0.0
    %4184 = vmatpush1.msra.mxu0 %v3918
    %4185 = vmatprep.subr.mxu0 0.0
    %4186 = vmatpush1.msra.mxu0 %v3917
    %4187 = vmatprep.subr.mxu0 0.0
    %4188 = vmatpush1.msra.mxu0 %v3916
    %4189 = vmatprep.subr.mxu0 0.0
    %4190 = vmatpush1.msra.mxu0 %v3915
    %4191 = vmatprep.subr.mxu0 0.0
    %4192 = vmatpush1.msra.mxu0 %v3914
    %4193 = vmatprep.subr.mxu0 0.0
    %4194 = vmatpush2.msra.mxu0 0.0
    %4195 = vmatprep.subr.mxu0 0.0
    %4196 = vmatpush2.msra.mxu0 0.0
    %4197 = vmatprep.subr.mxu0 0.0
    %4198 = vmatpush2.msra.mxu0 0.0
    %4199 = vmatprep.subr.mxu0 0.0
    %4200 = vmatpush2.msra.mxu0 0.0
    %4201 = vmatprep.subr.mxu0 0.0
    %4202 = vmatpush2.msra.mxu0 0.0
    %4203 = vmatprep.subr.mxu0 0.0
    %4204 = vmatpush2.msra.mxu0 0.0
    %4205 = vmatprep.subr.mxu0 0.0
    %4206 = vmatpush2.msra.mxu0 0.0
    %4207 = vmatprep.subr.mxu0 0.0
    %4208 = vmatpush2.msra.mxu0 0.0
    %4209 = vmatprep.subr.mxu0 0.0
    %4210 = vmatpush2.msra.mxu0 0.0
    %4211 = vmatprep.subr.mxu0 0.0
    %4212 = vmatpush2.msra.mxu0 0.0
    %4213 = vmatprep.subr.mxu0 0.0
    %4214 = vmatpush2.msra.mxu0 0.0
    %4215 = vmatprep.subr.mxu0 0.0
    %4216 = vmatpush2.msra.mxu0 0.0
    %4217 = vmatprep.subr.mxu0 0.0
    %4218 = vmatpush2.msra.mxu0 0.0
    %4219 = vmatprep.subr.mxu0 0.0
    %4220 = vmatpush2.msra.mxu0 0.0
    %4221 = vmatprep.subr.mxu0 0.0
    %4222 = vmatpush2.msra.mxu0 0.0
    %4223 = vmatprep.subr.mxu0 0.0
    %4224 = vmatpush2.msra.mxu0 0.0
    %4225 = vmatprep.mubr.f32.mxu0 0.0
    %4226 = vmatmul.mubr.f32.gmra.mxu0 %v3930
    %v4227 = vpop.f32.mrf.mxu0
    %v4228 = vadd.f32 %v3999, %v4227
    %v4229 = vpop.f32.mrf.mxu0
    %4230 = vmatprep.mubr.f32.mxu0 0.0
    %4231 = vmatmul.mubr.f32.gmra.mxu0 %v3931
    %v4232 = vpop.f32.mrf.mxu0
    %v4233 = vadd.f32 %v4004, %v4232
    %v4234 = vpop.f32.mrf.mxu0
    %4235 = vmatprep.mubr.f32.mxu0 0.0
    %4236 = vmatmul.mubr.f32.gmra.mxu0 %v3932
    %v4237 = vpop.f32.mrf.mxu0
    %v4238 = vadd.f32 %v4009, %v4237
    %v4239 = vpop.f32.mrf.mxu0
    %4240 = vmatprep.mubr.f32.mxu0 0.0
    %4241 = vmatmul.mubr.f32.gmra.mxu0 %v3933
    %v4242 = vpop.f32.mrf.mxu0
    %v4243 = vadd.f32 %v4014, %v4242
    %v4244 = vpop.f32.mrf.mxu0
    %4245 = vmatprep.mubr.f32.mxu0 0.0
    %4246 = vmatmul.mubr.f32.gmra.mxu0 %v3934
    %v4247 = vpop.f32.mrf.mxu0
    %v4248 = vadd.f32 %v4019, %v4247
    %v4249 = vpop.f32.mrf.mxu0
    %4250 = vmatprep.mubr.f32.mxu0 0.0
    %4251 = vmatmul.mubr.f32.gmra.mxu0 %v3935
    %v4252 = vpop.f32.mrf.mxu0
    %v4253 = vadd.f32 %v4024, %v4252
    %v4254 = vpop.f32.mrf.mxu0
    %4255 = vmatprep.mubr.f32.mxu0 0.0
    %4256 = vmatmul.mubr.f32.gmra.mxu0 %v3936
    %v4257 = vpop.f32.mrf.mxu0
    %v4258 = vadd.f32 %v4029, %v4257
    %v4259 = vpop.f32.mrf.mxu0
    %4260 = vmatprep.mubr.f32.mxu0 0.0
    %4261 = vmatmul.mubr.f32.gmra.mxu0 %v3937
    %v4262 = vpop.f32.mrf.mxu0
    %v4263 = vadd.f32 %v4034, %v4262
    %v4264 = vpop.f32.mrf.mxu0
    %4265 = vmatprep.mubr.f32.mxu0 0.0
    %4266 = vmatmul.mubr.f32.gmra.mxu0 %v3938
    %v4267 = vpop.f32.mrf.mxu0
    %v4268 = vadd.f32 %v4039, %v4267
    %v4269 = vpop.f32.mrf.mxu0
    %4270 = vmatprep.mubr.f32.mxu0 0.0
    %4271 = vmatmul.mubr.f32.gmra.mxu0 %v3939
    %v4272 = vpop.f32.mrf.mxu0
    %v4273 = vadd.f32 %v4044, %v4272
    %v4274 = vpop.f32.mrf.mxu0
    %4275 = vmatprep.mubr.f32.mxu0 0.0
    %4276 = vmatmul.mubr.f32.gmra.mxu0 %v3940
    %v4277 = vpop.f32.mrf.mxu0
    %v4278 = vadd.f32 %v4049, %v4277
    %v4279 = vpop.f32.mrf.mxu0
    %4280 = vmatprep.mubr.f32.mxu0 0.0
    %4281 = vmatmul.mubr.f32.gmra.mxu0 %v3941
    %v4282 = vpop.f32.mrf.mxu0
    %v4283 = vadd.f32 %v4054, %v4282
    %v4284 = vpop.f32.mrf.mxu0
    %4285 = vmatprep.mubr.f32.mxu0 0.0
    %4286 = vmatmul.mubr.f32.gmra.mxu0 %v3942
    %v4287 = vpop.f32.mrf.mxu0
    %v4288 = vadd.f32 %v4059, %v4287
    %v4289 = vpop.f32.mrf.mxu0
    %4290 = vmatprep.mubr.f32.mxu0 0.0
    %4291 = vmatmul.mubr.f32.gmra.mxu0 %v3943
    %v4292 = vpop.f32.mrf.mxu0
    %v4293 = vadd.f32 %v4064, %v4292
    %v4294 = vpop.f32.mrf.mxu0
    %4295 = vmatprep.mubr.f32.mxu0 0.0
    %4296 = vmatmul.mubr.f32.gmra.mxu0 %v3944
    %v4297 = vpop.f32.mrf.mxu0
    %v4298 = vadd.f32 %v4069, %v4297
    %v4299 = vpop.f32.mrf.mxu0
    %4300 = vmatprep.mubr.f32.mxu0 0.0
    %4301 = vmatmul.mubr.f32.gmra.mxu0 %v3945
    %v4302 = vpop.f32.mrf.mxu0
    %v4303 = vadd.f32 %v4074, %v4302
    %v4304 = vpop.f32.mrf.mxu0
    %4305 = vmatprep.mubr.f32.mxu0 0.0
    %4306 = vmatmul.mubr.f32.gmra.mxu0 %v3946
    %v4307 = vpop.f32.mrf.mxu0
    %v4308 = vadd.f32 %v4079, %v4307
    %v4309 = vpop.f32.mrf.mxu0
    %4310 = vmatprep.mubr.f32.mxu0 0.0
    %4311 = vmatmul.mubr.f32.gmra.mxu0 %v3947
    %v4312 = vpop.f32.mrf.mxu0
    %v4313 = vadd.f32 %v4084, %v4312
    %v4314 = vpop.f32.mrf.mxu0
    %4315 = vmatprep.mubr.f32.mxu0 0.0
    %4316 = vmatmul.mubr.f32.gmra.mxu0 %v3948
    %v4317 = vpop.f32.mrf.mxu0
    %v4318 = vadd.f32 %v4089, %v4317
    %v4319 = vpop.f32.mrf.mxu0
    %4320 = vmatprep.mubr.f32.mxu0 0.0
    %4321 = vmatmul.mubr.f32.gmra.mxu0 %v3949
    %v4322 = vpop.f32.mrf.mxu0
    %v4323 = vadd.f32 %v4094, %v4322
    %v4324 = vpop.f32.mrf.mxu0
    %4325 = vmatprep.mubr.f32.mxu0 0.0
    %4326 = vmatmul.mubr.f32.gmra.mxu0 %v3950
    %v4327 = vpop.f32.mrf.mxu0
    %v4328 = vadd.f32 %v4099, %v4327
    %v4329 = vpop.f32.mrf.mxu0
    %4330 = vmatprep.mubr.f32.mxu0 0.0
    %4331 = vmatmul.mubr.f32.gmra.mxu0 %v3951
    %v4332 = vpop.f32.mrf.mxu0
    %v4333 = vadd.f32 %v4104, %v4332
    %v4334 = vpop.f32.mrf.mxu0
    %4335 = vmatprep.mubr.f32.mxu0 0.0
    %4336 = vmatmul.mubr.f32.gmra.mxu0 %v3952
    %v4337 = vpop.f32.mrf.mxu0
    %v4338 = vadd.f32 %v4109, %v4337
    %v4339 = vpop.f32.mrf.mxu0
    %4340 = vmatprep.mubr.f32.mxu0 0.0
    %4341 = vmatmul.mubr.f32.gmra.mxu0 %v3953
    %v4342 = vpop.f32.mrf.mxu0
    %v4343 = vadd.f32 %v4114, %v4342
    %v4344 = vpop.f32.mrf.mxu0
    %4345 = vmatprep.mubr.f32.mxu0 0.0
    %4346 = vmatmul.mubr.f32.gmra.mxu0 %v3954
    %v4347 = vpop.f32.mrf.mxu0
    %v4348 = vadd.f32 %v4119, %v4347
    %v4349 = vpop.f32.mrf.mxu0
    %4350 = vmatprep.mubr.f32.mxu0 0.0
    %4351 = vmatmul.mubr.f32.gmra.mxu0 %v3955
    %v4352 = vpop.f32.mrf.mxu0
    %v4353 = vadd.f32 %v4124, %v4352
    %v4354 = vpop.f32.mrf.mxu0
    %4355 = vmatprep.mubr.f32.mxu0 0.0
    %4356 = vmatmul.mubr.f32.gmra.mxu0 %v3956
    %v4357 = vpop.f32.mrf.mxu0
    %v4358 = vadd.f32 %v4129, %v4357
    %v4359 = vpop.f32.mrf.mxu0
    %4360 = vmatprep.mubr.f32.mxu0 0.0
    %4361 = vmatmul.mubr.f32.gmra.mxu0 %v3957
    %v4362 = vpop.f32.mrf.mxu0
    %v4363 = vadd.f32 %v4134, %v4362
    %v4364 = vpop.f32.mrf.mxu0
    %4365 = vmatprep.mubr.f32.mxu0 0.0
    %4366 = vmatmul.mubr.f32.gmra.mxu0 %v3958
    %v4367 = vpop.f32.mrf.mxu0
    %v4368 = vadd.f32 %v4139, %v4367
    %v4369 = vpop.f32.mrf.mxu0
    %4370 = vmatprep.mubr.f32.mxu0 0.0
    %4371 = vmatmul.mubr.f32.gmra.mxu0 %v3959
    %v4372 = vpop.f32.mrf.mxu0
    %v4373 = vadd.f32 %v4144, %v4372
    %v4374 = vpop.f32.mrf.mxu0
    %4375 = vmatprep.mubr.f32.mxu0 0.0
    %4376 = vmatmul.mubr.f32.gmra.mxu0 %v3960
    %v4377 = vpop.f32.mrf.mxu0
    %v4378 = vadd.f32 %v4149, %v4377
    %v4379 = vpop.f32.mrf.mxu0
    %4380 = vmatprep.mubr.f32.mxu0 0.0
    %4381 = vmatmul.mubr.f32.gmra.mxu0 %v3961
    %v4382 = vpop.f32.mrf.mxu0
    %v4383 = vadd.f32 %v4154, %v4382
    %v4384 = vpop.f32.mrf.mxu0
    %4385 = vmatprep.mubr.f32.mxu0 0.0
    %4386 = vmatmul.mubr.f32.gmra.mxu0 %v3962
    %v4387 = vpop.f32.mrf.mxu0
    %v4388 = vadd.f32 %v4159, %v4387
    %v4389 = vpop.f32.mrf.mxu0
    %4390 = vdwg.mxu0
    %4391 = vst.msk [vmem:[%s13] sm:$0xff] %vm2981, %v4228
    %4392 = vst.msk [vmem:[%s13 + $0x8] sm:$0xff] %vm2981, %v4233
    %4393 = vst.msk [vmem:[%s13 + $0x10] sm:$0xff] %vm2981, %v4238
    %4394 = vst.msk [vmem:[%s13 + $0x18] sm:$0xff] %vm2981, %v4243
    %4395 = vst.msk [vmem:[%s13 + $0x20] sm:$0xff] %vm2981, %v4248
    %4396 = vst.msk [vmem:[%s13 + $0x28] sm:$0xff] %vm2981, %v4253
    %4397 = vst.msk [vmem:[%s13 + $0x30] sm:$0xff] %vm2981, %v4258
    %4398 = vst.msk [vmem:[%s13 + $0x38] sm:$0xff] %vm2981, %v4263
    %4399 = vst.msk [vmem:[%s13 + $0x40] sm:$0xff] %vm2981, %v4268
    %4400 = vst.msk [vmem:[%s13 + $0x48] sm:$0xff] %vm2981, %v4273
    %4401 = vst.msk [vmem:[%s13 + $0x50] sm:$0xff] %vm2981, %v4278
    %4402 = vst.msk [vmem:[%s13 + $0x58] sm:$0xff] %vm2981, %v4283
    %4403 = vst.msk [vmem:[%s13 + $0x60] sm:$0xff] %vm2981, %v4288
    %4404 = vst.msk [vmem:[%s13 + $0x68] sm:$0xff] %vm2981, %v4293
    %4405 = vst.msk [vmem:[%s13 + $0x70] sm:$0xff] %vm2981, %v4298
    %4406 = vst.msk [vmem:[%s13 + $0x78] sm:$0xff] %vm2981, %v4303
    %vm4407 = vcmask 2048
    %4408 = vst.msk [vmem:[%s13 + $0x80] sm:$0x7] %vm4407, %v4308
    %4426 = vrot.lane.b32.xlu0 %v4228, 127
    %v4427 = vpop.permute.xlu0 %4426
    %4428 = vrot.lane.b32.xlu0 %v4233, 127
    %v4429 = vpop.permute.xlu0 %4428
    %4430 = vrot.lane.b32.xlu0 %v4238, 127
    %v4431 = vpop.permute.xlu0 %4430
    %4432 = vrot.lane.b32.xlu0 %v4243, 127
    %v4433 = vpop.permute.xlu0 %4432
    %4434 = vrot.lane.b32.xlu0 %v4248, 127
    %v4435 = vpop.permute.xlu0 %4434
    %4436 = vrot.lane.b32.xlu0 %v4253, 127
    %v4437 = vpop.permute.xlu0 %4436
    %4438 = vrot.lane.b32.xlu0 %v4258, 127
    %v4439 = vpop.permute.xlu0 %4438
    %4440 = vrot.lane.b32.xlu0 %v4263, 127
    %v4441 = vpop.permute.xlu0 %4440
    %4442 = vrot.lane.b32.xlu0 %v4268, 127
    %v4443 = vpop.permute.xlu0 %4442
    %4444 = vrot.lane.b32.xlu0 %v4273, 127
    %v4445 = vpop.permute.xlu0 %4444
    %4446 = vrot.lane.b32.xlu0 %v4278, 127
    %v4447 = vpop.permute.xlu0 %4446
    %4448 = vrot.lane.b32.xlu0 %v4283, 127
    %v4449 = vpop.permute.xlu0 %4448
    %4450 = vrot.lane.b32.xlu0 %v4288, 127
    %v4451 = vpop.permute.xlu0 %4450
    %4452 = vrot.lane.b32.xlu0 %v4293, 127
    %v4453 = vpop.permute.xlu0 %4452
    %4454 = vrot.lane.b32.xlu0 %v4298, 127
    %v4455 = vpop.permute.xlu0 %4454
    %4456 = vrot.lane.b32.xlu0 %v4303, 127
    %v4457 = vpop.permute.xlu0 %4456
    %4458 = vrot.lane.b32.xlu0 %v4308, 127
    %v4459 = vpop.permute.xlu0 %4458
    %s4477 = scalar_lea.vmem %s13, 136
    %4478 = vst.msk [vmem:[%s4477] sm:$0xff] %vm2981, %v4427
    %4479 = vst.msk [vmem:[%s4477 + $0x8] sm:$0xff] %vm2981, %v4429
    %4480 = vst.msk [vmem:[%s4477 + $0x10] sm:$0xff] %vm2981, %v4431
    %4481 = vst.msk [vmem:[%s4477 + $0x18] sm:$0xff] %vm2981, %v4433
    %4482 = vst.msk [vmem:[%s4477 + $0x20] sm:$0xff] %vm2981, %v4435
    %4483 = vst.msk [vmem:[%s4477 + $0x28] sm:$0xff] %vm2981, %v4437
    %4484 = vst.msk [vmem:[%s4477 + $0x30] sm:$0xff] %vm2981, %v4439
    %4485 = vst.msk [vmem:[%s4477 + $0x38] sm:$0xff] %vm2981, %v4441
    %4486 = vst.msk [vmem:[%s4477 + $0x40] sm:$0xff] %vm2981, %v4443
    %4487 = vst.msk [vmem:[%s4477 + $0x48] sm:$0xff] %vm2981, %v4445
    %4488 = vst.msk [vmem:[%s4477 + $0x50] sm:$0xff] %vm2981, %v4447
    %4489 = vst.msk [vmem:[%s4477 + $0x58] sm:$0xff] %vm2981, %v4449
    %4490 = vst.msk [vmem:[%s4477 + $0x60] sm:$0xff] %vm2981, %v4451
    %4491 = vst.msk [vmem:[%s4477 + $0x68] sm:$0xff] %vm2981, %v4453
    %4492 = vst.msk [vmem:[%s4477 + $0x70] sm:$0xff] %vm2981, %v4455
    %4493 = vst.msk [vmem:[%s4477 + $0x78] sm:$0xff] %vm2981, %v4457
    %4494 = vst.msk [vmem:[%s4477 + $0x80] sm:$0x7] %vm4407, %v4459
    %s4495 = scalar_lea.vmem %s13, 272
    %vm4496 = vcmask 7171
    %4497 = vst.msk [vmem:[%s4495 - $0x3] sm:$0xf8] %vm4496, %v4308
    %4498 = vst.msk [vmem:[%s4495 + $0x5] sm:$0xff] %vm2981, %v4313
    %4499 = vst.msk [vmem:[%s4495 + $0xd] sm:$0xff] %vm2981, %v4318
    %4500 = vst.msk [vmem:[%s4495 + $0x15] sm:$0xff] %vm2981, %v4323
    %4501 = vst.msk [vmem:[%s4495 + $0x1d] sm:$0xff] %vm2981, %v4328
    %4502 = vst.msk [vmem:[%s4495 + $0x25] sm:$0xff] %vm2981, %v4333
    %4503 = vst.msk [vmem:[%s4495 + $0x2d] sm:$0xff] %vm2981, %v4338
    %4504 = vst.msk [vmem:[%s4495 + $0x35] sm:$0xff] %vm2981, %v4343
    %4505 = vst.msk [vmem:[%s4495 + $0x3d] sm:$0xff] %vm2981, %v4348
    %4506 = vst.msk [vmem:[%s4495 + $0x45] sm:$0xff] %vm2981, %v4353
    %4507 = vst.msk [vmem:[%s4495 + $0x4d] sm:$0xff] %vm2981, %v4358
    %4508 = vst.msk [vmem:[%s4495 + $0x55] sm:$0xff] %vm2981, %v4363
    %4509 = vst.msk [vmem:[%s4495 + $0x5d] sm:$0xff] %vm2981, %v4368
    %4510 = vst.msk [vmem:[%s4495 + $0x65] sm:$0xff] %vm2981, %v4373
    %4511 = vst.msk [vmem:[%s4495 + $0x6d] sm:$0xff] %vm2981, %v4378
    %4512 = vst.msk [vmem:[%s4495 + $0x75] sm:$0xff] %vm2981, %v4383
    %vm4513 = vcmask 5120
    %4514 = vst.msk [vmem:[%s4495 + $0x7d] sm:$0x3f] %vm4513, %v4388
    %4531 = vrot.lane.b32.xlu0 %v4313, 127
    %v4532 = vpop.permute.xlu0 %4531
    %4533 = vrot.lane.b32.xlu0 %v4318, 127
    %v4534 = vpop.permute.xlu0 %4533
    %4535 = vrot.lane.b32.xlu0 %v4323, 127
    %v4536 = vpop.permute.xlu0 %4535
    %4537 = vrot.lane.b32.xlu0 %v4328, 127
    %v4538 = vpop.permute.xlu0 %4537
    %4539 = vrot.lane.b32.xlu0 %v4333, 127
    %v4540 = vpop.permute.xlu0 %4539
    %4541 = vrot.lane.b32.xlu0 %v4338, 127
    %v4542 = vpop.permute.xlu0 %4541
    %4543 = vrot.lane.b32.xlu0 %v4343, 127
    %v4544 = vpop.permute.xlu0 %4543
    %4545 = vrot.lane.b32.xlu0 %v4348, 127
    %v4546 = vpop.permute.xlu0 %4545
    %4547 = vrot.lane.b32.xlu0 %v4353, 127
    %v4548 = vpop.permute.xlu0 %4547
    %4549 = vrot.lane.b32.xlu0 %v4358, 127
    %v4550 = vpop.permute.xlu0 %4549
    %4551 = vrot.lane.b32.xlu0 %v4363, 127
    %v4552 = vpop.permute.xlu0 %4551
    %4553 = vrot.lane.b32.xlu0 %v4368, 127
    %v4554 = vpop.permute.xlu0 %4553
    %4555 = vrot.lane.b32.xlu0 %v4373, 127
    %v4556 = vpop.permute.xlu0 %4555
    %4557 = vrot.lane.b32.xlu0 %v4378, 127
    %v4558 = vpop.permute.xlu0 %4557
    %4559 = vrot.lane.b32.xlu0 %v4383, 127
    %v4560 = vpop.permute.xlu0 %4559
    %4561 = vrot.lane.b32.xlu0 %v4388, 127
    %v4562 = vpop.permute.xlu0 %4561
    %s4579 = scalar_lea.vmem %s13, 408
    %4580 = vst.msk [vmem:[%s4579 - $0x3] sm:$0xf8] %vm4496, %v4459
    %4581 = vst.msk [vmem:[%s4579 + $0x5] sm:$0xff] %vm2981, %v4532
    %4582 = vst.msk [vmem:[%s4579 + $0xd] sm:$0xff] %vm2981, %v4534
    %4583 = vst.msk [vmem:[%s4579 + $0x15] sm:$0xff] %vm2981, %v4536
    %4584 = vst.msk [vmem:[%s4579 + $0x1d] sm:$0xff] %vm2981, %v4538
    %4585 = vst.msk [vmem:[%s4579 + $0x25] sm:$0xff] %vm2981, %v4540
    %4586 = vst.msk [vmem:[%s4579 + $0x2d] sm:$0xff] %vm2981, %v4542
    %4587 = vst.msk [vmem:[%s4579 + $0x35] sm:$0xff] %vm2981, %v4544
    %4588 = vst.msk [vmem:[%s4579 + $0x3d] sm:$0xff] %vm2981, %v4546
    %4589 = vst.msk [vmem:[%s4579 + $0x45] sm:$0xff] %vm2981, %v4548
    %4590 = vst.msk [vmem:[%s4579 + $0x4d] sm:$0xff] %vm2981, %v4550
    %4591 = vst.msk [vmem:[%s4579 + $0x55] sm:$0xff] %vm2981, %v4552
    %4592 = vst.msk [vmem:[%s4579 + $0x5d] sm:$0xff] %vm2981, %v4554
    %4593 = vst.msk [vmem:[%s4579 + $0x65] sm:$0xff] %vm2981, %v4556
    %4594 = vst.msk [vmem:[%s4579 + $0x6d] sm:$0xff] %vm2981, %v4558
    %4595 = vst.msk [vmem:[%s4579 + $0x75] sm:$0xff] %vm2981, %v4560
    %4596 = vst.msk [vmem:[%s4579 + $0x7d] sm:$0x3f] %vm4513, %v4562
    %v4597 = vld [vmem:[%s11] sm:$0x7]
    %v4598 = vld [vmem:[%s12] sm:$0xff]
    %v4599 = vld [vmem:[%s12 + $0x8] sm:$0xff]
    %v4600 = vld [vmem:[%s12 + $0x10] sm:$0xff]
    %v4601 = vld [vmem:[%s12 + $0x18] sm:$0xff]
    %v4602 = vld [vmem:[%s12 + $0x20] sm:$0xff]
    %v4603 = vld [vmem:[%s12 + $0x28] sm:$0xff]
    %v4604 = vld [vmem:[%s12 + $0x30] sm:$0xff]
    %v4605 = vld [vmem:[%s12 + $0x38] sm:$0xff]
    %v4606 = vld [vmem:[%s12 + $0x40] sm:$0xff]
    %v4607 = vld [vmem:[%s12 + $0x48] sm:$0xff]
    %v4608 = vld [vmem:[%s12 + $0x50] sm:$0xff]
    %v4609 = vld [vmem:[%s12 + $0x58] sm:$0xff]
    %v4610 = vld [vmem:[%s12 + $0x60] sm:$0xff]
    %v4611 = vld [vmem:[%s12 + $0x68] sm:$0xff]
    %v4612 = vld [vmem:[%s12 + $0x70] sm:$0xff]
    %v4613 = vld [vmem:[%s12 + $0x78] sm:$0xff]
    %v4614 = vld [vmem:[%s12 + $0x80] sm:$0x7]
    %4616 = vset.pattern.permute.xlu0 0
    %4617 = vperm.xlu0 %4616, %v4598
    %v4618 = vpop.permute.xlu0 %4617
    %4621 = vset.pattern.permute.xlu0 0
    %4622 = vperm.xlu0 %4621, %v4599
    %v4623 = vpop.permute.xlu0 %4622
    %4626 = vset.pattern.permute.xlu0 0
    %4627 = vperm.xlu0 %4626, %v4600
    %v4628 = vpop.permute.xlu0 %4627
    %4631 = vset.pattern.permute.xlu0 0
    %4632 = vperm.xlu0 %4631, %v4601
    %v4633 = vpop.permute.xlu0 %4632
    %4636 = vset.pattern.permute.xlu0 0
    %4637 = vperm.xlu0 %4636, %v4602
    %v4638 = vpop.permute.xlu0 %4637
    %4641 = vset.pattern.permute.xlu0 0
    %4642 = vperm.xlu0 %4641, %v4603
    %v4643 = vpop.permute.xlu0 %4642
    %4646 = vset.pattern.permute.xlu0 0
    %4647 = vperm.xlu0 %4646, %v4604
    %v4648 = vpop.permute.xlu0 %4647
    %4651 = vset.pattern.permute.xlu0 0
    %4652 = vperm.xlu0 %4651, %v4605
    %v4653 = vpop.permute.xlu0 %4652
    %4656 = vset.pattern.permute.xlu0 0
    %4657 = vperm.xlu0 %4656, %v4606
    %v4658 = vpop.permute.xlu0 %4657
    %4661 = vset.pattern.permute.xlu0 0
    %4662 = vperm.xlu0 %4661, %v4607
    %v4663 = vpop.permute.xlu0 %4662
    %4666 = vset.pattern.permute.xlu0 0
    %4667 = vperm.xlu0 %4666, %v4608
    %v4668 = vpop.permute.xlu0 %4667
    %4671 = vset.pattern.permute.xlu0 0
    %4672 = vperm.xlu0 %4671, %v4609
    %v4673 = vpop.permute.xlu0 %4672
    %4676 = vset.pattern.permute.xlu0 0
    %4677 = vperm.xlu0 %4676, %v4610
    %v4678 = vpop.permute.xlu0 %4677
    %4681 = vset.pattern.permute.xlu0 0
    %4682 = vperm.xlu0 %4681, %v4611
    %v4683 = vpop.permute.xlu0 %4682
    %4686 = vset.pattern.permute.xlu0 0
    %4687 = vperm.xlu0 %4686, %v4612
    %v4688 = vpop.permute.xlu0 %4687
    %4691 = vset.pattern.permute.xlu0 0
    %4692 = vperm.xlu0 %4691, %v4613
    %v4693 = vpop.permute.xlu0 %4692
    %4696 = vset.pattern.permute.xlu0 0
    %4697 = vperm.xlu0 %4696, %v4614
    %v4698 = vpop.permute.xlu0 %4697
    %v4700 = vlaneseq
    %v4701 = vshrl.u32 %v4700, 7
    %v4702 = vsub.s32 0, %v4701
    %v4703 = vrot.slane %v4597, %v4702
    %v4704 = vmul.f32 %v4618, %v4703
    %v4705 = vmul.f32 %v4623, %v4703
    %v4706 = vmul.f32 %v4628, %v4703
    %v4707 = vmul.f32 %v4633, %v4703
    %v4708 = vmul.f32 %v4638, %v4703
    %v4709 = vmul.f32 %v4643, %v4703
    %v4710 = vmul.f32 %v4648, %v4703
    %v4711 = vmul.f32 %v4653, %v4703
    %v4712 = vmul.f32 %v4658, %v4703
    %v4713 = vmul.f32 %v4663, %v4703
    %v4714 = vmul.f32 %v4668, %v4703
    %v4715 = vmul.f32 %v4673, %v4703
    %v4716 = vmul.f32 %v4678, %v4703
    %v4717 = vmul.f32 %v4683, %v4703
    %v4718 = vmul.f32 %v4688, %v4703
    %v4719 = vmul.f32 %v4693, %v4703
    %v4720 = vmul.f32 %v4698, %v4703
    %4721 = vset.pattern.permute.xlu0 1
    %4722 = vperm.xlu0 %4721, %v4598
    %v4723 = vpop.permute.xlu0 %4722
    %4725 = vset.pattern.permute.xlu0 1
    %4726 = vperm.xlu0 %4725, %v4599
    %v4727 = vpop.permute.xlu0 %4726
    %4729 = vset.pattern.permute.xlu0 1
    %4730 = vperm.xlu0 %4729, %v4600
    %v4731 = vpop.permute.xlu0 %4730
    %4733 = vset.pattern.permute.xlu0 1
    %4734 = vperm.xlu0 %4733, %v4601
    %v4735 = vpop.permute.xlu0 %4734
    %4737 = vset.pattern.permute.xlu0 1
    %4738 = vperm.xlu0 %4737, %v4602
    %v4739 = vpop.permute.xlu0 %4738
    %4741 = vset.pattern.permute.xlu0 1
    %4742 = vperm.xlu0 %4741, %v4603
    %v4743 = vpop.permute.xlu0 %4742
    %4745 = vset.pattern.permute.xlu0 1
    %4746 = vperm.xlu0 %4745, %v4604
    %v4747 = vpop.permute.xlu0 %4746
    %4749 = vset.pattern.permute.xlu0 1
    %4750 = vperm.xlu0 %4749, %v4605
    %v4751 = vpop.permute.xlu0 %4750
    %4753 = vset.pattern.permute.xlu0 1
    %4754 = vperm.xlu0 %4753, %v4606
    %v4755 = vpop.permute.xlu0 %4754
    %4757 = vset.pattern.permute.xlu0 1
    %4758 = vperm.xlu0 %4757, %v4607
    %v4759 = vpop.permute.xlu0 %4758
    %4761 = vset.pattern.permute.xlu0 1
    %4762 = vperm.xlu0 %4761, %v4608
    %v4763 = vpop.permute.xlu0 %4762
    %4765 = vset.pattern.permute.xlu0 1
    %4766 = vperm.xlu0 %4765, %v4609
    %v4767 = vpop.permute.xlu0 %4766
    %4769 = vset.pattern.permute.xlu0 1
    %4770 = vperm.xlu0 %4769, %v4610
    %v4771 = vpop.permute.xlu0 %4770
    %4773 = vset.pattern.permute.xlu0 1
    %4774 = vperm.xlu0 %4773, %v4611
    %v4775 = vpop.permute.xlu0 %4774
    %4777 = vset.pattern.permute.xlu0 1
    %4778 = vperm.xlu0 %4777, %v4612
    %v4779 = vpop.permute.xlu0 %4778
    %4781 = vset.pattern.permute.xlu0 1
    %4782 = vperm.xlu0 %4781, %v4613
    %v4783 = vpop.permute.xlu0 %4782
    %4785 = vset.pattern.permute.xlu0 1
    %4786 = vperm.xlu0 %4785, %v4614
    %v4787 = vpop.permute.xlu0 %4786
    %v4789 = vlaneseq
    %v4790 = vshrl.u32 %v4789, 7
    %v4791 = vsub.s32 1, %v4790
    %v4792 = vrot.slane %v4597, %v4791
    %v4793 = vmul.f32 %v4723, %v4792
    %v4794 = vmul.f32 %v4727, %v4792
    %v4795 = vmul.f32 %v4731, %v4792
    %v4796 = vmul.f32 %v4735, %v4792
    %v4797 = vmul.f32 %v4739, %v4792
    %v4798 = vmul.f32 %v4743, %v4792
    %v4799 = vmul.f32 %v4747, %v4792
    %v4800 = vmul.f32 %v4751, %v4792
    %v4801 = vmul.f32 %v4755, %v4792
    %v4802 = vmul.f32 %v4759, %v4792
    %v4803 = vmul.f32 %v4763, %v4792
    %v4804 = vmul.f32 %v4767, %v4792
    %v4805 = vmul.f32 %v4771, %v4792
    %v4806 = vmul.f32 %v4775, %v4792
    %v4807 = vmul.f32 %v4779, %v4792
    %v4808 = vmul.f32 %v4783, %v4792
    %v4809 = vmul.f32 %v4787, %v4792
    %v4810 = vadd.f32 %v4704, %v4793
    %v4811 = vadd.f32 %v4705, %v4794
    %v4812 = vadd.f32 %v4706, %v4795
    %v4813 = vadd.f32 %v4707, %v4796
    %v4814 = vadd.f32 %v4708, %v4797
    %v4815 = vadd.f32 %v4709, %v4798
    %v4816 = vadd.f32 %v4710, %v4799
    %v4817 = vadd.f32 %v4711, %v4800
    %v4818 = vadd.f32 %v4712, %v4801
    %v4819 = vadd.f32 %v4713, %v4802
    %v4820 = vadd.f32 %v4714, %v4803
    %v4821 = vadd.f32 %v4715, %v4804
    %v4822 = vadd.f32 %v4716, %v4805
    %v4823 = vadd.f32 %v4717, %v4806
    %v4824 = vadd.f32 %v4718, %v4807
    %v4825 = vadd.f32 %v4719, %v4808
    %v4826 = vadd.f32 %v4720, %v4809
    %4827 = vset.pattern.permute.xlu0 2
    %4828 = vperm.xlu0 %4827, %v4598
    %v4829 = vpop.permute.xlu0 %4828
    %4831 = vset.pattern.permute.xlu0 2
    %4832 = vperm.xlu0 %4831, %v4599
    %v4833 = vpop.permute.xlu0 %4832
    %4835 = vset.pattern.permute.xlu0 2
    %4836 = vperm.xlu0 %4835, %v4600
    %v4837 = vpop.permute.xlu0 %4836
    %4839 = vset.pattern.permute.xlu0 2
    %4840 = vperm.xlu0 %4839, %v4601
    %v4841 = vpop.permute.xlu0 %4840
    %4843 = vset.pattern.permute.xlu0 2
    %4844 = vperm.xlu0 %4843, %v4602
    %v4845 = vpop.permute.xlu0 %4844
    %4847 = vset.pattern.permute.xlu0 2
    %4848 = vperm.xlu0 %4847, %v4603
    %v4849 = vpop.permute.xlu0 %4848
    %4851 = vset.pattern.permute.xlu0 2
    %4852 = vperm.xlu0 %4851, %v4604
    %v4853 = vpop.permute.xlu0 %4852
    %4855 = vset.pattern.permute.xlu0 2
    %4856 = vperm.xlu0 %4855, %v4605
    %v4857 = vpop.permute.xlu0 %4856
    %4859 = vset.pattern.permute.xlu0 2
    %4860 = vperm.xlu0 %4859, %v4606
    %v4861 = vpop.permute.xlu0 %4860
    %4863 = vset.pattern.permute.xlu0 2
    %4864 = vperm.xlu0 %4863, %v4607
    %v4865 = vpop.permute.xlu0 %4864
    %4867 = vset.pattern.permute.xlu0 2
    %4868 = vperm.xlu0 %4867, %v4608
    %v4869 = vpop.permute.xlu0 %4868
    %4871 = vset.pattern.permute.xlu0 2
    %4872 = vperm.xlu0 %4871, %v4609
    %v4873 = vpop.permute.xlu0 %4872
    %4875 = vset.pattern.permute.xlu0 2
    %4876 = vperm.xlu0 %4875, %v4610
    %v4877 = vpop.permute.xlu0 %4876
    %4879 = vset.pattern.permute.xlu0 2
    %4880 = vperm.xlu0 %4879, %v4611
    %v4881 = vpop.permute.xlu0 %4880
    %4883 = vset.pattern.permute.xlu0 2
    %4884 = vperm.xlu0 %4883, %v4612
    %v4885 = vpop.permute.xlu0 %4884
    %4887 = vset.pattern.permute.xlu0 2
    %4888 = vperm.xlu0 %4887, %v4613
    %v4889 = vpop.permute.xlu0 %4888
    %4891 = vset.pattern.permute.xlu0 2
    %4892 = vperm.xlu0 %4891, %v4614
    %v4893 = vpop.permute.xlu0 %4892
    %v4895 = vlaneseq
    %v4896 = vshrl.u32 %v4895, 7
    %v4897 = vsub.s32 2, %v4896
    %v4898 = vrot.slane %v4597, %v4897
    %v4899 = vmul.f32 %v4829, %v4898
    %v4900 = vmul.f32 %v4833, %v4898
    %v4901 = vmul.f32 %v4837, %v4898
    %v4902 = vmul.f32 %v4841, %v4898
    %v4903 = vmul.f32 %v4845, %v4898
    %v4904 = vmul.f32 %v4849, %v4898
    %v4905 = vmul.f32 %v4853, %v4898
    %v4906 = vmul.f32 %v4857, %v4898
    %v4907 = vmul.f32 %v4861, %v4898
    %v4908 = vmul.f32 %v4865, %v4898
    %v4909 = vmul.f32 %v4869, %v4898
    %v4910 = vmul.f32 %v4873, %v4898
    %v4911 = vmul.f32 %v4877, %v4898
    %v4912 = vmul.f32 %v4881, %v4898
    %v4913 = vmul.f32 %v4885, %v4898
    %v4914 = vmul.f32 %v4889, %v4898
    %v4915 = vmul.f32 %v4893, %v4898
    %v4916 = vadd.f32 %v4810, %v4899
    %v4917 = vadd.f32 %v4811, %v4900
    %v4918 = vadd.f32 %v4812, %v4901
    %v4919 = vadd.f32 %v4813, %v4902
    %v4920 = vadd.f32 %v4814, %v4903
    %v4921 = vadd.f32 %v4815, %v4904
    %v4922 = vadd.f32 %v4816, %v4905
    %v4923 = vadd.f32 %v4817, %v4906
    %v4924 = vadd.f32 %v4818, %v4907
    %v4925 = vadd.f32 %v4819, %v4908
    %v4926 = vadd.f32 %v4820, %v4909
    %v4927 = vadd.f32 %v4821, %v4910
    %v4928 = vadd.f32 %v4822, %v4911
    %v4929 = vadd.f32 %v4823, %v4912
    %v4930 = vadd.f32 %v4824, %v4913
    %v4931 = vadd.f32 %v4825, %v4914
    %v4932 = vadd.f32 %v4826, %v4915
    %4933 = vst [vmem:[%s14] sm:$0xff] %v4916
    %4934 = vst [vmem:[%s14 + $0x8] sm:$0xff] %v4917
    %4935 = vst [vmem:[%s14 + $0x10] sm:$0xff] %v4918
    %4936 = vst [vmem:[%s14 + $0x18] sm:$0xff] %v4919
    %4937 = vst [vmem:[%s14 + $0x20] sm:$0xff] %v4920
    %4938 = vst [vmem:[%s14 + $0x28] sm:$0xff] %v4921
    %4939 = vst [vmem:[%s14 + $0x30] sm:$0xff] %v4922
    %4940 = vst [vmem:[%s14 + $0x38] sm:$0xff] %v4923
    %4941 = vst [vmem:[%s14 + $0x40] sm:$0xff] %v4924
    %4942 = vst [vmem:[%s14 + $0x48] sm:$0xff] %v4925
    %4943 = vst [vmem:[%s14 + $0x50] sm:$0xff] %v4926
    %4944 = vst [vmem:[%s14 + $0x58] sm:$0xff] %v4927
    %4945 = vst [vmem:[%s14 + $0x60] sm:$0xff] %v4928
    %4946 = vst [vmem:[%s14 + $0x68] sm:$0xff] %v4929
    %4947 = vst [vmem:[%s14 + $0x70] sm:$0xff] %v4930
    %4948 = vst [vmem:[%s14 + $0x78] sm:$0xff] %v4931
    %4949 = vst [vmem:[%s14 + $0x80] sm:$0x7] %v4932
    %s4950 = scalar_lea.vmem %s12, 136
    %v4951 = vld [vmem:[%s4950] sm:$0xff]
    %v4952 = vld [vmem:[%s4950 + $0x8] sm:$0xff]
    %v4953 = vld [vmem:[%s4950 + $0x10] sm:$0xff]
    %v4954 = vld [vmem:[%s4950 + $0x18] sm:$0xff]
    %v4955 = vld [vmem:[%s4950 + $0x20] sm:$0xff]
    %v4956 = vld [vmem:[%s4950 + $0x28] sm:$0xff]
    %v4957 = vld [vmem:[%s4950 + $0x30] sm:$0xff]
    %v4958 = vld [vmem:[%s4950 + $0x38] sm:$0xff]
    %v4959 = vld [vmem:[%s4950 + $0x40] sm:$0xff]
    %v4960 = vld [vmem:[%s4950 + $0x48] sm:$0xff]
    %v4961 = vld [vmem:[%s4950 + $0x50] sm:$0xff]
    %v4962 = vld [vmem:[%s4950 + $0x58] sm:$0xff]
    %v4963 = vld [vmem:[%s4950 + $0x60] sm:$0xff]
    %v4964 = vld [vmem:[%s4950 + $0x68] sm:$0xff]
    %v4965 = vld [vmem:[%s4950 + $0x70] sm:$0xff]
    %v4966 = vld [vmem:[%s4950 + $0x78] sm:$0xff]
    %v4967 = vld [vmem:[%s4950 + $0x80] sm:$0x7]
    %4969 = vset.pattern.permute.xlu0 0
    %4970 = vperm.xlu0 %4969, %v4951
    %v4971 = vpop.permute.xlu0 %4970
    %4974 = vset.pattern.permute.xlu0 0
    %4975 = vperm.xlu0 %4974, %v4952
    %v4976 = vpop.permute.xlu0 %4975
    %4979 = vset.pattern.permute.xlu0 0
    %4980 = vperm.xlu0 %4979, %v4953
    %v4981 = vpop.permute.xlu0 %4980
    %4984 = vset.pattern.permute.xlu0 0
    %4985 = vperm.xlu0 %4984, %v4954
    %v4986 = vpop.permute.xlu0 %4985
    %4989 = vset.pattern.permute.xlu0 0
    %4990 = vperm.xlu0 %4989, %v4955
    %v4991 = vpop.permute.xlu0 %4990
    %4994 = vset.pattern.permute.xlu0 0
    %4995 = vperm.xlu0 %4994, %v4956
    %v4996 = vpop.permute.xlu0 %4995
    %4999 = vset.pattern.permute.xlu0 0
    %5000 = vperm.xlu0 %4999, %v4957
    %v5001 = vpop.permute.xlu0 %5000
    %5004 = vset.pattern.permute.xlu0 0
    %5005 = vperm.xlu0 %5004, %v4958
    %v5006 = vpop.permute.xlu0 %5005
    %5009 = vset.pattern.permute.xlu0 0
    %5010 = vperm.xlu0 %5009, %v4959
    %v5011 = vpop.permute.xlu0 %5010
    %5014 = vset.pattern.permute.xlu0 0
    %5015 = vperm.xlu0 %5014, %v4960
    %v5016 = vpop.permute.xlu0 %5015
    %5019 = vset.pattern.permute.xlu0 0
    %5020 = vperm.xlu0 %5019, %v4961
    %v5021 = vpop.permute.xlu0 %5020
    %5024 = vset.pattern.permute.xlu0 0
    %5025 = vperm.xlu0 %5024, %v4962
    %v5026 = vpop.permute.xlu0 %5025
    %5029 = vset.pattern.permute.xlu0 0
    %5030 = vperm.xlu0 %5029, %v4963
    %v5031 = vpop.permute.xlu0 %5030
    %5034 = vset.pattern.permute.xlu0 0
    %5035 = vperm.xlu0 %5034, %v4964
    %v5036 = vpop.permute.xlu0 %5035
    %5039 = vset.pattern.permute.xlu0 0
    %5040 = vperm.xlu0 %5039, %v4965
    %v5041 = vpop.permute.xlu0 %5040
    %5044 = vset.pattern.permute.xlu0 0
    %5045 = vperm.xlu0 %5044, %v4966
    %v5046 = vpop.permute.xlu0 %5045
    %5049 = vset.pattern.permute.xlu0 0
    %5050 = vperm.xlu0 %5049, %v4967
    %v5051 = vpop.permute.xlu0 %5050
    %v5053 = vmul.f32 %v4971, %v4703
    %v5054 = vmul.f32 %v4976, %v4703
    %v5055 = vmul.f32 %v4981, %v4703
    %v5056 = vmul.f32 %v4986, %v4703
    %v5057 = vmul.f32 %v4991, %v4703
    %v5058 = vmul.f32 %v4996, %v4703
    %v5059 = vmul.f32 %v5001, %v4703
    %v5060 = vmul.f32 %v5006, %v4703
    %v5061 = vmul.f32 %v5011, %v4703
    %v5062 = vmul.f32 %v5016, %v4703
    %v5063 = vmul.f32 %v5021, %v4703
    %v5064 = vmul.f32 %v5026, %v4703
    %v5065 = vmul.f32 %v5031, %v4703
    %v5066 = vmul.f32 %v5036, %v4703
    %v5067 = vmul.f32 %v5041, %v4703
    %v5068 = vmul.f32 %v5046, %v4703
    %v5069 = vmul.f32 %v5051, %v4703
    %5070 = vset.pattern.permute.xlu0 1
    %5071 = vperm.xlu0 %5070, %v4951
    %v5072 = vpop.permute.xlu0 %5071
    %5074 = vset.pattern.permute.xlu0 1
    %5075 = vperm.xlu0 %5074, %v4952
    %v5076 = vpop.permute.xlu0 %5075
    %5078 = vset.pattern.permute.xlu0 1
    %5079 = vperm.xlu0 %5078, %v4953
    %v5080 = vpop.permute.xlu0 %5079
    %5082 = vset.pattern.permute.xlu0 1
    %5083 = vperm.xlu0 %5082, %v4954
    %v5084 = vpop.permute.xlu0 %5083
    %5086 = vset.pattern.permute.xlu0 1
    %5087 = vperm.xlu0 %5086, %v4955
    %v5088 = vpop.permute.xlu0 %5087
    %5090 = vset.pattern.permute.xlu0 1
    %5091 = vperm.xlu0 %5090, %v4956
    %v5092 = vpop.permute.xlu0 %5091
    %5094 = vset.pattern.permute.xlu0 1
    %5095 = vperm.xlu0 %5094, %v4957
    %v5096 = vpop.permute.xlu0 %5095
    %5098 = vset.pattern.permute.xlu0 1
    %5099 = vperm.xlu0 %5098, %v4958
    %v5100 = vpop.permute.xlu0 %5099
    %5102 = vset.pattern.permute.xlu0 1
    %5103 = vperm.xlu0 %5102, %v4959
    %v5104 = vpop.permute.xlu0 %5103
    %5106 = vset.pattern.permute.xlu0 1
    %5107 = vperm.xlu0 %5106, %v4960
    %v5108 = vpop.permute.xlu0 %5107
    %5110 = vset.pattern.permute.xlu0 1
    %5111 = vperm.xlu0 %5110, %v4961
    %v5112 = vpop.permute.xlu0 %5111
    %5114 = vset.pattern.permute.xlu0 1
    %5115 = vperm.xlu0 %5114, %v4962
    %v5116 = vpop.permute.xlu0 %5115
    %5118 = vset.pattern.permute.xlu0 1
    %5119 = vperm.xlu0 %5118, %v4963
    %v5120 = vpop.permute.xlu0 %5119
    %5122 = vset.pattern.permute.xlu0 1
    %5123 = vperm.xlu0 %5122, %v4964
    %v5124 = vpop.permute.xlu0 %5123
    %5126 = vset.pattern.permute.xlu0 1
    %5127 = vperm.xlu0 %5126, %v4965
    %v5128 = vpop.permute.xlu0 %5127
    %5130 = vset.pattern.permute.xlu0 1
    %5131 = vperm.xlu0 %5130, %v4966
    %v5132 = vpop.permute.xlu0 %5131
    %5134 = vset.pattern.permute.xlu0 1
    %5135 = vperm.xlu0 %5134, %v4967
    %v5136 = vpop.permute.xlu0 %5135
    %v5138 = vmul.f32 %v5072, %v4792
    %v5139 = vmul.f32 %v5076, %v4792
    %v5140 = vmul.f32 %v5080, %v4792
    %v5141 = vmul.f32 %v5084, %v4792
    %v5142 = vmul.f32 %v5088, %v4792
    %v5143 = vmul.f32 %v5092, %v4792
    %v5144 = vmul.f32 %v5096, %v4792
    %v5145 = vmul.f32 %v5100, %v4792
    %v5146 = vmul.f32 %v5104, %v4792
    %v5147 = vmul.f32 %v5108, %v4792
    %v5148 = vmul.f32 %v5112, %v4792
    %v5149 = vmul.f32 %v5116, %v4792
    %v5150 = vmul.f32 %v5120, %v4792
    %v5151 = vmul.f32 %v5124, %v4792
    %v5152 = vmul.f32 %v5128, %v4792
    %v5153 = vmul.f32 %v5132, %v4792
    %v5154 = vmul.f32 %v5136, %v4792
    %v5155 = vadd.f32 %v5053, %v5138
    %v5156 = vadd.f32 %v5054, %v5139
    %v5157 = vadd.f32 %v5055, %v5140
    %v5158 = vadd.f32 %v5056, %v5141
    %v5159 = vadd.f32 %v5057, %v5142
    %v5160 = vadd.f32 %v5058, %v5143
    %v5161 = vadd.f32 %v5059, %v5144
    %v5162 = vadd.f32 %v5060, %v5145
    %v5163 = vadd.f32 %v5061, %v5146
    %v5164 = vadd.f32 %v5062, %v5147
    %v5165 = vadd.f32 %v5063, %v5148
    %v5166 = vadd.f32 %v5064, %v5149
    %v5167 = vadd.f32 %v5065, %v5150
    %v5168 = vadd.f32 %v5066, %v5151
    %v5169 = vadd.f32 %v5067, %v5152
    %v5170 = vadd.f32 %v5068, %v5153
    %v5171 = vadd.f32 %v5069, %v5154
    %5172 = vset.pattern.permute.xlu0 2
    %5173 = vperm.xlu0 %5172, %v4951
    %v5174 = vpop.permute.xlu0 %5173
    %5176 = vset.pattern.permute.xlu0 2
    %5177 = vperm.xlu0 %5176, %v4952
    %v5178 = vpop.permute.xlu0 %5177
    %5180 = vset.pattern.permute.xlu0 2
    %5181 = vperm.xlu0 %5180, %v4953
    %v5182 = vpop.permute.xlu0 %5181
    %5184 = vset.pattern.permute.xlu0 2
    %5185 = vperm.xlu0 %5184, %v4954
    %v5186 = vpop.permute.xlu0 %5185
    %5188 = vset.pattern.permute.xlu0 2
    %5189 = vperm.xlu0 %5188, %v4955
    %v5190 = vpop.permute.xlu0 %5189
    %5192 = vset.pattern.permute.xlu0 2
    %5193 = vperm.xlu0 %5192, %v4956
    %v5194 = vpop.permute.xlu0 %5193
    %5196 = vset.pattern.permute.xlu0 2
    %5197 = vperm.xlu0 %5196, %v4957
    %v5198 = vpop.permute.xlu0 %5197
    %5200 = vset.pattern.permute.xlu0 2
    %5201 = vperm.xlu0 %5200, %v4958
    %v5202 = vpop.permute.xlu0 %5201
    %5204 = vset.pattern.permute.xlu0 2
    %5205 = vperm.xlu0 %5204, %v4959
    %v5206 = vpop.permute.xlu0 %5205
    %5208 = vset.pattern.permute.xlu0 2
    %5209 = vperm.xlu0 %5208, %v4960
    %v5210 = vpop.permute.xlu0 %5209
    %5212 = vset.pattern.permute.xlu0 2
    %5213 = vperm.xlu0 %5212, %v4961
    %v5214 = vpop.permute.xlu0 %5213
    %5216 = vset.pattern.permute.xlu0 2
    %5217 = vperm.xlu0 %5216, %v4962
    %v5218 = vpop.permute.xlu0 %5217
    %5220 = vset.pattern.permute.xlu0 2
    %5221 = vperm.xlu0 %5220, %v4963
    %v5222 = vpop.permute.xlu0 %5221
    %5224 = vset.pattern.permute.xlu0 2
    %5225 = vperm.xlu0 %5224, %v4964
    %v5226 = vpop.permute.xlu0 %5225
    %5228 = vset.pattern.permute.xlu0 2
    %5229 = vperm.xlu0 %5228, %v4965
    %v5230 = vpop.permute.xlu0 %5229
    %5232 = vset.pattern.permute.xlu0 2
    %5233 = vperm.xlu0 %5232, %v4966
    %v5234 = vpop.permute.xlu0 %5233
    %5236 = vset.pattern.permute.xlu0 2
    %5237 = vperm.xlu0 %5236, %v4967
    %v5238 = vpop.permute.xlu0 %5237
    %v5240 = vmul.f32 %v5174, %v4898
    %v5241 = vmul.f32 %v5178, %v4898
    %v5242 = vmul.f32 %v5182, %v4898
    %v5243 = vmul.f32 %v5186, %v4898
    %v5244 = vmul.f32 %v5190, %v4898
    %v5245 = vmul.f32 %v5194, %v4898
    %v5246 = vmul.f32 %v5198, %v4898
    %v5247 = vmul.f32 %v5202, %v4898
    %v5248 = vmul.f32 %v5206, %v4898
    %v5249 = vmul.f32 %v5210, %v4898
    %v5250 = vmul.f32 %v5214, %v4898
    %v5251 = vmul.f32 %v5218, %v4898
    %v5252 = vmul.f32 %v5222, %v4898
    %v5253 = vmul.f32 %v5226, %v4898
    %v5254 = vmul.f32 %v5230, %v4898
    %v5255 = vmul.f32 %v5234, %v4898
    %v5256 = vmul.f32 %v5238, %v4898
    %v5257 = vadd.f32 %v5155, %v5240
    %v5258 = vadd.f32 %v5156, %v5241
    %v5259 = vadd.f32 %v5157, %v5242
    %v5260 = vadd.f32 %v5158, %v5243
    %v5261 = vadd.f32 %v5159, %v5244
    %v5262 = vadd.f32 %v5160, %v5245
    %v5263 = vadd.f32 %v5161, %v5246
    %v5264 = vadd.f32 %v5162, %v5247
    %v5265 = vadd.f32 %v5163, %v5248
    %v5266 = vadd.f32 %v5164, %v5249
    %v5267 = vadd.f32 %v5165, %v5250
    %v5268 = vadd.f32 %v5166, %v5251
    %v5269 = vadd.f32 %v5167, %v5252
    %v5270 = vadd.f32 %v5168, %v5253
    %v5271 = vadd.f32 %v5169, %v5254
    %v5272 = vadd.f32 %v5170, %v5255
    %v5273 = vadd.f32 %v5171, %v5256
    %s5274 = scalar_lea.vmem %s14, 136
    %5275 = vst [vmem:[%s5274] sm:$0xff] %v5257
    %5276 = vst [vmem:[%s5274 + $0x8] sm:$0xff] %v5258
    %5277 = vst [vmem:[%s5274 + $0x10] sm:$0xff] %v5259
    %5278 = vst [vmem:[%s5274 + $0x18] sm:$0xff] %v5260
    %5279 = vst [vmem:[%s5274 + $0x20] sm:$0xff] %v5261
    %5280 = vst [vmem:[%s5274 + $0x28] sm:$0xff] %v5262
    %5281 = vst [vmem:[%s5274 + $0x30] sm:$0xff] %v5263
    %5282 = vst [vmem:[%s5274 + $0x38] sm:$0xff] %v5264
    %5283 = vst [vmem:[%s5274 + $0x40] sm:$0xff] %v5265
    %5284 = vst [vmem:[%s5274 + $0x48] sm:$0xff] %v5266
    %5285 = vst [vmem:[%s5274 + $0x50] sm:$0xff] %v5267
    %5286 = vst [vmem:[%s5274 + $0x58] sm:$0xff] %v5268
    %5287 = vst [vmem:[%s5274 + $0x60] sm:$0xff] %v5269
    %5288 = vst [vmem:[%s5274 + $0x68] sm:$0xff] %v5270
    %5289 = vst [vmem:[%s5274 + $0x70] sm:$0xff] %v5271
    %5290 = vst [vmem:[%s5274 + $0x78] sm:$0xff] %v5272
    %5291 = vst [vmem:[%s5274 + $0x80] sm:$0x7] %v5273
    // Predicated region
    $region58: #{ae_atlasnet_forward.2} parent=1 // pred_check
      _
    $region59: #{ae_atlasnet_forward.2} parent=1 // pred_check_branch
      %5293 = sbr.rel (0) target = $region61
    $region60: #{ae_atlasnet_forward.2} parent=1 // pred_region
      _
    $region61: #{ae_atlasnet_forward.2} parent=1 // pred_fallthru
      _
    // Predicated region
    $region62: #{ae_atlasnet_forward.2} parent=1 // pred_check
      _
    $region63: #{ae_atlasnet_forward.2} parent=1 // pred_check_branch
      %5295 = sbr.rel (0) target = $region65
    $region64: #{ae_atlasnet_forward.2} parent=1 // pred_region
      _
    $region65: #{ae_atlasnet_forward.2} parent=1 // pred_fallthru
      _
    // Predicated region
    $region66: #{ae_atlasnet_forward.2} parent=1 // pred_check
      _
    $region67: #{ae_atlasnet_forward.2} parent=1 // pred_check_branch
      %5297 = sbr.rel (0) target = $region69
    $region68: #{ae_atlasnet_forward.2} parent=1 // pred_region
      _
    $region69: #{ae_atlasnet_forward.2} parent=1 // pred_fallthru
      _
    // Predicated region
    $region70: #{ae_atlasnet_forward.2} parent=1 // pred_check
      _
    $region71: #{ae_atlasnet_forward.2} parent=1 // pred_check_branch
      %5299 = sbr.rel (0) target = $region73
    $region72: #{ae_atlasnet_forward.2} parent=1 // pred_region
      _
    $region73: #{ae_atlasnet_forward.2} parent=1 // pred_fallthru
      _
    %5300 = vsyncpa [#allocation3], 1

</llo_original>
